<compile_context>
chip_gen: v5e
topology: v5e:2x2
jax: 0.10.0
libtpu: 0.0.40
codegen_flags: <defaults>
</compile_context>

<pallas_src>
import functools
import math

import jax
import jax.numpy as jnp
from jax.experimental import pallas as pl
from jax.experimental.pallas import tpu as pltpu

_CP = getattr(pltpu, "CompilerParams", None) or getattr(pltpu, "TPUCompilerParams")
_HAS_RECIP = hasattr(pl, "reciprocal")
_BN_EVAL_SCALE = 1.0 / math.sqrt(1.0 + 1e-5)   # BatchNorm1d eval, default running stats


def _parallel(n=1):
    return _CP(dimension_semantics=("parallel",) * n)


def _layer_norm_f32(x, g, b, eps=1e-5):
    mu = jnp.mean(x, axis=-1, keepdims=True)
    var = jnp.mean(jnp.square(x - mu), axis=-1, keepdims=True)
    return (x - mu) * jax.lax.rsqrt(var + eps) * g + b


# ---------------------------------------------------------------------------
# Fused (pre-LN) -> matmul -> bias -> activation -> (scale) -> (+residual) -> (post-LN)
# ---------------------------------------------------------------------------

def _fused_linear_kernel(*refs, pre_ln, act, has_res, out_scale, out_ln):
    it = iter(refs[:-1])
    o_ref = refs[-1]
    x = next(it)[...]                                   # f32
    if pre_ln:
        g = next(it)[...]
        b = next(it)[...]
        x = _layer_norm_f32(x, g, b)
    w = next(it)[...]                                   # bf16 (K, N)
    bias = next(it)[...]                                # f32 (1, N)
    y = jnp.dot(x.astype(jnp.bfloat16), w, preferred_element_type=jnp.float32) + bias
    if act == "silu":
        y = y * jax.nn.sigmoid(y)
    elif act == "relu":
        y = jnp.maximum(y, 0.0)
    elif act == "sigmoid":
        y = jax.nn.sigmoid(y)
    elif act == "glu":
        half = y.shape[-1] // 2
        y = y[:, :half] * jax.nn.sigmoid(y[:, half:])
    if out_scale != 1.0:
        y = y * out_scale
    if has_res:
        y = y + next(it)[...]
    if out_ln:
        g = next(it)[...]
        b = next(it)[...]
        y = _layer_norm_f32(y, g, b)
    o_ref[...] = y


def fused_linear(x, w, b=None, *, pre_ln=None, act="none", residual=None,
                 out_scale=1.0, out_ln=None):
    """out = [LN_out]( [residual +] out_scale * act( [LN_pre](x) @ w + b ) )

    x: (M, K) f32; w: (K, N) (cast to bf16 for the MXU); b: (N,) or None.
    Everything is one pallas_call; rows (M) are tiled when M divides 128/256.
    """
    M, K = x.shape
    N = w.shape[1]
    n_out = N // 2 if act == "glu" else N
    if b is None:
        b = jnp.zeros((N,), jnp.float32)

    tm = M
    for cand in (256, 128):
        if M > cand and M % cand == 0:
            tm = cand
            break
    grid = (M // tm,)
    row_map = lambda i: (i, 0)
    fix_map = lambda i: (0, 0)

    args = [x.astype(jnp.float32)]
    in_specs = [pl.BlockSpec((tm, K), row_map)]
    if pre_ln is not None:
        g, beta = pre_ln
        args += [g.reshape(1, K).astype(jnp.float32),
                 beta.reshape(1, K).astype(jnp.float32)]
        in_specs += [pl.BlockSpec((1, K), fix_map), pl.BlockSpec((1, K), fix_map)]
    args += [w.astype(jnp.bfloat16), b.reshape(1, N).astype(jnp.float32)]
    in_specs += [pl.BlockSpec((K, N), fix_map), pl.BlockSpec((1, N), fix_map)]
    if residual is not None:
        args.append(residual.astype(jnp.float32))
        in_specs.append(pl.BlockSpec((tm, n_out), row_map))
    if out_ln is not None:
        g, beta = out_ln
        args += [g.reshape(1, n_out).astype(jnp.float32),
                 beta.reshape(1, n_out).astype(jnp.float32)]
        in_specs += [pl.BlockSpec((1, n_out), fix_map), pl.BlockSpec((1, n_out), fix_map)]

    kernel = functools.partial(
        _fused_linear_kernel, pre_ln=pre_ln is not None, act=act,
        has_res=residual is not None, out_scale=out_scale, out_ln=out_ln is not None)
    return pl.pallas_call(
        kernel,
        out_shape=jax.ShapeDtypeStruct((M, n_out), jnp.float32),
        grid=grid,
        in_specs=in_specs,
        out_specs=pl.BlockSpec((tm, n_out), row_map),
        compiler_params=_parallel(1),
    )(*args)


# ---------------------------------------------------------------------------
# Fused multi-head self-attention (heads packed on the 128-lane model dim)
# ---------------------------------------------------------------------------

def _attn_kernel(qkv_ref, bias_ref, o_ref, *, num_heads, scale):
    qkv = qkv_ref[0]                               # (T, 3D) f32
    bias = bias_ref[0]                             # (1, T)  f32 additive key mask
    D = qkv.shape[-1] // 3
    dh = D // num_heads
    q, k, v = qkv[:, :D], qkv[:, D:2 * D], qkv[:, 2 * D:]
    outs = []
    for h in range(num_heads):
        sl = slice(h * dh, (h + 1) * dh)
        qh = q[:, sl].astype(jnp.bfloat16)
        kh = k[:, sl].astype(jnp.bfloat16)
        vh = v[:, sl].astype(jnp.bfloat16)
        s = jax.lax.dot_general(qh, kh, (((1,), (1,)), ((), ())),
                                preferred_element_type=jnp.float32)
        s = s * scale + bias                       # mask added in f32 (post-accumulate)
        s = s - jnp.max(s, axis=-1, keepdims=True)
        e = jnp.exp(s)
        denom = jnp.sum(e, axis=-1, keepdims=True)
        p = e * (pl.reciprocal(denom, approx=True) if _HAS_RECIP else 1.0 / denom)
        outs.append(jnp.dot(p.astype(jnp.bfloat16), vh,
                            preferred_element_type=jnp.float32))
    o_ref[0] = jnp.concatenate(outs, axis=-1)      # lane-dense (T, D) store


def pl_attention(qkv, key_bias, num_heads):
    """qkv: (B, T, 3D) packed [q;k;v]; key_bias: (B, 1, T) additive mask -> (B, T, D)."""
    B, T, D3 = qkv.shape
    D = D3 // 3
    scale = 1.0 / math.sqrt(D // num_heads)
    return pl.pallas_call(
        functools.partial(_attn_kernel, num_heads=num_heads, scale=scale),
        out_shape=jax.ShapeDtypeStruct((B, T, D), jnp.float32),
        grid=(B,),
        in_specs=[pl.BlockSpec((1, T, D3), lambda g: (g, 0, 0)),
                  pl.BlockSpec((1, 1, T), lambda g: (g, 0, 0))],
        out_specs=pl.BlockSpec((1, T, D), lambda g: (g, 0, 0)),
        compiler_params=_parallel(1),
    )(qkv.astype(jnp.float32), key_bias.astype(jnp.float32))


# ---------------------------------------------------------------------------
# Depthwise conv1d (channel-last) + bias + BatchNorm(eval) + SiLU, fused
# ---------------------------------------------------------------------------

def _dwconv_kernel(x_ref, w_ref, b_ref, o_ref, *, ksize, t_out):
    x = x_ref[0]                                   # (Tpad, D) f32 -- time on sublanes
    w = w_ref[...]                                 # (K, D)   f32
    acc = jnp.zeros((t_out, x.shape[-1]), jnp.float32)
    for k in range(ksize):                         # 31 VPU MACs, sublane-offset reads
        acc = acc + x[k:k + t_out, :] * w[k:k + 1, :]
    acc = (acc + b_ref[...]) * _BN_EVAL_SCALE      # conv bias + BatchNorm1d(eval)
    o_ref[0] = acc * jax.nn.sigmoid(acc)           # SiLU


def pl_depthwise_conv_bn_silu(x, w_kd, b):
    """x: (B, T, D) channel-last; w_kd: (K, D); b: (D,); 'same' padding (odd K)."""
    B, T, D = x.shape
    K = w_kd.shape[0]
    pad = (K - 1) // 2
    xp = jnp.pad(x, ((0, 0), (pad, pad), (0, 0)))
    Tp = T + 2 * pad
    return pl.pallas_call(
        functools.partial(_dwconv_kernel, ksize=K, t_out=T),
        out_shape=jax.ShapeDtypeStruct((B, T, D), jnp.float32),
        grid=(B,),
        in_specs=[pl.BlockSpec((1, Tp, D), lambda g: (g, 0, 0)),
                  pl.BlockSpec((K, D), lambda g: (0, 0)),
                  pl.BlockSpec((1, D), lambda g: (0, 0))],
        out_specs=pl.BlockSpec((1, T, D), lambda g: (g, 0, 0)),
        compiler_params=_parallel(1),
    )(xp.astype(jnp.float32), w_kd.astype(jnp.float32),
      b.reshape(1, D).astype(jnp.float32))


# ---------------------------------------------------------------------------
# Fully fused bidirectional LSTM recurrence + fc(512->1) + sigmoid
# ---------------------------------------------------------------------------

def _bilstm_fc_kernel(xf_ref, xb_ref, whf_ref, whb_ref, wcf_ref, wcb_ref, fcb_ref,
                      o_ref, h_sc, c_sc, hf_all, hb_all, *, T, H):
    def run_direction(x_ref, whh_ref, h_out, reverse):
        h_sc[...] = jnp.zeros(h_sc.shape, jnp.float32)
        c_sc[...] = jnp.zeros(c_sc.shape, jnp.float32)

        def step(s, carry):
            t = T - 1 - s if reverse else s
            gates = x_ref[t] + jnp.dot(h_sc[...].astype(jnp.bfloat16), whh_ref[...],
                                       preferred_element_type=jnp.float32)
            i = jax.nn.sigmoid(gates[:, 0:H])
            f = jax.nn.sigmoid(gates[:, H:2 * H])
            g = jnp.tanh(gates[:, 2 * H:3 * H])
            o = jax.nn.sigmoid(gates[:, 3 * H:4 * H])
            c_sc[...] = f * c_sc[...] + i * g
            h_sc[...] = o * jnp.tanh(c_sc[...])
            h_out[t] = h_sc[...]
            return carry

        jax.lax.fori_loop(0, T, step, 0)

    run_direction(xf_ref, whf_ref, hf_all, reverse=False)    # forward pass
    run_direction(xb_ref, whb_ref, hb_all, reverse=True)     # backward pass
    # fc(512 -> 1) + sigmoid epilogue as a VPU/XLU lane reduction (no N=1 MXU store)
    logits = (jnp.sum(hf_all[...] * wcf_ref[...][None], axis=-1)
              + jnp.sum(hb_all[...] * wcb_ref[...][None], axis=-1)
              + fcb_ref[...])
    o_ref[...] = jax.nn.sigmoid(logits)


def bilstm_fc_sigmoid(y, p):
    """y: (B, T, 128) -> sigmoid(fc(concat(LSTM_fw, LSTM_bw))) : (B, T).
    One matmul per direction for the x @ W_ih gates, then a single Pallas kernel for the
    full recurrence (w_hh / h / c resident in VMEM) with the fc+sigmoid fused in."""
    B, T, I = y.shape
    H = p["lstm_w_hh_fw"].shape[0]
    yf = y.reshape(B * T, I)
    xp_fw = fused_linear(yf, p["lstm_w_ih_fw"], p["lstm_b_fw"]).reshape(B, T, 4 * H)
    xp_bw = fused_linear(yf, p["lstm_w_ih_bw"], p["lstm_b_bw"]).reshape(B, T, 4 * H)
    xp_fw = xp_fw.transpose(1, 0, 2)                          # time-major (T, B, 4H)
    xp_bw = xp_bw.transpose(1, 0, 2)

    out_tb = pl.pallas_call(
        functools.partial(_bilstm_fc_kernel, T=T, H=H),
        out_shape=jax.ShapeDtypeStruct((T, B), jnp.float32),
        grid=(1,),
        in_specs=[
            pl.BlockSpec((T, B, 4 * H), lambda i: (0, 0, 0)),
            pl.BlockSpec((T, B, 4 * H), lambda i: (0, 0, 0)),
            pl.BlockSpec((H, 4 * H), lambda i: (0, 0)),
            pl.BlockSpec((H, 4 * H), lambda i: (0, 0)),
            pl.BlockSpec((1, H), lambda i: (0, 0)),
            pl.BlockSpec((1, H), lambda i: (0, 0)),
            pl.BlockSpec((1, 1), lambda i: (0, 0)),
        ],
        out_specs=pl.BlockSpec((T, B), lambda i: (0, 0)),
        scratch_shapes=[
            pltpu.VMEM((B, H), jnp.float32),       # h
            pltpu.VMEM((B, H), jnp.float32),       # c
            pltpu.VMEM((T, B, H), jnp.float32),    # forward h history
            pltpu.VMEM((T, B, H), jnp.float32),    # backward h history
        ],
    )(xp_fw, xp_bw,
      p["lstm_w_hh_fw"].astype(jnp.bfloat16), p["lstm_w_hh_bw"].astype(jnp.bfloat16),
      p["fc_w_fw"].astype(jnp.float32), p["fc_w_bw"].astype(jnp.float32),
      p["fc_b"].astype(jnp.float32))
    return out_tb.T                                # (B, T)


# ---------------------------------------------------------------------------
# Non-Pallas glue (tiny ops, per the performance review)
# ---------------------------------------------------------------------------

def conv2d_relu(x, w, b, stride=2):
    # Tiny Cout=1 downsampling conv: kept on the XLA conv (review: im2col + MXU with
    # K=27 / N=1 is pure launch + masked-store overhead at these sizes).
    y = jax.lax.conv_general_dilated(
        x, w, window_strides=(stride, stride), padding="VALID",
        dimension_numbers=("NCHW", "OIHW", "NCHW"))
    return jnp.maximum(y + b[None, :, None, None], 0.0)


def conv_transpose1d_relu(x_btd, w_flat, b):
    """ConvTranspose1d(k=3, stride=2) + ReLU, channel-last.
    x_btd: (B, Tin, Cin); w_flat: (Cin, K*Cout) [w.transpose(0,2,1).reshape]; b: (Cout,)."""
    B, Tin, Cin = x_btd.shape
    Cout = b.shape[0]
    K = w_flat.shape[1] // Cout                     # == 3
    y = fused_linear(x_btd.reshape(B * Tin, Cin), w_flat, None).reshape(B, Tin, K, Cout)
    # stride-2 / K=3 specific interleave (no scatter-add): out[2j]=y[j,0]+y[j-1,2], out[2j+1]=y[j,1]
    even = (jnp.pad(y[:, :, 0, :], ((0, 0), (0, 1), (0, 0)))
            + jnp.pad(y[:, :, 2, :], ((0, 0), (1, 0), (0, 0))))       # (B, Tin+1, Cout)
    odd = y[:, :, 1, :]                                               # (B, Tin,   Cout)
    out = jnp.concatenate(
        [jnp.stack([even[:, :Tin], odd], axis=2).reshape(B, 2 * Tin, Cout),
         even[:, Tin:]], axis=1)                                      # (B, 2*Tin+1, Cout)
    return jnp.maximum(out + b[None, None, :], 0.0)


# ---------------------------------------------------------------------------
# torchaudio-style Conformer layer built from the fused kernels
# ---------------------------------------------------------------------------

def conformer_layer(x, p, key_bias, num_heads=4):
    B, T, D = x.shape
    xf = x.reshape(B * T, D)

    # FFN 1 (half-step residual): [LN + Linear + SiLU] and [Linear + 0.5x + residual] fused
    h = fused_linear(xf, p["ffn1_w1"], p["ffn1_b1"],
                     pre_ln=(p["ffn1_ln_g"], p["ffn1_ln_b"]), act="silu")
    xf = fused_linear(h, p["ffn1_w2"], p["ffn1_b2"], residual=xf, out_scale=0.5)

    # Multi-head self-attention: [LN + QKV] fused, heads stay packed on 128 lanes
    qkv = fused_linear(xf, p["attn_in_w"], p["attn_in_b"],
                       pre_ln=(p["attn_ln_g"], p["attn_ln_b"]))
    att = pl_attention(qkv.reshape(B, T, 3 * D), key_bias, num_heads)
    xf = fused_linear(att.reshape(B * T, D), p["attn_out_w"], p["attn_out_b"],
                      residual=xf)

    # Convolution module: [LN + pointwise(2D) + GLU], [depthwise + BN + SiLU],
    # [pointwise + residual] -- three fused kernels
    cm = fused_linear(xf, p["conv_pw1_w"], p["conv_pw1_b"],
                      pre_ln=(p["conv_ln_g"], p["conv_ln_b"]), act="glu")
    cm = pl_depthwise_conv_bn_silu(cm.reshape(B, T, D), p["conv_dw_w"], p["conv_dw_b"])
    xf = fused_linear(cm.reshape(B * T, D), p["conv_pw2_w"], p["conv_pw2_b"],
                      residual=xf)

    # FFN 2 (half-step residual) with the layer's final LayerNorm fused into the epilogue
    h = fused_linear(xf, p["ffn2_w1"], p["ffn2_b1"],
                     pre_ln=(p["ffn2_ln_g"], p["ffn2_ln_b"]), act="silu")
    xf = fused_linear(h, p["ffn2_w2"], p["ffn2_b2"], residual=xf, out_scale=0.5,
                      out_ln=(p["final_ln_g"], p["final_ln_b"]))
    return xf.reshape(B, T, D)


def conformer(x, lengths, layer_params, num_heads=4):
    B, T, D = x.shape
    # key-padding bias built ONCE; broadcast to (T, T) happens inside the attention kernel
    pad_mask = jnp.arange(T)[None, :] >= lengths[:, None]
    key_bias = jnp.where(pad_mask, -1e9, 0.0).astype(jnp.float32).reshape(B, 1, T)
    for lp in layer_params:        # unrolled Python loop: no scan, weights prefetchable
        x = conformer_layer(x, lp, key_bias, num_heads)
    return x


# ---------------------------------------------------------------------------
# Full DetectionNet forward
# ---------------------------------------------------------------------------

@jax.jit
def detection_net_forward(params, x, length):
    B, C, Fq, T = x.shape
    sequence = T

    # --- Conv2dDownsampling(3 -> 1) ---
    pad1 = 1 - (T % 2)
    xp = jnp.pad(x, ((0, 0), (0, 0), (0, 0), (0, pad1)))
    y = conv2d_relu(xp, params["ds_w1"], params["ds_b1"])
    length = (length - 3 + pad1) // 2 + 1
    W1 = y.shape[-1]
    pad2 = 1 - (W1 % 2)
    yp = jnp.pad(y, ((0, 0), (0, 0), (0, 0), (0, pad2)))
    y = conv2d_relu(yp, params["ds_w2"], params["ds_b2"])
    length = (length - 3 + pad2) // 2 + 1

    # squeeze(1).transpose(1,2): (B, 1, F', T') -> (B, T', F')
    y = y[:, 0].transpose(0, 2, 1)
    B_, T2, F2 = y.shape

    # Linear(31 -> 128); Dropout = eval identity
    y = fused_linear(y.reshape(B_ * T2, F2), params["lin_w"], params["lin_b"])
    y = y.reshape(B_, T2, 128)

    # --- Conformer(128, heads=4, ffn=256, layers=8, dw_kernel=31) ---
    y = conformer(y, length, params["conformer"])

    # --- Conv1dUpsampling(128 -> 128): two ConvTranspose1d(k=3, s=2) + ReLU ---
    y = conv_transpose1d_relu(y, params["up_w1"], params["up_b1"])   # (B, 2*T2+1, 128)
    y = conv_transpose1d_relu(y, params["up_w2"], params["up_b2"])   # (B, T_up, 128)

    # --- bidirectional LSTM(128 -> 2*256) + fc(512 -> 1) + sigmoid, fully fused ---
    out = bilstm_fc_sigmoid(y, params)                               # (B, T_up)
    return out[:, :sequence]


# ---------------------------------------------------------------------------
# Deterministic parameter initialization (synthetic weights, PyTorch-like fan-in),
# stored in kernel-ready layout: matmul weights pre-transposed to (K, N) bf16.
# ---------------------------------------------------------------------------

def init_params(key):
    keys = iter(jax.random.split(key, 512))

    def uni(shape, fan_in):
        bound = 1.0 / math.sqrt(fan_in)
        return jax.random.uniform(next(keys), shape, jnp.float32, -bound, bound)

    def mm(w_out_in):
        """PyTorch (out, in) Linear weight -> (in, out) bf16, MXU-ready."""
        return jnp.transpose(w_out_in).astype(jnp.bfloat16)

    p = {}

    # Conv2dDownsampling (PyTorch OIHW layout, executed with lax.conv)
    p["ds_w1"] = uni((1, 3, 3, 3), 27)
    p["ds_b1"] = uni((1,), 27)
    p["ds_w2"] = uni((1, 1, 3, 3), 9)
    p["ds_b2"] = uni((1,), 9)

    # Linear(31, 128)
    p["lin_w"] = mm(uni((128, 31), 31))
    p["lin_b"] = uni((128,), 31)

    D, FF, K_DW = 128, 256, 31

    def conformer_layer_params():
        lp = {}
        for name in ("ffn1", "ffn2"):
            lp[f"{name}_ln_g"] = jnp.ones((D,), jnp.float32)
            lp[f"{name}_ln_b"] = jnp.zeros((D,), jnp.float32)
            lp[f"{name}_w1"] = mm(uni((FF, D), D))
            lp[f"{name}_b1"] = uni((FF,), D)
            lp[f"{name}_w2"] = mm(uni((D, FF), FF))
            lp[f"{name}_b2"] = uni((D,), FF)
        lp["attn_ln_g"] = jnp.ones((D,), jnp.float32)
        lp["attn_ln_b"] = jnp.zeros((D,), jnp.float32)
        lp["attn_in_w"] = mm(uni((3 * D, D), D))              # packed [q; k; v]
        lp["attn_in_b"] = jnp.zeros((3 * D,), jnp.float32)
        lp["attn_out_w"] = mm(uni((D, D), D))
        lp["attn_out_b"] = jnp.zeros((D,), jnp.float32)
        lp["conv_ln_g"] = jnp.ones((D,), jnp.float32)
        lp["conv_ln_b"] = jnp.zeros((D,), jnp.float32)
        lp["conv_pw1_w"] = mm(uni((2 * D, D), D))
        lp["conv_pw1_b"] = uni((2 * D,), D)
        # depthwise Conv1d weight, PyTorch (D, 1, K) -> channel-last (K, D) f32 (VPU kernel)
        lp["conv_dw_w"] = jnp.transpose(uni((D, K_DW), K_DW))
        lp["conv_dw_b"] = uni((D,), K_DW)
        lp["conv_pw2_w"] = mm(uni((D, D), D))
        lp["conv_pw2_b"] = uni((D,), D)
        lp["final_ln_g"] = jnp.ones((D,), jnp.float32)
        lp["final_ln_b"] = jnp.zeros((D,), jnp.float32)
        return lp

    p["conformer"] = [conformer_layer_params() for _ in range(8)]

    # Conv1dUpsampling: ConvTranspose1d weight (Cin, Cout, K) -> (Cin, K*Cout) bf16
    def deconv_flat():
        w = uni((128, 128, 3), 128 * 3)
        return jnp.transpose(w, (0, 2, 1)).reshape(128, 3 * 128).astype(jnp.bfloat16)

    p["up_w1"] = deconv_flat()
    p["up_b1"] = uni((128,), 128 * 3)
    p["up_w2"] = deconv_flat()
    p["up_b2"] = uni((128,), 128 * 3)

    # bidirectional LSTM(128 -> 256 per direction), gate order (i, f, g, o)
    H = 256
    for d in ("fw", "bw"):
        p[f"lstm_w_ih_{d}"] = mm(uni((4 * H, 128), H))            # (128, 4H) bf16
        p[f"lstm_w_hh_{d}"] = mm(uni((4 * H, H), H))              # (H,   4H) bf16
        p[f"lstm_b_{d}"] = uni((4 * H,), H) + uni((4 * H,), H)    # b_ih + b_hh folded

    # fc(512, 1) + sigmoid, split per LSTM direction for the fused in-kernel epilogue
    fc_w = uni((1, 512), 512)
    p["fc_w_fw"] = fc_w[:, :H]
    p["fc_w_bw"] = fc_w[:, H:]
    p["fc_b"] = uni((1, 1), 512)
    return p


if __name__ == "__main__":
    key = jax.random.PRNGKey(0)
    pkey, xkey = jax.random.split(key)
    params = init_params(pkey)

    # Freq must be 128 so that two stride-2 valid convs give 31 freq bins (Linear(31, 128)).
    B, Cin, Freq, T = 2, 3, 128, 32
    x = jax.random.normal(xkey, (B, Cin, Freq, T), jnp.float32)
    length = jnp.array([32, 24], dtype=jnp.int32)

    out = jax.block_until_ready(detection_net_forward(params, x, length))

    assert out.shape == (B, T), out.shape
    assert bool(jnp.all(jnp.isfinite(out)))
    assert bool(jnp.all((out >= 0.0) & (out <= 1.0)))
    print("KERNEL_OK")
</pallas_src>

<mosaic_0001>
module attributes {stable_mosaic.version = 11 : i64} {
  func.func @_fused_linear_kernel(%arg0: i32, %arg1: memref<16x31xf32, #tpu.memory_space<vmem>>, %arg2: memref<31x128xbf16, #tpu.memory_space<vmem>>, %arg3: memref<1x128xf32, #tpu.memory_space<vmem>>, %arg4: memref<16x128xf32, #tpu.memory_space<vmem>>) attributes {dimension_semantics = [#tpu.dimension_semantics<parallel>], iteration_bounds = array<i64: 1>, scalar_prefetch = 0 : i64, scratch_operands = 0 : i64, tpu.core_type = #tpu.core_type<tc>, window_params = [{transform_indices = @transform_0, window_bounds = array<i64: 16, 31>}, {pipeline_mode = #tpu.pipeline_mode<synchronous>, transform_indices = @transform_1, window_bounds = array<i64: 31, 128>}, {pipeline_mode = #tpu.pipeline_mode<synchronous>, transform_indices = @transform_2, window_bounds = array<i64: 1, 128>}, {transform_indices = @transform_3, window_bounds = array<i64: 16, 128>}]} {
    %c0 = arith.constant 0 : index
    %c0_0 = arith.constant 0 : index
    %0 = vector.load %arg1[%c0, %c0_0] : memref<16x31xf32, #tpu.memory_space<vmem>>, vector<16x31xf32>
    %c0_1 = arith.constant 0 : index
    %c0_2 = arith.constant 0 : index
    %1 = vector.load %arg2[%c0_1, %c0_2] : memref<31x128xbf16, #tpu.memory_space<vmem>>, vector<31x128xbf16>
    %c0_3 = arith.constant 0 : index
    %c0_4 = arith.constant 0 : index
    %2 = vector.load %arg3[%c0_3, %c0_4] : memref<1x128xf32, #tpu.memory_space<vmem>>, vector<1x128xf32>
    %3 = arith.truncf %0 : vector<16x31xf32> to vector<16x31xbf16>
    %cst = arith.constant dense<0.000000e+00> : vector<16x128xf32>
    %4 = tpu.matmul %3, %1, %cst {dimension_numbers = #tpu.dot_dimension_numbers<[1], [0], [0], [1], [0, 0, 1, 1], [], []>} : vector<16x31xbf16>, vector<31x128xbf16>, vector<16x128xf32> -> vector<16x128xf32>
    %5 = vector.broadcast %2 : vector<1x128xf32> to vector<16x128xf32>
    %6 = arith.addf %4, %5 : vector<16x128xf32>
    %c0_5 = arith.constant 0 : index
    %c0_6 = arith.constant 0 : index
    %7 = vector.load %arg4[%c0_5, %c0_6] : memref<16x128xf32, #tpu.memory_space<vmem>>, vector<16x128xf32>
    tpu.vector_store %arg4[%c0_5, %c0_6], %6 {strides = array<i32>} : memref<16x128xf32, #tpu.memory_space<vmem>>, vector<16x128xf32>,
    return
  }
  func.func @transform_0(%arg0: i32) -> (i32, i32) {
    %c0_i32 = arith.constant 0 : i32
    %c0_i32_0 = arith.constant 0 : i32
    return %arg0, %c0_i32 : i32, i32
  }
  func.func @transform_1(%arg0: i32) -> (i32, i32) {
    %c0_i32 = arith.constant 0 : i32
    %c0_i32_0 = arith.constant 0 : i32
    %c0_i32_1 = arith.constant 0 : i32
    return %c0_i32, %c0_i32_0 : i32, i32
  }
  func.func @transform_2(%arg0: i32) -> (i32, i32) {
    %c0_i32 = arith.constant 0 : i32
    %c0_i32_0 = arith.constant 0 : i32
    %c0_i32_1 = arith.constant 0 : i32
    return %c0_i32, %c0_i32_0 : i32, i32
  }
  func.func @transform_3(%arg0: i32) -> (i32, i32) {
    %c0_i32 = arith.constant 0 : i32
    %c0_i32_0 = arith.constant 0 : i32
    return %arg0, %c0_i32 : i32, i32
  }
}

module attributes {stable_mosaic.version = 11 : i64} {
  func.func @_fused_linear_kernel(%arg0: i32, %arg1: memref<16x256xf32, #tpu.memory_space<vmem>>, %arg2: memref<256x128xbf16, #tpu.memory_space<vmem>>, %arg3: memref<1x128xf32, #tpu.memory_space<vmem>>, %arg4: memref<16x128xf32, #tpu.memory_space<vmem>>, %arg5: memref<16x128xf32, #tpu.memory_space<vmem>>) attributes {dimension_semantics = [#tpu.dimension_semantics<parallel>], iteration_bounds = array<i64: 1>, scalar_prefetch = 0 : i64, scratch_operands = 0 : i64, tpu.core_type = #tpu.core_type<tc>, window_params = [{transform_indices = @transform_0, window_bounds = array<i64: 16, 256>}, {pipeline_mode = #tpu.pipeline_mode<synchronous>, transform_indices = @transform_1, window_bounds = array<i64: 256, 128>}, {pipeline_mode = #tpu.pipeline_mode<synchronous>, transform_indices = @transform_2, window_bounds = array<i64: 1, 128>}, {transform_indices = @transform_3, window_bounds = array<i64: 16, 128>}, {transform_indices = @transform_4, window_bounds = array<i64: 16, 128>}]} {
    %c0 = arith.constant 0 : index
    %c0_0 = arith.constant 0 : index
    %0 = vector.load %arg1[%c0, %c0_0] : memref<16x256xf32, #tpu.memory_space<vmem>>, vector<16x256xf32>
    %c0_1 = arith.constant 0 : index
    %c0_2 = arith.constant 0 : index
    %1 = vector.load %arg2[%c0_1, %c0_2] : memref<256x128xbf16, #tpu.memory_space<vmem>>, vector<256x128xbf16>
    %c0_3 = arith.constant 0 : index
    %c0_4 = arith.constant 0 : index
    %2 = vector.load %arg3[%c0_3, %c0_4] : memref<1x128xf32, #tpu.memory_space<vmem>>, vector<1x128xf32>
    %3 = arith.truncf %0 : vector<16x256xf32> to vector<16x256xbf16>
    %cst = arith.constant dense<0.000000e+00> : vector<16x128xf32>
    %4 = tpu.matmul %3, %1, %cst {dimension_numbers = #tpu.dot_dimension_numbers<[1], [0], [0], [1], [0, 0, 1, 1], [], []>} : vector<16x256xbf16>, vector<256x128xbf16>, vector<16x128xf32> -> vector<16x128xf32>
    %5 = vector.broadcast %2 : vector<1x128xf32> to vector<16x128xf32>
    %6 = arith.addf %4, %5 : vector<16x128xf32>
    %cst_5 = arith.constant 5.000000e-01 : f32
    %7 = vector.broadcast %cst_5 : f32 to vector<16x128xf32>
    %8 = arith.mulf %6, %7 : vector<16x128xf32>
    %c0_6 = arith.constant 0 : index
    %c0_7 = arith.constant 0 : index
    %9 = vector.load %arg4[%c0_6, %c0_7] : memref<16x128xf32, #tpu.memory_space<vmem>>, vector<16x128xf32>
    %10 = arith.addf %8, %9 : vector<16x128xf32>
    %c0_8 = arith.constant 0 : index
    %c0_9 = arith.constant 0 : index
    %11 = vector.load %arg5[%c0_8, %c0_9] : memref<16x128xf32, #tpu.memory_space<vmem>>, vector<16x128xf32>
    tpu.vector_store %arg5[%c0_8, %c0_9], %10 {strides = array<i32>} : memref<16x128xf32, #tpu.memory_space<vmem>>, vector<16x128xf32>,
    return
  }
  func.func @transform_0(%arg0: i32) -> (i32, i32) {
    %c0_i32 = arith.constant 0 : i32
    %c0_i32_0 = arith.constant 0 : i32
    return %arg0, %c0_i32 : i32, i32
  }
  func.func @transform_1(%arg0: i32) -> (i32, i32) {
    %c0_i32 = arith.constant 0 : i32
    %c0_i32_0 = arith.constant 0 : i32
    %c0_i32_1 = arith.constant 0 : i32
    return %c0_i32, %c0_i32_0 : i32, i32
  }
  func.func @transform_2(%arg0: i32) -> (i32, i32) {
    %c0_i32 = arith.constant 0 : i32
    %c0_i32_0 = arith.constant 0 : i32
    %c0_i32_1 = arith.constant 0 : i32
    return %c0_i32, %c0_i32_0 : i32, i32
  }
  func.func @transform_3(%arg0: i32) -> (i32, i32) {
    %c0_i32 = arith.constant 0 : i32
    %c0_i32_0 = arith.constant 0 : i32
    return %arg0, %c0_i32 : i32, i32
  }
  func.func @transform_4(%arg0: i32) -> (i32, i32) {
    %c0_i32 = arith.constant 0 : i32
    %c0_i32_0 = arith.constant 0 : i32
    return %arg0, %c0_i32 : i32, i32
  }
}

module attributes {stable_mosaic.version = 11 : i64} {
  func.func @_fused_linear_kernel(%arg0: i32, %arg1: memref<16x128xf32, #tpu.memory_space<vmem>>, %arg2: memref<1x128xf32, #tpu.memory_space<vmem>>, %arg3: memref<1x128xf32, #tpu.memory_space<vmem>>, %arg4: memref<128x256xbf16, #tpu.memory_space<vmem>>, %arg5: memref<1x256xf32, #tpu.memory_space<vmem>>, %arg6: memref<16x256xf32, #tpu.memory_space<vmem>>) attributes {dimension_semantics = [#tpu.dimension_semantics<parallel>], iteration_bounds = array<i64: 1>, scalar_prefetch = 0 : i64, scratch_operands = 0 : i64, tpu.core_type = #tpu.core_type<tc>, window_params = [{transform_indices = @transform_0, window_bounds = array<i64: 16, 128>}, {pipeline_mode = #tpu.pipeline_mode<synchronous>, transform_indices = @transform_1, window_bounds = array<i64: 1, 128>}, {pipeline_mode = #tpu.pipeline_mode<synchronous>, transform_indices = @transform_2, window_bounds = array<i64: 1, 128>}, {pipeline_mode = #tpu.pipeline_mode<synchronous>, transform_indices = @transform_3, window_bounds = array<i64: 128, 256>}, {pipeline_mode = #tpu.pipeline_mode<synchronous>, transform_indices = @transform_4, window_bounds = array<i64: 1, 256>}, {transform_indices = @transform_5, window_bounds = array<i64: 16, 256>}]} {
    %c0 = arith.constant 0 : index
    %c0_0 = arith.constant 0 : index
    %0 = vector.load %arg1[%c0, %c0_0] : memref<16x128xf32, #tpu.memory_space<vmem>>, vector<16x128xf32>
    %c0_1 = arith.constant 0 : index
    %c0_2 = arith.constant 0 : index
    %1 = vector.load %arg2[%c0_1, %c0_2] : memref<1x128xf32, #tpu.memory_space<vmem>>, vector<1x128xf32>
    %c0_3 = arith.constant 0 : index
    %c0_4 = arith.constant 0 : index
    %2 = vector.load %arg3[%c0_3, %c0_4] : memref<1x128xf32, #tpu.memory_space<vmem>>, vector<1x128xf32>
    %cst = arith.constant dense<0.000000e+00> : vector<16xf32>
    %3 = vector.multi_reduction <add>, %0, %cst [1] : vector<16x128xf32> to vector<16xf32>
    %4 = vector.shape_cast %3 : vector<16xf32> to vector<16x1xf32>
    %cst_5 = arith.constant 1.280000e+02 : f32
    %5 = vector.broadcast %cst_5 : f32 to vector<16x1xf32>
    %6 = arith.divf %4, %5 : vector<16x1xf32>
    %7 = vector.broadcast %6 : vector<16x1xf32> to vector<16x128xf32>
    %8 = arith.subf %0, %7 : vector<16x128xf32>
    %9 = arith.mulf %8, %8 : vector<16x128xf32>
    %cst_6 = arith.constant dense<0.000000e+00> : vector<16xf32>
    %10 = vector.multi_reduction <add>, %9, %cst_6 [1] : vector<16x128xf32> to vector<16xf32>
    %11 = vector.shape_cast %10 : vector<16xf32> to vector<16x1xf32>
    %cst_7 = arith.constant 1.280000e+02 : f32
    %12 = vector.broadcast %cst_7 : f32 to vector<16x1xf32>
    %13 = arith.divf %11, %12 : vector<16x1xf32>
    %14 = vector.broadcast %6 : vector<16x1xf32> to vector<16x128xf32>
    %15 = arith.subf %0, %14 : vector<16x128xf32>
    %cst_8 = arith.constant 9.99999974E-6 : f32
    %16 = vector.broadcast %cst_8 : f32 to vector<16x1xf32>
    %17 = arith.addf %13, %16 : vector<16x1xf32>
    %18 = math.rsqrt %17 : vector<16x1xf32>
    %19 = vector.broadcast %18 : vector<16x1xf32> to vector<16x128xf32>
    %20 = arith.mulf %15, %19 : vector<16x128xf32>
    %21 = vector.broadcast %1 : vector<1x128xf32> to vector<16x128xf32>
    %22 = arith.mulf %20, %21 : vector<16x128xf32>
    %23 = vector.broadcast %2 : vector<1x128xf32> to vector<16x128xf32>
    %24 = arith.addf %22, %23 : vector<16x128xf32>
    %c0_9 = arith.constant 0 : index
    %c0_10 = arith.constant 0 : index
    %25 = vector.load %arg4[%c0_9, %c0_10] : memref<128x256xbf16, #tpu.memory_space<vmem>>, vector<128x256xbf16>
    %c0_11 = arith.constant 0 : index
    %c0_12 = arith.constant 0 : index
    %26 = vector.load %arg5[%c0_11, %c0_12] : memref<1x256xf32, #tpu.memory_space<vmem>>, vector<1x256xf32>
    %27 = arith.truncf %24 : vector<16x128xf32> to vector<16x128xbf16>
    %cst_13 = arith.constant dense<0.000000e+00> : vector<16x256xf32>
    %28 = tpu.matmul %27, %25, %cst_13 {dimension_numbers = #tpu.dot_dimension_numbers<[1], [0], [0], [1], [0, 0, 1, 1], [], []>} : vector<16x128xbf16>, vector<128x256xbf16>, vector<16x256xf32> -> vector<16x256xf32>
    %29 = vector.broadcast %26 : vector<1x256xf32> to vector<16x256xf32>
    %30 = arith.addf %28, %29 : vector<16x256xf32>
    %31 = arith.negf %30 : vector<16x256xf32>
    %32 = math.exp %31 : vector<16x256xf32>
    %cst_14 = arith.constant 1.000000e+00 : f32
    %33 = vector.broadcast %cst_14 : f32 to vector<16x256xf32>
    %34 = arith.addf %33, %32 : vector<16x256xf32>
    %35 = arith.divf %33, %34 : vector<16x256xf32>
    %36 = arith.mulf %30, %35 : vector<16x256xf32>
    %c0_15 = arith.constant 0 : index
    %c0_16 = arith.constant 0 : index
    %37 = vector.load %arg6[%c0_15, %c0_16] : memref<16x256xf32, #tpu.memory_space<vmem>>, vector<16x256xf32>
    tpu.vector_store %arg6[%c0_15, %c0_16], %36 {strides = array<i32>} : memref<16x256xf32, #tpu.memory_space<vmem>>, vector<16x256xf32>,
    return
  }
  func.func @transform_0(%arg0: i32) -> (i32, i32) {
    %c0_i32 = arith.constant 0 : i32
    %c0_i32_0 = arith.constant 0 : i32
    return %arg0, %c0_i32 : i32, i32
  }
  func.func @transform_1(%arg0: i32) -> (i32, i32) {
    %c0_i32 = arith.constant 0 : i32
    %c0_i32_0 = arith.constant 0 : i32
    %c0_i32_1 = arith.constant 0 : i32
    return %c0_i32, %c0_i32_0 : i32, i32
  }
  func.func @transform_2(%arg0: i32) -> (i32, i32) {
    %c0_i32 = arith.constant 0 : i32
    %c0_i32_0 = arith.constant 0 : i32
    %c0_i32_1 = arith.constant 0 : i32
    return %c0_i32, %c0_i32_0 : i32, i32
  }
  func.func @transform_3(%arg0: i32) -> (i32, i32) {
    %c0_i32 = arith.constant 0 : i32
    %c0_i32_0 = arith.constant 0 : i32
    %c0_i32_1 = arith.constant 0 : i32
    return %c0_i32, %c0_i32_0 : i32, i32
  }
  func.func @transform_4(%arg0: i32) -> (i32, i32) {
    %c0_i32 = arith.constant 0 : i32
    %c0_i32_0 = arith.constant 0 : i32
    %c0_i32_1 = arith.constant 0 : i32
    return %c0_i32, %c0_i32_0 : i32, i32
  }
  func.func @transform_5(%arg0: i32) -> (i32, i32) {
    %c0_i32 = arith.constant 0 : i32
    %c0_i32_0 = arith.constant 0 : i32
    return %arg0, %c0_i32 : i32, i32
  }
}

module attributes {stable_mosaic.version = 11 : i64} {
  func.func @_fused_linear_kernel(%arg0: i32, %arg1: memref<16x128xf32, #tpu.memory_space<vmem>>, %arg2: memref<1x128xf32, #tpu.memory_space<vmem>>, %arg3: memref<1x128xf32, #tpu.memory_space<vmem>>, %arg4: memref<128x384xbf16, #tpu.memory_space<vmem>>, %arg5: memref<1x384xf32, #tpu.memory_space<vmem>>, %arg6: memref<16x384xf32, #tpu.memory_space<vmem>>) attributes {dimension_semantics = [#tpu.dimension_semantics<parallel>], iteration_bounds = array<i64: 1>, scalar_prefetch = 0 : i64, scratch_operands = 0 : i64, tpu.core_type = #tpu.core_type<tc>, window_params = [{transform_indices = @transform_0, window_bounds = array<i64: 16, 128>}, {pipeline_mode = #tpu.pipeline_mode<synchronous>, transform_indices = @transform_1, window_bounds = array<i64: 1, 128>}, {pipeline_mode = #tpu.pipeline_mode<synchronous>, transform_indices = @transform_2, window_bounds = array<i64: 1, 128>}, {pipeline_mode = #tpu.pipeline_mode<synchronous>, transform_indices = @transform_3, window_bounds = array<i64: 128, 384>}, {pipeline_mode = #tpu.pipeline_mode<synchronous>, transform_indices = @transform_4, window_bounds = array<i64: 1, 384>}, {transform_indices = @transform_5, window_bounds = array<i64: 16, 384>}]} {
    %c0 = arith.constant 0 : index
    %c0_0 = arith.constant 0 : index
    %0 = vector.load %arg1[%c0, %c0_0] : memref<16x128xf32, #tpu.memory_space<vmem>>, vector<16x128xf32>
    %c0_1 = arith.constant 0 : index
    %c0_2 = arith.constant 0 : index
    %1 = vector.load %arg2[%c0_1, %c0_2] : memref<1x128xf32, #tpu.memory_space<vmem>>, vector<1x128xf32>
    %c0_3 = arith.constant 0 : index
    %c0_4 = arith.constant 0 : index
    %2 = vector.load %arg3[%c0_3, %c0_4] : memref<1x128xf32, #tpu.memory_space<vmem>>, vector<1x128xf32>
    %cst = arith.constant dense<0.000000e+00> : vector<16xf32>
    %3 = vector.multi_reduction <add>, %0, %cst [1] : vector<16x128xf32> to vector<16xf32>
    %4 = vector.shape_cast %3 : vector<16xf32> to vector<16x1xf32>
    %cst_5 = arith.constant 1.280000e+02 : f32
    %5 = vector.broadcast %cst_5 : f32 to vector<16x1xf32>
    %6 = arith.divf %4, %5 : vector<16x1xf32>
    %7 = vector.broadcast %6 : vector<16x1xf32> to vector<16x128xf32>
    %8 = arith.subf %0, %7 : vector<16x128xf32>
    %9 = arith.mulf %8, %8 : vector<16x128xf32>
    %cst_6 = arith.constant dense<0.000000e+00> : vector<16xf32>
    %10 = vector.multi_reduction <add>, %9, %cst_6 [1] : vector<16x128xf32> to vector<16xf32>
    %11 = vector.shape_cast %10 : vector<16xf32> to vector<16x1xf32>
    %cst_7 = arith.constant 1.280000e+02 : f32
    %12 = vector.broadcast %cst_7 : f32 to vector<16x1xf32>
    %13 = arith.divf %11, %12 : vector<16x1xf32>
    %14 = vector.broadcast %6 : vector<16x1xf32> to vector<16x128xf32>
    %15 = arith.subf %0, %14 : vector<16x128xf32>
    %cst_8 = arith.constant 9.99999974E-6 : f32
    %16 = vector.broadcast %cst_8 : f32 to vector<16x1xf32>
    %17 = arith.addf %13, %16 : vector<16x1xf32>
    %18 = math.rsqrt %17 : vector<16x1xf32>
    %19 = vector.broadcast %18 : vector<16x1xf32> to vector<16x128xf32>
    %20 = arith.mulf %15, %19 : vector<16x128xf32>
    %21 = vector.broadcast %1 : vector<1x128xf32> to vector<16x128xf32>
    %22 = arith.mulf %20, %21 : vector<16x128xf32>
    %23 = vector.broadcast %2 : vector<1x128xf32> to vector<16x128xf32>
    %24 = arith.addf %22, %23 : vector<16x128xf32>
    %c0_9 = arith.constant 0 : index
    %c0_10 = arith.constant 0 : index
    %25 = vector.load %arg4[%c0_9, %c0_10] : memref<128x384xbf16, #tpu.memory_space<vmem>>, vector<128x384xbf16>
    %c0_11 = arith.constant 0 : index
    %c0_12 = arith.constant 0 : index
    %26 = vector.load %arg5[%c0_11, %c0_12] : memref<1x384xf32, #tpu.memory_space<vmem>>, vector<1x384xf32>
    %27 = arith.truncf %24 : vector<16x128xf32> to vector<16x128xbf16>
    %cst_13 = arith.constant dense<0.000000e+00> : vector<16x384xf32>
    %28 = tpu.matmul %27, %25, %cst_13 {dimension_numbers = #tpu.dot_dimension_numbers<[1], [0], [0], [1], [0, 0, 1, 1], [], []>} : vector<16x128xbf16>, vector<128x384xbf16>, vector<16x384xf32> -> vector<16x384xf32>
    %29 = vector.broadcast %26 : vector<1x384xf32> to vector<16x384xf32>
    %30 = arith.addf %28, %29 : vector<16x384xf32>
    %c0_14 = arith.constant 0 : index
    %c0_15 = arith.constant 0 : index
    %31 = vector.load %arg6[%c0_14, %c0_15] : memref<16x384xf32, #tpu.memory_space<vmem>>, vector<16x384xf32>
    tpu.vector_store %arg6[%c0_14, %c0_15], %30 {strides = array<i32>} : memref<16x384xf32, #tpu.memory_space<vmem>>, vector<16x384xf32>,
    return
  }
  func.func @transform_0(%arg0: i32) -> (i32, i32) {
    %c0_i32 = arith.constant 0 : i32
    %c0_i32_0 = arith.constant 0 : i32
    return %arg0, %c0_i32 : i32, i32
  }
  func.func @transform_1(%arg0: i32) -> (i32, i32) {
    %c0_i32 = arith.constant 0 : i32
    %c0_i32_0 = arith.constant 0 : i32
    %c0_i32_1 = arith.constant 0 : i32
    return %c0_i32, %c0_i32_0 : i32, i32
  }
  func.func @transform_2(%arg0: i32) -> (i32, i32) {
    %c0_i32 = arith.constant 0 : i32
    %c0_i32_0 = arith.constant 0 : i32
    %c0_i32_1 = arith.constant 0 : i32
    return %c0_i32, %c0_i32_0 : i32, i32
  }
  func.func @transform_3(%arg0: i32) -> (i32, i32) {
    %c0_i32 = arith.constant 0 : i32
    %c0_i32_0 = arith.constant 0 : i32
    %c0_i32_1 = arith.constant 0 : i32
    return %c0_i32, %c0_i32_0 : i32, i32
  }
  func.func @transform_4(%arg0: i32) -> (i32, i32) {
    %c0_i32 = arith.constant 0 : i32
    %c0_i32_0 = arith.constant 0 : i32
    %c0_i32_1 = arith.constant 0 : i32
    return %c0_i32, %c0_i32_0 : i32, i32
  }
  func.func @transform_5(%arg0: i32) -> (i32, i32) {
    %c0_i32 = arith.constant 0 : i32
    %c0_i32_0 = arith.constant 0 : i32
    return %arg0, %c0_i32 : i32, i32
  }
}

module attributes {stable_mosaic.version = 11 : i64} {
  func.func @_attn_kernel(%arg0: i32, %arg1: memref<1x8x384xf32, #tpu.memory_space<vmem>>, %arg2: memref<1x1x8xf32, #tpu.memory_space<vmem>>, %arg3: memref<1x8x128xf32, #tpu.memory_space<vmem>>) attributes {dimension_semantics = [#tpu.dimension_semantics<parallel>], iteration_bounds = array<i64: 2>, scalar_prefetch = 0 : i64, scratch_operands = 0 : i64, tpu.core_type = #tpu.core_type<tc>, window_params = [{transform_indices = @transform_0, window_bounds = array<i64: 1, 8, 384>}, {transform_indices = @transform_1, window_bounds = array<i64: 1, 1, 8>}, {transform_indices = @transform_2, window_bounds = array<i64: 1, 8, 128>}]} {
    %c0 = arith.constant 0 : index
    %c0_0 = arith.constant 0 : index
    %c0_1 = arith.constant 0 : index
    %0 = vector.load %arg1[%c0, %c0_0, %c0_1] : memref<1x8x384xf32, #tpu.memory_space<vmem>>, vector<1x8x384xf32>
    %1 = vector.shape_cast %0 : vector<1x8x384xf32> to vector<8x384xf32>
    %c0_2 = arith.constant 0 : index
    %c0_3 = arith.constant 0 : index
    %c0_4 = arith.constant 0 : index
    %2 = vector.load %arg2[%c0_2, %c0_3, %c0_4] : memref<1x1x8xf32, #tpu.memory_space<vmem>>, vector<1x1x8xf32>
    %3 = vector.shape_cast %2 : vector<1x1x8xf32> to vector<1x8xf32>
    %4 = vector.extract_strided_slice %1 {offsets = [0, 0], sizes = [8, 128], strides = [1, 1]} : vector<8x384xf32> to vector<8x128xf32>
    %5 = vector.extract_strided_slice %1 {offsets = [0, 128], sizes = [8, 128], strides = [1, 1]} : vector<8x384xf32> to vector<8x128xf32>
    %6 = vector.extract_strided_slice %1 {offsets = [0, 256], sizes = [8, 128], strides = [1, 1]} : vector<8x384xf32> to vector<8x128xf32>
    %7 = vector.extract_strided_slice %4 {offsets = [0, 0], sizes = [8, 32], strides = [1, 1]} : vector<8x128xf32> to vector<8x32xf32>
    %8 = arith.truncf %7 : vector<8x32xf32> to vector<8x32xbf16>
    %9 = vector.extract_strided_slice %5 {offsets = [0, 0], sizes = [8, 32], strides = [1, 1]} : vector<8x128xf32> to vector<8x32xf32>
    %10 = arith.truncf %9 : vector<8x32xf32> to vector<8x32xbf16>
    %11 = vector.extract_strided_slice %6 {offsets = [0, 0], sizes = [8, 32], strides = [1, 1]} : vector<8x128xf32> to vector<8x32xf32>
    %12 = arith.truncf %11 : vector<8x32xf32> to vector<8x32xbf16>
    %cst = arith.constant dense<0.000000e+00> : vector<8x8xf32>
    %13 = tpu.matmul %8, %10, %cst {dimension_numbers = #tpu.dot_dimension_numbers<[1], [1], [0], [0], [0, 0, 1, 0], [], []>} : vector<8x32xbf16>, vector<8x32xbf16>, vector<8x8xf32> -> vector<8x8xf32>
    %cst_5 = arith.constant 0.176776692 : f32
    %14 = vector.broadcast %cst_5 : f32 to vector<8x8xf32>
    %15 = arith.mulf %13, %14 : vector<8x8xf32>
    %16 = vector.broadcast %3 : vector<1x8xf32> to vector<8x8xf32>
    %17 = arith.addf %15, %16 : vector<8x8xf32>
    %cst_6 = arith.constant dense<0xFF800000> : vector<8xf32>
    %18 = vector.multi_reduction <maximumf>, %17, %cst_6 [1] : vector<8x8xf32> to vector<8xf32>
    %19 = vector.shape_cast %18 : vector<8xf32> to vector<8x1xf32>
    %20 = vector.broadcast %19 : vector<8x1xf32> to vector<8x8xf32>
    %21 = arith.subf %17, %20 : vector<8x8xf32>
    %22 = math.exp %21 : vector<8x8xf32>
    %cst_7 = arith.constant dense<0.000000e+00> : vector<8xf32>
    %23 = vector.multi_reduction <add>, %22, %cst_7 [1] : vector<8x8xf32> to vector<8xf32>
    %24 = vector.shape_cast %23 : vector<8xf32> to vector<8x1xf32>
    %25 = tpu.reciprocal %24 {approx = true} : vector<8x1xf32> -> vector<8x1xf32>
    %26 = vector.broadcast %25 : vector<8x1xf32> to vector<8x8xf32>
    %27 = arith.mulf %22, %26 : vector<8x8xf32>
    %28 = arith.truncf %27 : vector<8x8xf32> to vector<8x8xbf16>
    %cst_8 = arith.constant dense<0.000000e+00> : vector<8x32xf32>
    %29 = tpu.matmul %28, %12, %cst_8 {dimension_numbers = #tpu.dot_dimension_numbers<[1], [0], [0], [1], [0, 0, 1, 1], [], []>} : vector<8x8xbf16>, vector<8x32xbf16>, vector<8x32xf32> -> vector<8x32xf32>
    %30 = vector.extract_strided_slice %4 {offsets = [0, 32], sizes = [8, 32], strides = [1, 1]} : vector<8x128xf32> to vector<8x32xf32>
    %31 = arith.truncf %30 : vector<8x32xf32> to vector<8x32xbf16>
    %32 = vector.extract_strided_slice %5 {offsets = [0, 32], sizes = [8, 32], strides = [1, 1]} : vector<8x128xf32> to vector<8x32xf32>
    %33 = arith.truncf %32 : vector<8x32xf32> to vector<8x32xbf16>
    %34 = vector.extract_strided_slice %6 {offsets = [0, 32], sizes = [8, 32], strides = [1, 1]} : vector<8x128xf32> to vector<8x32xf32>
    %35 = arith.truncf %34 : vector<8x32xf32> to vector<8x32xbf16>
    %cst_9 = arith.constant dense<0.000000e+00> : vector<8x8xf32>
    %36 = tpu.matmul %31, %33, %cst_9 {dimension_numbers = #tpu.dot_dimension_numbers<[1], [1], [0], [0], [0, 0, 1, 0], [], []>} : vector<8x32xbf16>, vector<8x32xbf16>, vector<8x8xf32> -> vector<8x8xf32>
    %cst_10 = arith.constant 0.176776692 : f32
    %37 = vector.broadcast %cst_10 : f32 to vector<8x8xf32>
    %38 = arith.mulf %36, %37 : vector<8x8xf32>
    %39 = vector.broadcast %3 : vector<1x8xf32> to vector<8x8xf32>
    %40 = arith.addf %38, %39 : vector<8x8xf32>
    %cst_11 = arith.constant dense<0xFF800000> : vector<8xf32>
    %41 = vector.multi_reduction <maximumf>, %40, %cst_11 [1] : vector<8x8xf32> to vector<8xf32>
    %42 = vector.shape_cast %41 : vector<8xf32> to vector<8x1xf32>
    %43 = vector.broadcast %42 : vector<8x1xf32> to vector<8x8xf32>
    %44 = arith.subf %40, %43 : vector<8x8xf32>
    %45 = math.exp %44 : vector<8x8xf32>
    %cst_12 = arith.constant dense<0.000000e+00> : vector<8xf32>
    %46 = vector.multi_reduction <add>, %45, %cst_12 [1] : vector<8x8xf32> to vector<8xf32>
    %47 = vector.shape_cast %46 : vector<8xf32> to vector<8x1xf32>
    %48 = tpu.reciprocal %47 {approx = true} : vector<8x1xf32> -> vector<8x1xf32>
    %49 = vector.broadcast %48 : vector<8x1xf32> to vector<8x8xf32>
    %50 = arith.mulf %45, %49 : vector<8x8xf32>
    %51 = arith.truncf %50 : vector<8x8xf32> to vector<8x8xbf16>
    %cst_13 = arith.constant dense<0.000000e+00> : vector<8x32xf32>
    %52 = tpu.matmul %51, %35, %cst_13 {dimension_numbers = #tpu.dot_dimension_numbers<[1], [0], [0], [1], [0, 0, 1, 1], [], []>} : vector<8x8xbf16>, vector<8x32xbf16>, vector<8x32xf32> -> vector<8x32xf32>
    %53 = vector.extract_strided_slice %4 {offsets = [0, 64], sizes = [8, 32], strides = [1, 1]} : vector<8x128xf32> to vector<8x32xf32>
    %54 = arith.truncf %53 : vector<8x32xf32> to vector<8x32xbf16>
    %55 = vector.extract_strided_slice %5 {offsets = [0, 64], sizes = [8, 32], strides = [1, 1]} : vector<8x128xf32> to vector<8x32xf32>
    %56 = arith.truncf %55 : vector<8x32xf32> to vector<8x32xbf16>
    %57 = vector.extract_strided_slice %6 {offsets = [0, 64], sizes = [8, 32], strides = [1, 1]} : vector<8x128xf32> to vector<8x32xf32>
    %58 = arith.truncf %57 : vector<8x32xf32> to vector<8x32xbf16>
    %cst_14 = arith.constant dense<0.000000e+00> : vector<8x8xf32>
    %59 = tpu.matmul %54, %56, %cst_14 {dimension_numbers = #tpu.dot_dimension_numbers<[1], [1], [0], [0], [0, 0, 1, 0], [], []>} : vector<8x32xbf16>, vector<8x32xbf16>, vector<8x8xf32> -> vector<8x8xf32>
    %cst_15 = arith.constant 0.176776692 : f32
    %60 = vector.broadcast %cst_15 : f32 to vector<8x8xf32>
    %61 = arith.mulf %59, %60 : vector<8x8xf32>
    %62 = vector.broadcast %3 : vector<1x8xf32> to vector<8x8xf32>
    %63 = arith.addf %61, %62 : vector<8x8xf32>
    %cst_16 = arith.constant dense<0xFF800000> : vector<8xf32>
    %64 = vector.multi_reduction <maximumf>, %63, %cst_16 [1] : vector<8x8xf32> to vector<8xf32>
    %65 = vector.shape_cast %64 : vector<8xf32> to vector<8x1xf32>
    %66 = vector.broadcast %65 : vector<8x1xf32> to vector<8x8xf32>
    %67 = arith.subf %63, %66 : vector<8x8xf32>
    %68 = math.exp %67 : vector<8x8xf32>
    %cst_17 = arith.constant dense<0.000000e+00> : vector<8xf32>
    %69 = vector.multi_reduction <add>, %68, %cst_17 [1] : vector<8x8xf32> to vector<8xf32>
    %70 = vector.shape_cast %69 : vector<8xf32> to vector<8x1xf32>
    %71 = tpu.reciprocal %70 {approx = true} : vector<8x1xf32> -> vector<8x1xf32>
    %72 = vector.broadcast %71 : vector<8x1xf32> to vector<8x8xf32>
    %73 = arith.mulf %68, %72 : vector<8x8xf32>
    %74 = arith.truncf %73 : vector<8x8xf32> to vector<8x8xbf16>
    %cst_18 = arith.constant dense<0.000000e+00> : vector<8x32xf32>
    %75 = tpu.matmul %74, %58, %cst_18 {dimension_numbers = #tpu.dot_dimension_numbers<[1], [0], [0], [1], [0, 0, 1, 1], [], []>} : vector<8x8xbf16>, vector<8x32xbf16>, vector<8x32xf32> -> vector<8x32xf32>
    %76 = vector.extract_strided_slice %4 {offsets = [0, 96], sizes = [8, 32], strides = [1, 1]} : vector<8x128xf32> to vector<8x32xf32>
    %77 = arith.truncf %76 : vector<8x32xf32> to vector<8x32xbf16>
    %78 = vector.extract_strided_slice %5 {offsets = [0, 96], sizes = [8, 32], strides = [1, 1]} : vector<8x128xf32> to vector<8x32xf32>
    %79 = arith.truncf %78 : vector<8x32xf32> to vector<8x32xbf16>
    %80 = vector.extract_strided_slice %6 {offsets = [0, 96], sizes = [8, 32], strides = [1, 1]} : vector<8x128xf32> to vector<8x32xf32>
    %81 = arith.truncf %80 : vector<8x32xf32> to vector<8x32xbf16>
    %cst_19 = arith.constant dense<0.000000e+00> : vector<8x8xf32>
    %82 = tpu.matmul %77, %79, %cst_19 {dimension_numbers = #tpu.dot_dimension_numbers<[1], [1], [0], [0], [0, 0, 1, 0], [], []>} : vector<8x32xbf16>, vector<8x32xbf16>, vector<8x8xf32> -> vector<8x8xf32>
    %cst_20 = arith.constant 0.176776692 : f32
    %83 = vector.broadcast %cst_20 : f32 to vector<8x8xf32>
    %84 = arith.mulf %82, %83 : vector<8x8xf32>
    %85 = vector.broadcast %3 : vector<1x8xf32> to vector<8x8xf32>
    %86 = arith.addf %84, %85 : vector<8x8xf32>
    %cst_21 = arith.constant dense<0xFF800000> : vector<8xf32>
    %87 = vector.multi_reduction <maximumf>, %86, %cst_21 [1] : vector<8x8xf32> to vector<8xf32>
    %88 = vector.shape_cast %87 : vector<8xf32> to vector<8x1xf32>
    %89 = vector.broadcast %88 : vector<8x1xf32> to vector<8x8xf32>
    %90 = arith.subf %86, %89 : vector<8x8xf32>
    %91 = math.exp %90 : vector<8x8xf32>
    %cst_22 = arith.constant dense<0.000000e+00> : vector<8xf32>
    %92 = vector.multi_reduction <add>, %91, %cst_22 [1] : vector<8x8xf32> to vector<8xf32>
    %93 = vector.shape_cast %92 : vector<8xf32> to vector<8x1xf32>
    %94 = tpu.reciprocal %93 {approx = true} : vector<8x1xf32> -> vector<8x1xf32>
    %95 = vector.broadcast %94 : vector<8x1xf32> to vector<8x8xf32>
    %96 = arith.mulf %91, %95 : vector<8x8xf32>
    %97 = arith.truncf %96 : vector<8x8xf32> to vector<8x8xbf16>
    %cst_23 = arith.constant dense<0.000000e+00> : vector<8x32xf32>
    %98 = tpu.matmul %97, %81, %cst_23 {dimension_numbers = #tpu.dot_dimension_numbers<[1], [0], [0], [1], [0, 0, 1, 1], [], []>} : vector<8x8xbf16>, vector<8x32xbf16>, vector<8x32xf32> -> vector<8x32xf32>
    %99 = tpu.concatenate %29, %52, %75, %98 in 1 : vector<8x32xf32>, vector<8x32xf32>, vector<8x32xf32>, vector<8x32xf32> -> vector<8x128xf32>
    %c0_24 = arith.constant 0 : index
    %c0_25 = arith.constant 0 : index
    %c0_26 = arith.constant 0 : index
    %100 = vector.load %arg3[%c0_24, %c0_25, %c0_26] : memref<1x8x128xf32, #tpu.memory_space<vmem>>, vector<1x8x128xf32>
    %101 = vector.shape_cast %100 : vector<1x8x128xf32> to vector<8x128xf32>
    %102 = vector.shape_cast %99 : vector<8x128xf32> to vector<1x8x128xf32>
    tpu.vector_store %arg3[%c0_24, %c0_25, %c0_26], %102 {strides = array<i32>} : memref<1x8x128xf32, #tpu.memory_space<vmem>>, vector<1x8x128xf32>,
    return
  }
  func.func @transform_0(%arg0: i32) -> (i32, i32, i32) {
    %c0_i32 = arith.constant 0 : i32
    %c0_i32_0 = arith.constant 0 : i32
    %c0_i32_1 = arith.constant 0 : i32
    return %arg0, %c0_i32, %c0_i32_0 : i32, i32, i32
  }
  func.func @transform_1(%arg0: i32) -> (i32, i32, i32) {
    %c0_i32 = arith.constant 0 : i32
    %c0_i32_0 = arith.constant 0 : i32
    %c0_i32_1 = arith.constant 0 : i32
    return %arg0, %c0_i32, %c0_i32_0 : i32, i32, i32
  }
  func.func @transform_2(%arg0: i32) -> (i32, i32, i32) {
    %c0_i32 = arith.constant 0 : i32
    %c0_i32_0 = arith.constant 0 : i32
    %c0_i32_1 = arith.constant 0 : i32
    return %arg0, %c0_i32, %c0_i32_0 : i32, i32, i32
  }
}

module attributes {stable_mosaic.version = 11 : i64} {
  func.func @_fused_linear_kernel(%arg0: i32, %arg1: memref<16x128xf32, #tpu.memory_space<vmem>>, %arg2: memref<128x128xbf16, #tpu.memory_space<vmem>>, %arg3: memref<1x128xf32, #tpu.memory_space<vmem>>, %arg4: memref<16x128xf32, #tpu.memory_space<vmem>>, %arg5: memref<16x128xf32, #tpu.memory_space<vmem>>) attributes {dimension_semantics = [#tpu.dimension_semantics<parallel>], iteration_bounds = array<i64: 1>, scalar_prefetch = 0 : i64, scratch_operands = 0 : i64, tpu.core_type = #tpu.core_type<tc>, window_params = [{transform_indices = @transform_0, window_bounds = array<i64: 16, 128>}, {pipeline_mode = #tpu.pipeline_mode<synchronous>, transform_indices = @transform_1, window_bounds = array<i64: 128, 128>}, {pipeline_mode = #tpu.pipeline_mode<synchronous>, transform_indices = @transform_2, window_bounds = array<i64: 1, 128>}, {transform_indices = @transform_3, window_bounds = array<i64: 16, 128>}, {transform_indices = @transform_4, window_bounds = array<i64: 16, 128>}]} {
    %c0 = arith.constant 0 : index
    %c0_0 = arith.constant 0 : index
    %0 = vector.load %arg1[%c0, %c0_0] : memref<16x128xf32, #tpu.memory_space<vmem>>, vector<16x128xf32>
    %c0_1 = arith.constant 0 : index
    %c0_2 = arith.constant 0 : index
    %1 = vector.load %arg2[%c0_1, %c0_2] : memref<128x128xbf16, #tpu.memory_space<vmem>>, vector<128x128xbf16>
    %c0_3 = arith.constant 0 : index
    %c0_4 = arith.constant 0 : index
    %2 = vector.load %arg3[%c0_3, %c0_4] : memref<1x128xf32, #tpu.memory_space<vmem>>, vector<1x128xf32>
    %3 = arith.truncf %0 : vector<16x128xf32> to vector<16x128xbf16>
    %cst = arith.constant dense<0.000000e+00> : vector<16x128xf32>
    %4 = tpu.matmul %3, %1, %cst {dimension_numbers = #tpu.dot_dimension_numbers<[1], [0], [0], [1], [0, 0, 1, 1], [], []>} : vector<16x128xbf16>, vector<128x128xbf16>, vector<16x128xf32> -> vector<16x128xf32>
    %5 = vector.broadcast %2 : vector<1x128xf32> to vector<16x128xf32>
    %6 = arith.addf %4, %5 : vector<16x128xf32>
    %c0_5 = arith.constant 0 : index
    %c0_6 = arith.constant 0 : index
    %7 = vector.load %arg4[%c0_5, %c0_6] : memref<16x128xf32, #tpu.memory_space<vmem>>, vector<16x128xf32>
    %8 = arith.addf %6, %7 : vector<16x128xf32>
    %c0_7 = arith.constant 0 : index
    %c0_8 = arith.constant 0 : index
    %9 = vector.load %arg5[%c0_7, %c0_8] : memref<16x128xf32, #tpu.memory_space<vmem>>, vector<16x128xf32>
    tpu.vector_store %arg5[%c0_7, %c0_8], %8 {strides = array<i32>} : memref<16x128xf32, #tpu.memory_space<vmem>>, vector<16x128xf32>,
    return
  }
  func.func @transform_0(%arg0: i32) -> (i32, i32) {
    %c0_i32 = arith.constant 0 : i32
    %c0_i32_0 = arith.constant 0 : i32
    return %arg0, %c0_i32 : i32, i32
  }
  func.func @transform_1(%arg0: i32) -> (i32, i32) {
    %c0_i32 = arith.constant 0 : i32
    %c0_i32_0 = arith.constant 0 : i32
    %c0_i32_1 = arith.constant 0 : i32
    return %c0_i32, %c0_i32_0 : i32, i32
  }
  func.func @transform_2(%arg0: i32) -> (i32, i32) {
    %c0_i32 = arith.constant 0 : i32
    %c0_i32_0 = arith.constant 0 : i32
    %c0_i32_1 = arith.constant 0 : i32
    return %c0_i32, %c0_i32_0 : i32, i32
  }
  func.func @transform_3(%arg0: i32) -> (i32, i32) {
    %c0_i32 = arith.constant 0 : i32
    %c0_i32_0 = arith.constant 0 : i32
    return %arg0, %c0_i32 : i32, i32
  }
  func.func @transform_4(%arg0: i32) -> (i32, i32) {
    %c0_i32 = arith.constant 0 : i32
    %c0_i32_0 = arith.constant 0 : i32
    return %arg0, %c0_i32 : i32, i32
  }
}

module attributes {stable_mosaic.version = 11 : i64} {
  func.func @_fused_linear_kernel(%arg0: i32, %arg1: memref<16x128xf32, #tpu.memory_space<vmem>>, %arg2: memref<1x128xf32, #tpu.memory_space<vmem>>, %arg3: memref<1x128xf32, #tpu.memory_space<vmem>>, %arg4: memref<128x256xbf16, #tpu.memory_space<vmem>>, %arg5: memref<1x256xf32, #tpu.memory_space<vmem>>, %arg6: memref<16x128xf32, #tpu.memory_space<vmem>>) attributes {dimension_semantics = [#tpu.dimension_semantics<parallel>], iteration_bounds = array<i64: 1>, scalar_prefetch = 0 : i64, scratch_operands = 0 : i64, tpu.core_type = #tpu.core_type<tc>, window_params = [{transform_indices = @transform_0, window_bounds = array<i64: 16, 128>}, {pipeline_mode = #tpu.pipeline_mode<synchronous>, transform_indices = @transform_1, window_bounds = array<i64: 1, 128>}, {pipeline_mode = #tpu.pipeline_mode<synchronous>, transform_indices = @transform_2, window_bounds = array<i64: 1, 128>}, {pipeline_mode = #tpu.pipeline_mode<synchronous>, transform_indices = @transform_3, window_bounds = array<i64: 128, 256>}, {pipeline_mode = #tpu.pipeline_mode<synchronous>, transform_indices = @transform_4, window_bounds = array<i64: 1, 256>}, {transform_indices = @transform_5, window_bounds = array<i64: 16, 128>}]} {
    %c0 = arith.constant 0 : index
    %c0_0 = arith.constant 0 : index
    %0 = vector.load %arg1[%c0, %c0_0] : memref<16x128xf32, #tpu.memory_space<vmem>>, vector<16x128xf32>
    %c0_1 = arith.constant 0 : index
    %c0_2 = arith.constant 0 : index
    %1 = vector.load %arg2[%c0_1, %c0_2] : memref<1x128xf32, #tpu.memory_space<vmem>>, vector<1x128xf32>
    %c0_3 = arith.constant 0 : index
    %c0_4 = arith.constant 0 : index
    %2 = vector.load %arg3[%c0_3, %c0_4] : memref<1x128xf32, #tpu.memory_space<vmem>>, vector<1x128xf32>
    %cst = arith.constant dense<0.000000e+00> : vector<16xf32>
    %3 = vector.multi_reduction <add>, %0, %cst [1] : vector<16x128xf32> to vector<16xf32>
    %4 = vector.shape_cast %3 : vector<16xf32> to vector<16x1xf32>
    %cst_5 = arith.constant 1.280000e+02 : f32
    %5 = vector.broadcast %cst_5 : f32 to vector<16x1xf32>
    %6 = arith.divf %4, %5 : vector<16x1xf32>
    %7 = vector.broadcast %6 : vector<16x1xf32> to vector<16x128xf32>
    %8 = arith.subf %0, %7 : vector<16x128xf32>
    %9 = arith.mulf %8, %8 : vector<16x128xf32>
    %cst_6 = arith.constant dense<0.000000e+00> : vector<16xf32>
    %10 = vector.multi_reduction <add>, %9, %cst_6 [1] : vector<16x128xf32> to vector<16xf32>
    %11 = vector.shape_cast %10 : vector<16xf32> to vector<16x1xf32>
    %cst_7 = arith.constant 1.280000e+02 : f32
    %12 = vector.broadcast %cst_7 : f32 to vector<16x1xf32>
    %13 = arith.divf %11, %12 : vector<16x1xf32>
    %14 = vector.broadcast %6 : vector<16x1xf32> to vector<16x128xf32>
    %15 = arith.subf %0, %14 : vector<16x128xf32>
    %cst_8 = arith.constant 9.99999974E-6 : f32
    %16 = vector.broadcast %cst_8 : f32 to vector<16x1xf32>
    %17 = arith.addf %13, %16 : vector<16x1xf32>
    %18 = math.rsqrt %17 : vector<16x1xf32>
    %19 = vector.broadcast %18 : vector<16x1xf32> to vector<16x128xf32>
    %20 = arith.mulf %15, %19 : vector<16x128xf32>
    %21 = vector.broadcast %1 : vector<1x128xf32> to vector<16x128xf32>
    %22 = arith.mulf %20, %21 : vector<16x128xf32>
    %23 = vector.broadcast %2 : vector<1x128xf32> to vector<16x128xf32>
    %24 = arith.addf %22, %23 : vector<16x128xf32>
    %c0_9 = arith.constant 0 : index
    %c0_10 = arith.constant 0 : index
    %25 = vector.load %arg4[%c0_9, %c0_10] : memref<128x256xbf16, #tpu.memory_space<vmem>>, vector<128x256xbf16>
    %c0_11 = arith.constant 0 : index
    %c0_12 = arith.constant 0 : index
    %26 = vector.load %arg5[%c0_11, %c0_12] : memref<1x256xf32, #tpu.memory_space<vmem>>, vector<1x256xf32>
    %27 = arith.truncf %24 : vector<16x128xf32> to vector<16x128xbf16>
    %cst_13 = arith.constant dense<0.000000e+00> : vector<16x256xf32>
    %28 = tpu.matmul %27, %25, %cst_13 {dimension_numbers = #tpu.dot_dimension_numbers<[1], [0], [0], [1], [0, 0, 1, 1], [], []>} : vector<16x128xbf16>, vector<128x256xbf16>, vector<16x256xf32> -> vector<16x256xf32>
    %29 = vector.broadcast %26 : vector<1x256xf32> to vector<16x256xf32>
    %30 = arith.addf %28, %29 : vector<16x256xf32>
    %31 = vector.extract_strided_slice %30 {offsets = [0, 0], sizes = [16, 128], strides = [1, 1]} : vector<16x256xf32> to vector<16x128xf32>
    %32 = vector.extract_strided_slice %30 {offsets = [0, 128], sizes = [16, 128], strides = [1, 1]} : vector<16x256xf32> to vector<16x128xf32>
    %33 = arith.negf %32 : vector<16x128xf32>
    %34 = math.exp %33 : vector<16x128xf32>
    %cst_14 = arith.constant 1.000000e+00 : f32
    %35 = vector.broadcast %cst_14 : f32 to vector<16x128xf32>
    %36 = arith.addf %35, %34 : vector<16x128xf32>
    %37 = arith.divf %35, %36 : vector<16x128xf32>
    %38 = arith.mulf %31, %37 : vector<16x128xf32>
    %c0_15 = arith.constant 0 : index
    %c0_16 = arith.constant 0 : index
    %39 = vector.load %arg6[%c0_15, %c0_16] : memref<16x128xf32, #tpu.memory_space<vmem>>, vector<16x128xf32>
    tpu.vector_store %arg6[%c0_15, %c0_16], %38 {strides = array<i32>} : memref<16x128xf32, #tpu.memory_space<vmem>>, vector<16x128xf32>,
    return
  }
  func.func @transform_0(%arg0: i32) -> (i32, i32) {
    %c0_i32 = arith.constant 0 : i32
    %c0_i32_0 = arith.constant 0 : i32
    return %arg0, %c0_i32 : i32, i32
  }
  func.func @transform_1(%arg0: i32) -> (i32, i32) {
    %c0_i32 = arith.constant 0 : i32
    %c0_i32_0 = arith.constant 0 : i32
    %c0_i32_1 = arith.constant 0 : i32
    return %c0_i32, %c0_i32_0 : i32, i32
  }
  func.func @transform_2(%arg0: i32) -> (i32, i32) {
    %c0_i32 = arith.constant 0 : i32
    %c0_i32_0 = arith.constant 0 : i32
    %c0_i32_1 = arith.constant 0 : i32
    return %c0_i32, %c0_i32_0 : i32, i32
  }
  func.func @transform_3(%arg0: i32) -> (i32, i32) {
    %c0_i32 = arith.constant 0 : i32
    %c0_i32_0 = arith.constant 0 : i32
    %c0_i32_1 = arith.constant 0 : i32
    return %c0_i32, %c0_i32_0 : i32, i32
  }
  func.func @transform_4(%arg0: i32) -> (i32, i32) {
    %c0_i32 = arith.constant 0 : i32
    %c0_i32_0 = arith.constant 0 : i32
    %c0_i32_1 = arith.constant 0 : i32
    return %c0_i32, %c0_i32_0 : i32, i32
  }
  func.func @transform_5(%arg0: i32) -> (i32, i32) {
    %c0_i32 = arith.constant 0 : i32
    %c0_i32_0 = arith.constant 0 : i32
    return %arg0, %c0_i32 : i32, i32
  }
}

module attributes {stable_mosaic.version = 11 : i64} {
  func.func @_dwconv_kernel(%arg0: i32, %arg1: memref<1x38x128xf32, #tpu.memory_space<vmem>>, %arg2: memref<31x128xf32, #tpu.memory_space<vmem>>, %arg3: memref<1x128xf32, #tpu.memory_space<vmem>>, %arg4: memref<1x8x128xf32, #tpu.memory_space<vmem>>) attributes {dimension_semantics = [#tpu.dimension_semantics<parallel>], iteration_bounds = array<i64: 2>, scalar_prefetch = 0 : i64, scratch_operands = 0 : i64, tpu.core_type = #tpu.core_type<tc>, window_params = [{transform_indices = @transform_0, window_bounds = array<i64: 1, 38, 128>}, {pipeline_mode = #tpu.pipeline_mode<synchronous>, transform_indices = @transform_1, window_bounds = array<i64: 31, 128>}, {pipeline_mode = #tpu.pipeline_mode<synchronous>, transform_indices = @transform_2, window_bounds = array<i64: 1, 128>}, {transform_indices = @transform_3, window_bounds = array<i64: 1, 8, 128>}]} {
    %c0 = arith.constant 0 : index
    %c0_0 = arith.constant 0 : index
    %c0_1 = arith.constant 0 : index
    %0 = vector.load %arg1[%c0, %c0_0, %c0_1] : memref<1x38x128xf32, #tpu.memory_space<vmem>>, vector<1x38x128xf32>
    %1 = vector.shape_cast %0 : vector<1x38x128xf32> to vector<38x128xf32>
    %c0_2 = arith.constant 0 : index
    %c0_3 = arith.constant 0 : index
    %2 = vector.load %arg2[%c0_2, %c0_3] : memref<31x128xf32, #tpu.memory_space<vmem>>, vector<31x128xf32>
    %cst = arith.constant 0.000000e+00 : f32
    %3 = vector.broadcast %cst : f32 to vector<8x128xf32>
    %4 = vector.extract_strided_slice %1 {offsets = [0, 0], sizes = [8, 128], strides = [1, 1]} : vector<38x128xf32> to vector<8x128xf32>
    %5 = vector.extract_strided_slice %2 {offsets = [0, 0], sizes = [1, 128], strides = [1, 1]} : vector<31x128xf32> to vector<1x128xf32>
    %6 = vector.broadcast %5 : vector<1x128xf32> to vector<8x128xf32>
    %7 = arith.mulf %4, %6 : vector<8x128xf32>
    %8 = arith.addf %3, %7 : vector<8x128xf32>
    %9 = vector.extract_strided_slice %1 {offsets = [1, 0], sizes = [8, 128], strides = [1, 1]} : vector<38x128xf32> to vector<8x128xf32>
    %10 = vector.extract_strided_slice %2 {offsets = [1, 0], sizes = [1, 128], strides = [1, 1]} : vector<31x128xf32> to vector<1x128xf32>
    %11 = vector.broadcast %10 : vector<1x128xf32> to vector<8x128xf32>
    %12 = arith.mulf %9, %11 : vector<8x128xf32>
    %13 = arith.addf %8, %12 : vector<8x128xf32>
    %14 = vector.extract_strided_slice %1 {offsets = [2, 0], sizes = [8, 128], strides = [1, 1]} : vector<38x128xf32> to vector<8x128xf32>
    %15 = vector.extract_strided_slice %2 {offsets = [2, 0], sizes = [1, 128], strides = [1, 1]} : vector<31x128xf32> to vector<1x128xf32>
    %16 = vector.broadcast %15 : vector<1x128xf32> to vector<8x128xf32>
    %17 = arith.mulf %14, %16 : vector<8x128xf32>
    %18 = arith.addf %13, %17 : vector<8x128xf32>
    %19 = vector.extract_strided_slice %1 {offsets = [3, 0], sizes = [8, 128], strides = [1, 1]} : vector<38x128xf32> to vector<8x128xf32>
    %20 = vector.extract_strided_slice %2 {offsets = [3, 0], sizes = [1, 128], strides = [1, 1]} : vector<31x128xf32> to vector<1x128xf32>
    %21 = vector.broadcast %20 : vector<1x128xf32> to vector<8x128xf32>
    %22 = arith.mulf %19, %21 : vector<8x128xf32>
    %23 = arith.addf %18, %22 : vector<8x128xf32>
    %24 = vector.extract_strided_slice %1 {offsets = [4, 0], sizes = [8, 128], strides = [1, 1]} : vector<38x128xf32> to vector<8x128xf32>
    %25 = vector.extract_strided_slice %2 {offsets = [4, 0], sizes = [1, 128], strides = [1, 1]} : vector<31x128xf32> to vector<1x128xf32>
    %26 = vector.broadcast %25 : vector<1x128xf32> to vector<8x128xf32>
    %27 = arith.mulf %24, %26 : vector<8x128xf32>
    %28 = arith.addf %23, %27 : vector<8x128xf32>
    %29 = vector.extract_strided_slice %1 {offsets = [5, 0], sizes = [8, 128], strides = [1, 1]} : vector<38x128xf32> to vector<8x128xf32>
    %30 = vector.extract_strided_slice %2 {offsets = [5, 0], sizes = [1, 128], strides = [1, 1]} : vector<31x128xf32> to vector<1x128xf32>
    %31 = vector.broadcast %30 : vector<1x128xf32> to vector<8x128xf32>
    %32 = arith.mulf %29, %31 : vector<8x128xf32>
    %33 = arith.addf %28, %32 : vector<8x128xf32>
    %34 = vector.extract_strided_slice %1 {offsets = [6, 0], sizes = [8, 128], strides = [1, 1]} : vector<38x128xf32> to vector<8x128xf32>
    %35 = vector.extract_strided_slice %2 {offsets = [6, 0], sizes = [1, 128], strides = [1, 1]} : vector<31x128xf32> to vector<1x128xf32>
    %36 = vector.broadcast %35 : vector<1x128xf32> to vector<8x128xf32>
    %37 = arith.mulf %34, %36 : vector<8x128xf32>
    %38 = arith.addf %33, %37 : vector<8x128xf32>
    %39 = vector.extract_strided_slice %1 {offsets = [7, 0], sizes = [8, 128], strides = [1, 1]} : vector<38x128xf32> to vector<8x128xf32>
    %40 = vector.extract_strided_slice %2 {offsets = [7, 0], sizes = [1, 128], strides = [1, 1]} : vector<31x128xf32> to vector<1x128xf32>
    %41 = vector.broadcast %40 : vector<1x128xf32> to vector<8x128xf32>
    %42 = arith.mulf %39, %41 : vector<8x128xf32>
    %43 = arith.addf %38, %42 : vector<8x128xf32>
    %44 = vector.extract_strided_slice %1 {offsets = [8, 0], sizes = [8, 128], strides = [1, 1]} : vector<38x128xf32> to vector<8x128xf32>
    %45 = vector.extract_strided_slice %2 {offsets = [8, 0], sizes = [1, 128], strides = [1, 1]} : vector<31x128xf32> to vector<1x128xf32>
    %46 = vector.broadcast %45 : vector<1x128xf32> to vector<8x128xf32>
    %47 = arith.mulf %44, %46 : vector<8x128xf32>
    %48 = arith.addf %43, %47 : vector<8x128xf32>
    %49 = vector.extract_strided_slice %1 {offsets = [9, 0], sizes = [8, 128], strides = [1, 1]} : vector<38x128xf32> to vector<8x128xf32>
    %50 = vector.extract_strided_slice %2 {offsets = [9, 0], sizes = [1, 128], strides = [1, 1]} : vector<31x128xf32> to vector<1x128xf32>
    %51 = vector.broadcast %50 : vector<1x128xf32> to vector<8x128xf32>
    %52 = arith.mulf %49, %51 : vector<8x128xf32>
    %53 = arith.addf %48, %52 : vector<8x128xf32>
    %54 = vector.extract_strided_slice %1 {offsets = [10, 0], sizes = [8, 128], strides = [1, 1]} : vector<38x128xf32> to vector<8x128xf32>
    %55 = vector.extract_strided_slice %2 {offsets = [10, 0], sizes = [1, 128], strides = [1, 1]} : vector<31x128xf32> to vector<1x128xf32>
    %56 = vector.broadcast %55 : vector<1x128xf32> to vector<8x128xf32>
    %57 = arith.mulf %54, %56 : vector<8x128xf32>
    %58 = arith.addf %53, %57 : vector<8x128xf32>
    %59 = vector.extract_strided_slice %1 {offsets = [11, 0], sizes = [8, 128], strides = [1, 1]} : vector<38x128xf32> to vector<8x128xf32>
    %60 = vector.extract_strided_slice %2 {offsets = [11, 0], sizes = [1, 128], strides = [1, 1]} : vector<31x128xf32> to vector<1x128xf32>
    %61 = vector.broadcast %60 : vector<1x128xf32> to vector<8x128xf32>
    %62 = arith.mulf %59, %61 : vector<8x128xf32>
    %63 = arith.addf %58, %62 : vector<8x128xf32>
    %64 = vector.extract_strided_slice %1 {offsets = [12, 0], sizes = [8, 128], strides = [1, 1]} : vector<38x128xf32> to vector<8x128xf32>
    %65 = vector.extract_strided_slice %2 {offsets = [12, 0], sizes = [1, 128], strides = [1, 1]} : vector<31x128xf32> to vector<1x128xf32>
    %66 = vector.broadcast %65 : vector<1x128xf32> to vector<8x128xf32>
    %67 = arith.mulf %64, %66 : vector<8x128xf32>
    %68 = arith.addf %63, %67 : vector<8x128xf32>
    %69 = vector.extract_strided_slice %1 {offsets = [13, 0], sizes = [8, 128], strides = [1, 1]} : vector<38x128xf32> to vector<8x128xf32>
    %70 = vector.extract_strided_slice %2 {offsets = [13, 0], sizes = [1, 128], strides = [1, 1]} : vector<31x128xf32> to vector<1x128xf32>
    %71 = vector.broadcast %70 : vector<1x128xf32> to vector<8x128xf32>
    %72 = arith.mulf %69, %71 : vector<8x128xf32>
    %73 = arith.addf %68, %72 : vector<8x128xf32>
    %74 = vector.extract_strided_slice %1 {offsets = [14, 0], sizes = [8, 128], strides = [1, 1]} : vector<38x128xf32> to vector<8x128xf32>
    %75 = vector.extract_strided_slice %2 {offsets = [14, 0], sizes = [1, 128], strides = [1, 1]} : vector<31x128xf32> to vector<1x128xf32>
    %76 = vector.broadcast %75 : vector<1x128xf32> to vector<8x128xf32>
    %77 = arith.mulf %74, %76 : vector<8x128xf32>
    %78 = arith.addf %73, %77 : vector<8x128xf32>
    %79 = vector.extract_strided_slice %1 {offsets = [15, 0], sizes = [8, 128], strides = [1, 1]} : vector<38x128xf32> to vector<8x128xf32>
    %80 = vector.extract_strided_slice %2 {offsets = [15, 0], sizes = [1, 128], strides = [1, 1]} : vector<31x128xf32> to vector<1x128xf32>
    %81 = vector.broadcast %80 : vector<1x128xf32> to vector<8x128xf32>
    %82 = arith.mulf %79, %81 : vector<8x128xf32>
    %83 = arith.addf %78, %82 : vector<8x128xf32>
    %84 = vector.extract_strided_slice %1 {offsets = [16, 0], sizes = [8, 128], strides = [1, 1]} : vector<38x128xf32> to vector<8x128xf32>
    %85 = vector.extract_strided_slice %2 {offsets = [16, 0], sizes = [1, 128], strides = [1, 1]} : vector<31x128xf32> to vector<1x128xf32>
    %86 = vector.broadcast %85 : vector<1x128xf32> to vector<8x128xf32>
    %87 = arith.mulf %84, %86 : vector<8x128xf32>
    %88 = arith.addf %83, %87 : vector<8x128xf32>
    %89 = vector.extract_strided_slice %1 {offsets = [17, 0], sizes = [8, 128], strides = [1, 1]} : vector<38x128xf32> to vector<8x128xf32>
    %90 = vector.extract_strided_slice %2 {offsets = [17, 0], sizes = [1, 128], strides = [1, 1]} : vector<31x128xf32> to vector<1x128xf32>
    %91 = vector.broadcast %90 : vector<1x128xf32> to vector<8x128xf32>
    %92 = arith.mulf %89, %91 : vector<8x128xf32>
    %93 = arith.addf %88, %92 : vector<8x128xf32>
    %94 = vector.extract_strided_slice %1 {offsets = [18, 0], sizes = [8, 128], strides = [1, 1]} : vector<38x128xf32> to vector<8x128xf32>
    %95 = vector.extract_strided_slice %2 {offsets = [18, 0], sizes = [1, 128], strides = [1, 1]} : vector<31x128xf32> to vector<1x128xf32>
    %96 = vector.broadcast %95 : vector<1x128xf32> to vector<8x128xf32>
    %97 = arith.mulf %94, %96 : vector<8x128xf32>
    %98 = arith.addf %93, %97 : vector<8x128xf32>
    %99 = vector.extract_strided_slice %1 {offsets = [19, 0], sizes = [8, 128], strides = [1, 1]} : vector<38x128xf32> to vector<8x128xf32>
    %100 = vector.extract_strided_slice %2 {offsets = [19, 0], sizes = [1, 128], strides = [1, 1]} : vector<31x128xf32> to vector<1x128xf32>
    %101 = vector.broadcast %100 : vector<1x128xf32> to vector<8x128xf32>
    %102 = arith.mulf %99, %101 : vector<8x128xf32>
    %103 = arith.addf %98, %102 : vector<8x128xf32>
    %104 = vector.extract_strided_slice %1 {offsets = [20, 0], sizes = [8, 128], strides = [1, 1]} : vector<38x128xf32> to vector<8x128xf32>
    %105 = vector.extract_strided_slice %2 {offsets = [20, 0], sizes = [1, 128], strides = [1, 1]} : vector<31x128xf32> to vector<1x128xf32>
    %106 = vector.broadcast %105 : vector<1x128xf32> to vector<8x128xf32>
    %107 = arith.mulf %104, %106 : vector<8x128xf32>
    %108 = arith.addf %103, %107 : vector<8x128xf32>
    %109 = vector.extract_strided_slice %1 {offsets = [21, 0], sizes = [8, 128], strides = [1, 1]} : vector<38x128xf32> to vector<8x128xf32>
    %110 = vector.extract_strided_slice %2 {offsets = [21, 0], sizes = [1, 128], strides = [1, 1]} : vector<31x128xf32> to vector<1x128xf32>
    %111 = vector.broadcast %110 : vector<1x128xf32> to vector<8x128xf32>
    %112 = arith.mulf %109, %111 : vector<8x128xf32>
    %113 = arith.addf %108, %112 : vector<8x128xf32>
    %114 = vector.extract_strided_slice %1 {offsets = [22, 0], sizes = [8, 128], strides = [1, 1]} : vector<38x128xf32> to vector<8x128xf32>
    %115 = vector.extract_strided_slice %2 {offsets = [22, 0], sizes = [1, 128], strides = [1, 1]} : vector<31x128xf32> to vector<1x128xf32>
    %116 = vector.broadcast %115 : vector<1x128xf32> to vector<8x128xf32>
    %117 = arith.mulf %114, %116 : vector<8x128xf32>
    %118 = arith.addf %113, %117 : vector<8x128xf32>
    %119 = vector.extract_strided_slice %1 {offsets = [23, 0], sizes = [8, 128], strides = [1, 1]} : vector<38x128xf32> to vector<8x128xf32>
    %120 = vector.extract_strided_slice %2 {offsets = [23, 0], sizes = [1, 128], strides = [1, 1]} : vector<31x128xf32> to vector<1x128xf32>
    %121 = vector.broadcast %120 : vector<1x128xf32> to vector<8x128xf32>
    %122 = arith.mulf %119, %121 : vector<8x128xf32>
    %123 = arith.addf %118, %122 : vector<8x128xf32>
    %124 = vector.extract_strided_slice %1 {offsets = [24, 0], sizes = [8, 128], strides = [1, 1]} : vector<38x128xf32> to vector<8x128xf32>
    %125 = vector.extract_strided_slice %2 {offsets = [24, 0], sizes = [1, 128], strides = [1, 1]} : vector<31x128xf32> to vector<1x128xf32>
    %126 = vector.broadcast %125 : vector<1x128xf32> to vector<8x128xf32>
    %127 = arith.mulf %124, %126 : vector<8x128xf32>
    %128 = arith.addf %123, %127 : vector<8x128xf32>
    %129 = vector.extract_strided_slice %1 {offsets = [25, 0], sizes = [8, 128], strides = [1, 1]} : vector<38x128xf32> to vector<8x128xf32>
    %130 = vector.extract_strided_slice %2 {offsets = [25, 0], sizes = [1, 128], strides = [1, 1]} : vector<31x128xf32> to vector<1x128xf32>
    %131 = vector.broadcast %130 : vector<1x128xf32> to vector<8x128xf32>
    %132 = arith.mulf %129, %131 : vector<8x128xf32>
    %133 = arith.addf %128, %132 : vector<8x128xf32>
    %134 = vector.extract_strided_slice %1 {offsets = [26, 0], sizes = [8, 128], strides = [1, 1]} : vector<38x128xf32> to vector<8x128xf32>
    %135 = vector.extract_strided_slice %2 {offsets = [26, 0], sizes = [1, 128], strides = [1, 1]} : vector<31x128xf32> to vector<1x128xf32>
    %136 = vector.broadcast %135 : vector<1x128xf32> to vector<8x128xf32>
    %137 = arith.mulf %134, %136 : vector<8x128xf32>
    %138 = arith.addf %133, %137 : vector<8x128xf32>
    %139 = vector.extract_strided_slice %1 {offsets = [27, 0], sizes = [8, 128], strides = [1, 1]} : vector<38x128xf32> to vector<8x128xf32>
    %140 = vector.extract_strided_slice %2 {offsets = [27, 0], sizes = [1, 128], strides = [1, 1]} : vector<31x128xf32> to vector<1x128xf32>
    %141 = vector.broadcast %140 : vector<1x128xf32> to vector<8x128xf32>
    %142 = arith.mulf %139, %141 : vector<8x128xf32>
    %143 = arith.addf %138, %142 : vector<8x128xf32>
    %144 = vector.extract_strided_slice %1 {offsets = [28, 0], sizes = [8, 128], strides = [1, 1]} : vector<38x128xf32> to vector<8x128xf32>
    %145 = vector.extract_strided_slice %2 {offsets = [28, 0], sizes = [1, 128], strides = [1, 1]} : vector<31x128xf32> to vector<1x128xf32>
    %146 = vector.broadcast %145 : vector<1x128xf32> to vector<8x128xf32>
    %147 = arith.mulf %144, %146 : vector<8x128xf32>
    %148 = arith.addf %143, %147 : vector<8x128xf32>
    %149 = vector.extract_strided_slice %1 {offsets = [29, 0], sizes = [8, 128], strides = [1, 1]} : vector<38x128xf32> to vector<8x128xf32>
    %150 = vector.extract_strided_slice %2 {offsets = [29, 0], sizes = [1, 128], strides = [1, 1]} : vector<31x128xf32> to vector<1x128xf32>
    %151 = vector.broadcast %150 : vector<1x128xf32> to vector<8x128xf32>
    %152 = arith.mulf %149, %151 : vector<8x128xf32>
    %153 = arith.addf %148, %152 : vector<8x128xf32>
    %154 = vector.extract_strided_slice %1 {offsets = [30, 0], sizes = [8, 128], strides = [1, 1]} : vector<38x128xf32> to vector<8x128xf32>
    %155 = vector.extract_strided_slice %2 {offsets = [30, 0], sizes = [1, 128], strides = [1, 1]} : vector<31x128xf32> to vector<1x128xf32>
    %156 = vector.broadcast %155 : vector<1x128xf32> to vector<8x128xf32>
    %157 = arith.mulf %154, %156 : vector<8x128xf32>
    %158 = arith.addf %153, %157 : vector<8x128xf32>
    %c0_4 = arith.constant 0 : index
    %c0_5 = arith.constant 0 : index
    %159 = vector.load %arg3[%c0_4, %c0_5] : memref<1x128xf32, #tpu.memory_space<vmem>>, vector<1x128xf32>
    %160 = vector.broadcast %159 : vector<1x128xf32> to vector<8x128xf32>
    %161 = arith.addf %158, %160 : vector<8x128xf32>
    %cst_6 = arith.constant 0.999994993 : f32
    %162 = vector.broadcast %cst_6 : f32 to vector<8x128xf32>
    %163 = arith.mulf %161, %162 : vector<8x128xf32>
    %164 = arith.negf %163 : vector<8x128xf32>
    %165 = math.exp %164 : vector<8x128xf32>
    %cst_7 = arith.constant 1.000000e+00 : f32
    %166 = vector.broadcast %cst_7 : f32 to vector<8x128xf32>
    %167 = arith.addf %166, %165 : vector<8x128xf32>
    %168 = arith.divf %166, %167 : vector<8x128xf32>
    %169 = arith.mulf %163, %168 : vector<8x128xf32>
    %c0_8 = arith.constant 0 : index
    %c0_9 = arith.constant 0 : index
    %c0_10 = arith.constant 0 : index
    %170 = vector.load %arg4[%c0_8, %c0_9, %c0_10] : memref<1x8x128xf32, #tpu.memory_space<vmem>>, vector<1x8x128xf32>
    %171 = vector.shape_cast %170 : vector<1x8x128xf32> to vector<8x128xf32>
    %172 = vector.shape_cast %169 : vector<8x128xf32> to vector<1x8x128xf32>
    tpu.vector_store %arg4[%c0_8, %c0_9, %c0_10], %172 {strides = array<i32>} : memref<1x8x128xf32, #tpu.memory_space<vmem>>, vector<1x8x128xf32>,
    return
  }
  func.func @transform_0(%arg0: i32) -> (i32, i32, i32) {
    %c0_i32 = arith.constant 0 : i32
    %c0_i32_0 = arith.constant 0 : i32
    %c0_i32_1 = arith.constant 0 : i32
    return %arg0, %c0_i32, %c0_i32_0 : i32, i32, i32
  }
  func.func @transform_1(%arg0: i32) -> (i32, i32) {
    %c0_i32 = arith.constant 0 : i32
    %c0_i32_0 = arith.constant 0 : i32
    %c0_i32_1 = arith.constant 0 : i32
    return %c0_i32, %c0_i32_0 : i32, i32
  }
  func.func @transform_2(%arg0: i32) -> (i32, i32) {
    %c0_i32 = arith.constant 0 : i32
    %c0_i32_0 = arith.constant 0 : i32
    %c0_i32_1 = arith.constant 0 : i32
    return %c0_i32, %c0_i32_0 : i32, i32
  }
  func.func @transform_3(%arg0: i32) -> (i32, i32, i32) {
    %c0_i32 = arith.constant 0 : i32
    %c0_i32_0 = arith.constant 0 : i32
    %c0_i32_1 = arith.constant 0 : i32
    return %arg0, %c0_i32, %c0_i32_0 : i32, i32, i32
  }
}

module attributes {stable_mosaic.version = 11 : i64} {
  func.func @_fused_linear_kernel(%arg0: i32, %arg1: memref<16x256xf32, #tpu.memory_space<vmem>>, %arg2: memref<256x128xbf16, #tpu.memory_space<vmem>>, %arg3: memref<1x128xf32, #tpu.memory_space<vmem>>, %arg4: memref<16x128xf32, #tpu.memory_space<vmem>>, %arg5: memref<1x128xf32, #tpu.memory_space<vmem>>, %arg6: memref<1x128xf32, #tpu.memory_space<vmem>>, %arg7: memref<16x128xf32, #tpu.memory_space<vmem>>) attributes {dimension_semantics = [#tpu.dimension_semantics<parallel>], iteration_bounds = array<i64: 1>, scalar_prefetch = 0 : i64, scratch_operands = 0 : i64, tpu.core_type = #tpu.core_type<tc>, window_params = [{transform_indices = @transform_0, window_bounds = array<i64: 16, 256>}, {pipeline_mode = #tpu.pipeline_mode<synchronous>, transform_indices = @transform_1, window_bounds = array<i64: 256, 128>}, {pipeline_mode = #tpu.pipeline_mode<synchronous>, transform_indices = @transform_2, window_bounds = array<i64: 1, 128>}, {transform_indices = @transform_3, window_bounds = array<i64: 16, 128>}, {pipeline_mode = #tpu.pipeline_mode<synchronous>, transform_indices = @transform_4, window_bounds = array<i64: 1, 128>}, {pipeline_mode = #tpu.pipeline_mode<synchronous>, transform_indices = @transform_5, window_bounds = array<i64: 1, 128>}, {transform_indices = @transform_6, window_bounds = array<i64: 16, 128>}]} {
    %c0 = arith.constant 0 : index
    %c0_0 = arith.constant 0 : index
    %0 = vector.load %arg1[%c0, %c0_0] : memref<16x256xf32, #tpu.memory_space<vmem>>, vector<16x256xf32>
    %c0_1 = arith.constant 0 : index
    %c0_2 = arith.constant 0 : index
    %1 = vector.load %arg2[%c0_1, %c0_2] : memref<256x128xbf16, #tpu.memory_space<vmem>>, vector<256x128xbf16>
    %c0_3 = arith.constant 0 : index
    %c0_4 = arith.constant 0 : index
    %2 = vector.load %arg3[%c0_3, %c0_4] : memref<1x128xf32, #tpu.memory_space<vmem>>, vector<1x128xf32>
    %3 = arith.truncf %0 : vector<16x256xf32> to vector<16x256xbf16>
    %cst = arith.constant dense<0.000000e+00> : vector<16x128xf32>
    %4 = tpu.matmul %3, %1, %cst {dimension_numbers = #tpu.dot_dimension_numbers<[1], [0], [0], [1], [0, 0, 1, 1], [], []>} : vector<16x256xbf16>, vector<256x128xbf16>, vector<16x128xf32> -> vector<16x128xf32>
    %5 = vector.broadcast %2 : vector<1x128xf32> to vector<16x128xf32>
    %6 = arith.addf %4, %5 : vector<16x128xf32>
    %cst_5 = arith.constant 5.000000e-01 : f32
    %7 = vector.broadcast %cst_5 : f32 to vector<16x128xf32>
    %8 = arith.mulf %6, %7 : vector<16x128xf32>
    %c0_6 = arith.constant 0 : index
    %c0_7 = arith.constant 0 : index
    %9 = vector.load %arg4[%c0_6, %c0_7] : memref<16x128xf32, #tpu.memory_space<vmem>>, vector<16x128xf32>
    %10 = arith.addf %8, %9 : vector<16x128xf32>
    %c0_8 = arith.constant 0 : index
    %c0_9 = arith.constant 0 : index
    %11 = vector.load %arg5[%c0_8, %c0_9] : memref<1x128xf32, #tpu.memory_space<vmem>>, vector<1x128xf32>
    %c0_10 = arith.constant 0 : index
    %c0_11 = arith.constant 0 : index
    %12 = vector.load %arg6[%c0_10, %c0_11] : memref<1x128xf32, #tpu.memory_space<vmem>>, vector<1x128xf32>
    %cst_12 = arith.constant dense<0.000000e+00> : vector<16xf32>
    %13 = vector.multi_reduction <add>, %10, %cst_12 [1] : vector<16x128xf32> to vector<16xf32>
    %14 = vector.shape_cast %13 : vector<16xf32> to vector<16x1xf32>
    %cst_13 = arith.constant 1.280000e+02 : f32
    %15 = vector.broadcast %cst_13 : f32 to vector<16x1xf32>
    %16 = arith.divf %14, %15 : vector<16x1xf32>
    %17 = vector.broadcast %16 : vector<16x1xf32> to vector<16x128xf32>
    %18 = arith.subf %10, %17 : vector<16x128xf32>
    %19 = arith.mulf %18, %18 : vector<16x128xf32>
    %cst_14 = arith.constant dense<0.000000e+00> : vector<16xf32>
    %20 = vector.multi_reduction <add>, %19, %cst_14 [1] : vector<16x128xf32> to vector<16xf32>
    %21 = vector.shape_cast %20 : vector<16xf32> to vector<16x1xf32>
    %cst_15 = arith.constant 1.280000e+02 : f32
    %22 = vector.broadcast %cst_15 : f32 to vector<16x1xf32>
    %23 = arith.divf %21, %22 : vector<16x1xf32>
    %24 = vector.broadcast %16 : vector<16x1xf32> to vector<16x128xf32>
    %25 = arith.subf %10, %24 : vector<16x128xf32>
    %cst_16 = arith.constant 9.99999974E-6 : f32
    %26 = vector.broadcast %cst_16 : f32 to vector<16x1xf32>
    %27 = arith.addf %23, %26 : vector<16x1xf32>
    %28 = math.rsqrt %27 : vector<16x1xf32>
    %29 = vector.broadcast %28 : vector<16x1xf32> to vector<16x128xf32>
    %30 = arith.mulf %25, %29 : vector<16x128xf32>
    %31 = vector.broadcast %11 : vector<1x128xf32> to vector<16x128xf32>
    %32 = arith.mulf %30, %31 : vector<16x128xf32>
    %33 = vector.broadcast %12 : vector<1x128xf32> to vector<16x128xf32>
    %34 = arith.addf %32, %33 : vector<16x128xf32>
    %c0_17 = arith.constant 0 : index
    %c0_18 = arith.constant 0 : index
    %35 = vector.load %arg7[%c0_17, %c0_18] : memref<16x128xf32, #tpu.memory_space<vmem>>, vector<16x128xf32>
    tpu.vector_store %arg7[%c0_17, %c0_18], %34 {strides = array<i32>} : memref<16x128xf32, #tpu.memory_space<vmem>>, vector<16x128xf32>,
    return
  }
  func.func @transform_0(%arg0: i32) -> (i32, i32) {
    %c0_i32 = arith.constant 0 : i32
    %c0_i32_0 = arith.constant 0 : i32
    return %arg0, %c0_i32 : i32, i32
  }
  func.func @transform_1(%arg0: i32) -> (i32, i32) {
    %c0_i32 = arith.constant 0 : i32
    %c0_i32_0 = arith.constant 0 : i32
    %c0_i32_1 = arith.constant 0 : i32
    return %c0_i32, %c0_i32_0 : i32, i32
  }
  func.func @transform_2(%arg0: i32) -> (i32, i32) {
    %c0_i32 = arith.constant 0 : i32
    %c0_i32_0 = arith.constant 0 : i32
    %c0_i32_1 = arith.constant 0 : i32
    return %c0_i32, %c0_i32_0 : i32, i32
  }
  func.func @transform_3(%arg0: i32) -> (i32, i32) {
    %c0_i32 = arith.constant 0 : i32
    %c0_i32_0 = arith.constant 0 : i32
    return %arg0, %c0_i32 : i32, i32
  }
  func.func @transform_4(%arg0: i32) -> (i32, i32) {
    %c0_i32 = arith.constant 0 : i32
    %c0_i32_0 = arith.constant 0 : i32
    %c0_i32_1 = arith.constant 0 : i32
    return %c0_i32, %c0_i32_0 : i32, i32
  }
  func.func @transform_5(%arg0: i32) -> (i32, i32) {
    %c0_i32 = arith.constant 0 : i32
    %c0_i32_0 = arith.constant 0 : i32
    %c0_i32_1 = arith.constant 0 : i32
    return %c0_i32, %c0_i32_0 : i32, i32
  }
  func.func @transform_6(%arg0: i32) -> (i32, i32) {
    %c0_i32 = arith.constant 0 : i32
    %c0_i32_0 = arith.constant 0 : i32
    return %arg0, %c0_i32 : i32, i32
  }
}

module attributes {stable_mosaic.version = 11 : i64} {
  func.func @_fused_linear_kernel(%arg0: i32, %arg1: memref<16x128xf32, #tpu.memory_space<vmem>>, %arg2: memref<1x128xf32, #tpu.memory_space<vmem>>, %arg3: memref<1x128xf32, #tpu.memory_space<vmem>>, %arg4: memref<128x256xbf16, #tpu.memory_space<vmem>>, %arg5: memref<1x256xf32, #tpu.memory_space<vmem>>, %arg6: memref<16x256xf32, #tpu.memory_space<vmem>>) attributes {dimension_semantics = [#tpu.dimension_semantics<parallel>], iteration_bounds = array<i64: 1>, scalar_prefetch = 0 : i64, scratch_operands = 0 : i64, tpu.core_type = #tpu.core_type<tc>, window_params = [{transform_indices = @transform_0, window_bounds = array<i64: 16, 128>}, {pipeline_mode = #tpu.pipeline_mode<synchronous>, transform_indices = @transform_1, window_bounds = array<i64: 1, 128>}, {pipeline_mode = #tpu.pipeline_mode<synchronous>, transform_indices = @transform_2, window_bounds = array<i64: 1, 128>}, {pipeline_mode = #tpu.pipeline_mode<synchronous>, transform_indices = @transform_3, window_bounds = array<i64: 128, 256>}, {pipeline_mode = #tpu.pipeline_mode<synchronous>, transform_indices = @transform_4, window_bounds = array<i64: 1, 256>}, {transform_indices = @transform_5, window_bounds = array<i64: 16, 256>}]} {
    %c0 = arith.constant 0 : index
    %c0_0 = arith.constant 0 : index
    %0 = vector.load %arg1[%c0, %c0_0] : memref<16x128xf32, #tpu.memory_space<vmem>>, vector<16x128xf32>
    %c0_1 = arith.constant 0 : index
    %c0_2 = arith.constant 0 : index
    %1 = vector.load %arg2[%c0_1, %c0_2] : memref<1x128xf32, #tpu.memory_space<vmem>>, vector<1x128xf32>
    %c0_3 = arith.constant 0 : index
    %c0_4 = arith.constant 0 : index
    %2 = vector.load %arg3[%c0_3, %c0_4] : memref<1x128xf32, #tpu.memory_space<vmem>>, vector<1x128xf32>
    %cst = arith.constant dense<0.000000e+00> : vector<16xf32>
    %3 = vector.multi_reduction <add>, %0, %cst [1] : vector<16x128xf32> to vector<16xf32>
    %4 = vector.shape_cast %3 : vector<16xf32> to vector<16x1xf32>
    %cst_5 = arith.constant 1.280000e+02 : f32
    %5 = vector.broadcast %cst_5 : f32 to vector<16x1xf32>
    %6 = arith.divf %4, %5 : vector<16x1xf32>
    %7 = vector.broadcast %6 : vector<16x1xf32> to vector<16x128xf32>
    %8 = arith.subf %0, %7 : vector<16x128xf32>
    %9 = arith.mulf %8, %8 : vector<16x128xf32>
    %cst_6 = arith.constant dense<0.000000e+00> : vector<16xf32>
    %10 = vector.multi_reduction <add>, %9, %cst_6 [1] : vector<16x128xf32> to vector<16xf32>
    %11 = vector.shape_cast %10 : vector<16xf32> to vector<16x1xf32>
    %cst_7 = arith.constant 1.280000e+02 : f32
    %12 = vector.broadcast %cst_7 : f32 to vector<16x1xf32>
    %13 = arith.divf %11, %12 : vector<16x1xf32>
    %14 = vector.broadcast %6 : vector<16x1xf32> to vector<16x128xf32>
    %15 = arith.subf %0, %14 : vector<16x128xf32>
    %cst_8 = arith.constant 9.99999974E-6 : f32
    %16 = vector.broadcast %cst_8 : f32 to vector<16x1xf32>
    %17 = arith.addf %13, %16 : vector<16x1xf32>
    %18 = math.rsqrt %17 : vector<16x1xf32>
    %19 = vector.broadcast %18 : vector<16x1xf32> to vector<16x128xf32>
    %20 = arith.mulf %15, %19 : vector<16x128xf32>
    %21 = vector.broadcast %1 : vector<1x128xf32> to vector<16x128xf32>
    %22 = arith.mulf %20, %21 : vector<16x128xf32>
    %23 = vector.broadcast %2 : vector<1x128xf32> to vector<16x128xf32>
    %24 = arith.addf %22, %23 : vector<16x128xf32>
    %c0_9 = arith.constant 0 : index
    %c0_10 = arith.constant 0 : index
    %25 = vector.load %arg4[%c0_9, %c0_10] : memref<128x256xbf16, #tpu.memory_space<vmem>>, vector<128x256xbf16>
    %c0_11 = arith.constant 0 : index
    %c0_12 = arith.constant 0 : index
    %26 = vector.load %arg5[%c0_11, %c0_12] : memref<1x256xf32, #tpu.memory_space<vmem>>, vector<1x256xf32>
    %27 = arith.truncf %24 : vector<16x128xf32> to vector<16x128xbf16>
    %cst_13 = arith.constant dense<0.000000e+00> : vector<16x256xf32>
    %28 = tpu.matmul %27, %25, %cst_13 {dimension_numbers = #tpu.dot_dimension_numbers<[1], [0], [0], [1], [0, 0, 1, 1], [], []>} : vector<16x128xbf16>, vector<128x256xbf16>, vector<16x256xf32> -> vector<16x256xf32>
    %29 = vector.broadcast %26 : vector<1x256xf32> to vector<16x256xf32>
    %30 = arith.addf %28, %29 : vector<16x256xf32>
    %31 = arith.negf %30 : vector<16x256xf32>
    %32 = math.exp %31 : vector<16x256xf32>
    %cst_14 = arith.constant 1.000000e+00 : f32
    %33 = vector.broadcast %cst_14 : f32 to vector<16x256xf32>
    %34 = arith.addf %33, %32 : vector<16x256xf32>
    %35 = arith.divf %33, %34 : vector<16x256xf32>
    %36 = arith.mulf %30, %35 : vector<16x256xf32>
    %c0_15 = arith.constant 0 : index
    %c0_16 = arith.constant 0 : index
    %37 = vector.load %arg6[%c0_15, %c0_16] : memref<16x256xf32, #tpu.memory_space<vmem>>, vector<16x256xf32>
    tpu.vector_store %arg6[%c0_15, %c0_16], %36 {strides = array<i32>} : memref<16x256xf32, #tpu.memory_space<vmem>>, vector<16x256xf32>,
    return
  }
  func.func @transform_0(%arg0: i32) -> (i32, i32) {
    %c0_i32 = arith.constant 0 : i32
    %c0_i32_0 = arith.constant 0 : i32
    return %arg0, %c0_i32 : i32, i32
  }
  func.func @transform_1(%arg0: i32) -> (i32, i32) {
    %c0_i32 = arith.constant 0 : i32
    %c0_i32_0 = arith.constant 0 : i32
    %c0_i32_1 = arith.constant 0 : i32
    return %c0_i32, %c0_i32_0 : i32, i32
  }
  func.func @transform_2(%arg0: i32) -> (i32, i32) {
    %c0_i32 = arith.constant 0 : i32
    %c0_i32_0 = arith.constant 0 : i32
    %c0_i32_1 = arith.constant 0 : i32
    return %c0_i32, %c0_i32_0 : i32, i32
  }
  func.func @transform_3(%arg0: i32) -> (i32, i32) {
    %c0_i32 = arith.constant 0 : i32
    %c0_i32_0 = arith.constant 0 : i32
    %c0_i32_1 = arith.constant 0 : i32
    return %c0_i32, %c0_i32_0 : i32, i32
  }
  func.func @transform_4(%arg0: i32) -> (i32, i32) {
    %c0_i32 = arith.constant 0 : i32
    %c0_i32_0 = arith.constant 0 : i32
    %c0_i32_1 = arith.constant 0 : i32
    return %c0_i32, %c0_i32_0 : i32, i32
  }
  func.func @transform_5(%arg0: i32) -> (i32, i32) {
    %c0_i32 = arith.constant 0 : i32
    %c0_i32_0 = arith.constant 0 : i32
    return %arg0, %c0_i32 : i32, i32
  }
}

module attributes {stable_mosaic.version = 11 : i64} {
  func.func @_fused_linear_kernel(%arg0: i32, %arg1: memref<16x256xf32, #tpu.memory_space<vmem>>, %arg2: memref<256x128xbf16, #tpu.memory_space<vmem>>, %arg3: memref<1x128xf32, #tpu.memory_space<vmem>>, %arg4: memref<16x128xf32, #tpu.memory_space<vmem>>, %arg5: memref<1x128xf32, #tpu.memory_space<vmem>>, %arg6: memref<1x128xf32, #tpu.memory_space<vmem>>, %arg7: memref<16x128xf32, #tpu.memory_space<vmem>>) attributes {dimension_semantics = [#tpu.dimension_semantics<parallel>], iteration_bounds = array<i64: 1>, scalar_prefetch = 0 : i64, scratch_operands = 0 : i64, tpu.core_type = #tpu.core_type<tc>, window_params = [{transform_indices = @transform_0, window_bounds = array<i64: 16, 256>}, {pipeline_mode = #tpu.pipeline_mode<synchronous>, transform_indices = @transform_1, window_bounds = array<i64: 256, 128>}, {pipeline_mode = #tpu.pipeline_mode<synchronous>, transform_indices = @transform_2, window_bounds = array<i64: 1, 128>}, {transform_indices = @transform_3, window_bounds = array<i64: 16, 128>}, {pipeline_mode = #tpu.pipeline_mode<synchronous>, transform_indices = @transform_4, window_bounds = array<i64: 1, 128>}, {pipeline_mode = #tpu.pipeline_mode<synchronous>, transform_indices = @transform_5, window_bounds = array<i64: 1, 128>}, {transform_indices = @transform_6, window_bounds = array<i64: 16, 128>}]} {
    %c0 = arith.constant 0 : index
    %c0_0 = arith.constant 0 : index
    %0 = vector.load %arg1[%c0, %c0_0] : memref<16x256xf32, #tpu.memory_space<vmem>>, vector<16x256xf32>
    %c0_1 = arith.constant 0 : index
    %c0_2 = arith.constant 0 : index
    %1 = vector.load %arg2[%c0_1, %c0_2] : memref<256x128xbf16, #tpu.memory_space<vmem>>, vector<256x128xbf16>
    %c0_3 = arith.constant 0 : index
    %c0_4 = arith.constant 0 : index
    %2 = vector.load %arg3[%c0_3, %c0_4] : memref<1x128xf32, #tpu.memory_space<vmem>>, vector<1x128xf32>
    %3 = arith.truncf %0 : vector<16x256xf32> to vector<16x256xbf16>
    %cst = arith.constant dense<0.000000e+00> : vector<16x128xf32>
    %4 = tpu.matmul %3, %1, %cst {dimension_numbers = #tpu.dot_dimension_numbers<[1], [0], [0], [1], [0, 0, 1, 1], [], []>} : vector<16x256xbf16>, vector<256x128xbf16>, vector<16x128xf32> -> vector<16x128xf32>
    %5 = vector.broadcast %2 : vector<1x128xf32> to vector<16x128xf32>
    %6 = arith.addf %4, %5 : vector<16x128xf32>
    %cst_5 = arith.constant 5.000000e-01 : f32
    %7 = vector.broadcast %cst_5 : f32 to vector<16x128xf32>
    %8 = arith.mulf %6, %7 : vector<16x128xf32>
    %c0_6 = arith.constant 0 : index
    %c0_7 = arith.constant 0 : index
    %9 = vector.load %arg4[%c0_6, %c0_7] : memref<16x128xf32, #tpu.memory_space<vmem>>, vector<16x128xf32>
    %10 = arith.addf %8, %9 : vector<16x128xf32>
    %c0_8 = arith.constant 0 : index
    %c0_9 = arith.constant 0 : index
    %11 = vector.load %arg5[%c0_8, %c0_9] : memref<1x128xf32, #tpu.memory_space<vmem>>, vector<1x128xf32>
    %c0_10 = arith.constant 0 : index
    %c0_11 = arith.constant 0 : index
    %12 = vector.load %arg6[%c0_10, %c0_11] : memref<1x128xf32, #tpu.memory_space<vmem>>, vector<1x128xf32>
    %cst_12 = arith.constant dense<0.000000e+00> : vector<16xf32>
    %13 = vector.multi_reduction <add>, %10, %cst_12 [1] : vector<16x128xf32> to vector<16xf32>
    %14 = vector.shape_cast %13 : vector<16xf32> to vector<16x1xf32>
    %cst_13 = arith.constant 1.280000e+02 : f32
    %15 = vector.broadcast %cst_13 : f32 to vector<16x1xf32>
    %16 = arith.divf %14, %15 : vector<16x1xf32>
    %17 = vector.broadcast %16 : vector<16x1xf32> to vector<16x128xf32>
    %18 = arith.subf %10, %17 : vector<16x128xf32>
    %19 = arith.mulf %18, %18 : vector<16x128xf32>
    %cst_14 = arith.constant dense<0.000000e+00> : vector<16xf32>
    %20 = vector.multi_reduction <add>, %19, %cst_14 [1] : vector<16x128xf32> to vector<16xf32>
    %21 = vector.shape_cast %20 : vector<16xf32> to vector<16x1xf32>
    %cst_15 = arith.constant 1.280000e+02 : f32
    %22 = vector.broadcast %cst_15 : f32 to vector<16x1xf32>
    %23 = arith.divf %21, %22 : vector<16x1xf32>
    %24 = vector.broadcast %16 : vector<16x1xf32> to vector<16x128xf32>
    %25 = arith.subf %10, %24 : vector<16x128xf32>
    %cst_16 = arith.constant 9.99999974E-6 : f32
    %26 = vector.broadcast %cst_16 : f32 to vector<16x1xf32>
    %27 = arith.addf %23, %26 : vector<16x1xf32>
    %28 = math.rsqrt %27 : vector<16x1xf32>
    %29 = vector.broadcast %28 : vector<16x1xf32> to vector<16x128xf32>
    %30 = arith.mulf %25, %29 : vector<16x128xf32>
    %31 = vector.broadcast %11 : vector<1x128xf32> to vector<16x128xf32>
    %32 = arith.mulf %30, %31 : vector<16x128xf32>
    %33 = vector.broadcast %12 : vector<1x128xf32> to vector<16x128xf32>
    %34 = arith.addf %32, %33 : vector<16x128xf32>
    %c0_17 = arith.constant 0 : index
    %c0_18 = arith.constant 0 : index
    %35 = vector.load %arg7[%c0_17, %c0_18] : memref<16x128xf32, #tpu.memory_space<vmem>>, vector<16x128xf32>
    tpu.vector_store %arg7[%c0_17, %c0_18], %34 {strides = array<i32>} : memref<16x128xf32, #tpu.memory_space<vmem>>, vector<16x128xf32>,
    return
  }
  func.func @transform_0(%arg0: i32) -> (i32, i32) {
    %c0_i32 = arith.constant 0 : i32
    %c0_i32_0 = arith.constant 0 : i32
    return %arg0, %c0_i32 : i32, i32
  }
  func.func @transform_1(%arg0: i32) -> (i32, i32) {
    %c0_i32 = arith.constant 0 : i32
    %c0_i32_0 = arith.constant 0 : i32
    %c0_i32_1 = arith.constant 0 : i32
    return %c0_i32, %c0_i32_0 : i32, i32
  }
  func.func @transform_2(%arg0: i32) -> (i32, i32) {
    %c0_i32 = arith.constant 0 : i32
    %c0_i32_0 = arith.constant 0 : i32
    %c0_i32_1 = arith.constant 0 : i32
    return %c0_i32, %c0_i32_0 : i32, i32
  }
  func.func @transform_3(%arg0: i32) -> (i32, i32) {
    %c0_i32 = arith.constant 0 : i32
    %c0_i32_0 = arith.constant 0 : i32
    return %arg0, %c0_i32 : i32, i32
  }
  func.func @transform_4(%arg0: i32) -> (i32, i32) {
    %c0_i32 = arith.constant 0 : i32
    %c0_i32_0 = arith.constant 0 : i32
    %c0_i32_1 = arith.constant 0 : i32
    return %c0_i32, %c0_i32_0 : i32, i32
  }
  func.func @transform_5(%arg0: i32) -> (i32, i32) {
    %c0_i32 = arith.constant 0 : i32
    %c0_i32_0 = arith.constant 0 : i32
    %c0_i32_1 = arith.constant 0 : i32
    return %c0_i32, %c0_i32_0 : i32, i32
  }
  func.func @transform_6(%arg0: i32) -> (i32, i32) {
    %c0_i32 = arith.constant 0 : i32
    %c0_i32_0 = arith.constant 0 : i32
    return %arg0, %c0_i32 : i32, i32
  }
}

module attributes {stable_mosaic.version = 11 : i64} {
  func.func @_fused_linear_kernel(%arg0: i32, %arg1: memref<16x256xf32, #tpu.memory_space<vmem>>, %arg2: memref<256x128xbf16, #tpu.memory_space<vmem>>, %arg3: memref<1x128xf32, #tpu.memory_space<vmem>>, %arg4: memref<16x128xf32, #tpu.memory_space<vmem>>, %arg5: memref<16x128xf32, #tpu.memory_space<vmem>>) attributes {dimension_semantics = [#tpu.dimension_semantics<parallel>], iteration_bounds = array<i64: 1>, scalar_prefetch = 0 : i64, scratch_operands = 0 : i64, tpu.core_type = #tpu.core_type<tc>, window_params = [{transform_indices = @transform_0, window_bounds = array<i64: 16, 256>}, {pipeline_mode = #tpu.pipeline_mode<synchronous>, transform_indices = @transform_1, window_bounds = array<i64: 256, 128>}, {pipeline_mode = #tpu.pipeline_mode<synchronous>, transform_indices = @transform_2, window_bounds = array<i64: 1, 128>}, {transform_indices = @transform_3, window_bounds = array<i64: 16, 128>}, {transform_indices = @transform_4, window_bounds = array<i64: 16, 128>}]} {
    %c0 = arith.constant 0 : index
    %c0_0 = arith.constant 0 : index
    %0 = vector.load %arg1[%c0, %c0_0] : memref<16x256xf32, #tpu.memory_space<vmem>>, vector<16x256xf32>
    %c0_1 = arith.constant 0 : index
    %c0_2 = arith.constant 0 : index
    %1 = vector.load %arg2[%c0_1, %c0_2] : memref<256x128xbf16, #tpu.memory_space<vmem>>, vector<256x128xbf16>
    %c0_3 = arith.constant 0 : index
    %c0_4 = arith.constant 0 : index
    %2 = vector.load %arg3[%c0_3, %c0_4] : memref<1x128xf32, #tpu.memory_space<vmem>>, vector<1x128xf32>
    %3 = arith.truncf %0 : vector<16x256xf32> to vector<16x256xbf16>
    %cst = arith.constant dense<0.000000e+00> : vector<16x128xf32>
    %4 = tpu.matmul %3, %1, %cst {dimension_numbers = #tpu.dot_dimension_numbers<[1], [0], [0], [1], [0, 0, 1, 1], [], []>} : vector<16x256xbf16>, vector<256x128xbf16>, vector<16x128xf32> -> vector<16x128xf32>
    %5 = vector.broadcast %2 : vector<1x128xf32> to vector<16x128xf32>
    %6 = arith.addf %4, %5 : vector<16x128xf32>
    %cst_5 = arith.constant 5.000000e-01 : f32
    %7 = vector.broadcast %cst_5 : f32 to vector<16x128xf32>
    %8 = arith.mulf %6, %7 : vector<16x128xf32>
    %c0_6 = arith.constant 0 : index
    %c0_7 = arith.constant 0 : index
    %9 = vector.load %arg4[%c0_6, %c0_7] : memref<16x128xf32, #tpu.memory_space<vmem>>, vector<16x128xf32>
    %10 = arith.addf %8, %9 : vector<16x128xf32>
    %c0_8 = arith.constant 0 : index
    %c0_9 = arith.constant 0 : index
    %11 = vector.load %arg5[%c0_8, %c0_9] : memref<16x128xf32, #tpu.memory_space<vmem>>, vector<16x128xf32>
    tpu.vector_store %arg5[%c0_8, %c0_9], %10 {strides = array<i32>} : memref<16x128xf32, #tpu.memory_space<vmem>>, vector<16x128xf32>,
    return
  }
  func.func @transform_0(%arg0: i32) -> (i32, i32) {
    %c0_i32 = arith.constant 0 : i32
    %c0_i32_0 = arith.constant 0 : i32
    return %arg0, %c0_i32 : i32, i32
  }
  func.func @transform_1(%arg0: i32) -> (i32, i32) {
    %c0_i32 = arith.constant 0 : i32
    %c0_i32_0 = arith.constant 0 : i32
    %c0_i32_1 = arith.constant 0 : i32
    return %c0_i32, %c0_i32_0 : i32, i32
  }
  func.func @transform_2(%arg0: i32) -> (i32, i32) {
    %c0_i32 = arith.constant 0 : i32
    %c0_i32_0 = arith.constant 0 : i32
    %c0_i32_1 = arith.constant 0 : i32
    return %c0_i32, %c0_i32_0 : i32, i32
  }
  func.func @transform_3(%arg0: i32) -> (i32, i32) {
    %c0_i32 = arith.constant 0 : i32
    %c0_i32_0 = arith.constant 0 : i32
    return %arg0, %c0_i32 : i32, i32
  }
  func.func @transform_4(%arg0: i32) -> (i32, i32) {
    %c0_i32 = arith.constant 0 : i32
    %c0_i32_0 = arith.constant 0 : i32
    return %arg0, %c0_i32 : i32, i32
  }
}

module attributes {stable_mosaic.version = 11 : i64} {
  func.func @_fused_linear_kernel(%arg0: i32, %arg1: memref<16x128xf32, #tpu.memory_space<vmem>>, %arg2: memref<1x128xf32, #tpu.memory_space<vmem>>, %arg3: memref<1x128xf32, #tpu.memory_space<vmem>>, %arg4: memref<128x256xbf16, #tpu.memory_space<vmem>>, %arg5: memref<1x256xf32, #tpu.memory_space<vmem>>, %arg6: memref<16x128xf32, #tpu.memory_space<vmem>>) attributes {dimension_semantics = [#tpu.dimension_semantics<parallel>], iteration_bounds = array<i64: 1>, scalar_prefetch = 0 : i64, scratch_operands = 0 : i64, tpu.core_type = #tpu.core_type<tc>, window_params = [{transform_indices = @transform_0, window_bounds = array<i64: 16, 128>}, {pipeline_mode = #tpu.pipeline_mode<synchronous>, transform_indices = @transform_1, window_bounds = array<i64: 1, 128>}, {pipeline_mode = #tpu.pipeline_mode<synchronous>, transform_indices = @transform_2, window_bounds = array<i64: 1, 128>}, {pipeline_mode = #tpu.pipeline_mode<synchronous>, transform_indices = @transform_3, window_bounds = array<i64: 128, 256>}, {pipeline_mode = #tpu.pipeline_mode<synchronous>, transform_indices = @transform_4, window_bounds = array<i64: 1, 256>}, {transform_indices = @transform_5, window_bounds = array<i64: 16, 128>}]} {
    %c0 = arith.constant 0 : index
    %c0_0 = arith.constant 0 : index
    %0 = vector.load %arg1[%c0, %c0_0] : memref<16x128xf32, #tpu.memory_space<vmem>>, vector<16x128xf32>
    %c0_1 = arith.constant 0 : index
    %c0_2 = arith.constant 0 : index
    %1 = vector.load %arg2[%c0_1, %c0_2] : memref<1x128xf32, #tpu.memory_space<vmem>>, vector<1x128xf32>
    %c0_3 = arith.constant 0 : index
    %c0_4 = arith.constant 0 : index
    %2 = vector.load %arg3[%c0_3, %c0_4] : memref<1x128xf32, #tpu.memory_space<vmem>>, vector<1x128xf32>
    %cst = arith.constant dense<0.000000e+00> : vector<16xf32>
    %3 = vector.multi_reduction <add>, %0, %cst [1] : vector<16x128xf32> to vector<16xf32>
    %4 = vector.shape_cast %3 : vector<16xf32> to vector<16x1xf32>
    %cst_5 = arith.constant 1.280000e+02 : f32
    %5 = vector.broadcast %cst_5 : f32 to vector<16x1xf32>
    %6 = arith.divf %4, %5 : vector<16x1xf32>
    %7 = vector.broadcast %6 : vector<16x1xf32> to vector<16x128xf32>
    %8 = arith.subf %0, %7 : vector<16x128xf32>
    %9 = arith.mulf %8, %8 : vector<16x128xf32>
    %cst_6 = arith.constant dense<0.000000e+00> : vector<16xf32>
    %10 = vector.multi_reduction <add>, %9, %cst_6 [1] : vector<16x128xf32> to vector<16xf32>
    %11 = vector.shape_cast %10 : vector<16xf32> to vector<16x1xf32>
    %cst_7 = arith.constant 1.280000e+02 : f32
    %12 = vector.broadcast %cst_7 : f32 to vector<16x1xf32>
    %13 = arith.divf %11, %12 : vector<16x1xf32>
    %14 = vector.broadcast %6 : vector<16x1xf32> to vector<16x128xf32>
    %15 = arith.subf %0, %14 : vector<16x128xf32>
    %cst_8 = arith.constant 9.99999974E-6 : f32
    %16 = vector.broadcast %cst_8 : f32 to vector<16x1xf32>
    %17 = arith.addf %13, %16 : vector<16x1xf32>
    %18 = math.rsqrt %17 : vector<16x1xf32>
    %19 = vector.broadcast %18 : vector<16x1xf32> to vector<16x128xf32>
    %20 = arith.mulf %15, %19 : vector<16x128xf32>
    %21 = vector.broadcast %1 : vector<1x128xf32> to vector<16x128xf32>
    %22 = arith.mulf %20, %21 : vector<16x128xf32>
    %23 = vector.broadcast %2 : vector<1x128xf32> to vector<16x128xf32>
    %24 = arith.addf %22, %23 : vector<16x128xf32>
    %c0_9 = arith.constant 0 : index
    %c0_10 = arith.constant 0 : index
    %25 = vector.load %arg4[%c0_9, %c0_10] : memref<128x256xbf16, #tpu.memory_space<vmem>>, vector<128x256xbf16>
    %c0_11 = arith.constant 0 : index
    %c0_12 = arith.constant 0 : index
    %26 = vector.load %arg5[%c0_11, %c0_12] : memref<1x256xf32, #tpu.memory_space<vmem>>, vector<1x256xf32>
    %27 = arith.truncf %24 : vector<16x128xf32> to vector<16x128xbf16>
    %cst_13 = arith.constant dense<0.000000e+00> : vector<16x256xf32>
    %28 = tpu.matmul %27, %25, %cst_13 {dimension_numbers = #tpu.dot_dimension_numbers<[1], [0], [0], [1], [0, 0, 1, 1], [], []>} : vector<16x128xbf16>, vector<128x256xbf16>, vector<16x256xf32> -> vector<16x256xf32>
    %29 = vector.broadcast %26 : vector<1x256xf32> to vector<16x256xf32>
    %30 = arith.addf %28, %29 : vector<16x256xf32>
    %31 = vector.extract_strided_slice %30 {offsets = [0, 0], sizes = [16, 128], strides = [1, 1]} : vector<16x256xf32> to vector<16x128xf32>
    %32 = vector.extract_strided_slice %30 {offsets = [0, 128], sizes = [16, 128], strides = [1, 1]} : vector<16x256xf32> to vector<16x128xf32>
    %33 = arith.negf %32 : vector<16x128xf32>
    %34 = math.exp %33 : vector<16x128xf32>
    %cst_14 = arith.constant 1.000000e+00 : f32
    %35 = vector.broadcast %cst_14 : f32 to vector<16x128xf32>
    %36 = arith.addf %35, %34 : vector<16x128xf32>
    %37 = arith.divf %35, %36 : vector<16x128xf32>
    %38 = arith.mulf %31, %37 : vector<16x128xf32>
    %c0_15 = arith.constant 0 : index
    %c0_16 = arith.constant 0 : index
    %39 = vector.load %arg6[%c0_15, %c0_16] : memref<16x128xf32, #tpu.memory_space<vmem>>, vector<16x128xf32>
    tpu.vector_store %arg6[%c0_15, %c0_16], %38 {strides = array<i32>} : memref<16x128xf32, #tpu.memory_space<vmem>>, vector<16x128xf32>,
    return
  }
  func.func @transform_0(%arg0: i32) -> (i32, i32) {
    %c0_i32 = arith.constant 0 : i32
    %c0_i32_0 = arith.constant 0 : i32
    return %arg0, %c0_i32 : i32, i32
  }
  func.func @transform_1(%arg0: i32) -> (i32, i32) {
    %c0_i32 = arith.constant 0 : i32
    %c0_i32_0 = arith.constant 0 : i32
    %c0_i32_1 = arith.constant 0 : i32
    return %c0_i32, %c0_i32_0 : i32, i32
  }
  func.func @transform_2(%arg0: i32) -> (i32, i32) {
    %c0_i32 = arith.constant 0 : i32
    %c0_i32_0 = arith.constant 0 : i32
    %c0_i32_1 = arith.constant 0 : i32
    return %c0_i32, %c0_i32_0 : i32, i32
  }
  func.func @transform_3(%arg0: i32) -> (i32, i32) {
    %c0_i32 = arith.constant 0 : i32
    %c0_i32_0 = arith.constant 0 : i32
    %c0_i32_1 = arith.constant 0 : i32
    return %c0_i32, %c0_i32_0 : i32, i32
  }
  func.func @transform_4(%arg0: i32) -> (i32, i32) {
    %c0_i32 = arith.constant 0 : i32
    %c0_i32_0 = arith.constant 0 : i32
    %c0_i32_1 = arith.constant 0 : i32
    return %c0_i32, %c0_i32_0 : i32, i32
  }
  func.func @transform_5(%arg0: i32) -> (i32, i32) {
    %c0_i32 = arith.constant 0 : i32
    %c0_i32_0 = arith.constant 0 : i32
    return %arg0, %c0_i32 : i32, i32
  }
}

module attributes {stable_mosaic.version = 11 : i64} {
  func.func @_fused_linear_kernel(%arg0: i32, %arg1: memref<16x128xf32, #tpu.memory_space<vmem>>, %arg2: memref<128x384xbf16, #tpu.memory_space<vmem>>, %arg3: memref<1x384xf32, #tpu.memory_space<vmem>>, %arg4: memref<16x384xf32, #tpu.memory_space<vmem>>) attributes {dimension_semantics = [#tpu.dimension_semantics<parallel>], iteration_bounds = array<i64: 1>, scalar_prefetch = 0 : i64, scratch_operands = 0 : i64, tpu.core_type = #tpu.core_type<tc>, window_params = [{transform_indices = @transform_0, window_bounds = array<i64: 16, 128>}, {pipeline_mode = #tpu.pipeline_mode<synchronous>, transform_indices = @transform_1, window_bounds = array<i64: 128, 384>}, {pipeline_mode = #tpu.pipeline_mode<synchronous>, transform_indices = @transform_2, window_bounds = array<i64: 1, 384>}, {transform_indices = @transform_3, window_bounds = array<i64: 16, 384>}]} {
    %c0 = arith.constant 0 : index
    %c0_0 = arith.constant 0 : index
    %0 = vector.load %arg1[%c0, %c0_0] : memref<16x128xf32, #tpu.memory_space<vmem>>, vector<16x128xf32>
    %c0_1 = arith.constant 0 : index
    %c0_2 = arith.constant 0 : index
    %1 = vector.load %arg2[%c0_1, %c0_2] : memref<128x384xbf16, #tpu.memory_space<vmem>>, vector<128x384xbf16>
    %c0_3 = arith.constant 0 : index
    %c0_4 = arith.constant 0 : index
    %2 = vector.load %arg3[%c0_3, %c0_4] : memref<1x384xf32, #tpu.memory_space<vmem>>, vector<1x384xf32>
    %3 = arith.truncf %0 : vector<16x128xf32> to vector<16x128xbf16>
    %cst = arith.constant dense<0.000000e+00> : vector<16x384xf32>
    %4 = tpu.matmul %3, %1, %cst {dimension_numbers = #tpu.dot_dimension_numbers<[1], [0], [0], [1], [0, 0, 1, 1], [], []>} : vector<16x128xbf16>, vector<128x384xbf16>, vector<16x384xf32> -> vector<16x384xf32>
    %5 = vector.broadcast %2 : vector<1x384xf32> to vector<16x384xf32>
    %6 = arith.addf %4, %5 : vector<16x384xf32>
    %c0_5 = arith.constant 0 : index
    %c0_6 = arith.constant 0 : index
    %7 = vector.load %arg4[%c0_5, %c0_6] : memref<16x384xf32, #tpu.memory_space<vmem>>, vector<16x384xf32>
    tpu.vector_store %arg4[%c0_5, %c0_6], %6 {strides = array<i32>} : memref<16x384xf32, #tpu.memory_space<vmem>>, vector<16x384xf32>,
    return
  }
  func.func @transform_0(%arg0: i32) -> (i32, i32) {
    %c0_i32 = arith.constant 0 : i32
    %c0_i32_0 = arith.constant 0 : i32
    return %arg0, %c0_i32 : i32, i32
  }
  func.func @transform_1(%arg0: i32) -> (i32, i32) {
    %c0_i32 = arith.constant 0 : i32
    %c0_i32_0 = arith.constant 0 : i32
    %c0_i32_1 = arith.constant 0 : i32
    return %c0_i32, %c0_i32_0 : i32, i32
  }
  func.func @transform_2(%arg0: i32) -> (i32, i32) {
    %c0_i32 = arith.constant 0 : i32
    %c0_i32_0 = arith.constant 0 : i32
    %c0_i32_1 = arith.constant 0 : i32
    return %c0_i32, %c0_i32_0 : i32, i32
  }
  func.func @transform_3(%arg0: i32) -> (i32, i32) {
    %c0_i32 = arith.constant 0 : i32
    %c0_i32_0 = arith.constant 0 : i32
    return %arg0, %c0_i32 : i32, i32
  }
}

module attributes {stable_mosaic.version = 11 : i64} {
  func.func @_fused_linear_kernel(%arg0: i32, %arg1: memref<34x128xf32, #tpu.memory_space<vmem>>, %arg2: memref<128x384xbf16, #tpu.memory_space<vmem>>, %arg3: memref<1x384xf32, #tpu.memory_space<vmem>>, %arg4: memref<34x384xf32, #tpu.memory_space<vmem>>) attributes {dimension_semantics = [#tpu.dimension_semantics<parallel>], iteration_bounds = array<i64: 1>, scalar_prefetch = 0 : i64, scratch_operands = 0 : i64, tpu.core_type = #tpu.core_type<tc>, window_params = [{transform_indices = @transform_0, window_bounds = array<i64: 34, 128>}, {pipeline_mode = #tpu.pipeline_mode<synchronous>, transform_indices = @transform_1, window_bounds = array<i64: 128, 384>}, {pipeline_mode = #tpu.pipeline_mode<synchronous>, transform_indices = @transform_2, window_bounds = array<i64: 1, 384>}, {transform_indices = @transform_3, window_bounds = array<i64: 34, 384>}]} {
    %c0 = arith.constant 0 : index
    %c0_0 = arith.constant 0 : index
    %0 = vector.load %arg1[%c0, %c0_0] : memref<34x128xf32, #tpu.memory_space<vmem>>, vector<34x128xf32>
    %c0_1 = arith.constant 0 : index
    %c0_2 = arith.constant 0 : index
    %1 = vector.load %arg2[%c0_1, %c0_2] : memref<128x384xbf16, #tpu.memory_space<vmem>>, vector<128x384xbf16>
    %c0_3 = arith.constant 0 : index
    %c0_4 = arith.constant 0 : index
    %2 = vector.load %arg3[%c0_3, %c0_4] : memref<1x384xf32, #tpu.memory_space<vmem>>, vector<1x384xf32>
    %3 = arith.truncf %0 : vector<34x128xf32> to vector<34x128xbf16>
    %cst = arith.constant dense<0.000000e+00> : vector<34x384xf32>
    %4 = tpu.matmul %3, %1, %cst {dimension_numbers = #tpu.dot_dimension_numbers<[1], [0], [0], [1], [0, 0, 1, 1], [], []>} : vector<34x128xbf16>, vector<128x384xbf16>, vector<34x384xf32> -> vector<34x384xf32>
    %5 = vector.broadcast %2 : vector<1x384xf32> to vector<34x384xf32>
    %6 = arith.addf %4, %5 : vector<34x384xf32>
    %c0_5 = arith.constant 0 : index
    %c0_6 = arith.constant 0 : index
    %7 = vector.load %arg4[%c0_5, %c0_6] : memref<34x384xf32, #tpu.memory_space<vmem>>, vector<34x384xf32>
    tpu.vector_store %arg4[%c0_5, %c0_6], %6 {strides = array<i32>} : memref<34x384xf32, #tpu.memory_space<vmem>>, vector<34x384xf32>,
    return
  }
  func.func @transform_0(%arg0: i32) -> (i32, i32) {
    %c0_i32 = arith.constant 0 : i32
    %c0_i32_0 = arith.constant 0 : i32
    return %arg0, %c0_i32 : i32, i32
  }
  func.func @transform_1(%arg0: i32) -> (i32, i32) {
    %c0_i32 = arith.constant 0 : i32
    %c0_i32_0 = arith.constant 0 : i32
    %c0_i32_1 = arith.constant 0 : i32
    return %c0_i32, %c0_i32_0 : i32, i32
  }
  func.func @transform_2(%arg0: i32) -> (i32, i32) {
    %c0_i32 = arith.constant 0 : i32
    %c0_i32_0 = arith.constant 0 : i32
    %c0_i32_1 = arith.constant 0 : i32
    return %c0_i32, %c0_i32_0 : i32, i32
  }
  func.func @transform_3(%arg0: i32) -> (i32, i32) {
    %c0_i32 = arith.constant 0 : i32
    %c0_i32_0 = arith.constant 0 : i32
    return %arg0, %c0_i32 : i32, i32
  }
}

module attributes {stable_mosaic.version = 11 : i64} {
  func.func @_fused_linear_kernel(%arg0: i32, %arg1: memref<70x128xf32, #tpu.memory_space<vmem>>, %arg2: memref<128x1024xbf16, #tpu.memory_space<vmem>>, %arg3: memref<1x1024xf32, #tpu.memory_space<vmem>>, %arg4: memref<70x1024xf32, #tpu.memory_space<vmem>>) attributes {dimension_semantics = [#tpu.dimension_semantics<parallel>], iteration_bounds = array<i64: 1>, scalar_prefetch = 0 : i64, scratch_operands = 0 : i64, tpu.core_type = #tpu.core_type<tc>, window_params = [{transform_indices = @transform_0, window_bounds = array<i64: 70, 128>}, {pipeline_mode = #tpu.pipeline_mode<synchronous>, transform_indices = @transform_1, window_bounds = array<i64: 128, 1024>}, {pipeline_mode = #tpu.pipeline_mode<synchronous>, transform_indices = @transform_2, window_bounds = array<i64: 1, 1024>}, {transform_indices = @transform_3, window_bounds = array<i64: 70, 1024>}]} {
    %c0 = arith.constant 0 : index
    %c0_0 = arith.constant 0 : index
    %0 = vector.load %arg1[%c0, %c0_0] : memref<70x128xf32, #tpu.memory_space<vmem>>, vector<70x128xf32>
    %c0_1 = arith.constant 0 : index
    %c0_2 = arith.constant 0 : index
    %1 = vector.load %arg2[%c0_1, %c0_2] : memref<128x1024xbf16, #tpu.memory_space<vmem>>, vector<128x1024xbf16>
    %c0_3 = arith.constant 0 : index
    %c0_4 = arith.constant 0 : index
    %2 = vector.load %arg3[%c0_3, %c0_4] : memref<1x1024xf32, #tpu.memory_space<vmem>>, vector<1x1024xf32>
    %3 = arith.truncf %0 : vector<70x128xf32> to vector<70x128xbf16>
    %cst = arith.constant dense<0.000000e+00> : vector<70x1024xf32>
    %4 = tpu.matmul %3, %1, %cst {dimension_numbers = #tpu.dot_dimension_numbers<[1], [0], [0], [1], [0, 0, 1, 1], [], []>} : vector<70x128xbf16>, vector<128x1024xbf16>, vector<70x1024xf32> -> vector<70x1024xf32>
    %5 = vector.broadcast %2 : vector<1x1024xf32> to vector<70x1024xf32>
    %6 = arith.addf %4, %5 : vector<70x1024xf32>
    %c0_5 = arith.constant 0 : index
    %c0_6 = arith.constant 0 : index
    %7 = vector.load %arg4[%c0_5, %c0_6] : memref<70x1024xf32, #tpu.memory_space<vmem>>, vector<70x1024xf32>
    tpu.vector_store %arg4[%c0_5, %c0_6], %6 {strides = array<i32>} : memref<70x1024xf32, #tpu.memory_space<vmem>>, vector<70x1024xf32>,
    return
  }
  func.func @transform_0(%arg0: i32) -> (i32, i32) {
    %c0_i32 = arith.constant 0 : i32
    %c0_i32_0 = arith.constant 0 : i32
    return %arg0, %c0_i32 : i32, i32
  }
  func.func @transform_1(%arg0: i32) -> (i32, i32) {
    %c0_i32 = arith.constant 0 : i32
    %c0_i32_0 = arith.constant 0 : i32
    %c0_i32_1 = arith.constant 0 : i32
    return %c0_i32, %c0_i32_0 : i32, i32
  }
  func.func @transform_2(%arg0: i32) -> (i32, i32) {
    %c0_i32 = arith.constant 0 : i32
    %c0_i32_0 = arith.constant 0 : i32
    %c0_i32_1 = arith.constant 0 : i32
    return %c0_i32, %c0_i32_0 : i32, i32
  }
  func.func @transform_3(%arg0: i32) -> (i32, i32) {
    %c0_i32 = arith.constant 0 : i32
    %c0_i32_0 = arith.constant 0 : i32
    return %arg0, %c0_i32 : i32, i32
  }
}

module attributes {stable_mosaic.version = 11 : i64} {
  func.func @_bilstm_fc_kernel(%arg0: i32, %arg1: memref<35x2x1024xf32, #tpu.memory_space<vmem>>, %arg2: memref<35x2x1024xf32, #tpu.memory_space<vmem>>, %arg3: memref<256x1024xbf16, #tpu.memory_space<vmem>>, %arg4: memref<256x1024xbf16, #tpu.memory_space<vmem>>, %arg5: memref<1x256xf32, #tpu.memory_space<vmem>>, %arg6: memref<1x256xf32, #tpu.memory_space<vmem>>, %arg7: memref<1x1xf32, #tpu.memory_space<vmem>>, %arg8: memref<35x2xf32, #tpu.memory_space<vmem>>, %arg9: memref<2x256xf32, #tpu.memory_space<vmem>>, %arg10: memref<2x256xf32, #tpu.memory_space<vmem>>, %arg11: memref<35x2x256xf32, #tpu.memory_space<vmem>>, %arg12: memref<35x2x256xf32, #tpu.memory_space<vmem>>) attributes {dimension_semantics = [#tpu.dimension_semantics<arbitrary>], iteration_bounds = array<i64: 1>, scalar_prefetch = 0 : i64, scratch_operands = 4 : i64, tpu.core_type = #tpu.core_type<tc>, window_params = [{pipeline_mode = #tpu.pipeline_mode<synchronous>, transform_indices = @transform_0, window_bounds = array<i64: 35, 2, 1024>}, {pipeline_mode = #tpu.pipeline_mode<synchronous>, transform_indices = @transform_1, window_bounds = array<i64: 35, 2, 1024>}, {pipeline_mode = #tpu.pipeline_mode<synchronous>, transform_indices = @transform_2, window_bounds = array<i64: 256, 1024>}, {pipeline_mode = #tpu.pipeline_mode<synchronous>, transform_indices = @transform_3, window_bounds = array<i64: 256, 1024>}, {pipeline_mode = #tpu.pipeline_mode<synchronous>, transform_indices = @transform_4, window_bounds = array<i64: 1, 256>}, {pipeline_mode = #tpu.pipeline_mode<synchronous>, transform_indices = @transform_5, window_bounds = array<i64: 1, 256>}, {pipeline_mode = #tpu.pipeline_mode<synchronous>, transform_indices = @transform_6, window_bounds = array<i64: 1, 1>}, {pipeline_mode = #tpu.pipeline_mode<synchronous>, transform_indices = @transform_7, window_bounds = array<i64: 35, 2>}]} {
    %cst = arith.constant 0.000000e+00 : f32
    %0 = vector.broadcast %cst : f32 to vector<2x256xf32>
    %c0 = arith.constant 0 : index
    %c0_0 = arith.constant 0 : index
    %1 = vector.load %arg9[%c0, %c0_0] : memref<2x256xf32, #tpu.memory_space<vmem>>, vector<2x256xf32>
    tpu.vector_store %arg9[%c0, %c0_0], %0 {strides = array<i32>} : memref<2x256xf32, #tpu.memory_space<vmem>>, vector<2x256xf32>,
    %cst_1 = arith.constant 0.000000e+00 : f32
    %2 = vector.broadcast %cst_1 : f32 to vector<2x256xf32>
    %c0_2 = arith.constant 0 : index
    %c0_3 = arith.constant 0 : index
    %3 = vector.load %arg10[%c0_2, %c0_3] : memref<2x256xf32, #tpu.memory_space<vmem>>, vector<2x256xf32>
    tpu.vector_store %arg10[%c0_2, %c0_3], %2 {strides = array<i32>} : memref<2x256xf32, #tpu.memory_space<vmem>>, vector<2x256xf32>,
    %c0_i32 = arith.constant 0 : i32
    %c35_i32 = arith.constant 35 : i32
    %4 = arith.addi %c0_i32, %c35_i32 : i32
    %c1_i32 = arith.constant 1 : i32
    scf.for %arg13 = %c0_i32 to %4 step %c1_i32  : i32 {
      %32 = arith.index_cast %arg13 : i32 to index
      %c0_32 = arith.constant 0 : index
      %c0_33 = arith.constant 0 : index
      %33 = vector.load %arg1[%32, %c0_32, %c0_33] : memref<35x2x1024xf32, #tpu.memory_space<vmem>>, vector<1x2x1024xf32>
      %34 = vector.shape_cast %33 : vector<1x2x1024xf32> to vector<2x1024xf32>
      %c0_34 = arith.constant 0 : index
      %c0_35 = arith.constant 0 : index
      %35 = vector.load %arg9[%c0_34, %c0_35] : memref<2x256xf32, #tpu.memory_space<vmem>>, vector<2x256xf32>
      %36 = arith.truncf %35 : vector<2x256xf32> to vector<2x256xbf16>
      %c0_36 = arith.constant 0 : index
      %c0_37 = arith.constant 0 : index
      %37 = vector.load %arg3[%c0_36, %c0_37] : memref<256x1024xbf16, #tpu.memory_space<vmem>>, vector<256x1024xbf16>
      %cst_38 = arith.constant dense<0.000000e+00> : vector<2x1024xf32>
      %38 = tpu.matmul %36, %37, %cst_38 {dimension_numbers = #tpu.dot_dimension_numbers<[1], [0], [0], [1], [0, 0, 1, 1], [], []>} : vector<2x256xbf16>, vector<256x1024xbf16>, vector<2x1024xf32> -> vector<2x1024xf32>
      %39 = arith.addf %34, %38 : vector<2x1024xf32>
      %40 = vector.extract_strided_slice %39 {offsets = [0, 0], sizes = [2, 256], strides = [1, 1]} : vector<2x1024xf32> to vector<2x256xf32>
      %41 = arith.negf %40 : vector<2x256xf32>
      %42 = math.exp %41 : vector<2x256xf32>
      %cst_39 = arith.constant 1.000000e+00 : f32
      %43 = vector.broadcast %cst_39 : f32 to vector<2x256xf32>
      %44 = arith.addf %43, %42 : vector<2x256xf32>
      %45 = arith.divf %43, %44 : vector<2x256xf32>
      %46 = vector.extract_strided_slice %39 {offsets = [0, 256], sizes = [2, 256], strides = [1, 1]} : vector<2x1024xf32> to vector<2x256xf32>
      %47 = arith.negf %46 : vector<2x256xf32>
      %48 = math.exp %47 : vector<2x256xf32>
      %cst_40 = arith.constant 1.000000e+00 : f32
      %49 = vector.broadcast %cst_40 : f32 to vector<2x256xf32>
      %50 = arith.addf %49, %48 : vector<2x256xf32>
      %51 = arith.divf %49, %50 : vector<2x256xf32>
      %52 = vector.extract_strided_slice %39 {offsets = [0, 512], sizes = [2, 256], strides = [1, 1]} : vector<2x1024xf32> to vector<2x256xf32>
      %53 = math.tanh %52 : vector<2x256xf32>
      %54 = vector.extract_strided_slice %39 {offsets = [0, 768], sizes = [2, 256], strides = [1, 1]} : vector<2x1024xf32> to vector<2x256xf32>
      %55 = arith.negf %54 : vector<2x256xf32>
      %56 = math.exp %55 : vector<2x256xf32>
      %cst_41 = arith.constant 1.000000e+00 : f32
      %57 = vector.broadcast %cst_41 : f32 to vector<2x256xf32>
      %58 = arith.addf %57, %56 : vector<2x256xf32>
      %59 = arith.divf %57, %58 : vector<2x256xf32>
      %c0_42 = arith.constant 0 : index
      %c0_43 = arith.constant 0 : index
      %60 = vector.load %arg10[%c0_42, %c0_43] : memref<2x256xf32, #tpu.memory_space<vmem>>, vector<2x256xf32>
      %61 = arith.mulf %51, %60 : vector<2x256xf32>
      %62 = arith.mulf %45, %53 : vector<2x256xf32>
      %63 = arith.addf %61, %62 : vector<2x256xf32>
      %c0_44 = arith.constant 0 : index
      %c0_45 = arith.constant 0 : index
      %64 = vector.load %arg10[%c0_44, %c0_45] : memref<2x256xf32, #tpu.memory_space<vmem>>, vector<2x256xf32>
      tpu.vector_store %arg10[%c0_44, %c0_45], %63 {strides = array<i32>} : memref<2x256xf32, #tpu.memory_space<vmem>>, vector<2x256xf32>,
      %c0_46 = arith.constant 0 : index
      %c0_47 = arith.constant 0 : index
      %65 = vector.load %arg10[%c0_46, %c0_47] : memref<2x256xf32, #tpu.memory_space<vmem>>, vector<2x256xf32>
      %66 = math.tanh %65 : vector<2x256xf32>
      %67 = arith.mulf %59, %66 : vector<2x256xf32>
      %c0_48 = arith.constant 0 : index
      %c0_49 = arith.constant 0 : index
      %68 = vector.load %arg9[%c0_48, %c0_49] : memref<2x256xf32, #tpu.memory_space<vmem>>, vector<2x256xf32>
      tpu.vector_store %arg9[%c0_48, %c0_49], %67 {strides = array<i32>} : memref<2x256xf32, #tpu.memory_space<vmem>>, vector<2x256xf32>,
      %c0_50 = arith.constant 0 : index
      %c0_51 = arith.constant 0 : index
      %69 = vector.load %arg9[%c0_50, %c0_51] : memref<2x256xf32, #tpu.memory_space<vmem>>, vector<2x256xf32>
      %70 = arith.index_cast %arg13 : i32 to index
      %c0_52 = arith.constant 0 : index
      %c0_53 = arith.constant 0 : index
      %71 = vector.load %arg11[%70, %c0_52, %c0_53] : memref<35x2x256xf32, #tpu.memory_space<vmem>>, vector<1x2x256xf32>
      %72 = vector.shape_cast %71 : vector<1x2x256xf32> to vector<2x256xf32>
      %73 = vector.shape_cast %69 : vector<2x256xf32> to vector<1x2x256xf32>
      tpu.vector_store %arg11[%70, %c0_52, %c0_53], %73 {strides = array<i32>} : memref<35x2x256xf32, #tpu.memory_space<vmem>>, vector<1x2x256xf32>,
    }
    %c35_i32_4 = arith.constant 35 : i32
    %cst_5 = arith.constant 0.000000e+00 : f32
    %5 = vector.broadcast %cst_5 : f32 to vector<2x256xf32>
    %c0_6 = arith.constant 0 : index
    %c0_7 = arith.constant 0 : index
    %6 = vector.load %arg9[%c0_6, %c0_7] : memref<2x256xf32, #tpu.memory_space<vmem>>, vector<2x256xf32>
    tpu.vector_store %arg9[%c0_6, %c0_7], %5 {strides = array<i32>} : memref<2x256xf32, #tpu.memory_space<vmem>>, vector<2x256xf32>,
    %cst_8 = arith.constant 0.000000e+00 : f32
    %7 = vector.broadcast %cst_8 : f32 to vector<2x256xf32>
    %c0_9 = arith.constant 0 : index
    %c0_10 = arith.constant 0 : index
    %8 = vector.load %arg10[%c0_9, %c0_10] : memref<2x256xf32, #tpu.memory_space<vmem>>, vector<2x256xf32>
    tpu.vector_store %arg10[%c0_9, %c0_10], %7 {strides = array<i32>} : memref<2x256xf32, #tpu.memory_space<vmem>>, vector<2x256xf32>,
    %c0_i32_11 = arith.constant 0 : i32
    %c35_i32_12 = arith.constant 35 : i32
    %9 = arith.addi %c0_i32_11, %c35_i32_12 : i32
    %c1_i32_13 = arith.constant 1 : i32
    scf.for %arg13 = %c0_i32_11 to %9 step %c1_i32_13  : i32 {
      %c34_i32 = arith.constant 34 : i32
      %32 = arith.subi %c34_i32, %arg13 : i32
      %33 = arith.index_cast %32 : i32 to index
      %c0_32 = arith.constant 0 : index
      %c0_33 = arith.constant 0 : index
      %34 = vector.load %arg2[%33, %c0_32, %c0_33] : memref<35x2x1024xf32, #tpu.memory_space<vmem>>, vector<1x2x1024xf32>
      %35 = vector.shape_cast %34 : vector<1x2x1024xf32> to vector<2x1024xf32>
      %c0_34 = arith.constant 0 : index
      %c0_35 = arith.constant 0 : index
      %36 = vector.load %arg9[%c0_34, %c0_35] : memref<2x256xf32, #tpu.memory_space<vmem>>, vector<2x256xf32>
      %37 = arith.truncf %36 : vector<2x256xf32> to vector<2x256xbf16>
      %c0_36 = arith.constant 0 : index
      %c0_37 = arith.constant 0 : index
      %38 = vector.load %arg4[%c0_36, %c0_37] : memref<256x1024xbf16, #tpu.memory_space<vmem>>, vector<256x1024xbf16>
      %cst_38 = arith.constant dense<0.000000e+00> : vector<2x1024xf32>
      %39 = tpu.matmul %37, %38, %cst_38 {dimension_numbers = #tpu.dot_dimension_numbers<[1], [0], [0], [1], [0, 0, 1, 1], [], []>} : vector<2x256xbf16>, vector<256x1024xbf16>, vector<2x1024xf32> -> vector<2x1024xf32>
      %40 = arith.addf %35, %39 : vector<2x1024xf32>
      %41 = vector.extract_strided_slice %40 {offsets = [0, 0], sizes = [2, 256], strides = [1, 1]} : vector<2x1024xf32> to vector<2x256xf32>
      %42 = arith.negf %41 : vector<2x256xf32>
      %43 = math.exp %42 : vector<2x256xf32>
      %cst_39 = arith.constant 1.000000e+00 : f32
      %44 = vector.broadcast %cst_39 : f32 to vector<2x256xf32>
      %45 = arith.addf %44, %43 : vector<2x256xf32>
      %46 = arith.divf %44, %45 : vector<2x256xf32>
      %47 = vector.extract_strided_slice %40 {offsets = [0, 256], sizes = [2, 256], strides = [1, 1]} : vector<2x1024xf32> to vector<2x256xf32>
      %48 = arith.negf %47 : vector<2x256xf32>
      %49 = math.exp %48 : vector<2x256xf32>
      %cst_40 = arith.constant 1.000000e+00 : f32
      %50 = vector.broadcast %cst_40 : f32 to vector<2x256xf32>
      %51 = arith.addf %50, %49 : vector<2x256xf32>
      %52 = arith.divf %50, %51 : vector<2x256xf32>
      %53 = vector.extract_strided_slice %40 {offsets = [0, 512], sizes = [2, 256], strides = [1, 1]} : vector<2x1024xf32> to vector<2x256xf32>
      %54 = math.tanh %53 : vector<2x256xf32>
      %55 = vector.extract_strided_slice %40 {offsets = [0, 768], sizes = [2, 256], strides = [1, 1]} : vector<2x1024xf32> to vector<2x256xf32>
      %56 = arith.negf %55 : vector<2x256xf32>
      %57 = math.exp %56 : vector<2x256xf32>
      %cst_41 = arith.constant 1.000000e+00 : f32
      %58 = vector.broadcast %cst_41 : f32 to vector<2x256xf32>
      %59 = arith.addf %58, %57 : vector<2x256xf32>
      %60 = arith.divf %58, %59 : vector<2x256xf32>
      %c0_42 = arith.constant 0 : index
      %c0_43 = arith.constant 0 : index
      %61 = vector.load %arg10[%c0_42, %c0_43] : memref<2x256xf32, #tpu.memory_space<vmem>>, vector<2x256xf32>
      %62 = arith.mulf %52, %61 : vector<2x256xf32>
      %63 = arith.mulf %46, %54 : vector<2x256xf32>
      %64 = arith.addf %62, %63 : vector<2x256xf32>
      %c0_44 = arith.constant 0 : index
      %c0_45 = arith.constant 0 : index
      %65 = vector.load %arg10[%c0_44, %c0_45] : memref<2x256xf32, #tpu.memory_space<vmem>>, vector<2x256xf32>
      tpu.vector_store %arg10[%c0_44, %c0_45], %64 {strides = array<i32>} : memref<2x256xf32, #tpu.memory_space<vmem>>, vector<2x256xf32>,
      %c0_46 = arith.constant 0 : index
      %c0_47 = arith.constant 0 : index
      %66 = vector.load %arg10[%c0_46, %c0_47] : memref<2x256xf32, #tpu.memory_space<vmem>>, vector<2x256xf32>
      %67 = math.tanh %66 : vector<2x256xf32>
      %68 = arith.mulf %60, %67 : vector<2x256xf32>
      %c0_48 = arith.constant 0 : index
      %c0_49 = arith.constant 0 : index
      %69 = vector.load %arg9[%c0_48, %c0_49] : memref<2x256xf32, #tpu.memory_space<vmem>>, vector<2x256xf32>
      tpu.vector_store %arg9[%c0_48, %c0_49], %68 {strides = array<i32>} : memref<2x256xf32, #tpu.memory_space<vmem>>, vector<2x256xf32>,
      %c0_50 = arith.constant 0 : index
      %c0_51 = arith.constant 0 : index
      %70 = vector.load %arg9[%c0_50, %c0_51] : memref<2x256xf32, #tpu.memory_space<vmem>>, vector<2x256xf32>
      %71 = arith.index_cast %32 : i32 to index
      %c0_52 = arith.constant 0 : index
      %c0_53 = arith.constant 0 : index
      %72 = vector.load %arg12[%71, %c0_52, %c0_53] : memref<35x2x256xf32, #tpu.memory_space<vmem>>, vector<1x2x256xf32>
      %73 = vector.shape_cast %72 : vector<1x2x256xf32> to vector<2x256xf32>
      %74 = vector.shape_cast %70 : vector<2x256xf32> to vector<1x2x256xf32>
      tpu.vector_store %arg12[%71, %c0_52, %c0_53], %74 {strides = array<i32>} : memref<35x2x256xf32, #tpu.memory_space<vmem>>, vector<1x2x256xf32>,
    }
    %c35_i32_14 = arith.constant 35 : i32
    %c0_15 = arith.constant 0 : index
    %c0_16 = arith.constant 0 : index
    %c0_17 = arith.constant 0 : index
    %10 = vector.load %arg11[%c0_15, %c0_16, %c0_17] : memref<35x2x256xf32, #tpu.memory_space<vmem>>, vector<35x2x256xf32>
    %c0_18 = arith.constant 0 : index
    %c0_19 = arith.constant 0 : index
    %11 = vector.load %arg5[%c0_18, %c0_19] : memref<1x256xf32, #tpu.memory_space<vmem>>, vector<1x256xf32>
    %12 = vector.shape_cast %11 : vector<1x256xf32> to vector<1x1x256xf32>
    %13 = vector.broadcast %12 : vector<1x1x256xf32> to vector<35x2x256xf32>
    %14 = arith.mulf %10, %13 : vector<35x2x256xf32>
    %cst_20 = arith.constant dense<0.000000e+00> : vector<35x2xf32>
    %15 = vector.multi_reduction <add>, %14, %cst_20 [2] : vector<35x2x256xf32> to vector<35x2xf32>
    %c0_21 = arith.constant 0 : index
    %c0_22 = arith.constant 0 : index
    %c0_23 = arith.constant 0 : index
    %16 = vector.load %arg12[%c0_21, %c0_22, %c0_23] : memref<35x2x256xf32, #tpu.memory_space<vmem>>, vector<35x2x256xf32>
    %c0_24 = arith.constant 0 : index
    %c0_25 = arith.constant 0 : index
    %17 = vector.load %arg6[%c0_24, %c0_25] : memref<1x256xf32, #tpu.memory_space<vmem>>, vector<1x256xf32>
    %18 = vector.shape_cast %17 : vector<1x256xf32> to vector<1x1x256xf32>
    %19 = vector.broadcast %18 : vector<1x1x256xf32> to vector<35x2x256xf32>
    %20 = arith.mulf %16, %19 : vector<35x2x256xf32>
    %cst_26 = arith.constant dense<0.000000e+00> : vector<35x2xf32>
    %21 = vector.multi_reduction <add>, %20, %cst_26 [2] : vector<35x2x256xf32> to vector<35x2xf32>
    %22 = arith.addf %15, %21 : vector<35x2xf32>
    %c0_27 = arith.constant 0 : index
    %c0_28 = arith.constant 0 : index
    %23 = vector.load %arg7[%c0_27, %c0_28] : memref<1x1xf32, #tpu.memory_space<vmem>>, vector<1x1xf32>
    %24 = vector.broadcast %23 : vector<1x1xf32> to vector<35x2xf32>
    %25 = arith.addf %22, %24 : vector<35x2xf32>
    %26 = arith.negf %25 : vector<35x2xf32>
    %27 = math.exp %26 : vector<35x2xf32>
    %cst_29 = arith.constant 1.000000e+00 : f32
    %28 = vector.broadcast %cst_29 : f32 to vector<35x2xf32>
    %29 = arith.addf %28, %27 : vector<35x2xf32>
    %30 = arith.divf %28, %29 : vector<35x2xf32>
    %c0_30 = arith.constant 0 : index
    %c0_31 = arith.constant 0 : index
    %31 = vector.load %arg8[%c0_30, %c0_31] : memref<35x2xf32, #tpu.memory_space<vmem>>, vector<35x2xf32>
    tpu.vector_store %arg8[%c0_30, %c0_31], %30 {strides = array<i32>} : memref<35x2xf32, #tpu.memory_space<vmem>>, vector<35x2xf32>,
    return
  }
  func.func @transform_0(%arg0: i32) -> (i32, i32, i32) {
    %c0_i32 = arith.constant 0 : i32
    %c0_i32_0 = arith.constant 0 : i32
    %c0_i32_1 = arith.constant 0 : i32
    %c0_i32_2 = arith.constant 0 : i32
    return %c0_i32, %c0_i32_0, %c0_i32_1 : i32, i32, i32
  }
  func.func @transform_1(%arg0: i32) -> (i32, i32, i32) {
    %c0_i32 = arith.constant 0 : i32
    %c0_i32_0 = arith.constant 0 : i32
    %c0_i32_1 = arith.constant 0 : i32
    %c0_i32_2 = arith.constant 0 : i32
    return %c0_i32, %c0_i32_0, %c0_i32_1 : i32, i32, i32
  }
  func.func @transform_2(%arg0: i32) -> (i32, i32) {
    %c0_i32 = arith.constant 0 : i32
    %c0_i32_0 = arith.constant 0 : i32
    %c0_i32_1 = arith.constant 0 : i32
    return %c0_i32, %c0_i32_0 : i32, i32
  }
  func.func @transform_3(%arg0: i32) -> (i32, i32) {
    %c0_i32 = arith.constant 0 : i32
    %c0_i32_0 = arith.constant 0 : i32
    %c0_i32_1 = arith.constant 0 : i32
    return %c0_i32, %c0_i32_0 : i32, i32
  }
  func.func @transform_4(%arg0: i32) -> (i32, i32) {
    %c0_i32 = arith.constant 0 : i32
    %c0_i32_0 = arith.constant 0 : i32
    %c0_i32_1 = arith.constant 0 : i32
    return %c0_i32, %c0_i32_0 : i32, i32
  }
  func.func @transform_5(%arg0: i32) -> (i32, i32) {
    %c0_i32 = arith.constant 0 : i32
    %c0_i32_0 = arith.constant 0 : i32
    %c0_i32_1 = arith.constant 0 : i32
    return %c0_i32, %c0_i32_0 : i32, i32
  }
  func.func @transform_6(%arg0: i32) -> (i32, i32) {
    %c0_i32 = arith.constant 0 : i32
    %c0_i32_0 = arith.constant 0 : i32
    %c0_i32_1 = arith.constant 0 : i32
    return %c0_i32, %c0_i32_0 : i32, i32
  }
  func.func @transform_7(%arg0: i32) -> (i32, i32) {
    %c0_i32 = arith.constant 0 : i32
    %c0_i32_0 = arith.constant 0 : i32
    %c0_i32_1 = arith.constant 0 : i32
    return %c0_i32, %c0_i32_0 : i32, i32
  }
}

</mosaic_0001>

<llo_original>
// kernel: detection_net_forward.86
$region0: #{detection_net_forward.86}
  #allocation0 [shape = 'u32[]', space=smem, size = 0x4, offset = 0x4, fixed_abs, tag = 'smem constant byte address 0x4 - core index']
  #allocation1 [shape = 'u32[72,128]{1,0:T(1,128)}', space=vmem, size = 0x9000, scoped, tag = 'internal scratch']
  %s0 = inlined_call_operand.vmem [shape: f32[16,31], index: 0, kind: input, shape index: {}]
  %s1 = inlined_call_operand.hbm [shape: bf16[31,128], index: 1, kind: input, shape index: {}]
  %s2 = inlined_call_operand.hbm [shape: f32[1,128], index: 2, kind: input, shape index: {}]
  %s3 = inlined_call_operand.vmem [shape: f32[16,128], index: 3, kind: output, shape index: {}]
  %s4 = sld [smem:[#allocation0]]
  $region30: #{detection_net_forward.86} parent=0
    _
  %s6 = ssub.s32 1, %s4
  %s7 = scalar_select 0, %s6, %s4
  $region1: #{detection_net_forward.86} parent=0
    #allocation2 [shape = 'u8[8192]{0}', space=vmem, size = 0x2000, scoped, tag = 'input window, operand 1, single buffered']
    #allocation3 [shape = 's32[1]{0}', space=sflag, size = 0x4, scoped, tag = 'scoped memory for detection_net_forward.86']
    #allocation4 [shape = 'u8[512]{0}', space=vmem, size = 0x400, scoped, tag = 'input window, operand 2, single buffered']
    #allocation5 [shape = 's32[1]{0}', space=sflag, size = 0x4, scoped, tag = 'scoped memory for detection_net_forward.86']
    %8 = vsyncpa [#allocation3], 0
    %9 = vsyncpa [#allocation5], 0
    // Predicated region
    $region2: #{detection_net_forward.86} parent=1 // pred_check
      _
    $region3: #{detection_net_forward.86} parent=1 // pred_check_branch
      %11 = sbr.rel (0) target = $region5
    $region4: #{detection_net_forward.86} parent=1 // pred_region
      _
    $region5: #{detection_net_forward.86} parent=1 // pred_fallthru
      _
    // Predicated region
    $region6: #{detection_net_forward.86} parent=1 // pred_check
      _
    $region7: #{detection_net_forward.86} parent=1 // pred_check_branch
      %13 = sbr.rel (0) target = $region9
    $region8: #{detection_net_forward.86} parent=1 // pred_region
      %15 = vsyncadd [#allocation3], 0
      %s16 = sshll.u32 %s1, 4
      %s17 = int_to_ptr.hbm [resolvable:$true] %s16
      %s18 = sshll.u32 [#allocation2], 4
      %s19 = int_to_ptr.vmem [resolvable:$true] %s18
      %24 = dma.hbm_to_vmem [thread:$0]  %s17, 256, %s19, [#allocation3], 64, 64, 4
    $region9: #{detection_net_forward.86} parent=1 // pred_fallthru
      _
    // Predicated region
    $region10: #{detection_net_forward.86} parent=1 // pred_check
      _
    $region11: #{detection_net_forward.86} parent=1 // pred_check_branch
      %26 = sbr.rel (0) target = $region13
    $region12: #{detection_net_forward.86} parent=1 // pred_region
      %28 = vsyncadd [#allocation5], 0
      %s30 = sshll.u32 %s2, 4
      %s31 = int_to_ptr.hbm [resolvable:$true] %s30
      %s32 = sshll.u32 [#allocation4], 4
      %s33 = int_to_ptr.vmem [resolvable:$true] %s32
      %35 = dma.hbm_to_vmem [thread:$0]  %s31, 16, %s33, [#allocation5]
    $region13: #{detection_net_forward.86} parent=1 // pred_fallthru
      _
    // Predicated region
    $region14: #{detection_net_forward.86} parent=1 // pred_check
      _
    $region15: #{detection_net_forward.86} parent=1 // pred_check_branch
      %37 = sbr.rel (0) target = $region17
    $region16: #{detection_net_forward.86} parent=1 // pred_region
      %39 = dma.done [#allocation3], 256
    $region17: #{detection_net_forward.86} parent=1 // pred_fallthru
      _
    // Predicated region
    $region18: #{detection_net_forward.86} parent=1 // pred_check
      _
    $region19: #{detection_net_forward.86} parent=1 // pred_check_branch
      %41 = sbr.rel (0) target = $region21
    $region20: #{detection_net_forward.86} parent=1 // pred_region
      %43 = dma.done [#allocation5], 16
    $region21: #{detection_net_forward.86} parent=1 // pred_fallthru
      _
    %v45 = vld [vmem:[%s0] sm:$0xff]
    %v46 = vld [vmem:[%s0 + $0x8] sm:$0xff]
    %v47 = vld [vmem:[#allocation2] sm:$0xf]
    %v48 = vld [vmem:[#allocation2 + $0x4] sm:$0xf]
    %v49 = vld [vmem:[#allocation2 + $0x8] sm:$0xf]
    %v50 = vld [vmem:[#allocation2 + $0xc] sm:$0xf]
    %v51 = vld [vmem:[#allocation4] sm:$0x1]
    %v52 = vpack.c.bf16 %v46, %v45
    %v54 = vperm.slane %v51, 0
    %v60 = vunpack.c.l.b16 %v47
    %v61 = vunpack.c.l.b16 %v48
    %v62 = vunpack.c.l.b16 %v49
    %v63 = vunpack.c.l.b16 %v50
    %v64 = vpack.c.b16 %v61, %v60
    %v65 = vpack.c.b16 %v63, %v62
    %vm67 = vcmask 252928
    %v69 = vsel %vm67, %v52, 0
    %vm71 = vcmask 1046528
    %vm72 = vcmask 1047552
    %v73 = vsel %vm71, 4294967295, 65535
    %v74 = vsel %vm72, %v73, 0
    %v76 = vand.u32 %v65, %v74
    %78 = vmatpush.bf16.msra.mxu0 0
    %79 = vmatpush.bf16.msra.mxu0 0
    %80 = vmatpush.bf16.msra.mxu0 0
    %81 = vmatpush.bf16.msra.mxu0 0
    %82 = vmatpush.bf16.msra.mxu0 0
    %83 = vmatpush.bf16.msra.mxu0 0
    %84 = vmatpush.bf16.msra.mxu0 %v76
    %85 = vmatpush.bf16.msra.mxu0 %v64
    %86 = vmatmul.bf16.gmra.mxu0 %v69
    %v87 = vpop.f32.mrf.mxu0
    %v88 = vadd.f32 %v54, %v87
    %v89 = vpop.f32.mrf.mxu0
    %v90 = vadd.f32 %v54, %v89
    %91 = vdwg.mxu0
    %92 = vst [vmem:[%s3] sm:$0xff] %v88
    %93 = vst [vmem:[%s3 + $0x8] sm:$0xff] %v90
    // Predicated region
    $region22: #{detection_net_forward.86} parent=1 // pred_check
      _
    $region23: #{detection_net_forward.86} parent=1 // pred_check_branch
      %95 = sbr.rel (0) target = $region25
    $region24: #{detection_net_forward.86} parent=1 // pred_region
      _
    $region25: #{detection_net_forward.86} parent=1 // pred_fallthru
      _
    // Predicated region
    $region26: #{detection_net_forward.86} parent=1 // pred_check
      _
    $region27: #{detection_net_forward.86} parent=1 // pred_check_branch
      %97 = sbr.rel (0) target = $region29
    $region28: #{detection_net_forward.86} parent=1 // pred_region
      _
    $region29: #{detection_net_forward.86} parent=1 // pred_fallthru
      _
    %98 = vsyncpa [#allocation3], 1
    %99 = vsyncpa [#allocation5], 1

// kernel: detection_net_forward.88
$region0: #{detection_net_forward.88}
  #allocation0 [shape = 'u32[]', space=smem, size = 0x4, offset = 0x4, fixed_abs, tag = 'smem constant byte address 0x4 - core index']
  #allocation1 [shape = 'u32[72,128]{1,0:T(1,128)}', space=vmem, size = 0x9000, scoped, tag = 'internal scratch']
  %s0 = inlined_call_operand.vmem [shape: f32[16,256], index: 0, kind: input, shape index: {}]
  %s1 = inlined_call_operand.vmem [shape: bf16[256,128], index: 1, kind: input, shape index: {}]
  %s2 = inlined_call_operand.hbm [shape: f32[1,128], index: 2, kind: input, shape index: {}]
  %s3 = inlined_call_operand.vmem [shape: f32[16,128], index: 3, kind: input, shape index: {}]
  %s4 = inlined_call_operand.vmem [shape: f32[16,128], index: 4, kind: output, shape index: {}]
  %s5 = sld [smem:[#allocation0]]
  $region30: #{detection_net_forward.88} parent=0
    _
  %s7 = ssub.s32 1, %s5
  %s8 = scalar_select 0, %s7, %s5
  $region1: #{detection_net_forward.88} parent=0
    #allocation2 [shape = 'u8[512]{0}', space=vmem, size = 0x400, scoped, tag = 'input window, operand 2, single buffered']
    #allocation3 [shape = 's32[1]{0}', space=sflag, size = 0x4, scoped, tag = 'scoped memory for detection_net_forward.88']
    %9 = vsyncpa [#allocation3], 0
    // Predicated region
    $region2: #{detection_net_forward.88} parent=1 // pred_check
      _
    $region3: #{detection_net_forward.88} parent=1 // pred_check_branch
      %11 = sbr.rel (0) target = $region5
    $region4: #{detection_net_forward.88} parent=1 // pred_region
      _
    $region5: #{detection_net_forward.88} parent=1 // pred_fallthru
      _
    // Predicated region
    $region6: #{detection_net_forward.88} parent=1 // pred_check
      _
    $region7: #{detection_net_forward.88} parent=1 // pred_check_branch
      %13 = sbr.rel (0) target = $region9
    $region8: #{detection_net_forward.88} parent=1 // pred_region
      _
    $region9: #{detection_net_forward.88} parent=1 // pred_fallthru
      _
    // Predicated region
    $region10: #{detection_net_forward.88} parent=1 // pred_check
      _
    $region11: #{detection_net_forward.88} parent=1 // pred_check_branch
      %15 = sbr.rel (0) target = $region13
    $region12: #{detection_net_forward.88} parent=1 // pred_region
      %17 = vsyncadd [#allocation3], 0
      %s19 = sshll.u32 %s2, 4
      %s20 = int_to_ptr.hbm [resolvable:$true] %s19
      %s21 = sshll.u32 [#allocation2], 4
      %s22 = int_to_ptr.vmem [resolvable:$true] %s21
      %24 = dma.hbm_to_vmem [thread:$0]  %s20, 16, %s22, [#allocation3]
    $region13: #{detection_net_forward.88} parent=1 // pred_fallthru
      _
    // Predicated region
    $region14: #{detection_net_forward.88} parent=1 // pred_check
      _
    $region15: #{detection_net_forward.88} parent=1 // pred_check_branch
      %26 = sbr.rel (0) target = $region17
    $region16: #{detection_net_forward.88} parent=1 // pred_region
      _
    $region17: #{detection_net_forward.88} parent=1 // pred_fallthru
      _
    // Predicated region
    $region18: #{detection_net_forward.88} parent=1 // pred_check
      _
    $region19: #{detection_net_forward.88} parent=1 // pred_check_branch
      %28 = sbr.rel (0) target = $region21
    $region20: #{detection_net_forward.88} parent=1 // pred_region
      %30 = dma.done [#allocation3], 16
    $region21: #{detection_net_forward.88} parent=1 // pred_fallthru
      _
    %v31 = vld [vmem:[%s0] sm:$0xff]
    %v32 = vld [vmem:[%s0 + $0x8] sm:$0xff]
    %v33 = vld [vmem:[%s0 + $0x10] sm:$0xff]
    %v34 = vld [vmem:[%s0 + $0x18] sm:$0xff]
    %v35 = vld [vmem:[%s1] sm:$0xf]
    %v36 = vld [vmem:[%s1 + $0x4] sm:$0xf]
    %v37 = vld [vmem:[%s1 + $0x8] sm:$0xf]
    %v38 = vld [vmem:[%s1 + $0xc] sm:$0xf]
    %v39 = vld [vmem:[%s1 + $0x10] sm:$0xf]
    %v40 = vld [vmem:[%s1 + $0x14] sm:$0xf]
    %v41 = vld [vmem:[%s1 + $0x18] sm:$0xf]
    %v42 = vld [vmem:[%s1 + $0x1c] sm:$0xf]
    %v43 = vld [vmem:[%s1 + $0x20] sm:$0xf]
    %v44 = vld [vmem:[%s1 + $0x24] sm:$0xf]
    %v45 = vld [vmem:[%s1 + $0x28] sm:$0xf]
    %v46 = vld [vmem:[%s1 + $0x2c] sm:$0xf]
    %v47 = vld [vmem:[%s1 + $0x30] sm:$0xf]
    %v48 = vld [vmem:[%s1 + $0x34] sm:$0xf]
    %v49 = vld [vmem:[%s1 + $0x38] sm:$0xf]
    %v50 = vld [vmem:[%s1 + $0x3c] sm:$0xf]
    %v51 = vld [vmem:[%s1 + $0x40] sm:$0xf]
    %v52 = vld [vmem:[%s1 + $0x44] sm:$0xf]
    %v53 = vld [vmem:[%s1 + $0x48] sm:$0xf]
    %v54 = vld [vmem:[%s1 + $0x4c] sm:$0xf]
    %v55 = vld [vmem:[%s1 + $0x50] sm:$0xf]
    %v56 = vld [vmem:[%s1 + $0x54] sm:$0xf]
    %v57 = vld [vmem:[%s1 + $0x58] sm:$0xf]
    %v58 = vld [vmem:[%s1 + $0x5c] sm:$0xf]
    %v59 = vld [vmem:[%s1 + $0x60] sm:$0xf]
    %v60 = vld [vmem:[%s1 + $0x64] sm:$0xf]
    %v61 = vld [vmem:[%s1 + $0x68] sm:$0xf]
    %v62 = vld [vmem:[%s1 + $0x6c] sm:$0xf]
    %v63 = vld [vmem:[%s1 + $0x70] sm:$0xf]
    %v64 = vld [vmem:[%s1 + $0x74] sm:$0xf]
    %v65 = vld [vmem:[%s1 + $0x78] sm:$0xf]
    %v66 = vld [vmem:[%s1 + $0x7c] sm:$0xf]
    %v67 = vld [vmem:[#allocation2] sm:$0x1]
    %v68 = vpack.c.bf16 %v33, %v31
    %v69 = vpack.c.bf16 %v34, %v32
    %v71 = vperm.slane %v67, 0
    %v105 = vunpack.c.l.b16 %v35
    %v106 = vunpack.c.l.b16 %v36
    %v107 = vunpack.c.l.b16 %v37
    %v108 = vunpack.c.l.b16 %v38
    %v109 = vunpack.c.l.b16 %v39
    %v110 = vunpack.c.l.b16 %v40
    %v111 = vunpack.c.l.b16 %v41
    %v112 = vunpack.c.l.b16 %v42
    %v113 = vunpack.c.l.b16 %v43
    %v114 = vunpack.c.l.b16 %v44
    %v115 = vunpack.c.l.b16 %v45
    %v116 = vunpack.c.l.b16 %v46
    %v117 = vunpack.c.l.b16 %v47
    %v118 = vunpack.c.l.b16 %v48
    %v119 = vunpack.c.l.b16 %v49
    %v120 = vunpack.c.l.b16 %v50
    %v121 = vunpack.c.l.b16 %v51
    %v122 = vunpack.c.l.b16 %v52
    %v123 = vunpack.c.l.b16 %v53
    %v124 = vunpack.c.l.b16 %v54
    %v125 = vunpack.c.l.b16 %v55
    %v126 = vunpack.c.l.b16 %v56
    %v127 = vunpack.c.l.b16 %v57
    %v128 = vunpack.c.l.b16 %v58
    %v129 = vunpack.c.l.b16 %v59
    %v130 = vunpack.c.l.b16 %v60
    %v131 = vunpack.c.l.b16 %v61
    %v132 = vunpack.c.l.b16 %v62
    %v133 = vunpack.c.l.b16 %v63
    %v134 = vunpack.c.l.b16 %v64
    %v135 = vunpack.c.l.b16 %v65
    %v136 = vunpack.c.l.b16 %v66
    %v137 = vpack.c.b16 %v106, %v105
    %v138 = vpack.c.b16 %v108, %v107
    %v139 = vpack.c.b16 %v110, %v109
    %v140 = vpack.c.b16 %v112, %v111
    %v141 = vpack.c.b16 %v114, %v113
    %v142 = vpack.c.b16 %v116, %v115
    %v143 = vpack.c.b16 %v118, %v117
    %v144 = vpack.c.b16 %v120, %v119
    %v145 = vpack.c.b16 %v122, %v121
    %v146 = vpack.c.b16 %v124, %v123
    %v147 = vpack.c.b16 %v126, %v125
    %v148 = vpack.c.b16 %v128, %v127
    %v149 = vpack.c.b16 %v130, %v129
    %v150 = vpack.c.b16 %v132, %v131
    %v151 = vpack.c.b16 %v134, %v133
    %v152 = vpack.c.b16 %v136, %v135
    %169 = vmatpush.bf16.msra.mxu0 %v144
    %170 = vmatpush.bf16.msra.mxu0 %v143
    %171 = vmatpush.bf16.msra.mxu0 %v142
    %172 = vmatpush.bf16.msra.mxu0 %v141
    %173 = vmatpush.bf16.msra.mxu0 %v140
    %174 = vmatpush.bf16.msra.mxu0 %v139
    %175 = vmatpush.bf16.msra.mxu0 %v138
    %176 = vmatpush.bf16.msra.mxu0 %v137
    %177 = vmatmul.bf16.gmra.mxu0 %v68
    %v178 = vpop.f32.mrf.mxu0
    %v179 = vadd.f32 %v71, %v178
    %v180 = vpop.f32.mrf.mxu0
    %v181 = vadd.f32 %v71, %v180
    %182 = vdwg.mxu0
    %183 = vmatpush.bf16.msra.mxu0 %v152
    %184 = vmatpush.bf16.msra.mxu0 %v151
    %185 = vmatpush.bf16.msra.mxu0 %v150
    %186 = vmatpush.bf16.msra.mxu0 %v149
    %187 = vmatpush.bf16.msra.mxu0 %v148
    %188 = vmatpush.bf16.msra.mxu0 %v147
    %189 = vmatpush.bf16.msra.mxu0 %v146
    %190 = vmatpush.bf16.msra.mxu0 %v145
    %191 = vmatmul.bf16.gmra.mxu0 %v69
    %v192 = vpop.f32.mrf.mxu0
    %v193 = vadd.f32 %v179, %v192
    %v194 = vpop.f32.mrf.mxu0
    %v195 = vadd.f32 %v181, %v194
    %196 = vdwg.mxu0
    %v197 = vmul.f32 %v193, 0.5
    %v198 = vmul.f32 %v195, 0.5
    %v199 = vld [vmem:[%s3] sm:$0xff]
    %v200 = vld [vmem:[%s3 + $0x8] sm:$0xff]
    %v201 = vadd.f32 %v197, %v199
    %v202 = vadd.f32 %v198, %v200
    %203 = vst [vmem:[%s4] sm:$0xff] %v201
    %204 = vst [vmem:[%s4 + $0x8] sm:$0xff] %v202
    // Predicated region
    $region22: #{detection_net_forward.88} parent=1 // pred_check
      _
    $region23: #{detection_net_forward.88} parent=1 // pred_check_branch
      %206 = sbr.rel (0) target = $region25
    $region24: #{detection_net_forward.88} parent=1 // pred_region
      _
    $region25: #{detection_net_forward.88} parent=1 // pred_fallthru
      _
    // Predicated region
    $region26: #{detection_net_forward.88} parent=1 // pred_check
      _
    $region27: #{detection_net_forward.88} parent=1 // pred_check_branch
      %208 = sbr.rel (0) target = $region29
    $region28: #{detection_net_forward.88} parent=1 // pred_region
      _
    $region29: #{detection_net_forward.88} parent=1 // pred_fallthru
      _
    %209 = vsyncpa [#allocation3], 1

// kernel: detection_net_forward.87
$region0: #{detection_net_forward.87}
  #allocation0 [shape = 'u32[]', space=smem, size = 0x4, offset = 0x4, fixed_abs, tag = 'smem constant byte address 0x4 - core index']
  #allocation1 [shape = 'u32[72,128]{1,0:T(1,128)}', space=vmem, size = 0x9000, scoped, tag = 'internal scratch']
  %s0 = inlined_call_operand.vmem [shape: f32[16,128], index: 0, kind: input, shape index: {}]
  %s1 = inlined_call_operand.hbm [shape: f32[1,128], index: 1, kind: input, shape index: {}]
  %s2 = inlined_call_operand.hbm [shape: f32[1,128], index: 2, kind: input, shape index: {}]
  %s3 = inlined_call_operand.vmem [shape: bf16[128,256], index: 3, kind: input, shape index: {}]
  %s4 = inlined_call_operand.hbm [shape: f32[1,256], index: 4, kind: input, shape index: {}]
  %s5 = inlined_call_operand.vmem [shape: f32[16,256], index: 5, kind: output, shape index: {}]
  %s6 = sld [smem:[#allocation0]]
  $region42: #{detection_net_forward.87} parent=0
    _
  %s8 = ssub.s32 1, %s6
  %s9 = scalar_select 0, %s8, %s6
  $region1: #{detection_net_forward.87} parent=0
    #allocation2 [shape = 'u8[512]{0}', space=vmem, size = 0x400, scoped, tag = 'input window, operand 1, single buffered']
    #allocation3 [shape = 's32[1]{0}', space=sflag, size = 0x4, scoped, tag = 'scoped memory for detection_net_forward.87']
    #allocation4 [shape = 'u8[512]{0}', space=vmem, size = 0x400, scoped, tag = 'input window, operand 2, single buffered']
    #allocation5 [shape = 's32[1]{0}', space=sflag, size = 0x4, scoped, tag = 'scoped memory for detection_net_forward.87']
    #allocation6 [shape = 'u8[1024]{0}', space=vmem, size = 0x400, scoped, tag = 'input window, operand 4, single buffered']
    %10 = vsyncpa [#allocation3], 0
    %11 = vsyncpa [#allocation5], 0
    // Predicated region
    $region2: #{detection_net_forward.87} parent=1 // pred_check
      _
    $region3: #{detection_net_forward.87} parent=1 // pred_check_branch
      %13 = sbr.rel (0) target = $region5
    $region4: #{detection_net_forward.87} parent=1 // pred_region
      _
    $region5: #{detection_net_forward.87} parent=1 // pred_fallthru
      _
    // Predicated region
    $region6: #{detection_net_forward.87} parent=1 // pred_check
      _
    $region7: #{detection_net_forward.87} parent=1 // pred_check_branch
      %15 = sbr.rel (0) target = $region9
    $region8: #{detection_net_forward.87} parent=1 // pred_region
      %17 = vsyncadd [#allocation3], 0
      %s19 = sshll.u32 %s1, 4
      %s20 = int_to_ptr.hbm [resolvable:$true] %s19
      %s21 = sshll.u32 [#allocation2], 4
      %s22 = int_to_ptr.vmem [resolvable:$true] %s21
      %24 = dma.hbm_to_vmem [thread:$0]  %s20, 16, %s22, [#allocation3]
    $region9: #{detection_net_forward.87} parent=1 // pred_fallthru
      _
    // Predicated region
    $region10: #{detection_net_forward.87} parent=1 // pred_check
      _
    $region11: #{detection_net_forward.87} parent=1 // pred_check_branch
      %26 = sbr.rel (0) target = $region13
    $region12: #{detection_net_forward.87} parent=1 // pred_region
      %28 = vsyncadd [#allocation5], 0
      %s30 = sshll.u32 %s2, 4
      %s31 = int_to_ptr.hbm [resolvable:$true] %s30
      %s32 = sshll.u32 [#allocation4], 4
      %s33 = int_to_ptr.vmem [resolvable:$true] %s32
      %35 = dma.hbm_to_vmem [thread:$0]  %s31, 16, %s33, [#allocation5]
    $region13: #{detection_net_forward.87} parent=1 // pred_fallthru
      _
    // Predicated region
    $region14: #{detection_net_forward.87} parent=1 // pred_check
      _
    $region15: #{detection_net_forward.87} parent=1 // pred_check_branch
      %37 = sbr.rel (0) target = $region17
    $region16: #{detection_net_forward.87} parent=1 // pred_region
      _
    $region17: #{detection_net_forward.87} parent=1 // pred_fallthru
      _
    // Predicated region
    $region18: #{detection_net_forward.87} parent=1 // pred_check
      _
    $region19: #{detection_net_forward.87} parent=1 // pred_check_branch
      %39 = sbr.rel (0) target = $region21
    $region20: #{detection_net_forward.87} parent=1 // pred_region
      %41 = vsyncadd [#allocation5], 0
      %s43 = sshll.u32 %s4, 4
      %s44 = int_to_ptr.hbm [resolvable:$true] %s43
      %s45 = sshll.u32 [#allocation6], 4
      %s46 = int_to_ptr.vmem [resolvable:$true] %s45
      %48 = dma.hbm_to_vmem [thread:$0]  %s44, 32, %s46, [#allocation5]
    $region21: #{detection_net_forward.87} parent=1 // pred_fallthru
      _
    // Predicated region
    $region22: #{detection_net_forward.87} parent=1 // pred_check
      _
    $region23: #{detection_net_forward.87} parent=1 // pred_check_branch
      %50 = sbr.rel (0) target = $region25
    $region24: #{detection_net_forward.87} parent=1 // pred_region
      %52 = dma.done [#allocation3], 16
    $region25: #{detection_net_forward.87} parent=1 // pred_fallthru
      _
    // Predicated region
    $region26: #{detection_net_forward.87} parent=1 // pred_check
      _
    $region27: #{detection_net_forward.87} parent=1 // pred_check_branch
      %54 = sbr.rel (0) target = $region29
    $region28: #{detection_net_forward.87} parent=1 // pred_region
      %56 = dma.done [#allocation5], 16
    $region29: #{detection_net_forward.87} parent=1 // pred_fallthru
      _
    // Predicated region
    $region30: #{detection_net_forward.87} parent=1 // pred_check
      _
    $region31: #{detection_net_forward.87} parent=1 // pred_check_branch
      %58 = sbr.rel (0) target = $region33
    $region32: #{detection_net_forward.87} parent=1 // pred_region
      %60 = dma.done [#allocation5], 32
    $region33: #{detection_net_forward.87} parent=1 // pred_fallthru
      _
    %v61 = vld [vmem:[%s0] sm:$0xff]
    %v62 = vld [vmem:[%s0 + $0x8] sm:$0xff]
    %v63 = vld [vmem:[#allocation2] sm:$0x1]
    %v64 = vld [vmem:[#allocation4] sm:$0x1]
    %65 = vadd.xlane.f32.xlu0 %v61
    %v66 = vpop.xlane.xlu0 %65
    %67 = vadd.xlane.f32.xlu0 %v62
    %v68 = vpop.xlane.xlu0 %67
    %v69 = vrcp.pop 128.0
    %v70 = vmul.f32 128.0, %v69
    %v71 = vsub.f32 1.0, %v70
    %v72 = vmul.f32 %v69, %v71
    %v73 = vadd.f32 %v69, %v72
    %vm74 = vweird.f32 %v69
    %v75 = vsel %vm74, %v69, %v73
    %v76 = vmul.f32 %v66, %v75
    %v77 = vmul.f32 %v68, %v75
    %v78 = vsub.f32 %v61, %v76
    %v79 = vsub.f32 %v62, %v77
    %v80 = vmul.f32 %v78, %v78
    %v81 = vmul.f32 %v79, %v79
    %82 = vadd.xlane.f32.xlu0 %v80
    %v83 = vpop.xlane.xlu0 %82
    %84 = vadd.xlane.f32.xlu0 %v81
    %v85 = vpop.xlane.xlu0 %84
    %v86 = vmul.f32 %v83, %v75
    %v87 = vmul.f32 %v85, %v75
    %v88 = vadd.f32 %v86, 1e-05
    %v89 = vadd.f32 %v87, 1e-05
    %v90 = vrsqrt.pop %v88
    %v91 = vmul.f32 %v90, %v88
    %v92 = vmul.f32 %v91, %v90
    %v93 = vmul.f32 0.5, %v92
    %v94 = vsub.f32 1.5, %v93
    %v95 = vmul.f32 %v90, %v94
    %vm96 = vweird.f32 %v88
    %vm97 = vweird.f32 %v90
    %vm98 = vmor %vm96, %vm97
    %v99 = vsel %vm98, %v90, %v95
    %v100 = vrsqrt.pop %v89
    %v101 = vmul.f32 %v100, %v89
    %v102 = vmul.f32 %v101, %v100
    %v103 = vmul.f32 0.5, %v102
    %v104 = vsub.f32 1.5, %v103
    %v105 = vmul.f32 %v100, %v104
    %vm106 = vweird.f32 %v89
    %vm107 = vweird.f32 %v100
    %vm108 = vmor %vm106, %vm107
    %v109 = vsel %vm108, %v100, %v105
    %v110 = vmul.f32 %v78, %v99
    %v111 = vmul.f32 %v79, %v109
    %v113 = vperm.slane %v63, 0
    %v115 = vmul.f32 %v110, %v113
    %v116 = vmul.f32 %v111, %v113
    %v118 = vperm.slane %v64, 0
    %v120 = vadd.f32 %v115, %v118
    %v121 = vadd.f32 %v116, %v118
    %v122 = vld [vmem:[%s3] sm:$0xff]
    %v123 = vld [vmem:[%s3 + $0x8] sm:$0xff]
    %v124 = vld [vmem:[%s3 + $0x10] sm:$0xff]
    %v125 = vld [vmem:[%s3 + $0x18] sm:$0xff]
    %v126 = vld [vmem:[%s3 + $0x20] sm:$0xff]
    %v127 = vld [vmem:[%s3 + $0x28] sm:$0xff]
    %v128 = vld [vmem:[%s3 + $0x30] sm:$0xff]
    %v129 = vld [vmem:[%s3 + $0x38] sm:$0xff]
    %v130 = vld [vmem:[%s3 + $0x40] sm:$0xff]
    %v131 = vld [vmem:[%s3 + $0x48] sm:$0xff]
    %v132 = vld [vmem:[%s3 + $0x50] sm:$0xff]
    %v133 = vld [vmem:[%s3 + $0x58] sm:$0xff]
    %v134 = vld [vmem:[%s3 + $0x60] sm:$0xff]
    %v135 = vld [vmem:[%s3 + $0x68] sm:$0xff]
    %v136 = vld [vmem:[%s3 + $0x70] sm:$0xff]
    %v137 = vld [vmem:[%s3 + $0x78] sm:$0xff]
    %v138 = vld [vmem:[#allocation6] sm:$0x3]
    %v139 = vpack.c.bf16 %v121, %v120
    %v141 = vperm.slane %v138, 0
    %v142 = vperm.slane %v138, 1
    %v161 = vunpack.c.l.b16 %v122
    %v162 = vunpack.c.h.b16 %v122
    %v163 = vunpack.c.l.b16 %v123
    %v164 = vunpack.c.h.b16 %v123
    %v165 = vunpack.c.l.b16 %v124
    %v166 = vunpack.c.h.b16 %v124
    %v167 = vunpack.c.l.b16 %v125
    %v168 = vunpack.c.h.b16 %v125
    %v169 = vunpack.c.l.b16 %v126
    %v170 = vunpack.c.h.b16 %v126
    %v171 = vunpack.c.l.b16 %v127
    %v172 = vunpack.c.h.b16 %v127
    %v173 = vunpack.c.l.b16 %v128
    %v174 = vunpack.c.h.b16 %v128
    %v175 = vunpack.c.l.b16 %v129
    %v176 = vunpack.c.h.b16 %v129
    %v177 = vunpack.c.l.b16 %v130
    %v178 = vunpack.c.h.b16 %v130
    %v179 = vunpack.c.l.b16 %v131
    %v180 = vunpack.c.h.b16 %v131
    %v181 = vunpack.c.l.b16 %v132
    %v182 = vunpack.c.h.b16 %v132
    %v183 = vunpack.c.l.b16 %v133
    %v184 = vunpack.c.h.b16 %v133
    %v185 = vunpack.c.l.b16 %v134
    %v186 = vunpack.c.h.b16 %v134
    %v187 = vunpack.c.l.b16 %v135
    %v188 = vunpack.c.h.b16 %v135
    %v189 = vunpack.c.l.b16 %v136
    %v190 = vunpack.c.h.b16 %v136
    %v191 = vunpack.c.l.b16 %v137
    %v192 = vunpack.c.h.b16 %v137
    %v193 = vpack.c.b16 %v163, %v161
    %v194 = vpack.c.b16 %v164, %v162
    %v195 = vpack.c.b16 %v167, %v165
    %v196 = vpack.c.b16 %v168, %v166
    %v197 = vpack.c.b16 %v171, %v169
    %v198 = vpack.c.b16 %v172, %v170
    %v199 = vpack.c.b16 %v175, %v173
    %v200 = vpack.c.b16 %v176, %v174
    %v201 = vpack.c.b16 %v179, %v177
    %v202 = vpack.c.b16 %v180, %v178
    %v203 = vpack.c.b16 %v183, %v181
    %v204 = vpack.c.b16 %v184, %v182
    %v205 = vpack.c.b16 %v187, %v185
    %v206 = vpack.c.b16 %v188, %v186
    %v207 = vpack.c.b16 %v191, %v189
    %v208 = vpack.c.b16 %v192, %v190
    %225 = vmatpush.bf16.msra.mxu0 %v207
    %226 = vmatpush.bf16.msra.mxu0 %v205
    %227 = vmatpush.bf16.msra.mxu0 %v203
    %228 = vmatpush.bf16.msra.mxu0 %v201
    %229 = vmatpush.bf16.msra.mxu0 %v199
    %230 = vmatpush.bf16.msra.mxu0 %v197
    %231 = vmatpush.bf16.msra.mxu0 %v195
    %232 = vmatpush.bf16.msra.mxu0 %v193
    %233 = vmatmul.bf16.gmra.mxu0 %v139
    %v234 = vpop.f32.mrf.mxu0
    %v235 = vadd.f32 %v141, %v234
    %v236 = vpop.f32.mrf.mxu0
    %v237 = vadd.f32 %v141, %v236
    %238 = vdwg.mxu0
    %239 = vmatpush.bf16.msra.mxu0 %v208
    %240 = vmatpush.bf16.msra.mxu0 %v206
    %241 = vmatpush.bf16.msra.mxu0 %v204
    %242 = vmatpush.bf16.msra.mxu0 %v202
    %243 = vmatpush.bf16.msra.mxu0 %v200
    %244 = vmatpush.bf16.msra.mxu0 %v198
    %245 = vmatpush.bf16.msra.mxu0 %v196
    %246 = vmatpush.bf16.msra.mxu0 %v194
    %247 = vmatmul.bf16.gmra.mxu0 %v139
    %v248 = vpop.f32.mrf.mxu0
    %v249 = vadd.f32 %v142, %v248
    %v250 = vpop.f32.mrf.mxu0
    %v251 = vadd.f32 %v142, %v250
    %252 = vdwg.mxu0
    %v253 = vxor.u32 %v235, 2147483648
    %v254 = vxor.u32 %v249, 2147483648
    %v255 = vxor.u32 %v237, 2147483648
    %v256 = vxor.u32 %v251, 2147483648
    %v257 = vmul.f32 %v253, 1.442695
    %v258 = vpow.pop %v257
    %v259 = vmul.f32 %v254, 1.442695
    %v260 = vpow.pop %v259
    %v261 = vmul.f32 %v255, 1.442695
    %v262 = vpow.pop %v261
    %v263 = vmul.f32 %v256, 1.442695
    %v264 = vpow.pop %v263
    %v265 = vadd.f32 %v258, 1.0
    %v266 = vadd.f32 %v260, 1.0
    %v267 = vadd.f32 %v262, 1.0
    %v268 = vadd.f32 %v264, 1.0
    %v269 = vrcp.pop %v265
    %v270 = vmul.f32 %v265, %v269
    %v271 = vsub.f32 1.0, %v270
    %v272 = vmul.f32 %v269, %v271
    %v273 = vadd.f32 %v269, %v272
    %vm274 = vweird.f32 %v265
    %vm275 = vweird.f32 %v269
    %vm276 = vmor %vm274, %vm275
    %v277 = vsel %vm276, %v269, %v273
    %v278 = vand.u32 2147483647, %v265
    %vm279 = vcmp.eq.f32.partialorder %v278, 8.507059e+37
    %v280 = vand.u32 %v265, 2147483648
    %v281 = vor.u32 1.1754944e-38, %v280
    %v282 = vsel %vm279, %v281, %v277
    %v283 = vmul.f32 1.0, %v282
    %v284 = vrcp.pop %v266
    %v285 = vmul.f32 %v266, %v284
    %v286 = vsub.f32 1.0, %v285
    %v287 = vmul.f32 %v284, %v286
    %v288 = vadd.f32 %v284, %v287
    %vm289 = vweird.f32 %v266
    %vm290 = vweird.f32 %v284
    %vm291 = vmor %vm289, %vm290
    %v292 = vsel %vm291, %v284, %v288
    %v293 = vand.u32 2147483647, %v266
    %vm294 = vcmp.eq.f32.partialorder %v293, 8.507059e+37
    %v295 = vand.u32 %v266, 2147483648
    %v296 = vor.u32 1.1754944e-38, %v295
    %v297 = vsel %vm294, %v296, %v292
    %v298 = vmul.f32 1.0, %v297
    %v299 = vrcp.pop %v267
    %v300 = vmul.f32 %v267, %v299
    %v301 = vsub.f32 1.0, %v300
    %v302 = vmul.f32 %v299, %v301
    %v303 = vadd.f32 %v299, %v302
    %vm304 = vweird.f32 %v267
    %vm305 = vweird.f32 %v299
    %vm306 = vmor %vm304, %vm305
    %v307 = vsel %vm306, %v299, %v303
    %v308 = vand.u32 2147483647, %v267
    %vm309 = vcmp.eq.f32.partialorder %v308, 8.507059e+37
    %v310 = vand.u32 %v267, 2147483648
    %v311 = vor.u32 1.1754944e-38, %v310
    %v312 = vsel %vm309, %v311, %v307
    %v313 = vmul.f32 1.0, %v312
    %v314 = vrcp.pop %v268
    %v315 = vmul.f32 %v268, %v314
    %v316 = vsub.f32 1.0, %v315
    %v317 = vmul.f32 %v314, %v316
    %v318 = vadd.f32 %v314, %v317
    %vm319 = vweird.f32 %v268
    %vm320 = vweird.f32 %v314
    %vm321 = vmor %vm319, %vm320
    %v322 = vsel %vm321, %v314, %v318
    %v323 = vand.u32 2147483647, %v268
    %vm324 = vcmp.eq.f32.partialorder %v323, 8.507059e+37
    %v325 = vand.u32 %v268, 2147483648
    %v326 = vor.u32 1.1754944e-38, %v325
    %v327 = vsel %vm324, %v326, %v322
    %v328 = vmul.f32 1.0, %v327
    %v329 = vmul.f32 %v235, %v283
    %v330 = vmul.f32 %v249, %v298
    %v331 = vmul.f32 %v237, %v313
    %v332 = vmul.f32 %v251, %v328
    %333 = vst [vmem:[%s5] sm:$0xff] %v329
    %334 = vst [vmem:[%s5 + $0x8] sm:$0xff] %v330
    %335 = vst [vmem:[%s5 + $0x10] sm:$0xff] %v331
    %336 = vst [vmem:[%s5 + $0x18] sm:$0xff] %v332
    // Predicated region
    $region34: #{detection_net_forward.87} parent=1 // pred_check
      _
    $region35: #{detection_net_forward.87} parent=1 // pred_check_branch
      %338 = sbr.rel (0) target = $region37
    $region36: #{detection_net_forward.87} parent=1 // pred_region
      _
    $region37: #{detection_net_forward.87} parent=1 // pred_fallthru
      _
    // Predicated region
    $region38: #{detection_net_forward.87} parent=1 // pred_check
      _
    $region39: #{detection_net_forward.87} parent=1 // pred_check_branch
      %340 = sbr.rel (0) target = $region41
    $region40: #{detection_net_forward.87} parent=1 // pred_region
      _
    $region41: #{detection_net_forward.87} parent=1 // pred_fallthru
      _
    %341 = vsyncpa [#allocation3], 1
    %342 = vsyncpa [#allocation5], 1

// kernel: detection_net_forward.89
$region0: #{detection_net_forward.89}
  #allocation0 [shape = 'u32[]', space=smem, size = 0x4, offset = 0x4, fixed_abs, tag = 'smem constant byte address 0x4 - core index']
  #allocation1 [shape = 'u32[72,128]{1,0:T(1,128)}', space=vmem, size = 0x9000, scoped, tag = 'internal scratch']
  %s0 = inlined_call_operand.vmem [shape: f32[16,128], index: 0, kind: input, shape index: {}]
  %s1 = inlined_call_operand.hbm [shape: f32[1,128], index: 1, kind: input, shape index: {}]
  %s2 = inlined_call_operand.hbm [shape: f32[1,128], index: 2, kind: input, shape index: {}]
  %s3 = inlined_call_operand.vmem [shape: bf16[128,384], index: 3, kind: input, shape index: {}]
  %s4 = inlined_call_operand.vmem [shape: f32[1,384], index: 4, kind: input, shape index: {}]
  %s5 = inlined_call_operand.vmem [shape: f32[16,384], index: 5, kind: output, shape index: {}]
  %s6 = sld [smem:[#allocation0]]
  $region38: #{detection_net_forward.89} parent=0
    _
  %s8 = ssub.s32 1, %s6
  %s9 = scalar_select 0, %s8, %s6
  $region1: #{detection_net_forward.89} parent=0
    #allocation2 [shape = 'u8[512]{0}', space=vmem, size = 0x400, scoped, tag = 'input window, operand 1, single buffered']
    #allocation3 [shape = 's32[1]{0}', space=sflag, size = 0x4, scoped, tag = 'scoped memory for detection_net_forward.89']
    #allocation4 [shape = 'u8[512]{0}', space=vmem, size = 0x400, scoped, tag = 'input window, operand 2, single buffered']
    #allocation5 [shape = 's32[1]{0}', space=sflag, size = 0x4, scoped, tag = 'scoped memory for detection_net_forward.89']
    %10 = vsyncpa [#allocation3], 0
    %11 = vsyncpa [#allocation5], 0
    // Predicated region
    $region2: #{detection_net_forward.89} parent=1 // pred_check
      _
    $region3: #{detection_net_forward.89} parent=1 // pred_check_branch
      %13 = sbr.rel (0) target = $region5
    $region4: #{detection_net_forward.89} parent=1 // pred_region
      _
    $region5: #{detection_net_forward.89} parent=1 // pred_fallthru
      _
    // Predicated region
    $region6: #{detection_net_forward.89} parent=1 // pred_check
      _
    $region7: #{detection_net_forward.89} parent=1 // pred_check_branch
      %15 = sbr.rel (0) target = $region9
    $region8: #{detection_net_forward.89} parent=1 // pred_region
      %17 = vsyncadd [#allocation3], 0
      %s19 = sshll.u32 %s1, 4
      %s20 = int_to_ptr.hbm [resolvable:$true] %s19
      %s21 = sshll.u32 [#allocation2], 4
      %s22 = int_to_ptr.vmem [resolvable:$true] %s21
      %24 = dma.hbm_to_vmem [thread:$0]  %s20, 16, %s22, [#allocation3]
    $region9: #{detection_net_forward.89} parent=1 // pred_fallthru
      _
    // Predicated region
    $region10: #{detection_net_forward.89} parent=1 // pred_check
      _
    $region11: #{detection_net_forward.89} parent=1 // pred_check_branch
      %26 = sbr.rel (0) target = $region13
    $region12: #{detection_net_forward.89} parent=1 // pred_region
      %28 = vsyncadd [#allocation5], 0
      %s30 = sshll.u32 %s2, 4
      %s31 = int_to_ptr.hbm [resolvable:$true] %s30
      %s32 = sshll.u32 [#allocation4], 4
      %s33 = int_to_ptr.vmem [resolvable:$true] %s32
      %35 = dma.hbm_to_vmem [thread:$0]  %s31, 16, %s33, [#allocation5]
    $region13: #{detection_net_forward.89} parent=1 // pred_fallthru
      _
    // Predicated region
    $region14: #{detection_net_forward.89} parent=1 // pred_check
      _
    $region15: #{detection_net_forward.89} parent=1 // pred_check_branch
      %37 = sbr.rel (0) target = $region17
    $region16: #{detection_net_forward.89} parent=1 // pred_region
      _
    $region17: #{detection_net_forward.89} parent=1 // pred_fallthru
      _
    // Predicated region
    $region18: #{detection_net_forward.89} parent=1 // pred_check
      _
    $region19: #{detection_net_forward.89} parent=1 // pred_check_branch
      %39 = sbr.rel (0) target = $region21
    $region20: #{detection_net_forward.89} parent=1 // pred_region
      _
    $region21: #{detection_net_forward.89} parent=1 // pred_fallthru
      _
    // Predicated region
    $region22: #{detection_net_forward.89} parent=1 // pred_check
      _
    $region23: #{detection_net_forward.89} parent=1 // pred_check_branch
      %41 = sbr.rel (0) target = $region25
    $region24: #{detection_net_forward.89} parent=1 // pred_region
      %43 = dma.done [#allocation3], 16
    $region25: #{detection_net_forward.89} parent=1 // pred_fallthru
      _
    // Predicated region
    $region26: #{detection_net_forward.89} parent=1 // pred_check
      _
    $region27: #{detection_net_forward.89} parent=1 // pred_check_branch
      %45 = sbr.rel (0) target = $region29
    $region28: #{detection_net_forward.89} parent=1 // pred_region
      %47 = dma.done [#allocation5], 16
    $region29: #{detection_net_forward.89} parent=1 // pred_fallthru
      _
    %v48 = vld [vmem:[%s0] sm:$0xff]
    %v49 = vld [vmem:[%s0 + $0x8] sm:$0xff]
    %v50 = vld [vmem:[#allocation2] sm:$0x1]
    %v51 = vld [vmem:[#allocation4] sm:$0x1]
    %52 = vadd.xlane.f32.xlu0 %v48
    %v53 = vpop.xlane.xlu0 %52
    %54 = vadd.xlane.f32.xlu0 %v49
    %v55 = vpop.xlane.xlu0 %54
    %v56 = vrcp.pop 128.0
    %v57 = vmul.f32 128.0, %v56
    %v58 = vsub.f32 1.0, %v57
    %v59 = vmul.f32 %v56, %v58
    %v60 = vadd.f32 %v56, %v59
    %vm61 = vweird.f32 %v56
    %v62 = vsel %vm61, %v56, %v60
    %v63 = vmul.f32 %v53, %v62
    %v64 = vmul.f32 %v55, %v62
    %v65 = vsub.f32 %v48, %v63
    %v66 = vsub.f32 %v49, %v64
    %v67 = vmul.f32 %v65, %v65
    %v68 = vmul.f32 %v66, %v66
    %69 = vadd.xlane.f32.xlu0 %v67
    %v70 = vpop.xlane.xlu0 %69
    %71 = vadd.xlane.f32.xlu0 %v68
    %v72 = vpop.xlane.xlu0 %71
    %v73 = vmul.f32 %v70, %v62
    %v74 = vmul.f32 %v72, %v62
    %v75 = vadd.f32 %v73, 1e-05
    %v76 = vadd.f32 %v74, 1e-05
    %v77 = vrsqrt.pop %v75
    %v78 = vmul.f32 %v77, %v75
    %v79 = vmul.f32 %v78, %v77
    %v80 = vmul.f32 0.5, %v79
    %v81 = vsub.f32 1.5, %v80
    %v82 = vmul.f32 %v77, %v81
    %vm83 = vweird.f32 %v75
    %vm84 = vweird.f32 %v77
    %vm85 = vmor %vm83, %vm84
    %v86 = vsel %vm85, %v77, %v82
    %v87 = vrsqrt.pop %v76
    %v88 = vmul.f32 %v87, %v76
    %v89 = vmul.f32 %v88, %v87
    %v90 = vmul.f32 0.5, %v89
    %v91 = vsub.f32 1.5, %v90
    %v92 = vmul.f32 %v87, %v91
    %vm93 = vweird.f32 %v76
    %vm94 = vweird.f32 %v87
    %vm95 = vmor %vm93, %vm94
    %v96 = vsel %vm95, %v87, %v92
    %v97 = vmul.f32 %v65, %v86
    %v98 = vmul.f32 %v66, %v96
    %v100 = vperm.slane %v50, 0
    %v102 = vmul.f32 %v97, %v100
    %v103 = vmul.f32 %v98, %v100
    %v105 = vperm.slane %v51, 0
    %v107 = vadd.f32 %v102, %v105
    %v108 = vadd.f32 %v103, %v105
    %v109 = vld [vmem:[%s3] sm:$0xff]
    %v110 = vld [vmem:[%s3 + $0x8] sm:$0xf]
    %v111 = vld [vmem:[%s3 + $0xc] sm:$0xff]
    %v112 = vld [vmem:[%s3 + $0x14] sm:$0xf]
    %v113 = vld [vmem:[%s3 + $0x18] sm:$0xff]
    %v114 = vld [vmem:[%s3 + $0x20] sm:$0xf]
    %v115 = vld [vmem:[%s3 + $0x24] sm:$0xff]
    %v116 = vld [vmem:[%s3 + $0x2c] sm:$0xf]
    %v117 = vld [vmem:[%s3 + $0x30] sm:$0xff]
    %v118 = vld [vmem:[%s3 + $0x38] sm:$0xf]
    %v119 = vld [vmem:[%s3 + $0x3c] sm:$0xff]
    %v120 = vld [vmem:[%s3 + $0x44] sm:$0xf]
    %v121 = vld [vmem:[%s3 + $0x48] sm:$0xff]
    %v122 = vld [vmem:[%s3 + $0x50] sm:$0xf]
    %v123 = vld [vmem:[%s3 + $0x54] sm:$0xff]
    %v124 = vld [vmem:[%s3 + $0x5c] sm:$0xf]
    %v125 = vld [vmem:[%s3 + $0x60] sm:$0xff]
    %v126 = vld [vmem:[%s3 + $0x68] sm:$0xf]
    %v127 = vld [vmem:[%s3 + $0x6c] sm:$0xff]
    %v128 = vld [vmem:[%s3 + $0x74] sm:$0xf]
    %v129 = vld [vmem:[%s3 + $0x78] sm:$0xff]
    %v130 = vld [vmem:[%s3 + $0x80] sm:$0xf]
    %v131 = vld [vmem:[%s3 + $0x84] sm:$0xff]
    %v132 = vld [vmem:[%s3 + $0x8c] sm:$0xf]
    %v133 = vld [vmem:[%s3 + $0x90] sm:$0xff]
    %v134 = vld [vmem:[%s3 + $0x98] sm:$0xf]
    %v135 = vld [vmem:[%s3 + $0x9c] sm:$0xff]
    %v136 = vld [vmem:[%s3 + $0xa4] sm:$0xf]
    %v137 = vld [vmem:[%s3 + $0xa8] sm:$0xff]
    %v138 = vld [vmem:[%s3 + $0xb0] sm:$0xf]
    %v139 = vld [vmem:[%s3 + $0xb4] sm:$0xff]
    %v140 = vld [vmem:[%s3 + $0xbc] sm:$0xf]
    %v141 = vld [vmem:[%s4] sm:$0x7]
    %v142 = vpack.c.bf16 %v108, %v107
    %v144 = vperm.slane %v141, 0
    %v145 = vperm.slane %v141, 1
    %v146 = vperm.slane %v141, 2
    %v182 = vunpack.c.l.b16 %v109
    %v183 = vunpack.c.h.b16 %v109
    %v184 = vunpack.c.l.b16 %v110
    %v185 = vunpack.c.l.b16 %v111
    %v186 = vunpack.c.h.b16 %v111
    %v187 = vunpack.c.l.b16 %v112
    %v188 = vunpack.c.l.b16 %v113
    %v189 = vunpack.c.h.b16 %v113
    %v190 = vunpack.c.l.b16 %v114
    %v191 = vunpack.c.l.b16 %v115
    %v192 = vunpack.c.h.b16 %v115
    %v193 = vunpack.c.l.b16 %v116
    %v194 = vunpack.c.l.b16 %v117
    %v195 = vunpack.c.h.b16 %v117
    %v196 = vunpack.c.l.b16 %v118
    %v197 = vunpack.c.l.b16 %v119
    %v198 = vunpack.c.h.b16 %v119
    %v199 = vunpack.c.l.b16 %v120
    %v200 = vunpack.c.l.b16 %v121
    %v201 = vunpack.c.h.b16 %v121
    %v202 = vunpack.c.l.b16 %v122
    %v203 = vunpack.c.l.b16 %v123
    %v204 = vunpack.c.h.b16 %v123
    %v205 = vunpack.c.l.b16 %v124
    %v206 = vunpack.c.l.b16 %v125
    %v207 = vunpack.c.h.b16 %v125
    %v208 = vunpack.c.l.b16 %v126
    %v209 = vunpack.c.l.b16 %v127
    %v210 = vunpack.c.h.b16 %v127
    %v211 = vunpack.c.l.b16 %v128
    %v212 = vunpack.c.l.b16 %v129
    %v213 = vunpack.c.h.b16 %v129
    %v214 = vunpack.c.l.b16 %v130
    %v215 = vunpack.c.l.b16 %v131
    %v216 = vunpack.c.h.b16 %v131
    %v217 = vunpack.c.l.b16 %v132
    %v218 = vunpack.c.l.b16 %v133
    %v219 = vunpack.c.h.b16 %v133
    %v220 = vunpack.c.l.b16 %v134
    %v221 = vunpack.c.l.b16 %v135
    %v222 = vunpack.c.h.b16 %v135
    %v223 = vunpack.c.l.b16 %v136
    %v224 = vunpack.c.l.b16 %v137
    %v225 = vunpack.c.h.b16 %v137
    %v226 = vunpack.c.l.b16 %v138
    %v227 = vunpack.c.l.b16 %v139
    %v228 = vunpack.c.h.b16 %v139
    %v229 = vunpack.c.l.b16 %v140
    %v230 = vpack.c.b16 %v185, %v182
    %v231 = vpack.c.b16 %v186, %v183
    %v232 = vpack.c.b16 %v187, %v184
    %v233 = vpack.c.b16 %v191, %v188
    %v234 = vpack.c.b16 %v192, %v189
    %v235 = vpack.c.b16 %v193, %v190
    %v236 = vpack.c.b16 %v197, %v194
    %v237 = vpack.c.b16 %v198, %v195
    %v238 = vpack.c.b16 %v199, %v196
    %v239 = vpack.c.b16 %v203, %v200
    %v240 = vpack.c.b16 %v204, %v201
    %v241 = vpack.c.b16 %v205, %v202
    %v242 = vpack.c.b16 %v209, %v206
    %v243 = vpack.c.b16 %v210, %v207
    %v244 = vpack.c.b16 %v211, %v208
    %v245 = vpack.c.b16 %v215, %v212
    %v246 = vpack.c.b16 %v216, %v213
    %v247 = vpack.c.b16 %v217, %v214
    %v248 = vpack.c.b16 %v221, %v218
    %v249 = vpack.c.b16 %v222, %v219
    %v250 = vpack.c.b16 %v223, %v220
    %v251 = vpack.c.b16 %v227, %v224
    %v252 = vpack.c.b16 %v228, %v225
    %v253 = vpack.c.b16 %v229, %v226
    %278 = vmatpush.bf16.msra.mxu0 %v251
    %279 = vmatpush.bf16.msra.mxu0 %v248
    %280 = vmatpush.bf16.msra.mxu0 %v245
    %281 = vmatpush.bf16.msra.mxu0 %v242
    %282 = vmatpush.bf16.msra.mxu0 %v239
    %283 = vmatpush.bf16.msra.mxu0 %v236
    %284 = vmatpush.bf16.msra.mxu0 %v233
    %285 = vmatpush.bf16.msra.mxu0 %v230
    %286 = vmatmul.bf16.gmra.mxu0 %v142
    %v287 = vpop.f32.mrf.mxu0
    %v288 = vadd.f32 %v144, %v287
    %v289 = vpop.f32.mrf.mxu0
    %v290 = vadd.f32 %v144, %v289
    %291 = vdwg.mxu0
    %292 = vmatpush.bf16.msra.mxu0 %v252
    %293 = vmatpush.bf16.msra.mxu0 %v249
    %294 = vmatpush.bf16.msra.mxu0 %v246
    %295 = vmatpush.bf16.msra.mxu0 %v243
    %296 = vmatpush.bf16.msra.mxu0 %v240
    %297 = vmatpush.bf16.msra.mxu0 %v237
    %298 = vmatpush.bf16.msra.mxu0 %v234
    %299 = vmatpush.bf16.msra.mxu0 %v231
    %300 = vmatmul.bf16.gmra.mxu0 %v142
    %v301 = vpop.f32.mrf.mxu0
    %v302 = vadd.f32 %v145, %v301
    %v303 = vpop.f32.mrf.mxu0
    %v304 = vadd.f32 %v145, %v303
    %305 = vdwg.mxu0
    %306 = vmatpush.bf16.msra.mxu0 %v253
    %307 = vmatpush.bf16.msra.mxu0 %v250
    %308 = vmatpush.bf16.msra.mxu0 %v247
    %309 = vmatpush.bf16.msra.mxu0 %v244
    %310 = vmatpush.bf16.msra.mxu0 %v241
    %311 = vmatpush.bf16.msra.mxu0 %v238
    %312 = vmatpush.bf16.msra.mxu0 %v235
    %313 = vmatpush.bf16.msra.mxu0 %v232
    %314 = vmatmul.bf16.gmra.mxu0 %v142
    %v315 = vpop.f32.mrf.mxu0
    %v316 = vadd.f32 %v146, %v315
    %v317 = vpop.f32.mrf.mxu0
    %v318 = vadd.f32 %v146, %v317
    %319 = vdwg.mxu0
    %320 = vst [vmem:[%s5] sm:$0xff] %v288
    %321 = vst [vmem:[%s5 + $0x8] sm:$0xff] %v302
    %322 = vst [vmem:[%s5 + $0x10] sm:$0xff] %v316
    %323 = vst [vmem:[%s5 + $0x18] sm:$0xff] %v290
    %324 = vst [vmem:[%s5 + $0x20] sm:$0xff] %v304
    %325 = vst [vmem:[%s5 + $0x28] sm:$0xff] %v318
    // Predicated region
    $region30: #{detection_net_forward.89} parent=1 // pred_check
      _
    $region31: #{detection_net_forward.89} parent=1 // pred_check_branch
      %327 = sbr.rel (0) target = $region33
    $region32: #{detection_net_forward.89} parent=1 // pred_region
      _
    $region33: #{detection_net_forward.89} parent=1 // pred_fallthru
      _
    // Predicated region
    $region34: #{detection_net_forward.89} parent=1 // pred_check
      _
    $region35: #{detection_net_forward.89} parent=1 // pred_check_branch
      %329 = sbr.rel (0) target = $region37
    $region36: #{detection_net_forward.89} parent=1 // pred_region
      _
    $region37: #{detection_net_forward.89} parent=1 // pred_fallthru
      _
    %330 = vsyncpa [#allocation3], 1
    %331 = vsyncpa [#allocation5], 1

// kernel: detection_net_forward.90
$region0: #{detection_net_forward.90}
  #allocation0 [shape = 'u32[]', space=smem, size = 0x4, offset = 0x4, fixed_abs, tag = 'smem constant byte address 0x4 - core index']
  #allocation1 [shape = 'u32[72,128]{1,0:T(1,128)}', space=vmem, size = 0x9000, scoped, tag = 'internal scratch']
  %s0 = inlined_call_operand.vmem [shape: f32[2,8,384], index: 0, kind: input, shape index: {}]
  %s1 = inlined_call_operand.vmem [shape: f32[2,1,8], index: 1, kind: input, shape index: {}]
  %s2 = inlined_call_operand.vmem [shape: f32[2,8,128], index: 2, kind: output, shape index: {}]
  %s3 = sld [smem:[#allocation0]]
  $region41: #{detection_net_forward.90} parent=0
    _
  %s5 = ssub.s32 1, %s3
  %s6 = scalar_select 0, %s5, %s3
  loop: start=0, step=1, limit=4
  $region2: #{detection_net_forward.90} parent=0 // loop_pre_header
    _
  $region3: #{detection_net_forward.90} parent=0 // loop_header
    %s8 = sphi 0, %s12
    %p9 = scmp.ge.s32.totalorder %s8, 4
    %s18 = sphi 0, %s20
    %s21 = sphi 0, %s18
    %s22 = sphi 0, %s21
    %s38 = sphi 0, %s22
    %s44 = sphi 0, %s46
    %s47 = sphi 0, %s44
    %s48 = sphi 0, %s47
    %s64 = sphi 0, %s48
    %s70 = sphi 0, %s72
    %s73 = sphi 0, %s70
    %s74 = sphi 0, %s73
    %s90 = sphi 0, %s74
  $region4: #{detection_net_forward.90} parent=0 // loop_header_branch
    %11 = sbr.rel (%p9) target = $region8
  $region5: #{detection_net_forward.90} parent=0 // loop_body
    %s13 = ssub.s32 %s8, 1
    %s14 = ssub.s32 %s8, 2
    %s15 = sadd.s32 %s8, 1
    %s16 = ssub.s32 %s8, %s15
    %p17 = scmp.eq.s32.totalorder %s16, 0
    %s19 = sadd.s32 %s18, 1
    %s20 = scalar_select %p17, %s18, %s19
    %p23 = pneg %p17
    %p24 = scmp.eq.s32.totalorder %s8, 1
    %p25 = por %p23, %p24
    %p26 = scmp.ne.s32.totalorder %s18, %s21
    %p27 = scmp.eq.s32.totalorder %s8, 0
    %p28 = por %p26, %p27
    %p29 = scmp.ne.s32.totalorder %s18, %s21
    %p30 = scmp.eq.s32.totalorder %s13, 1
    %p31 = por %p29, %p30
    %p32 = scmp.ne.s32.totalorder %s21, %s22
    %p33 = scmp.eq.s32.totalorder %s13, 0
    %p34 = por %p32, %p33
    %p35 = scmp.ne.s32.totalorder %s21, %s22
    %p36 = scmp.eq.s32.totalorder %s14, 1
    %p37 = por %p35, %p36
    %p39 = scmp.ne.s32.totalorder %s22, %s38
    %p40 = scmp.eq.s32.totalorder %s14, 0
    %p41 = por %p39, %p40
    %s42 = ssub.s32 %s8, %s15
    %p43 = scmp.eq.s32.totalorder %s42, 0
    %s45 = sadd.s32 %s44, 1
    %s46 = scalar_select %p43, %s44, %s45
    %p49 = pneg %p43
    %p50 = scmp.eq.s32.totalorder %s8, 1
    %p51 = por %p49, %p50
    %p52 = scmp.ne.s32.totalorder %s44, %s47
    %p53 = scmp.eq.s32.totalorder %s8, 0
    %p54 = por %p52, %p53
    %p55 = scmp.ne.s32.totalorder %s44, %s47
    %p56 = scmp.eq.s32.totalorder %s13, 1
    %p57 = por %p55, %p56
    %p58 = scmp.ne.s32.totalorder %s47, %s48
    %p59 = scmp.eq.s32.totalorder %s13, 0
    %p60 = por %p58, %p59
    %p61 = scmp.ne.s32.totalorder %s47, %s48
    %p62 = scmp.eq.s32.totalorder %s14, 1
    %p63 = por %p61, %p62
    %p65 = scmp.ne.s32.totalorder %s48, %s64
    %p66 = scmp.eq.s32.totalorder %s14, 0
    %p67 = por %p65, %p66
    %s68 = ssub.s32 %s8, %s15
    %p69 = scmp.eq.s32.totalorder %s68, 0
    %s71 = sadd.s32 %s70, 1
    %s72 = scalar_select %p69, %s70, %s71
    %p75 = pneg %p69
    %p76 = scmp.eq.s32.totalorder %s8, 1
    %p77 = por %p75, %p76
    %p78 = scmp.ne.s32.totalorder %s70, %s73
    %p79 = scmp.eq.s32.totalorder %s8, 0
    %p80 = por %p78, %p79
    %p81 = scmp.ne.s32.totalorder %s70, %s73
    %p82 = scmp.eq.s32.totalorder %s13, 1
    %p83 = por %p81, %p82
    %p84 = scmp.ne.s32.totalorder %s73, %s74
    %p85 = scmp.eq.s32.totalorder %s13, 0
    %p86 = por %p84, %p85
    %p87 = scmp.ne.s32.totalorder %s73, %s74
    %p88 = scmp.eq.s32.totalorder %s14, 1
    %p89 = por %p87, %p88
    %p91 = scmp.ne.s32.totalorder %s74, %s90
    %p92 = scmp.eq.s32.totalorder %s14, 0
    %p93 = por %p91, %p92
    %p94 = scmp.le.s32.totalorder 1, %s8
    %p95 = scmp.lt.s32.totalorder %s8, 3
    %p96 = pnand %p94, %p95
    %p97 = pneg %p96
    // Predicated region
    $region9: #{detection_net_forward.90} parent=5 // pred_check
      _
    $region10: #{detection_net_forward.90} parent=5 // pred_check_branch
      %99 = sbr.rel (%p96) target = $region12
    $region11: #{detection_net_forward.90} parent=5 // pred_region
      %s100 = ssub.s32 %s8, 1
    $region12: #{detection_net_forward.90} parent=5 // pred_fallthru
      _
    %p101 = scmp.lt.s32.totalorder %s8, 2
    // Predicated region
    $region13: #{detection_net_forward.90} parent=5 // pred_check
      %p102 = pneg %p101
    $region14: #{detection_net_forward.90} parent=5 // pred_check_branch
      %104 = sbr.rel (%p102) target = $region16
    $region15: #{detection_net_forward.90} parent=5 // pred_region
      // Predicated region
      $region17: #{detection_net_forward.90} parent=15 // pred_check
        %p105 = pneg %p28
      $region18: #{detection_net_forward.90} parent=15 // pred_check_branch
        %107 = sbr.rel (%p105) target = $region20
      $region19: #{detection_net_forward.90} parent=15 // pred_region
        %p108 = scmp.lt.s32.totalorder %s8, 1
        %s109 = scalar_select %p108, %s8, 1
        %s110 = smul.addr %s109, 3
        %s111 = smul.addr %s110, 8
        %s112 = scalar_lea.vmem %s0, %s111
      $region20: #{detection_net_forward.90} parent=15 // pred_fallthru
        _
      // Predicated region
      $region21: #{detection_net_forward.90} parent=15 // pred_check
        %p113 = pneg %p54
      $region22: #{detection_net_forward.90} parent=15 // pred_check_branch
        %115 = sbr.rel (%p113) target = $region24
      $region23: #{detection_net_forward.90} parent=15 // pred_region
        %p116 = scmp.lt.s32.totalorder %s8, 1
        %s117 = scalar_select %p116, %s8, 1
        %s118 = scalar_lea.vmem %s1, %s117
      $region24: #{detection_net_forward.90} parent=15 // pred_fallthru
        _
    $region16: #{detection_net_forward.90} parent=5 // pred_fallthru
      _
    %p119 = scmp.le.s32.totalorder 1, %s8
    %p120 = scmp.lt.s32.totalorder %s8, 3
    %p121 = pnand %p119, %p120
    %p122 = pneg %p121
    // Predicated region
    $region25: #{detection_net_forward.90} parent=5 // pred_check
      _
    $region26: #{detection_net_forward.90} parent=5 // pred_check_branch
      %124 = sbr.rel (%p121) target = $region28
    $region27: #{detection_net_forward.90} parent=5 // pred_region
      %s125 = ssub.s32 %s8, 1
      %p126 = scmp.lt.s32.totalorder %s13, 1
      %s127 = scalar_select %p126, %s13, 1
      %s128 = smul.addr %s127, 3
      %s129 = smul.addr %s128, 8
      %s130 = scalar_lea.vmem %s0, %s129
      %p131 = pneg %p34
      %p132 = pneg %p31
      %p133 = scmp.lt.s32.totalorder %s13, 1
      %s134 = scalar_select %p133, %s13, 1
      %s135 = scalar_lea.vmem %s1, %s134
      %p136 = pneg %p60
      %p137 = pneg %p57
      %p138 = pneg %p86
      %p139 = pneg %p83
      %p140 = scmp.lt.s32.totalorder %s13, 1
      %s141 = scalar_select %p140, %s13, 1
      %s142 = smul.addr %s141, 8
      %s143 = scalar_lea.vmem %s2, %s142
      %p144 = scmp.lt.s32.totalorder %s13, 1
      %s145 = scalar_select %p144, %s13, 1
      %s146 = smul.addr %s145, 3
      %s147 = smul.addr %s146, 8
      %s148 = scalar_lea.vmem %s0, %s147
      %p149 = scmp.lt.s32.totalorder %s13, 1
      %s150 = scalar_select %p149, %s13, 1
      %s151 = scalar_lea.vmem %s1, %s150
      %p152 = scmp.lt.s32.totalorder %s13, 1
      %s153 = scalar_select %p152, %s13, 1
      %s154 = smul.addr %s153, 8
      %s155 = scalar_lea.vmem %s2, %s154
      %v157 = vld [vmem:[%s148] sm:$0xff]
      %v158 = vld [vmem:[%s148 + $0x8] sm:$0xff]
      %v159 = vld [vmem:[%s148 + $0x10] sm:$0xff]
      %v160 = vld [vmem:[%s151] sm:$0x1]
      %v161 = vpack.c.bf16 %v157, %v157
      %v162 = vpack.c.bf16 %v158, %v158
      %v163 = vpack.c.bf16 %v159, %v159
      %vm164 = vcmask 261120
      %v166 = vsel %vm164, %v161, 0
      %v169 = vsel %vm164, %v162, 0
      %171 = vmatpush.bf16.xpose.msra.mxu0 0
      %172 = vmatpush.bf16.xpose.msra.mxu0 0
      %173 = vmatpush.bf16.xpose.msra.mxu0 0
      %174 = vmatpush.bf16.xpose.msra.mxu0 0
      %175 = vmatpush.bf16.xpose.msra.mxu0 0
      %176 = vmatpush.bf16.xpose.msra.mxu0 0
      %177 = vmatpush.bf16.xpose.msra.mxu0 0
      %178 = vmatpush.bf16.xpose.msra.mxu0 %v169
      %179 = vmatmul.bf16.gmra.mxu0 %v166
      %v180 = vpop.f32.mrf.mxu0
      %v181 = vadd.f32 0.0, %v180
      %v182 = vpop.f32.mrf.mxu0
      %183 = vdwg.mxu0
      %v184 = vmul.f32 %v181, 0.17677669
      %v186 = vperm.slane %v160, 0
      %v188 = vadd.f32 %v184, %v186
      %vm189 = vcmask 64512
      %v190 = vsel %vm189, %v188, -inf
      %191 = vmax.xlane.f32.xlu0 %v190
      %v192 = vpop.xlane.xlu0 %191
      %v193 = vsub.f32 %v188, %v192
      %v194 = vmul.f32 %v193, 1.442695
      %v195 = vpow.pop %v194
      %v196 = vsel %vm189, %v195, 0.0
      %197 = vadd.xlane.f32.xlu0 %v196
      %v198 = vpop.xlane.xlu0 %197
      %v199 = vrcp.pop %v198
      %v200 = vmul.f32 %v195, %v199
      %v201 = vpack.c.bf16 %v200, %v200
      %v203 = vsel %vm189, %v201, 0
      %vm205 = vcmask 1043456
      %v207 = vsel %vm205, %v163, 0
      %209 = vmatpush.bf16.msra.mxu0 0
      %210 = vmatpush.bf16.msra.mxu0 0
      %211 = vmatpush.bf16.msra.mxu0 0
      %212 = vmatpush.bf16.msra.mxu0 0
      %213 = vmatpush.bf16.msra.mxu0 0
      %214 = vmatpush.bf16.msra.mxu0 0
      %215 = vmatpush.bf16.msra.mxu0 0
      %216 = vmatpush.bf16.msra.mxu0 %v207
      %217 = vmatmul.bf16.gmra.mxu0 %v203
      %v218 = vpop.f32.mrf.mxu0
      %v219 = vadd.f32 0.0, %v218
      %v220 = vpop.f32.mrf.mxu0
      %221 = vdwg.mxu0
      %223 = vrot.lane.b32.xlu0 %v161, 96
      %v224 = vpop.permute.xlu0 %223
      %226 = vrot.lane.b32.xlu0 %v162, 96
      %v227 = vpop.permute.xlu0 %226
      %v229 = vsel %vm164, %v224, 0
      %v232 = vsel %vm164, %v227, 0
      %234 = vmatpush.bf16.xpose.msra.mxu0 0
      %235 = vmatpush.bf16.xpose.msra.mxu0 0
      %236 = vmatpush.bf16.xpose.msra.mxu0 0
      %237 = vmatpush.bf16.xpose.msra.mxu0 0
      %238 = vmatpush.bf16.xpose.msra.mxu0 0
      %239 = vmatpush.bf16.xpose.msra.mxu0 0
      %240 = vmatpush.bf16.xpose.msra.mxu0 0
      %241 = vmatpush.bf16.xpose.msra.mxu0 %v232
      %242 = vmatmul.bf16.gmra.mxu0 %v229
      %v243 = vpop.f32.mrf.mxu0
      %v244 = vadd.f32 0.0, %v243
      %v245 = vpop.f32.mrf.mxu0
      %246 = vdwg.mxu0
      %v247 = vmul.f32 %v244, 0.17677669
      %v248 = vadd.f32 %v247, %v186
      %v249 = vsel %vm189, %v248, -inf
      %250 = vmax.xlane.f32.xlu0 %v249
      %v251 = vpop.xlane.xlu0 %250
      %v252 = vsub.f32 %v248, %v251
      %v253 = vmul.f32 %v252, 1.442695
      %v254 = vpow.pop %v253
      %v255 = vsel %vm189, %v254, 0.0
      %256 = vadd.xlane.f32.xlu0 %v255
      %v257 = vpop.xlane.xlu0 %256
      %v258 = vrcp.pop %v257
      %v259 = vmul.f32 %v254, %v258
      %v260 = vpack.c.bf16 %v259, %v259
      %262 = vrot.lane.b32.xlu0 %v163, 96
      %v263 = vpop.permute.xlu0 %262
      %v265 = vsel %vm189, %v260, 0
      %v268 = vsel %vm205, %v263, 0
      %270 = vmatpush.bf16.msra.mxu0 0
      %271 = vmatpush.bf16.msra.mxu0 0
      %272 = vmatpush.bf16.msra.mxu0 0
      %273 = vmatpush.bf16.msra.mxu0 0
      %274 = vmatpush.bf16.msra.mxu0 0
      %275 = vmatpush.bf16.msra.mxu0 0
      %276 = vmatpush.bf16.msra.mxu0 0
      %277 = vmatpush.bf16.msra.mxu0 %v268
      %278 = vmatmul.bf16.gmra.mxu0 %v265
      %v279 = vpop.f32.mrf.mxu0
      %v280 = vadd.f32 0.0, %v279
      %v281 = vpop.f32.mrf.mxu0
      %282 = vdwg.mxu0
      %283 = vrot.lane.b32.xlu0 %v161, 64
      %v284 = vpop.permute.xlu0 %283
      %285 = vrot.lane.b32.xlu0 %v162, 64
      %v286 = vpop.permute.xlu0 %285
      %v288 = vsel %vm164, %v284, 0
      %v291 = vsel %vm164, %v286, 0
      %293 = vmatpush.bf16.xpose.msra.mxu0 0
      %294 = vmatpush.bf16.xpose.msra.mxu0 0
      %295 = vmatpush.bf16.xpose.msra.mxu0 0
      %296 = vmatpush.bf16.xpose.msra.mxu0 0
      %297 = vmatpush.bf16.xpose.msra.mxu0 0
      %298 = vmatpush.bf16.xpose.msra.mxu0 0
      %299 = vmatpush.bf16.xpose.msra.mxu0 0
      %300 = vmatpush.bf16.xpose.msra.mxu0 %v291
      %301 = vmatmul.bf16.gmra.mxu0 %v288
      %v302 = vpop.f32.mrf.mxu0
      %v303 = vadd.f32 0.0, %v302
      %v304 = vpop.f32.mrf.mxu0
      %305 = vdwg.mxu0
      %v306 = vmul.f32 %v303, 0.17677669
      %v307 = vadd.f32 %v306, %v186
      %v308 = vsel %vm189, %v307, -inf
      %309 = vmax.xlane.f32.xlu0 %v308
      %v310 = vpop.xlane.xlu0 %309
      %v311 = vsub.f32 %v307, %v310
      %v312 = vmul.f32 %v311, 1.442695
      %v313 = vpow.pop %v312
      %v314 = vsel %vm189, %v313, 0.0
      %315 = vadd.xlane.f32.xlu0 %v314
      %v316 = vpop.xlane.xlu0 %315
      %v317 = vrcp.pop %v316
      %v318 = vmul.f32 %v313, %v317
      %v319 = vpack.c.bf16 %v318, %v318
      %320 = vrot.lane.b32.xlu0 %v163, 64
      %v321 = vpop.permute.xlu0 %320
      %v323 = vsel %vm189, %v319, 0
      %v326 = vsel %vm205, %v321, 0
      %328 = vmatpush.bf16.msra.mxu0 0
      %329 = vmatpush.bf16.msra.mxu0 0
      %330 = vmatpush.bf16.msra.mxu0 0
      %331 = vmatpush.bf16.msra.mxu0 0
      %332 = vmatpush.bf16.msra.mxu0 0
      %333 = vmatpush.bf16.msra.mxu0 0
      %334 = vmatpush.bf16.msra.mxu0 0
      %335 = vmatpush.bf16.msra.mxu0 %v326
      %336 = vmatmul.bf16.gmra.mxu0 %v323
      %v337 = vpop.f32.mrf.mxu0
      %v338 = vadd.f32 0.0, %v337
      %v339 = vpop.f32.mrf.mxu0
      %340 = vdwg.mxu0
      %341 = vrot.lane.b32.xlu0 %v161, 32
      %v342 = vpop.permute.xlu0 %341
      %343 = vrot.lane.b32.xlu0 %v162, 32
      %v344 = vpop.permute.xlu0 %343
      %v346 = vsel %vm164, %v342, 0
      %v349 = vsel %vm164, %v344, 0
      %351 = vmatpush.bf16.xpose.msra.mxu0 0
      %352 = vmatpush.bf16.xpose.msra.mxu0 0
      %353 = vmatpush.bf16.xpose.msra.mxu0 0
      %354 = vmatpush.bf16.xpose.msra.mxu0 0
      %355 = vmatpush.bf16.xpose.msra.mxu0 0
      %356 = vmatpush.bf16.xpose.msra.mxu0 0
      %357 = vmatpush.bf16.xpose.msra.mxu0 0
      %358 = vmatpush.bf16.xpose.msra.mxu0 %v349
      %359 = vmatmul.bf16.gmra.mxu0 %v346
      %v360 = vpop.f32.mrf.mxu0
      %v361 = vadd.f32 0.0, %v360
      %v362 = vpop.f32.mrf.mxu0
      %363 = vdwg.mxu0
      %v364 = vmul.f32 %v361, 0.17677669
      %v365 = vadd.f32 %v364, %v186
      %v366 = vsel %vm189, %v365, -inf
      %367 = vmax.xlane.f32.xlu0 %v366
      %v368 = vpop.xlane.xlu0 %367
      %v369 = vsub.f32 %v365, %v368
      %v370 = vmul.f32 %v369, 1.442695
      %v371 = vpow.pop %v370
      %v372 = vsel %vm189, %v371, 0.0
      %373 = vadd.xlane.f32.xlu0 %v372
      %v374 = vpop.xlane.xlu0 %373
      %v375 = vrcp.pop %v374
      %v376 = vmul.f32 %v371, %v375
      %v377 = vpack.c.bf16 %v376, %v376
      %378 = vrot.lane.b32.xlu0 %v163, 32
      %v379 = vpop.permute.xlu0 %378
      %v381 = vsel %vm189, %v377, 0
      %v384 = vsel %vm205, %v379, 0
      %386 = vmatpush.bf16.msra.mxu0 0
      %387 = vmatpush.bf16.msra.mxu0 0
      %388 = vmatpush.bf16.msra.mxu0 0
      %389 = vmatpush.bf16.msra.mxu0 0
      %390 = vmatpush.bf16.msra.mxu0 0
      %391 = vmatpush.bf16.msra.mxu0 0
      %392 = vmatpush.bf16.msra.mxu0 0
      %393 = vmatpush.bf16.msra.mxu0 %v384
      %394 = vmatmul.bf16.gmra.mxu0 %v381
      %v395 = vpop.f32.mrf.mxu0
      %v396 = vadd.f32 0.0, %v395
      %v397 = vpop.f32.mrf.mxu0
      %398 = vdwg.mxu0
      %400 = vrot.lane.b32.xlu0 %v280, 32
      %v401 = vpop.permute.xlu0 %400
      %404 = vrot.lane.b32.xlu0 %v338, 64
      %v405 = vpop.permute.xlu0 %404
      %408 = vrot.lane.b32.xlu0 %v396, 96
      %v409 = vpop.permute.xlu0 %408
      %v411 = vsel %vm164, %v219, %v401
      %vm412 = vcmask 523264
      %v413 = vsel %vm412, %v411, %v405
      %vm414 = vcmask 785408
      %v415 = vsel %vm414, %v413, %v409
      %416 = vst [vmem:[%s155] sm:$0xff] %v415
      %p417 = scmp.lt.s32.totalorder %s13, 1
      %s418 = scalar_select %p417, %s13, 1
      %s419 = smul.addr %s418, 8
      %s420 = scalar_lea.vmem %s2, %s419
      // Predicated region
      $region29: #{detection_net_forward.90} parent=27 // pred_check
        %p421 = pneg %p83
      $region30: #{detection_net_forward.90} parent=27 // pred_check_branch
        %423 = sbr.rel (%p421) target = $region32
      $region31: #{detection_net_forward.90} parent=27 // pred_region
        _
      $region32: #{detection_net_forward.90} parent=27 // pred_fallthru
        _
    $region28: #{detection_net_forward.90} parent=5 // pred_fallthru
      _
    %p424 = scmp.le.s32.totalorder 2, %s8
    // Predicated region
    $region33: #{detection_net_forward.90} parent=5 // pred_check
      %p425 = pneg %p424
    $region34: #{detection_net_forward.90} parent=5 // pred_check_branch
      %427 = sbr.rel (%p425) target = $region36
    $region35: #{detection_net_forward.90} parent=5 // pred_region
      %s428 = ssub.s32 %s8, 2
      // Predicated region
      $region37: #{detection_net_forward.90} parent=35 // pred_check
        %p429 = pneg %p89
      $region38: #{detection_net_forward.90} parent=35 // pred_check_branch
        %431 = sbr.rel (%p429) target = $region40
      $region39: #{detection_net_forward.90} parent=35 // pred_region
        %p432 = scmp.lt.s32.totalorder %s14, 1
        %s433 = scalar_select %p432, %s14, 1
        %s434 = smul.addr %s433, 8
        %s435 = scalar_lea.vmem %s2, %s434
      $region40: #{detection_net_forward.90} parent=35 // pred_fallthru
        _
    $region36: #{detection_net_forward.90} parent=5 // pred_fallthru
      _
  $region6: #{detection_net_forward.90} parent=0 // loop_footer
    %s12 = sadd.s32 1, %s8
  $region7: #{detection_net_forward.90} parent=0 // loop_footer_branch
    %7 = sbr.rel target = $region3
  $region8: #{detection_net_forward.90} parent=0 // loop_exit
    _

// kernel: detection_net_forward.91
$region0: #{detection_net_forward.91}
  #allocation0 [shape = 'u32[]', space=smem, size = 0x4, offset = 0x4, fixed_abs, tag = 'smem constant byte address 0x4 - core index']
  #allocation1 [shape = 'u32[72,128]{1,0:T(1,128)}', space=vmem, size = 0x9000, scoped, tag = 'internal scratch']
  %s0 = inlined_call_operand.vmem [shape: f32[16,128], index: 0, kind: input, shape index: {}]
  %s1 = inlined_call_operand.hbm [shape: bf16[128,128], index: 1, kind: input, shape index: {}]
  %s2 = inlined_call_operand.hbm [shape: f32[1,128], index: 2, kind: input, shape index: {}]
  %s3 = inlined_call_operand.vmem [shape: f32[16,128], index: 3, kind: input, shape index: {}]
  %s4 = inlined_call_operand.vmem [shape: f32[16,128], index: 4, kind: output, shape index: {}]
  %s5 = sld [smem:[#allocation0]]
  $region34: #{detection_net_forward.91} parent=0
    _
  %s7 = ssub.s32 1, %s5
  %s8 = scalar_select 0, %s7, %s5
  $region1: #{detection_net_forward.91} parent=0
    #allocation2 [shape = 'u8[32768]{0}', space=vmem, size = 0x8000, scoped, tag = 'input window, operand 1, single buffered']
    #allocation3 [shape = 's32[1]{0}', space=sflag, size = 0x4, scoped, tag = 'scoped memory for detection_net_forward.91']
    #allocation4 [shape = 'u8[512]{0}', space=vmem, size = 0x400, scoped, tag = 'input window, operand 2, single buffered']
    #allocation5 [shape = 's32[1]{0}', space=sflag, size = 0x4, scoped, tag = 'scoped memory for detection_net_forward.91']
    %9 = vsyncpa [#allocation3], 0
    %10 = vsyncpa [#allocation5], 0
    // Predicated region
    $region2: #{detection_net_forward.91} parent=1 // pred_check
      _
    $region3: #{detection_net_forward.91} parent=1 // pred_check_branch
      %12 = sbr.rel (0) target = $region5
    $region4: #{detection_net_forward.91} parent=1 // pred_region
      _
    $region5: #{detection_net_forward.91} parent=1 // pred_fallthru
      _
    // Predicated region
    $region6: #{detection_net_forward.91} parent=1 // pred_check
      _
    $region7: #{detection_net_forward.91} parent=1 // pred_check_branch
      %14 = sbr.rel (0) target = $region9
    $region8: #{detection_net_forward.91} parent=1 // pred_region
      %16 = vsyncadd [#allocation3], 0
      %s17 = sshll.u32 %s1, 4
      %s18 = int_to_ptr.hbm [resolvable:$true] %s17
      %s19 = sshll.u32 [#allocation2], 4
      %s20 = int_to_ptr.vmem [resolvable:$true] %s19
      %25 = dma.hbm_to_vmem [thread:$0]  %s18, 1024, %s20, [#allocation3], 64, 64, 4
    $region9: #{detection_net_forward.91} parent=1 // pred_fallthru
      _
    // Predicated region
    $region10: #{detection_net_forward.91} parent=1 // pred_check
      _
    $region11: #{detection_net_forward.91} parent=1 // pred_check_branch
      %27 = sbr.rel (0) target = $region13
    $region12: #{detection_net_forward.91} parent=1 // pred_region
      %29 = vsyncadd [#allocation5], 0
      %s31 = sshll.u32 %s2, 4
      %s32 = int_to_ptr.hbm [resolvable:$true] %s31
      %s33 = sshll.u32 [#allocation4], 4
      %s34 = int_to_ptr.vmem [resolvable:$true] %s33
      %36 = dma.hbm_to_vmem [thread:$0]  %s32, 16, %s34, [#allocation5]
    $region13: #{detection_net_forward.91} parent=1 // pred_fallthru
      _
    // Predicated region
    $region14: #{detection_net_forward.91} parent=1 // pred_check
      _
    $region15: #{detection_net_forward.91} parent=1 // pred_check_branch
      %38 = sbr.rel (0) target = $region17
    $region16: #{detection_net_forward.91} parent=1 // pred_region
      _
    $region17: #{detection_net_forward.91} parent=1 // pred_fallthru
      _
    // Predicated region
    $region18: #{detection_net_forward.91} parent=1 // pred_check
      _
    $region19: #{detection_net_forward.91} parent=1 // pred_check_branch
      %40 = sbr.rel (0) target = $region21
    $region20: #{detection_net_forward.91} parent=1 // pred_region
      %42 = dma.done [#allocation3], 1024
    $region21: #{detection_net_forward.91} parent=1 // pred_fallthru
      _
    // Predicated region
    $region22: #{detection_net_forward.91} parent=1 // pred_check
      _
    $region23: #{detection_net_forward.91} parent=1 // pred_check_branch
      %44 = sbr.rel (0) target = $region25
    $region24: #{detection_net_forward.91} parent=1 // pred_region
      %46 = dma.done [#allocation5], 16
    $region25: #{detection_net_forward.91} parent=1 // pred_fallthru
      _
    %v47 = vld [vmem:[%s0] sm:$0xff]
    %v48 = vld [vmem:[%s0 + $0x8] sm:$0xff]
    %v49 = vld [vmem:[#allocation2] sm:$0xf]
    %v50 = vld [vmem:[#allocation2 + $0x4] sm:$0xf]
    %v51 = vld [vmem:[#allocation2 + $0x8] sm:$0xf]
    %v52 = vld [vmem:[#allocation2 + $0xc] sm:$0xf]
    %v53 = vld [vmem:[#allocation2 + $0x10] sm:$0xf]
    %v54 = vld [vmem:[#allocation2 + $0x14] sm:$0xf]
    %v55 = vld [vmem:[#allocation2 + $0x18] sm:$0xf]
    %v56 = vld [vmem:[#allocation2 + $0x1c] sm:$0xf]
    %v57 = vld [vmem:[#allocation2 + $0x20] sm:$0xf]
    %v58 = vld [vmem:[#allocation2 + $0x24] sm:$0xf]
    %v59 = vld [vmem:[#allocation2 + $0x28] sm:$0xf]
    %v60 = vld [vmem:[#allocation2 + $0x2c] sm:$0xf]
    %v61 = vld [vmem:[#allocation2 + $0x30] sm:$0xf]
    %v62 = vld [vmem:[#allocation2 + $0x34] sm:$0xf]
    %v63 = vld [vmem:[#allocation2 + $0x38] sm:$0xf]
    %v64 = vld [vmem:[#allocation2 + $0x3c] sm:$0xf]
    %v65 = vld [vmem:[#allocation4] sm:$0x1]
    %v66 = vpack.c.bf16 %v48, %v47
    %v68 = vperm.slane %v65, 0
    %v86 = vunpack.c.l.b16 %v49
    %v87 = vunpack.c.l.b16 %v50
    %v88 = vunpack.c.l.b16 %v51
    %v89 = vunpack.c.l.b16 %v52
    %v90 = vunpack.c.l.b16 %v53
    %v91 = vunpack.c.l.b16 %v54
    %v92 = vunpack.c.l.b16 %v55
    %v93 = vunpack.c.l.b16 %v56
    %v94 = vunpack.c.l.b16 %v57
    %v95 = vunpack.c.l.b16 %v58
    %v96 = vunpack.c.l.b16 %v59
    %v97 = vunpack.c.l.b16 %v60
    %v98 = vunpack.c.l.b16 %v61
    %v99 = vunpack.c.l.b16 %v62
    %v100 = vunpack.c.l.b16 %v63
    %v101 = vunpack.c.l.b16 %v64
    %v102 = vpack.c.b16 %v87, %v86
    %v103 = vpack.c.b16 %v89, %v88
    %v104 = vpack.c.b16 %v91, %v90
    %v105 = vpack.c.b16 %v93, %v92
    %v106 = vpack.c.b16 %v95, %v94
    %v107 = vpack.c.b16 %v97, %v96
    %v108 = vpack.c.b16 %v99, %v98
    %v109 = vpack.c.b16 %v101, %v100
    %118 = vmatpush.bf16.msra.mxu0 %v109
    %119 = vmatpush.bf16.msra.mxu0 %v108
    %120 = vmatpush.bf16.msra.mxu0 %v107
    %121 = vmatpush.bf16.msra.mxu0 %v106
    %122 = vmatpush.bf16.msra.mxu0 %v105
    %123 = vmatpush.bf16.msra.mxu0 %v104
    %124 = vmatpush.bf16.msra.mxu0 %v103
    %125 = vmatpush.bf16.msra.mxu0 %v102
    %126 = vmatmul.bf16.gmra.mxu0 %v66
    %v127 = vpop.f32.mrf.mxu0
    %v128 = vadd.f32 %v68, %v127
    %v129 = vpop.f32.mrf.mxu0
    %v130 = vadd.f32 %v68, %v129
    %131 = vdwg.mxu0
    %v132 = vld [vmem:[%s3] sm:$0xff]
    %v133 = vld [vmem:[%s3 + $0x8] sm:$0xff]
    %v134 = vadd.f32 %v128, %v132
    %v135 = vadd.f32 %v130, %v133
    %136 = vst [vmem:[%s4] sm:$0xff] %v134
    %137 = vst [vmem:[%s4 + $0x8] sm:$0xff] %v135
    // Predicated region
    $region26: #{detection_net_forward.91} parent=1 // pred_check
      _
    $region27: #{detection_net_forward.91} parent=1 // pred_check_branch
      %139 = sbr.rel (0) target = $region29
    $region28: #{detection_net_forward.91} parent=1 // pred_region
      _
    $region29: #{detection_net_forward.91} parent=1 // pred_fallthru
      _
    // Predicated region
    $region30: #{detection_net_forward.91} parent=1 // pred_check
      _
    $region31: #{detection_net_forward.91} parent=1 // pred_check_branch
      %141 = sbr.rel (0) target = $region33
    $region32: #{detection_net_forward.91} parent=1 // pred_region
      _
    $region33: #{detection_net_forward.91} parent=1 // pred_fallthru
      _
    %142 = vsyncpa [#allocation3], 1
    %143 = vsyncpa [#allocation5], 1

// kernel: detection_net_forward.92
$region0: #{detection_net_forward.92}
  #allocation0 [shape = 'u32[]', space=smem, size = 0x4, offset = 0x4, fixed_abs, tag = 'smem constant byte address 0x4 - core index']
  #allocation1 [shape = 'u32[72,128]{1,0:T(1,128)}', space=vmem, size = 0x9000, scoped, tag = 'internal scratch']
  %s0 = inlined_call_operand.vmem [shape: f32[16,128], index: 0, kind: input, shape index: {}]
  %s1 = inlined_call_operand.hbm [shape: f32[1,128], index: 1, kind: input, shape index: {}]
  %s2 = inlined_call_operand.hbm [shape: f32[1,128], index: 2, kind: input, shape index: {}]
  %s3 = inlined_call_operand.vmem [shape: bf16[128,256], index: 3, kind: input, shape index: {}]
  %s4 = inlined_call_operand.hbm [shape: f32[1,256], index: 4, kind: input, shape index: {}]
  %s5 = inlined_call_operand.vmem [shape: f32[16,128], index: 5, kind: output, shape index: {}]
  %s6 = sld [smem:[#allocation0]]
  $region42: #{detection_net_forward.92} parent=0
    _
  %s8 = ssub.s32 1, %s6
  %s9 = scalar_select 0, %s8, %s6
  $region1: #{detection_net_forward.92} parent=0
    #allocation2 [shape = 'u8[512]{0}', space=vmem, size = 0x400, scoped, tag = 'input window, operand 1, single buffered']
    #allocation3 [shape = 's32[1]{0}', space=sflag, size = 0x4, scoped, tag = 'scoped memory for detection_net_forward.92']
    #allocation4 [shape = 'u8[512]{0}', space=vmem, size = 0x400, scoped, tag = 'input window, operand 2, single buffered']
    #allocation5 [shape = 's32[1]{0}', space=sflag, size = 0x4, scoped, tag = 'scoped memory for detection_net_forward.92']
    #allocation6 [shape = 'u8[1024]{0}', space=vmem, size = 0x400, scoped, tag = 'input window, operand 4, single buffered']
    %10 = vsyncpa [#allocation3], 0
    %11 = vsyncpa [#allocation5], 0
    // Predicated region
    $region2: #{detection_net_forward.92} parent=1 // pred_check
      _
    $region3: #{detection_net_forward.92} parent=1 // pred_check_branch
      %13 = sbr.rel (0) target = $region5
    $region4: #{detection_net_forward.92} parent=1 // pred_region
      _
    $region5: #{detection_net_forward.92} parent=1 // pred_fallthru
      _
    // Predicated region
    $region6: #{detection_net_forward.92} parent=1 // pred_check
      _
    $region7: #{detection_net_forward.92} parent=1 // pred_check_branch
      %15 = sbr.rel (0) target = $region9
    $region8: #{detection_net_forward.92} parent=1 // pred_region
      %17 = vsyncadd [#allocation3], 0
      %s19 = sshll.u32 %s1, 4
      %s20 = int_to_ptr.hbm [resolvable:$true] %s19
      %s21 = sshll.u32 [#allocation2], 4
      %s22 = int_to_ptr.vmem [resolvable:$true] %s21
      %24 = dma.hbm_to_vmem [thread:$0]  %s20, 16, %s22, [#allocation3]
    $region9: #{detection_net_forward.92} parent=1 // pred_fallthru
      _
    // Predicated region
    $region10: #{detection_net_forward.92} parent=1 // pred_check
      _
    $region11: #{detection_net_forward.92} parent=1 // pred_check_branch
      %26 = sbr.rel (0) target = $region13
    $region12: #{detection_net_forward.92} parent=1 // pred_region
      %28 = vsyncadd [#allocation5], 0
      %s30 = sshll.u32 %s2, 4
      %s31 = int_to_ptr.hbm [resolvable:$true] %s30
      %s32 = sshll.u32 [#allocation4], 4
      %s33 = int_to_ptr.vmem [resolvable:$true] %s32
      %35 = dma.hbm_to_vmem [thread:$0]  %s31, 16, %s33, [#allocation5]
    $region13: #{detection_net_forward.92} parent=1 // pred_fallthru
      _
    // Predicated region
    $region14: #{detection_net_forward.92} parent=1 // pred_check
      _
    $region15: #{detection_net_forward.92} parent=1 // pred_check_branch
      %37 = sbr.rel (0) target = $region17
    $region16: #{detection_net_forward.92} parent=1 // pred_region
      _
    $region17: #{detection_net_forward.92} parent=1 // pred_fallthru
      _
    // Predicated region
    $region18: #{detection_net_forward.92} parent=1 // pred_check
      _
    $region19: #{detection_net_forward.92} parent=1 // pred_check_branch
      %39 = sbr.rel (0) target = $region21
    $region20: #{detection_net_forward.92} parent=1 // pred_region
      %41 = vsyncadd [#allocation5], 0
      %s43 = sshll.u32 %s4, 4
      %s44 = int_to_ptr.hbm [resolvable:$true] %s43
      %s45 = sshll.u32 [#allocation6], 4
      %s46 = int_to_ptr.vmem [resolvable:$true] %s45
      %48 = dma.hbm_to_vmem [thread:$0]  %s44, 32, %s46, [#allocation5]
    $region21: #{detection_net_forward.92} parent=1 // pred_fallthru
      _
    // Predicated region
    $region22: #{detection_net_forward.92} parent=1 // pred_check
      _
    $region23: #{detection_net_forward.92} parent=1 // pred_check_branch
      %50 = sbr.rel (0) target = $region25
    $region24: #{detection_net_forward.92} parent=1 // pred_region
      %52 = dma.done [#allocation3], 16
    $region25: #{detection_net_forward.92} parent=1 // pred_fallthru
      _
    // Predicated region
    $region26: #{detection_net_forward.92} parent=1 // pred_check
      _
    $region27: #{detection_net_forward.92} parent=1 // pred_check_branch
      %54 = sbr.rel (0) target = $region29
    $region28: #{detection_net_forward.92} parent=1 // pred_region
      %56 = dma.done [#allocation5], 16
    $region29: #{detection_net_forward.92} parent=1 // pred_fallthru
      _
    // Predicated region
    $region30: #{detection_net_forward.92} parent=1 // pred_check
      _
    $region31: #{detection_net_forward.92} parent=1 // pred_check_branch
      %58 = sbr.rel (0) target = $region33
    $region32: #{detection_net_forward.92} parent=1 // pred_region
      %60 = dma.done [#allocation5], 32
    $region33: #{detection_net_forward.92} parent=1 // pred_fallthru
      _
    %v61 = vld [vmem:[%s0] sm:$0xff]
    %v62 = vld [vmem:[%s0 + $0x8] sm:$0xff]
    %v63 = vld [vmem:[#allocation2] sm:$0x1]
    %v64 = vld [vmem:[#allocation4] sm:$0x1]
    %65 = vadd.xlane.f32.xlu0 %v61
    %v66 = vpop.xlane.xlu0 %65
    %67 = vadd.xlane.f32.xlu0 %v62
    %v68 = vpop.xlane.xlu0 %67
    %v69 = vrcp.pop 128.0
    %v70 = vmul.f32 128.0, %v69
    %v71 = vsub.f32 1.0, %v70
    %v72 = vmul.f32 %v69, %v71
    %v73 = vadd.f32 %v69, %v72
    %vm74 = vweird.f32 %v69
    %v75 = vsel %vm74, %v69, %v73
    %v76 = vmul.f32 %v66, %v75
    %v77 = vmul.f32 %v68, %v75
    %v78 = vsub.f32 %v61, %v76
    %v79 = vsub.f32 %v62, %v77
    %v80 = vmul.f32 %v78, %v78
    %v81 = vmul.f32 %v79, %v79
    %82 = vadd.xlane.f32.xlu0 %v80
    %v83 = vpop.xlane.xlu0 %82
    %84 = vadd.xlane.f32.xlu0 %v81
    %v85 = vpop.xlane.xlu0 %84
    %v86 = vmul.f32 %v83, %v75
    %v87 = vmul.f32 %v85, %v75
    %v88 = vadd.f32 %v86, 1e-05
    %v89 = vadd.f32 %v87, 1e-05
    %v90 = vrsqrt.pop %v88
    %v91 = vmul.f32 %v90, %v88
    %v92 = vmul.f32 %v91, %v90
    %v93 = vmul.f32 0.5, %v92
    %v94 = vsub.f32 1.5, %v93
    %v95 = vmul.f32 %v90, %v94
    %vm96 = vweird.f32 %v88
    %vm97 = vweird.f32 %v90
    %vm98 = vmor %vm96, %vm97
    %v99 = vsel %vm98, %v90, %v95
    %v100 = vrsqrt.pop %v89
    %v101 = vmul.f32 %v100, %v89
    %v102 = vmul.f32 %v101, %v100
    %v103 = vmul.f32 0.5, %v102
    %v104 = vsub.f32 1.5, %v103
    %v105 = vmul.f32 %v100, %v104
    %vm106 = vweird.f32 %v89
    %vm107 = vweird.f32 %v100
    %vm108 = vmor %vm106, %vm107
    %v109 = vsel %vm108, %v100, %v105
    %v110 = vmul.f32 %v78, %v99
    %v111 = vmul.f32 %v79, %v109
    %v113 = vperm.slane %v63, 0
    %v115 = vmul.f32 %v110, %v113
    %v116 = vmul.f32 %v111, %v113
    %v118 = vperm.slane %v64, 0
    %v120 = vadd.f32 %v115, %v118
    %v121 = vadd.f32 %v116, %v118
    %v122 = vld [vmem:[%s3] sm:$0xff]
    %v123 = vld [vmem:[%s3 + $0x8] sm:$0xff]
    %v124 = vld [vmem:[%s3 + $0x10] sm:$0xff]
    %v125 = vld [vmem:[%s3 + $0x18] sm:$0xff]
    %v126 = vld [vmem:[%s3 + $0x20] sm:$0xff]
    %v127 = vld [vmem:[%s3 + $0x28] sm:$0xff]
    %v128 = vld [vmem:[%s3 + $0x30] sm:$0xff]
    %v129 = vld [vmem:[%s3 + $0x38] sm:$0xff]
    %v130 = vld [vmem:[%s3 + $0x40] sm:$0xff]
    %v131 = vld [vmem:[%s3 + $0x48] sm:$0xff]
    %v132 = vld [vmem:[%s3 + $0x50] sm:$0xff]
    %v133 = vld [vmem:[%s3 + $0x58] sm:$0xff]
    %v134 = vld [vmem:[%s3 + $0x60] sm:$0xff]
    %v135 = vld [vmem:[%s3 + $0x68] sm:$0xff]
    %v136 = vld [vmem:[%s3 + $0x70] sm:$0xff]
    %v137 = vld [vmem:[%s3 + $0x78] sm:$0xff]
    %v138 = vld [vmem:[#allocation6] sm:$0x3]
    %v139 = vpack.c.bf16 %v121, %v120
    %v141 = vperm.slane %v138, 0
    %v142 = vperm.slane %v138, 1
    %v161 = vunpack.c.l.b16 %v122
    %v162 = vunpack.c.h.b16 %v122
    %v163 = vunpack.c.l.b16 %v123
    %v164 = vunpack.c.h.b16 %v123
    %v165 = vunpack.c.l.b16 %v124
    %v166 = vunpack.c.h.b16 %v124
    %v167 = vunpack.c.l.b16 %v125
    %v168 = vunpack.c.h.b16 %v125
    %v169 = vunpack.c.l.b16 %v126
    %v170 = vunpack.c.h.b16 %v126
    %v171 = vunpack.c.l.b16 %v127
    %v172 = vunpack.c.h.b16 %v127
    %v173 = vunpack.c.l.b16 %v128
    %v174 = vunpack.c.h.b16 %v128
    %v175 = vunpack.c.l.b16 %v129
    %v176 = vunpack.c.h.b16 %v129
    %v177 = vunpack.c.l.b16 %v130
    %v178 = vunpack.c.h.b16 %v130
    %v179 = vunpack.c.l.b16 %v131
    %v180 = vunpack.c.h.b16 %v131
    %v181 = vunpack.c.l.b16 %v132
    %v182 = vunpack.c.h.b16 %v132
    %v183 = vunpack.c.l.b16 %v133
    %v184 = vunpack.c.h.b16 %v133
    %v185 = vunpack.c.l.b16 %v134
    %v186 = vunpack.c.h.b16 %v134
    %v187 = vunpack.c.l.b16 %v135
    %v188 = vunpack.c.h.b16 %v135
    %v189 = vunpack.c.l.b16 %v136
    %v190 = vunpack.c.h.b16 %v136
    %v191 = vunpack.c.l.b16 %v137
    %v192 = vunpack.c.h.b16 %v137
    %v193 = vpack.c.b16 %v163, %v161
    %v194 = vpack.c.b16 %v164, %v162
    %v195 = vpack.c.b16 %v167, %v165
    %v196 = vpack.c.b16 %v168, %v166
    %v197 = vpack.c.b16 %v171, %v169
    %v198 = vpack.c.b16 %v172, %v170
    %v199 = vpack.c.b16 %v175, %v173
    %v200 = vpack.c.b16 %v176, %v174
    %v201 = vpack.c.b16 %v179, %v177
    %v202 = vpack.c.b16 %v180, %v178
    %v203 = vpack.c.b16 %v183, %v181
    %v204 = vpack.c.b16 %v184, %v182
    %v205 = vpack.c.b16 %v187, %v185
    %v206 = vpack.c.b16 %v188, %v186
    %v207 = vpack.c.b16 %v191, %v189
    %v208 = vpack.c.b16 %v192, %v190
    %225 = vmatpush.bf16.msra.mxu0 %v207
    %226 = vmatpush.bf16.msra.mxu0 %v205
    %227 = vmatpush.bf16.msra.mxu0 %v203
    %228 = vmatpush.bf16.msra.mxu0 %v201
    %229 = vmatpush.bf16.msra.mxu0 %v199
    %230 = vmatpush.bf16.msra.mxu0 %v197
    %231 = vmatpush.bf16.msra.mxu0 %v195
    %232 = vmatpush.bf16.msra.mxu0 %v193
    %233 = vmatmul.bf16.gmra.mxu0 %v139
    %v234 = vpop.f32.mrf.mxu0
    %v235 = vadd.f32 %v141, %v234
    %v236 = vpop.f32.mrf.mxu0
    %v237 = vadd.f32 %v141, %v236
    %238 = vdwg.mxu0
    %239 = vmatpush.bf16.msra.mxu0 %v208
    %240 = vmatpush.bf16.msra.mxu0 %v206
    %241 = vmatpush.bf16.msra.mxu0 %v204
    %242 = vmatpush.bf16.msra.mxu0 %v202
    %243 = vmatpush.bf16.msra.mxu0 %v200
    %244 = vmatpush.bf16.msra.mxu0 %v198
    %245 = vmatpush.bf16.msra.mxu0 %v196
    %246 = vmatpush.bf16.msra.mxu0 %v194
    %247 = vmatmul.bf16.gmra.mxu0 %v139
    %v248 = vpop.f32.mrf.mxu0
    %v249 = vadd.f32 %v142, %v248
    %v250 = vpop.f32.mrf.mxu0
    %v251 = vadd.f32 %v142, %v250
    %252 = vdwg.mxu0
    %v253 = vxor.u32 %v249, 2147483648
    %v254 = vxor.u32 %v251, 2147483648
    %v255 = vmul.f32 %v253, 1.442695
    %v256 = vpow.pop %v255
    %v257 = vmul.f32 %v254, 1.442695
    %v258 = vpow.pop %v257
    %v259 = vadd.f32 %v256, 1.0
    %v260 = vadd.f32 %v258, 1.0
    %v261 = vrcp.pop %v259
    %v262 = vmul.f32 %v259, %v261
    %v263 = vsub.f32 1.0, %v262
    %v264 = vmul.f32 %v261, %v263
    %v265 = vadd.f32 %v261, %v264
    %vm266 = vweird.f32 %v259
    %vm267 = vweird.f32 %v261
    %vm268 = vmor %vm266, %vm267
    %v269 = vsel %vm268, %v261, %v265
    %v270 = vand.u32 2147483647, %v259
    %vm271 = vcmp.eq.f32.partialorder %v270, 8.507059e+37
    %v272 = vand.u32 %v259, 2147483648
    %v273 = vor.u32 1.1754944e-38, %v272
    %v274 = vsel %vm271, %v273, %v269
    %v275 = vmul.f32 1.0, %v274
    %v276 = vrcp.pop %v260
    %v277 = vmul.f32 %v260, %v276
    %v278 = vsub.f32 1.0, %v277
    %v279 = vmul.f32 %v276, %v278
    %v280 = vadd.f32 %v276, %v279
    %vm281 = vweird.f32 %v260
    %vm282 = vweird.f32 %v276
    %vm283 = vmor %vm281, %vm282
    %v284 = vsel %vm283, %v276, %v280
    %v285 = vand.u32 2147483647, %v260
    %vm286 = vcmp.eq.f32.partialorder %v285, 8.507059e+37
    %v287 = vand.u32 %v260, 2147483648
    %v288 = vor.u32 1.1754944e-38, %v287
    %v289 = vsel %vm286, %v288, %v284
    %v290 = vmul.f32 1.0, %v289
    %v291 = vmul.f32 %v235, %v275
    %v292 = vmul.f32 %v237, %v290
    %293 = vst [vmem:[%s5] sm:$0xff] %v291
    %294 = vst [vmem:[%s5 + $0x8] sm:$0xff] %v292
    // Predicated region
    $region34: #{detection_net_forward.92} parent=1 // pred_check
      _
    $region35: #{detection_net_forward.92} parent=1 // pred_check_branch
      %296 = sbr.rel (0) target = $region37
    $region36: #{detection_net_forward.92} parent=1 // pred_region
      _
    $region37: #{detection_net_forward.92} parent=1 // pred_fallthru
      _
    // Predicated region
    $region38: #{detection_net_forward.92} parent=1 // pred_check
      _
    $region39: #{detection_net_forward.92} parent=1 // pred_check_branch
      %298 = sbr.rel (0) target = $region41
    $region40: #{detection_net_forward.92} parent=1 // pred_region
      _
    $region41: #{detection_net_forward.92} parent=1 // pred_fallthru
      _
    %299 = vsyncpa [#allocation3], 1
    %300 = vsyncpa [#allocation5], 1

// kernel: detection_net_forward.93
$region0: #{detection_net_forward.93}
  #allocation0 [shape = 'u32[]', space=smem, size = 0x4, offset = 0x4, fixed_abs, tag = 'smem constant byte address 0x4 - core index']
  #allocation1 [shape = 'u32[72,128]{1,0:T(1,128)}', space=vmem, size = 0x9000, scoped, tag = 'internal scratch']
  %s0 = inlined_call_operand.vmem [shape: f32[2,38,128], index: 0, kind: input, shape index: {}]
  %s1 = inlined_call_operand.hbm [shape: f32[31,128], index: 1, kind: input, shape index: {}]
  %s2 = inlined_call_operand.hbm [shape: f32[1,128], index: 2, kind: input, shape index: {}]
  %s3 = inlined_call_operand.vmem [shape: f32[2,8,128], index: 3, kind: output, shape index: {}]
  %s4 = sld [smem:[#allocation0]]
  $region53: #{detection_net_forward.93} parent=0
    _
  %s6 = ssub.s32 1, %s4
  %s7 = scalar_select 0, %s6, %s4
  $region1: #{detection_net_forward.93} parent=0
    #allocation2 [shape = 'u8[16384]{0}', space=vmem, size = 0x4000, scoped, tag = 'input window, operand 1, single buffered']
    #allocation3 [shape = 's32[2]{0}', space=sflag, size = 0x8, scoped, tag = 'scoped memory for detection_net_forward.93']
    #allocation4 [shape = 'u8[512]{0}', space=vmem, size = 0x400, scoped, tag = 'input window, operand 2, single buffered']
    #allocation5 [shape = 's32[1]{0}', space=sflag, size = 0x4, scoped, tag = 'scoped memory for detection_net_forward.93']
    %8 = vsyncpa [#allocation3], 0
    %9 = vsyncpa [#allocation5], 0
    loop: start=0, step=1, limit=4
    $region2: #{detection_net_forward.93} parent=1 // loop_pre_header
      _
    $region3: #{detection_net_forward.93} parent=1 // loop_header
      %s11 = sphi 0, %s15
      %p12 = scmp.ge.s32.totalorder %s11, 4
      %s21 = sphi 0, %s23
      %s24 = sphi 0, %s21
      %s25 = sphi 0, %s24
      %s41 = sphi 0, %s25
      %s45 = sphi 0, %s45
      %s47 = sphi 0, %s45
      %s48 = sphi 0, %s47
      %s62 = sphi 0, %s48
      %s66 = sphi 0, %s66
      %s68 = sphi 0, %s66
      %s69 = sphi 0, %s68
      %s83 = sphi 0, %s69
      %s89 = sphi 0, %s91
      %s92 = sphi 0, %s89
      %s93 = sphi 0, %s92
      %s109 = sphi 0, %s93
    $region4: #{detection_net_forward.93} parent=1 // loop_header_branch
      %14 = sbr.rel (%p12) target = $region8
    $region5: #{detection_net_forward.93} parent=1 // loop_body
      %s16 = ssub.s32 %s11, 1
      %s17 = ssub.s32 %s11, 2
      %s18 = sadd.s32 %s11, 1
      %s19 = ssub.s32 %s11, %s18
      %p20 = scmp.eq.s32.totalorder %s19, 0
      %s22 = sadd.s32 %s21, 1
      %s23 = scalar_select %p20, %s21, %s22
      %p26 = pneg %p20
      %p27 = scmp.eq.s32.totalorder %s11, 1
      %p28 = por %p26, %p27
      %p29 = scmp.ne.s32.totalorder %s21, %s24
      %p30 = scmp.eq.s32.totalorder %s11, 0
      %p31 = por %p29, %p30
      %p32 = scmp.ne.s32.totalorder %s21, %s24
      %p33 = scmp.eq.s32.totalorder %s16, 1
      %p34 = por %p32, %p33
      %p35 = scmp.ne.s32.totalorder %s24, %s25
      %p36 = scmp.eq.s32.totalorder %s16, 0
      %p37 = por %p35, %p36
      %p38 = scmp.ne.s32.totalorder %s24, %s25
      %p39 = scmp.eq.s32.totalorder %s17, 1
      %p40 = por %p38, %p39
      %p42 = scmp.ne.s32.totalorder %s25, %s41
      %p43 = scmp.eq.s32.totalorder %s17, 0
      %p44 = por %p42, %p43
      %s46 = sadd.s32 %s45, 1
      %p49 = scmp.eq.s32.totalorder %s11, 1
      %p50 = scmp.ne.s32.totalorder %s45, %s47
      %p51 = scmp.eq.s32.totalorder %s11, 0
      %p52 = por %p50, %p51
      %p53 = scmp.ne.s32.totalorder %s45, %s47
      %p54 = scmp.eq.s32.totalorder %s16, 1
      %p55 = por %p53, %p54
      %p56 = scmp.ne.s32.totalorder %s47, %s48
      %p57 = scmp.eq.s32.totalorder %s16, 0
      %p58 = por %p56, %p57
      %p59 = scmp.ne.s32.totalorder %s47, %s48
      %p60 = scmp.eq.s32.totalorder %s17, 1
      %p61 = por %p59, %p60
      %p63 = scmp.ne.s32.totalorder %s48, %s62
      %p64 = scmp.eq.s32.totalorder %s17, 0
      %p65 = por %p63, %p64
      %s67 = sadd.s32 %s66, 1
      %p70 = scmp.eq.s32.totalorder %s11, 1
      %p71 = scmp.ne.s32.totalorder %s66, %s68
      %p72 = scmp.eq.s32.totalorder %s11, 0
      %p73 = por %p71, %p72
      %p74 = scmp.ne.s32.totalorder %s66, %s68
      %p75 = scmp.eq.s32.totalorder %s16, 1
      %p76 = por %p74, %p75
      %p77 = scmp.ne.s32.totalorder %s68, %s69
      %p78 = scmp.eq.s32.totalorder %s16, 0
      %p79 = por %p77, %p78
      %p80 = scmp.ne.s32.totalorder %s68, %s69
      %p81 = scmp.eq.s32.totalorder %s17, 1
      %p82 = por %p80, %p81
      %p84 = scmp.ne.s32.totalorder %s69, %s83
      %p85 = scmp.eq.s32.totalorder %s17, 0
      %p86 = por %p84, %p85
      %s87 = ssub.s32 %s11, %s18
      %p88 = scmp.eq.s32.totalorder %s87, 0
      %s90 = sadd.s32 %s89, 1
      %s91 = scalar_select %p88, %s89, %s90
      %p94 = pneg %p88
      %p95 = scmp.eq.s32.totalorder %s11, 1
      %p96 = por %p94, %p95
      %p97 = scmp.ne.s32.totalorder %s89, %s92
      %p98 = scmp.eq.s32.totalorder %s11, 0
      %p99 = por %p97, %p98
      %p100 = scmp.ne.s32.totalorder %s89, %s92
      %p101 = scmp.eq.s32.totalorder %s16, 1
      %p102 = por %p100, %p101
      %p103 = scmp.ne.s32.totalorder %s92, %s93
      %p104 = scmp.eq.s32.totalorder %s16, 0
      %p105 = por %p103, %p104
      %p106 = scmp.ne.s32.totalorder %s92, %s93
      %p107 = scmp.eq.s32.totalorder %s17, 1
      %p108 = por %p106, %p107
      %p110 = scmp.ne.s32.totalorder %s93, %s109
      %p111 = scmp.eq.s32.totalorder %s17, 0
      %p112 = por %p110, %p111
      %p113 = scmp.le.s32.totalorder 1, %s11
      %p114 = scmp.lt.s32.totalorder %s11, 3
      %p115 = pnand %p113, %p114
      %p116 = pneg %p115
      // Predicated region
      $region9: #{detection_net_forward.93} parent=5 // pred_check
        _
      $region10: #{detection_net_forward.93} parent=5 // pred_check_branch
        %118 = sbr.rel (%p115) target = $region12
      $region11: #{detection_net_forward.93} parent=5 // pred_region
        %s119 = ssub.s32 %s11, 1
        // Predicated region
        $region13: #{detection_net_forward.93} parent=11 // pred_check
          %p120 = pneg %p58
        $region14: #{detection_net_forward.93} parent=11 // pred_check_branch
          %122 = sbr.rel (%p120) target = $region16
        $region15: #{detection_net_forward.93} parent=11 // pred_region
          %124 = vsyncadd [#allocation3], 0
          %s125 = sshll.u32 %s1, 4
          %s126 = int_to_ptr.hbm [resolvable:$true] %s125
          %s127 = sshll.u32 [#allocation2], 4
          %s128 = int_to_ptr.vmem [resolvable:$true] %s127
          %133 = dma.hbm_to_vmem [thread:$0]  %s126, 512, %s128, [#allocation3], 128, 128, 8
        $region16: #{detection_net_forward.93} parent=11 // pred_fallthru
          _
        // Predicated region
        $region17: #{detection_net_forward.93} parent=11 // pred_check
          %p134 = pneg %p79
        $region18: #{detection_net_forward.93} parent=11 // pred_check_branch
          %136 = sbr.rel (%p134) target = $region20
        $region19: #{detection_net_forward.93} parent=11 // pred_region
          %138 = vsyncadd [#allocation5], 0
          %s140 = sshll.u32 %s2, 4
          %s141 = int_to_ptr.hbm [resolvable:$true] %s140
          %s142 = sshll.u32 [#allocation4], 4
          %s143 = int_to_ptr.vmem [resolvable:$true] %s142
          %145 = dma.hbm_to_vmem [thread:$0]  %s141, 16, %s143, [#allocation5]
        $region20: #{detection_net_forward.93} parent=11 // pred_fallthru
          _
      $region12: #{detection_net_forward.93} parent=5 // pred_fallthru
        _
      %p146 = scmp.lt.s32.totalorder %s11, 2
      // Predicated region
      $region21: #{detection_net_forward.93} parent=5 // pred_check
        %p147 = pneg %p146
      $region22: #{detection_net_forward.93} parent=5 // pred_check_branch
        %149 = sbr.rel (%p147) target = $region24
      $region23: #{detection_net_forward.93} parent=5 // pred_region
        // Predicated region
        $region25: #{detection_net_forward.93} parent=23 // pred_check
          %p150 = pneg %p31
        $region26: #{detection_net_forward.93} parent=23 // pred_check_branch
          %152 = sbr.rel (%p150) target = $region28
        $region27: #{detection_net_forward.93} parent=23 // pred_region
          %p153 = scmp.lt.s32.totalorder %s11, 1
          %s154 = scalar_select %p153, %s11, 1
          %s155 = smul.addr %s154, 5
          %s156 = smul.addr %s155, 8
          %s157 = scalar_lea.vmem %s0, %s156
        $region28: #{detection_net_forward.93} parent=23 // pred_fallthru
          _
      $region24: #{detection_net_forward.93} parent=5 // pred_fallthru
        _
      %p158 = scmp.le.s32.totalorder 1, %s11
      %p159 = scmp.lt.s32.totalorder %s11, 3
      %p160 = pnand %p158, %p159
      %p161 = pneg %p160
      // Predicated region
      $region29: #{detection_net_forward.93} parent=5 // pred_check
        _
      $region30: #{detection_net_forward.93} parent=5 // pred_check_branch
        %163 = sbr.rel (%p160) target = $region32
      $region31: #{detection_net_forward.93} parent=5 // pred_region
        %s164 = ssub.s32 %s11, 1
        // Predicated region
        $region33: #{detection_net_forward.93} parent=31 // pred_check
          %p165 = pneg %p58
        $region34: #{detection_net_forward.93} parent=31 // pred_check_branch
          %167 = sbr.rel (%p165) target = $region36
        $region35: #{detection_net_forward.93} parent=31 // pred_region
          %169 = dma.done [#allocation3], 512
        $region36: #{detection_net_forward.93} parent=31 // pred_fallthru
          _
        // Predicated region
        $region37: #{detection_net_forward.93} parent=31 // pred_check
          %p170 = pneg %p79
        $region38: #{detection_net_forward.93} parent=31 // pred_check_branch
          %172 = sbr.rel (%p170) target = $region40
        $region39: #{detection_net_forward.93} parent=31 // pred_region
          %174 = dma.done [#allocation5], 16
        $region40: #{detection_net_forward.93} parent=31 // pred_fallthru
          _
        %p175 = scmp.lt.s32.totalorder %s16, 1
        %s176 = scalar_select %p175, %s16, 1
        %s177 = smul.addr %s176, 5
        %s178 = smul.addr %s177, 8
        %s179 = scalar_lea.vmem %s0, %s178
        %p180 = pneg %p37
        %p181 = pneg %p34
        %p182 = pneg %p58
        %p183 = pneg %p55
        %p184 = pneg %p79
        %p185 = pneg %p76
        %p186 = pneg %p105
        %p187 = pneg %p102
        %p188 = scmp.lt.s32.totalorder %s16, 1
        %s189 = scalar_select %p188, %s16, 1
        %s190 = smul.addr %s189, 8
        %s191 = scalar_lea.vmem %s3, %s190
        %p192 = scmp.lt.s32.totalorder %s16, 1
        %s193 = scalar_select %p192, %s16, 1
        %s194 = smul.addr %s193, 5
        %s195 = smul.addr %s194, 8
        %s196 = scalar_lea.vmem %s0, %s195
        %p197 = scmp.lt.s32.totalorder %s16, 1
        %s198 = scalar_select %p197, %s16, 1
        %s199 = smul.addr %s198, 8
        %s200 = scalar_lea.vmem %s3, %s199
        %v201 = vld [vmem:[%s196] sm:$0xff]
        %v202 = vld [vmem:[%s196 + $0x8] sm:$0xff]
        %v203 = vld [vmem:[%s196 + $0x10] sm:$0xff]
        %v204 = vld [vmem:[%s196 + $0x18] sm:$0xff]
        %v205 = vld [vmem:[%s196 + $0x20] sm:$0x3f]
        %v206 = vld [vmem:[#allocation2] sm:$0xff]
        %v207 = vld [vmem:[#allocation2 + $0x8] sm:$0xff]
        %v208 = vld [vmem:[#allocation2 + $0x10] sm:$0xff]
        %v209 = vld [vmem:[#allocation2 + $0x18] sm:$0x7f]
        %v210 = vperm.slane %v206, 0
        %v211 = vmul.f32 %v201, %v210
        %v212 = vadd.f32 %v211, 0.0
        %v213 = vperm.slane %v206, 1
        %v214 = vmul.f32 %v201, %v213
        %v215 = vmul.f32 %v202, %v213
        %vm218 = vcmask 1046528
        %v219 = vrot.slane %v214, 1
        %v220 = vrot.slane %v215, 1
        %v221 = vsel %vm218, %v219, %v220
        %v223 = vadd.f32 %v212, %v221
        %v224 = vperm.slane %v206, 2
        %v225 = vmul.f32 %v201, %v224
        %v226 = vmul.f32 %v202, %v224
        %vm229 = vcmask 1045504
        %v230 = vrot.slane %v225, 2
        %v231 = vrot.slane %v226, 2
        %v232 = vsel %vm229, %v230, %v231
        %v234 = vadd.f32 %v223, %v232
        %v235 = vperm.slane %v206, 3
        %v236 = vmul.f32 %v201, %v235
        %v237 = vmul.f32 %v202, %v235
        %vm240 = vcmask 1044480
        %v241 = vrot.slane %v236, 3
        %v242 = vrot.slane %v237, 3
        %v243 = vsel %vm240, %v241, %v242
        %v245 = vadd.f32 %v234, %v243
        %v246 = vperm.slane %v206, 4
        %v247 = vmul.f32 %v201, %v246
        %v248 = vmul.f32 %v202, %v246
        %vm251 = vcmask 1043456
        %v252 = vrot.slane %v247, 4
        %v253 = vrot.slane %v248, 4
        %v254 = vsel %vm251, %v252, %v253
        %v256 = vadd.f32 %v245, %v254
        %v257 = vperm.slane %v206, 5
        %v258 = vmul.f32 %v201, %v257
        %v259 = vmul.f32 %v202, %v257
        %vm262 = vcmask 1042432
        %v263 = vrot.slane %v258, 5
        %v264 = vrot.slane %v259, 5
        %v265 = vsel %vm262, %v263, %v264
        %v267 = vadd.f32 %v256, %v265
        %v268 = vperm.slane %v206, 6
        %v269 = vmul.f32 %v201, %v268
        %v270 = vmul.f32 %v202, %v268
        %vm273 = vcmask 1041408
        %v274 = vrot.slane %v269, 6
        %v275 = vrot.slane %v270, 6
        %v276 = vsel %vm273, %v274, %v275
        %v278 = vadd.f32 %v267, %v276
        %v279 = vperm.slane %v206, 7
        %v280 = vmul.f32 %v201, %v279
        %v281 = vmul.f32 %v202, %v279
        %vm284 = vcmask 1040384
        %v285 = vrot.slane %v280, 7
        %v286 = vrot.slane %v281, 7
        %v287 = vsel %vm284, %v285, %v286
        %v289 = vadd.f32 %v278, %v287
        %v290 = vperm.slane %v207, 0
        %v291 = vmul.f32 %v202, %v290
        %v292 = vadd.f32 %v289, %v291
        %v293 = vperm.slane %v207, 1
        %v294 = vmul.f32 %v202, %v293
        %v295 = vmul.f32 %v203, %v293
        %v298 = vrot.slane %v294, 1
        %v299 = vrot.slane %v295, 1
        %v300 = vsel %vm218, %v298, %v299
        %v302 = vadd.f32 %v292, %v300
        %v303 = vperm.slane %v207, 2
        %v304 = vmul.f32 %v202, %v303
        %v305 = vmul.f32 %v203, %v303
        %v308 = vrot.slane %v304, 2
        %v309 = vrot.slane %v305, 2
        %v310 = vsel %vm229, %v308, %v309
        %v312 = vadd.f32 %v302, %v310
        %v313 = vperm.slane %v207, 3
        %v314 = vmul.f32 %v202, %v313
        %v315 = vmul.f32 %v203, %v313
        %v318 = vrot.slane %v314, 3
        %v319 = vrot.slane %v315, 3
        %v320 = vsel %vm240, %v318, %v319
        %v322 = vadd.f32 %v312, %v320
        %v323 = vperm.slane %v207, 4
        %v324 = vmul.f32 %v202, %v323
        %v325 = vmul.f32 %v203, %v323
        %v328 = vrot.slane %v324, 4
        %v329 = vrot.slane %v325, 4
        %v330 = vsel %vm251, %v328, %v329
        %v332 = vadd.f32 %v322, %v330
        %v333 = vperm.slane %v207, 5
        %v334 = vmul.f32 %v202, %v333
        %v335 = vmul.f32 %v203, %v333
        %v338 = vrot.slane %v334, 5
        %v339 = vrot.slane %v335, 5
        %v340 = vsel %vm262, %v338, %v339
        %v342 = vadd.f32 %v332, %v340
        %v343 = vperm.slane %v207, 6
        %v344 = vmul.f32 %v202, %v343
        %v345 = vmul.f32 %v203, %v343
        %v348 = vrot.slane %v344, 6
        %v349 = vrot.slane %v345, 6
        %v350 = vsel %vm273, %v348, %v349
        %v352 = vadd.f32 %v342, %v350
        %v353 = vperm.slane %v207, 7
        %v354 = vmul.f32 %v202, %v353
        %v355 = vmul.f32 %v203, %v353
        %v358 = vrot.slane %v354, 7
        %v359 = vrot.slane %v355, 7
        %v360 = vsel %vm284, %v358, %v359
        %v362 = vadd.f32 %v352, %v360
        %v363 = vperm.slane %v208, 0
        %v364 = vmul.f32 %v203, %v363
        %v365 = vadd.f32 %v362, %v364
        %v366 = vperm.slane %v208, 1
        %v367 = vmul.f32 %v203, %v366
        %v368 = vmul.f32 %v204, %v366
        %v371 = vrot.slane %v367, 1
        %v372 = vrot.slane %v368, 1
        %v373 = vsel %vm218, %v371, %v372
        %v375 = vadd.f32 %v365, %v373
        %v376 = vperm.slane %v208, 2
        %v377 = vmul.f32 %v203, %v376
        %v378 = vmul.f32 %v204, %v376
        %v381 = vrot.slane %v377, 2
        %v382 = vrot.slane %v378, 2
        %v383 = vsel %vm229, %v381, %v382
        %v385 = vadd.f32 %v375, %v383
        %v386 = vperm.slane %v208, 3
        %v387 = vmul.f32 %v203, %v386
        %v388 = vmul.f32 %v204, %v386
        %v391 = vrot.slane %v387, 3
        %v392 = vrot.slane %v388, 3
        %v393 = vsel %vm240, %v391, %v392
        %v395 = vadd.f32 %v385, %v393
        %v396 = vperm.slane %v208, 4
        %v397 = vmul.f32 %v203, %v396
        %v398 = vmul.f32 %v204, %v396
        %v401 = vrot.slane %v397, 4
        %v402 = vrot.slane %v398, 4
        %v403 = vsel %vm251, %v401, %v402
        %v405 = vadd.f32 %v395, %v403
        %v406 = vperm.slane %v208, 5
        %v407 = vmul.f32 %v203, %v406
        %v408 = vmul.f32 %v204, %v406
        %v411 = vrot.slane %v407, 5
        %v412 = vrot.slane %v408, 5
        %v413 = vsel %vm262, %v411, %v412
        %v415 = vadd.f32 %v405, %v413
        %v416 = vperm.slane %v208, 6
        %v417 = vmul.f32 %v203, %v416
        %v418 = vmul.f32 %v204, %v416
        %v421 = vrot.slane %v417, 6
        %v422 = vrot.slane %v418, 6
        %v423 = vsel %vm273, %v421, %v422
        %v425 = vadd.f32 %v415, %v423
        %v426 = vperm.slane %v208, 7
        %v427 = vmul.f32 %v203, %v426
        %v428 = vmul.f32 %v204, %v426
        %v431 = vrot.slane %v427, 7
        %v432 = vrot.slane %v428, 7
        %v433 = vsel %vm284, %v431, %v432
        %v435 = vadd.f32 %v425, %v433
        %v436 = vperm.slane %v209, 0
        %v437 = vmul.f32 %v204, %v436
        %v438 = vadd.f32 %v435, %v437
        %v439 = vperm.slane %v209, 1
        %v440 = vmul.f32 %v204, %v439
        %v441 = vmul.f32 %v205, %v439
        %v444 = vrot.slane %v440, 1
        %v445 = vrot.slane %v441, 1
        %v446 = vsel %vm218, %v444, %v445
        %v448 = vadd.f32 %v438, %v446
        %v449 = vperm.slane %v209, 2
        %v450 = vmul.f32 %v204, %v449
        %v451 = vmul.f32 %v205, %v449
        %v454 = vrot.slane %v450, 2
        %v455 = vrot.slane %v451, 2
        %v456 = vsel %vm229, %v454, %v455
        %v458 = vadd.f32 %v448, %v456
        %v459 = vperm.slane %v209, 3
        %v460 = vmul.f32 %v204, %v459
        %v461 = vmul.f32 %v205, %v459
        %v464 = vrot.slane %v460, 3
        %v465 = vrot.slane %v461, 3
        %v466 = vsel %vm240, %v464, %v465
        %v468 = vadd.f32 %v458, %v466
        %v469 = vperm.slane %v209, 4
        %v470 = vmul.f32 %v204, %v469
        %v471 = vmul.f32 %v205, %v469
        %v474 = vrot.slane %v470, 4
        %v475 = vrot.slane %v471, 4
        %v476 = vsel %vm251, %v474, %v475
        %v478 = vadd.f32 %v468, %v476
        %v479 = vperm.slane %v209, 5
        %v480 = vmul.f32 %v204, %v479
        %v481 = vmul.f32 %v205, %v479
        %v484 = vrot.slane %v480, 5
        %v485 = vrot.slane %v481, 5
        %v486 = vsel %vm262, %v484, %v485
        %v488 = vadd.f32 %v478, %v486
        %v489 = vperm.slane %v209, 6
        %v490 = vmul.f32 %v204, %v489
        %v491 = vmul.f32 %v205, %v489
        %v494 = vrot.slane %v490, 6
        %v495 = vrot.slane %v491, 6
        %v496 = vsel %vm273, %v494, %v495
        %v498 = vadd.f32 %v488, %v496
        %v499 = vld [vmem:[#allocation4] sm:$0x1]
        %v501 = vperm.slane %v499, 0
        %v503 = vadd.f32 %v498, %v501
        %v504 = vmul.f32 %v503, 0.999995
        %v505 = vxor.u32 %v504, 2147483648
        %v506 = vmul.f32 %v505, 1.442695
        %v507 = vpow.pop %v506
        %v508 = vadd.f32 %v507, 1.0
        %v509 = vrcp.pop %v508
        %v510 = vmul.f32 %v508, %v509
        %v511 = vsub.f32 1.0, %v510
        %v512 = vmul.f32 %v509, %v511
        %v513 = vadd.f32 %v509, %v512
        %vm514 = vweird.f32 %v508
        %vm515 = vweird.f32 %v509
        %vm516 = vmor %vm514, %vm515
        %v517 = vsel %vm516, %v509, %v513
        %v518 = vand.u32 2147483647, %v508
        %vm519 = vcmp.eq.f32.partialorder %v518, 8.507059e+37
        %v520 = vand.u32 %v508, 2147483648
        %v521 = vor.u32 1.1754944e-38, %v520
        %v522 = vsel %vm519, %v521, %v517
        %v523 = vmul.f32 1.0, %v522
        %v524 = vmul.f32 %v504, %v523
        %525 = vst [vmem:[%s200] sm:$0xff] %v524
        %p526 = scmp.lt.s32.totalorder %s16, 1
        %s527 = scalar_select %p526, %s16, 1
        %s528 = smul.addr %s527, 8
        %s529 = scalar_lea.vmem %s3, %s528
        // Predicated region
        $region41: #{detection_net_forward.93} parent=31 // pred_check
          %p530 = pneg %p102
        $region42: #{detection_net_forward.93} parent=31 // pred_check_branch
          %532 = sbr.rel (%p530) target = $region44
        $region43: #{detection_net_forward.93} parent=31 // pred_region
          _
        $region44: #{detection_net_forward.93} parent=31 // pred_fallthru
          _
      $region32: #{detection_net_forward.93} parent=5 // pred_fallthru
        _
      %p533 = scmp.le.s32.totalorder 2, %s11
      // Predicated region
      $region45: #{detection_net_forward.93} parent=5 // pred_check
        %p534 = pneg %p533
      $region46: #{detection_net_forward.93} parent=5 // pred_check_branch
        %536 = sbr.rel (%p534) target = $region48
      $region47: #{detection_net_forward.93} parent=5 // pred_region
        %s537 = ssub.s32 %s11, 2
        // Predicated region
        $region49: #{detection_net_forward.93} parent=47 // pred_check
          %p538 = pneg %p108
        $region50: #{detection_net_forward.93} parent=47 // pred_check_branch
          %540 = sbr.rel (%p538) target = $region52
        $region51: #{detection_net_forward.93} parent=47 // pred_region
          %p541 = scmp.lt.s32.totalorder %s17, 1
          %s542 = scalar_select %p541, %s17, 1
          %s543 = smul.addr %s542, 8
          %s544 = scalar_lea.vmem %s3, %s543
        $region52: #{detection_net_forward.93} parent=47 // pred_fallthru
          _
      $region48: #{detection_net_forward.93} parent=5 // pred_fallthru
        _
    $region6: #{detection_net_forward.93} parent=1 // loop_footer
      %s15 = sadd.s32 1, %s11
    $region7: #{detection_net_forward.93} parent=1 // loop_footer_branch
      %10 = sbr.rel target = $region3
    $region8: #{detection_net_forward.93} parent=1 // loop_exit
      _
    %545 = vsyncpa [#allocation3], 1
    %s546 = scalar_lea.sflag [#allocation3], 1
    %547 = vsyncpa %s546, 1
    %548 = vsyncpa [#allocation5], 1

// kernel: detection_net_forward.96
$region0: #{detection_net_forward.96}
  #allocation0 [shape = 'u32[]', space=smem, size = 0x4, offset = 0x4, fixed_abs, tag = 'smem constant byte address 0x4 - core index']
  #allocation1 [shape = 'u32[72,128]{1,0:T(1,128)}', space=vmem, size = 0x9000, scoped, tag = 'internal scratch']
  %s0 = inlined_call_operand.vmem [shape: f32[16,256], index: 0, kind: input, shape index: {}]
  %s1 = inlined_call_operand.vmem [shape: bf16[256,128], index: 1, kind: input, shape index: {}]
  %s2 = inlined_call_operand.hbm [shape: f32[1,128], index: 2, kind: input, shape index: {}]
  %s3 = inlined_call_operand.vmem [shape: f32[16,128], index: 3, kind: input, shape index: {}]
  %s4 = inlined_call_operand.hbm [shape: f32[1,128], index: 4, kind: input, shape index: {}]
  %s5 = inlined_call_operand.hbm [shape: f32[1,128], index: 5, kind: input, shape index: {}]
  %s6 = inlined_call_operand.vmem [shape: f32[16,128], index: 6, kind: output, shape index: {}]
  %s7 = sld [smem:[#allocation0]]
  $region46: #{detection_net_forward.96} parent=0
    _
  %s9 = ssub.s32 1, %s7
  %s10 = scalar_select 0, %s9, %s7
  $region1: #{detection_net_forward.96} parent=0
    #allocation2 [shape = 'u8[512]{0}', space=vmem, size = 0x400, scoped, tag = 'input window, operand 2, single buffered']
    #allocation3 [shape = 's32[1]{0}', space=sflag, size = 0x4, scoped, tag = 'scoped memory for detection_net_forward.96']
    #allocation4 [shape = 'u8[512]{0}', space=vmem, size = 0x400, scoped, tag = 'input window, operand 4, single buffered']
    #allocation5 [shape = 's32[1]{0}', space=sflag, size = 0x4, scoped, tag = 'scoped memory for detection_net_forward.96']
    #allocation6 [shape = 'u8[512]{0}', space=vmem, size = 0x400, scoped, tag = 'input window, operand 5, single buffered']
    %11 = vsyncpa [#allocation3], 0
    %12 = vsyncpa [#allocation5], 0
    // Predicated region
    $region2: #{detection_net_forward.96} parent=1 // pred_check
      _
    $region3: #{detection_net_forward.96} parent=1 // pred_check_branch
      %14 = sbr.rel (0) target = $region5
    $region4: #{detection_net_forward.96} parent=1 // pred_region
      _
    $region5: #{detection_net_forward.96} parent=1 // pred_fallthru
      _
    // Predicated region
    $region6: #{detection_net_forward.96} parent=1 // pred_check
      _
    $region7: #{detection_net_forward.96} parent=1 // pred_check_branch
      %16 = sbr.rel (0) target = $region9
    $region8: #{detection_net_forward.96} parent=1 // pred_region
      _
    $region9: #{detection_net_forward.96} parent=1 // pred_fallthru
      _
    // Predicated region
    $region10: #{detection_net_forward.96} parent=1 // pred_check
      _
    $region11: #{detection_net_forward.96} parent=1 // pred_check_branch
      %18 = sbr.rel (0) target = $region13
    $region12: #{detection_net_forward.96} parent=1 // pred_region
      %20 = vsyncadd [#allocation3], 0
      %s22 = sshll.u32 %s2, 4
      %s23 = int_to_ptr.hbm [resolvable:$true] %s22
      %s24 = sshll.u32 [#allocation2], 4
      %s25 = int_to_ptr.vmem [resolvable:$true] %s24
      %27 = dma.hbm_to_vmem [thread:$0]  %s23, 16, %s25, [#allocation3]
    $region13: #{detection_net_forward.96} parent=1 // pred_fallthru
      _
    // Predicated region
    $region14: #{detection_net_forward.96} parent=1 // pred_check
      _
    $region15: #{detection_net_forward.96} parent=1 // pred_check_branch
      %29 = sbr.rel (0) target = $region17
    $region16: #{detection_net_forward.96} parent=1 // pred_region
      _
    $region17: #{detection_net_forward.96} parent=1 // pred_fallthru
      _
    // Predicated region
    $region18: #{detection_net_forward.96} parent=1 // pred_check
      _
    $region19: #{detection_net_forward.96} parent=1 // pred_check_branch
      %31 = sbr.rel (0) target = $region21
    $region20: #{detection_net_forward.96} parent=1 // pred_region
      %33 = vsyncadd [#allocation5], 0
      %s35 = sshll.u32 %s4, 4
      %s36 = int_to_ptr.hbm [resolvable:$true] %s35
      %s37 = sshll.u32 [#allocation4], 4
      %s38 = int_to_ptr.vmem [resolvable:$true] %s37
      %40 = dma.hbm_to_vmem [thread:$0]  %s36, 16, %s38, [#allocation5]
    $region21: #{detection_net_forward.96} parent=1 // pred_fallthru
      _
    // Predicated region
    $region22: #{detection_net_forward.96} parent=1 // pred_check
      _
    $region23: #{detection_net_forward.96} parent=1 // pred_check_branch
      %42 = sbr.rel (0) target = $region25
    $region24: #{detection_net_forward.96} parent=1 // pred_region
      %44 = vsyncadd [#allocation5], 0
      %s46 = sshll.u32 %s5, 4
      %s47 = int_to_ptr.hbm [resolvable:$true] %s46
      %s48 = sshll.u32 [#allocation6], 4
      %s49 = int_to_ptr.vmem [resolvable:$true] %s48
      %51 = dma.hbm_to_vmem [thread:$0]  %s47, 16, %s49, [#allocation5]
    $region25: #{detection_net_forward.96} parent=1 // pred_fallthru
      _
    // Predicated region
    $region26: #{detection_net_forward.96} parent=1 // pred_check
      _
    $region27: #{detection_net_forward.96} parent=1 // pred_check_branch
      %53 = sbr.rel (0) target = $region29
    $region28: #{detection_net_forward.96} parent=1 // pred_region
      %55 = dma.done [#allocation3], 16
    $region29: #{detection_net_forward.96} parent=1 // pred_fallthru
      _
    // Predicated region
    $region30: #{detection_net_forward.96} parent=1 // pred_check
      _
    $region31: #{detection_net_forward.96} parent=1 // pred_check_branch
      %57 = sbr.rel (0) target = $region33
    $region32: #{detection_net_forward.96} parent=1 // pred_region
      %59 = dma.done [#allocation5], 16
    $region33: #{detection_net_forward.96} parent=1 // pred_fallthru
      _
    // Predicated region
    $region34: #{detection_net_forward.96} parent=1 // pred_check
      _
    $region35: #{detection_net_forward.96} parent=1 // pred_check_branch
      %61 = sbr.rel (0) target = $region37
    $region36: #{detection_net_forward.96} parent=1 // pred_region
      %63 = dma.done [#allocation5], 16
    $region37: #{detection_net_forward.96} parent=1 // pred_fallthru
      _
    %v64 = vld [vmem:[%s0] sm:$0xff]
    %v65 = vld [vmem:[%s0 + $0x8] sm:$0xff]
    %v66 = vld [vmem:[%s0 + $0x10] sm:$0xff]
    %v67 = vld [vmem:[%s0 + $0x18] sm:$0xff]
    %v68 = vld [vmem:[%s1] sm:$0xf]
    %v69 = vld [vmem:[%s1 + $0x4] sm:$0xf]
    %v70 = vld [vmem:[%s1 + $0x8] sm:$0xf]
    %v71 = vld [vmem:[%s1 + $0xc] sm:$0xf]
    %v72 = vld [vmem:[%s1 + $0x10] sm:$0xf]
    %v73 = vld [vmem:[%s1 + $0x14] sm:$0xf]
    %v74 = vld [vmem:[%s1 + $0x18] sm:$0xf]
    %v75 = vld [vmem:[%s1 + $0x1c] sm:$0xf]
    %v76 = vld [vmem:[%s1 + $0x20] sm:$0xf]
    %v77 = vld [vmem:[%s1 + $0x24] sm:$0xf]
    %v78 = vld [vmem:[%s1 + $0x28] sm:$0xf]
    %v79 = vld [vmem:[%s1 + $0x2c] sm:$0xf]
    %v80 = vld [vmem:[%s1 + $0x30] sm:$0xf]
    %v81 = vld [vmem:[%s1 + $0x34] sm:$0xf]
    %v82 = vld [vmem:[%s1 + $0x38] sm:$0xf]
    %v83 = vld [vmem:[%s1 + $0x3c] sm:$0xf]
    %v84 = vld [vmem:[%s1 + $0x40] sm:$0xf]
    %v85 = vld [vmem:[%s1 + $0x44] sm:$0xf]
    %v86 = vld [vmem:[%s1 + $0x48] sm:$0xf]
    %v87 = vld [vmem:[%s1 + $0x4c] sm:$0xf]
    %v88 = vld [vmem:[%s1 + $0x50] sm:$0xf]
    %v89 = vld [vmem:[%s1 + $0x54] sm:$0xf]
    %v90 = vld [vmem:[%s1 + $0x58] sm:$0xf]
    %v91 = vld [vmem:[%s1 + $0x5c] sm:$0xf]
    %v92 = vld [vmem:[%s1 + $0x60] sm:$0xf]
    %v93 = vld [vmem:[%s1 + $0x64] sm:$0xf]
    %v94 = vld [vmem:[%s1 + $0x68] sm:$0xf]
    %v95 = vld [vmem:[%s1 + $0x6c] sm:$0xf]
    %v96 = vld [vmem:[%s1 + $0x70] sm:$0xf]
    %v97 = vld [vmem:[%s1 + $0x74] sm:$0xf]
    %v98 = vld [vmem:[%s1 + $0x78] sm:$0xf]
    %v99 = vld [vmem:[%s1 + $0x7c] sm:$0xf]
    %v100 = vld [vmem:[#allocation2] sm:$0x1]
    %v101 = vpack.c.bf16 %v66, %v64
    %v102 = vpack.c.bf16 %v67, %v65
    %v104 = vperm.slane %v100, 0
    %v138 = vunpack.c.l.b16 %v68
    %v139 = vunpack.c.l.b16 %v69
    %v140 = vunpack.c.l.b16 %v70
    %v141 = vunpack.c.l.b16 %v71
    %v142 = vunpack.c.l.b16 %v72
    %v143 = vunpack.c.l.b16 %v73
    %v144 = vunpack.c.l.b16 %v74
    %v145 = vunpack.c.l.b16 %v75
    %v146 = vunpack.c.l.b16 %v76
    %v147 = vunpack.c.l.b16 %v77
    %v148 = vunpack.c.l.b16 %v78
    %v149 = vunpack.c.l.b16 %v79
    %v150 = vunpack.c.l.b16 %v80
    %v151 = vunpack.c.l.b16 %v81
    %v152 = vunpack.c.l.b16 %v82
    %v153 = vunpack.c.l.b16 %v83
    %v154 = vunpack.c.l.b16 %v84
    %v155 = vunpack.c.l.b16 %v85
    %v156 = vunpack.c.l.b16 %v86
    %v157 = vunpack.c.l.b16 %v87
    %v158 = vunpack.c.l.b16 %v88
    %v159 = vunpack.c.l.b16 %v89
    %v160 = vunpack.c.l.b16 %v90
    %v161 = vunpack.c.l.b16 %v91
    %v162 = vunpack.c.l.b16 %v92
    %v163 = vunpack.c.l.b16 %v93
    %v164 = vunpack.c.l.b16 %v94
    %v165 = vunpack.c.l.b16 %v95
    %v166 = vunpack.c.l.b16 %v96
    %v167 = vunpack.c.l.b16 %v97
    %v168 = vunpack.c.l.b16 %v98
    %v169 = vunpack.c.l.b16 %v99
    %v170 = vpack.c.b16 %v139, %v138
    %v171 = vpack.c.b16 %v141, %v140
    %v172 = vpack.c.b16 %v143, %v142
    %v173 = vpack.c.b16 %v145, %v144
    %v174 = vpack.c.b16 %v147, %v146
    %v175 = vpack.c.b16 %v149, %v148
    %v176 = vpack.c.b16 %v151, %v150
    %v177 = vpack.c.b16 %v153, %v152
    %v178 = vpack.c.b16 %v155, %v154
    %v179 = vpack.c.b16 %v157, %v156
    %v180 = vpack.c.b16 %v159, %v158
    %v181 = vpack.c.b16 %v161, %v160
    %v182 = vpack.c.b16 %v163, %v162
    %v183 = vpack.c.b16 %v165, %v164
    %v184 = vpack.c.b16 %v167, %v166
    %v185 = vpack.c.b16 %v169, %v168
    %202 = vmatpush.bf16.msra.mxu0 %v177
    %203 = vmatpush.bf16.msra.mxu0 %v176
    %204 = vmatpush.bf16.msra.mxu0 %v175
    %205 = vmatpush.bf16.msra.mxu0 %v174
    %206 = vmatpush.bf16.msra.mxu0 %v173
    %207 = vmatpush.bf16.msra.mxu0 %v172
    %208 = vmatpush.bf16.msra.mxu0 %v171
    %209 = vmatpush.bf16.msra.mxu0 %v170
    %210 = vmatmul.bf16.gmra.mxu0 %v101
    %v211 = vpop.f32.mrf.mxu0
    %v212 = vadd.f32 %v104, %v211
    %v213 = vpop.f32.mrf.mxu0
    %v214 = vadd.f32 %v104, %v213
    %215 = vdwg.mxu0
    %216 = vmatpush.bf16.msra.mxu0 %v185
    %217 = vmatpush.bf16.msra.mxu0 %v184
    %218 = vmatpush.bf16.msra.mxu0 %v183
    %219 = vmatpush.bf16.msra.mxu0 %v182
    %220 = vmatpush.bf16.msra.mxu0 %v181
    %221 = vmatpush.bf16.msra.mxu0 %v180
    %222 = vmatpush.bf16.msra.mxu0 %v179
    %223 = vmatpush.bf16.msra.mxu0 %v178
    %224 = vmatmul.bf16.gmra.mxu0 %v102
    %v225 = vpop.f32.mrf.mxu0
    %v226 = vadd.f32 %v212, %v225
    %v227 = vpop.f32.mrf.mxu0
    %v228 = vadd.f32 %v214, %v227
    %229 = vdwg.mxu0
    %v230 = vmul.f32 %v226, 0.5
    %v231 = vmul.f32 %v228, 0.5
    %v232 = vld [vmem:[%s3] sm:$0xff]
    %v233 = vld [vmem:[%s3 + $0x8] sm:$0xff]
    %v234 = vadd.f32 %v230, %v232
    %v235 = vadd.f32 %v231, %v233
    %v236 = vld [vmem:[#allocation4] sm:$0x1]
    %v237 = vld [vmem:[#allocation6] sm:$0x1]
    %238 = vadd.xlane.f32.xlu0 %v234
    %v239 = vpop.xlane.xlu0 %238
    %240 = vadd.xlane.f32.xlu0 %v235
    %v241 = vpop.xlane.xlu0 %240
    %v242 = vrcp.pop 128.0
    %v243 = vmul.f32 128.0, %v242
    %v244 = vsub.f32 1.0, %v243
    %v245 = vmul.f32 %v242, %v244
    %v246 = vadd.f32 %v242, %v245
    %vm247 = vweird.f32 %v242
    %v248 = vsel %vm247, %v242, %v246
    %v249 = vmul.f32 %v239, %v248
    %v250 = vmul.f32 %v241, %v248
    %v251 = vsub.f32 %v234, %v249
    %v252 = vsub.f32 %v235, %v250
    %v253 = vmul.f32 %v251, %v251
    %v254 = vmul.f32 %v252, %v252
    %255 = vadd.xlane.f32.xlu0 %v253
    %v256 = vpop.xlane.xlu0 %255
    %257 = vadd.xlane.f32.xlu0 %v254
    %v258 = vpop.xlane.xlu0 %257
    %v259 = vmul.f32 %v256, %v248
    %v260 = vmul.f32 %v258, %v248
    %v261 = vadd.f32 %v259, 1e-05
    %v262 = vadd.f32 %v260, 1e-05
    %v263 = vrsqrt.pop %v261
    %v264 = vmul.f32 %v263, %v261
    %v265 = vmul.f32 %v264, %v263
    %v266 = vmul.f32 0.5, %v265
    %v267 = vsub.f32 1.5, %v266
    %v268 = vmul.f32 %v263, %v267
    %vm269 = vweird.f32 %v261
    %vm270 = vweird.f32 %v263
    %vm271 = vmor %vm269, %vm270
    %v272 = vsel %vm271, %v263, %v268
    %v273 = vrsqrt.pop %v262
    %v274 = vmul.f32 %v273, %v262
    %v275 = vmul.f32 %v274, %v273
    %v276 = vmul.f32 0.5, %v275
    %v277 = vsub.f32 1.5, %v276
    %v278 = vmul.f32 %v273, %v277
    %vm279 = vweird.f32 %v262
    %vm280 = vweird.f32 %v273
    %vm281 = vmor %vm279, %vm280
    %v282 = vsel %vm281, %v273, %v278
    %v283 = vmul.f32 %v251, %v272
    %v284 = vmul.f32 %v252, %v282
    %v286 = vperm.slane %v236, 0
    %v288 = vmul.f32 %v283, %v286
    %v289 = vmul.f32 %v284, %v286
    %v291 = vperm.slane %v237, 0
    %v293 = vadd.f32 %v288, %v291
    %v294 = vadd.f32 %v289, %v291
    %295 = vst [vmem:[%s6] sm:$0xff] %v293
    %296 = vst [vmem:[%s6 + $0x8] sm:$0xff] %v294
    // Predicated region
    $region38: #{detection_net_forward.96} parent=1 // pred_check
      _
    $region39: #{detection_net_forward.96} parent=1 // pred_check_branch
      %298 = sbr.rel (0) target = $region41
    $region40: #{detection_net_forward.96} parent=1 // pred_region
      _
    $region41: #{detection_net_forward.96} parent=1 // pred_fallthru
      _
    // Predicated region
    $region42: #{detection_net_forward.96} parent=1 // pred_check
      _
    $region43: #{detection_net_forward.96} parent=1 // pred_check_branch
      %300 = sbr.rel (0) target = $region45
    $region44: #{detection_net_forward.96} parent=1 // pred_region
      _
    $region45: #{detection_net_forward.96} parent=1 // pred_fallthru
      _
    %301 = vsyncpa [#allocation3], 1
    %302 = vsyncpa [#allocation5], 1

// kernel: detection_net_forward.117
$region0: #{detection_net_forward.117}
  #allocation0 [shape = 'u32[]', space=smem, size = 0x4, offset = 0x4, fixed_abs, tag = 'smem constant byte address 0x4 - core index']
  #allocation1 [shape = 'u32[72,128]{1,0:T(1,128)}', space=vmem, size = 0x9000, scoped, tag = 'internal scratch']
  %s0 = inlined_call_operand.vmem [shape: f32[16,128], index: 0, kind: input, shape index: {}]
  %s1 = inlined_call_operand.hbm [shape: f32[1,128], index: 1, kind: input, shape index: {}]
  %s2 = inlined_call_operand.hbm [shape: f32[1,128], index: 2, kind: input, shape index: {}]
  %s3 = inlined_call_operand.hbm [shape: bf16[128,256], index: 3, kind: input, shape index: {}]
  %s4 = inlined_call_operand.hbm [shape: f32[1,256], index: 4, kind: input, shape index: {}]
  %s5 = inlined_call_operand.vmem [shape: f32[16,256], index: 5, kind: output, shape index: {}]
  %s6 = sld [smem:[#allocation0]]
  $region46: #{detection_net_forward.117} parent=0
    _
  %s8 = ssub.s32 1, %s6
  %s9 = scalar_select 0, %s8, %s6
  $region1: #{detection_net_forward.117} parent=0
    #allocation2 [shape = 'u8[512]{0}', space=vmem, size = 0x400, scoped, tag = 'input window, operand 1, single buffered']
    #allocation3 [shape = 's32[1]{0}', space=sflag, size = 0x4, scoped, tag = 'scoped memory for detection_net_forward.117']
    #allocation4 [shape = 'u8[512]{0}', space=vmem, size = 0x400, scoped, tag = 'input window, operand 2, single buffered']
    #allocation5 [shape = 's32[1]{0}', space=sflag, size = 0x4, scoped, tag = 'scoped memory for detection_net_forward.117']
    #allocation6 [shape = 'u8[65536]{0}', space=vmem, size = 0x10000, scoped, tag = 'input window, operand 3, single buffered']
    #allocation7 [shape = 'u8[1024]{0}', space=vmem, size = 0x400, scoped, tag = 'input window, operand 4, single buffered']
    #allocation8 [shape = 's32[1]{0}', space=sflag, size = 0x4, scoped, tag = 'scoped memory for detection_net_forward.117']
    %10 = vsyncpa [#allocation3], 0
    %11 = vsyncpa [#allocation5], 0
    %12 = vsyncpa [#allocation8], 0
    // Predicated region
    $region2: #{detection_net_forward.117} parent=1 // pred_check
      _
    $region3: #{detection_net_forward.117} parent=1 // pred_check_branch
      %14 = sbr.rel (0) target = $region5
    $region4: #{detection_net_forward.117} parent=1 // pred_region
      _
    $region5: #{detection_net_forward.117} parent=1 // pred_fallthru
      _
    // Predicated region
    $region6: #{detection_net_forward.117} parent=1 // pred_check
      _
    $region7: #{detection_net_forward.117} parent=1 // pred_check_branch
      %16 = sbr.rel (0) target = $region9
    $region8: #{detection_net_forward.117} parent=1 // pred_region
      %18 = vsyncadd [#allocation3], 0
      %s20 = sshll.u32 %s1, 4
      %s21 = int_to_ptr.hbm [resolvable:$true] %s20
      %s22 = sshll.u32 [#allocation2], 4
      %s23 = int_to_ptr.vmem [resolvable:$true] %s22
      %25 = dma.hbm_to_vmem [thread:$0]  %s21, 16, %s23, [#allocation3]
    $region9: #{detection_net_forward.117} parent=1 // pred_fallthru
      _
    // Predicated region
    $region10: #{detection_net_forward.117} parent=1 // pred_check
      _
    $region11: #{detection_net_forward.117} parent=1 // pred_check_branch
      %27 = sbr.rel (0) target = $region13
    $region12: #{detection_net_forward.117} parent=1 // pred_region
      %29 = vsyncadd [#allocation5], 0
      %s31 = sshll.u32 %s2, 4
      %s32 = int_to_ptr.hbm [resolvable:$true] %s31
      %s33 = sshll.u32 [#allocation4], 4
      %s34 = int_to_ptr.vmem [resolvable:$true] %s33
      %36 = dma.hbm_to_vmem [thread:$0]  %s32, 16, %s34, [#allocation5]
    $region13: #{detection_net_forward.117} parent=1 // pred_fallthru
      _
    // Predicated region
    $region14: #{detection_net_forward.117} parent=1 // pred_check
      _
    $region15: #{detection_net_forward.117} parent=1 // pred_check_branch
      %38 = sbr.rel (0) target = $region17
    $region16: #{detection_net_forward.117} parent=1 // pred_region
      %40 = vsyncadd [#allocation5], 0
      %s41 = sshll.u32 %s3, 4
      %s42 = int_to_ptr.hbm [resolvable:$true] %s41
      %s43 = sshll.u32 [#allocation6], 4
      %s44 = int_to_ptr.vmem [resolvable:$true] %s43
      %49 = dma.hbm_to_vmem [thread:$0]  %s42, 2048, %s44, [#allocation5], 128, 128, 8
    $region17: #{detection_net_forward.117} parent=1 // pred_fallthru
      _
    // Predicated region
    $region18: #{detection_net_forward.117} parent=1 // pred_check
      _
    $region19: #{detection_net_forward.117} parent=1 // pred_check_branch
      %51 = sbr.rel (0) target = $region21
    $region20: #{detection_net_forward.117} parent=1 // pred_region
      %53 = vsyncadd [#allocation8], 0
      %s55 = sshll.u32 %s4, 4
      %s56 = int_to_ptr.hbm [resolvable:$true] %s55
      %s57 = sshll.u32 [#allocation7], 4
      %s58 = int_to_ptr.vmem [resolvable:$true] %s57
      %60 = dma.hbm_to_vmem [thread:$0]  %s56, 32, %s58, [#allocation8]
    $region21: #{detection_net_forward.117} parent=1 // pred_fallthru
      _
    // Predicated region
    $region22: #{detection_net_forward.117} parent=1 // pred_check
      _
    $region23: #{detection_net_forward.117} parent=1 // pred_check_branch
      %62 = sbr.rel (0) target = $region25
    $region24: #{detection_net_forward.117} parent=1 // pred_region
      %64 = dma.done [#allocation3], 16
    $region25: #{detection_net_forward.117} parent=1 // pred_fallthru
      _
    // Predicated region
    $region26: #{detection_net_forward.117} parent=1 // pred_check
      _
    $region27: #{detection_net_forward.117} parent=1 // pred_check_branch
      %66 = sbr.rel (0) target = $region29
    $region28: #{detection_net_forward.117} parent=1 // pred_region
      %68 = dma.done [#allocation5], 16
    $region29: #{detection_net_forward.117} parent=1 // pred_fallthru
      _
    // Predicated region
    $region30: #{detection_net_forward.117} parent=1 // pred_check
      _
    $region31: #{detection_net_forward.117} parent=1 // pred_check_branch
      %70 = sbr.rel (0) target = $region33
    $region32: #{detection_net_forward.117} parent=1 // pred_region
      %72 = dma.done [#allocation5], 2048
    $region33: #{detection_net_forward.117} parent=1 // pred_fallthru
      _
    // Predicated region
    $region34: #{detection_net_forward.117} parent=1 // pred_check
      _
    $region35: #{detection_net_forward.117} parent=1 // pred_check_branch
      %74 = sbr.rel (0) target = $region37
    $region36: #{detection_net_forward.117} parent=1 // pred_region
      %76 = dma.done [#allocation8], 32
    $region37: #{detection_net_forward.117} parent=1 // pred_fallthru
      _
    %v77 = vld [vmem:[%s0] sm:$0xff]
    %v78 = vld [vmem:[%s0 + $0x8] sm:$0xff]
    %v79 = vld [vmem:[#allocation2] sm:$0x1]
    %v80 = vld [vmem:[#allocation4] sm:$0x1]
    %81 = vadd.xlane.f32.xlu0 %v77
    %v82 = vpop.xlane.xlu0 %81
    %83 = vadd.xlane.f32.xlu0 %v78
    %v84 = vpop.xlane.xlu0 %83
    %v85 = vrcp.pop 128.0
    %v86 = vmul.f32 128.0, %v85
    %v87 = vsub.f32 1.0, %v86
    %v88 = vmul.f32 %v85, %v87
    %v89 = vadd.f32 %v85, %v88
    %vm90 = vweird.f32 %v85
    %v91 = vsel %vm90, %v85, %v89
    %v92 = vmul.f32 %v82, %v91
    %v93 = vmul.f32 %v84, %v91
    %v94 = vsub.f32 %v77, %v92
    %v95 = vsub.f32 %v78, %v93
    %v96 = vmul.f32 %v94, %v94
    %v97 = vmul.f32 %v95, %v95
    %98 = vadd.xlane.f32.xlu0 %v96
    %v99 = vpop.xlane.xlu0 %98
    %100 = vadd.xlane.f32.xlu0 %v97
    %v101 = vpop.xlane.xlu0 %100
    %v102 = vmul.f32 %v99, %v91
    %v103 = vmul.f32 %v101, %v91
    %v104 = vadd.f32 %v102, 1e-05
    %v105 = vadd.f32 %v103, 1e-05
    %v106 = vrsqrt.pop %v104
    %v107 = vmul.f32 %v106, %v104
    %v108 = vmul.f32 %v107, %v106
    %v109 = vmul.f32 0.5, %v108
    %v110 = vsub.f32 1.5, %v109
    %v111 = vmul.f32 %v106, %v110
    %vm112 = vweird.f32 %v104
    %vm113 = vweird.f32 %v106
    %vm114 = vmor %vm112, %vm113
    %v115 = vsel %vm114, %v106, %v111
    %v116 = vrsqrt.pop %v105
    %v117 = vmul.f32 %v116, %v105
    %v118 = vmul.f32 %v117, %v116
    %v119 = vmul.f32 0.5, %v118
    %v120 = vsub.f32 1.5, %v119
    %v121 = vmul.f32 %v116, %v120
    %vm122 = vweird.f32 %v105
    %vm123 = vweird.f32 %v116
    %vm124 = vmor %vm122, %vm123
    %v125 = vsel %vm124, %v116, %v121
    %v126 = vmul.f32 %v94, %v115
    %v127 = vmul.f32 %v95, %v125
    %v129 = vperm.slane %v79, 0
    %v131 = vmul.f32 %v126, %v129
    %v132 = vmul.f32 %v127, %v129
    %v134 = vperm.slane %v80, 0
    %v136 = vadd.f32 %v131, %v134
    %v137 = vadd.f32 %v132, %v134
    %v138 = vld [vmem:[#allocation6] sm:$0xff]
    %v139 = vld [vmem:[#allocation6 + $0x8] sm:$0xff]
    %v140 = vld [vmem:[#allocation6 + $0x10] sm:$0xff]
    %v141 = vld [vmem:[#allocation6 + $0x18] sm:$0xff]
    %v142 = vld [vmem:[#allocation6 + $0x20] sm:$0xff]
    %v143 = vld [vmem:[#allocation6 + $0x28] sm:$0xff]
    %v144 = vld [vmem:[#allocation6 + $0x30] sm:$0xff]
    %v145 = vld [vmem:[#allocation6 + $0x38] sm:$0xff]
    %v146 = vld [vmem:[#allocation6 + $0x40] sm:$0xff]
    %v147 = vld [vmem:[#allocation6 + $0x48] sm:$0xff]
    %v148 = vld [vmem:[#allocation6 + $0x50] sm:$0xff]
    %v149 = vld [vmem:[#allocation6 + $0x58] sm:$0xff]
    %v150 = vld [vmem:[#allocation6 + $0x60] sm:$0xff]
    %v151 = vld [vmem:[#allocation6 + $0x68] sm:$0xff]
    %v152 = vld [vmem:[#allocation6 + $0x70] sm:$0xff]
    %v153 = vld [vmem:[#allocation6 + $0x78] sm:$0xff]
    %v154 = vld [vmem:[#allocation7] sm:$0x3]
    %v155 = vpack.c.bf16 %v137, %v136
    %v157 = vperm.slane %v154, 0
    %v158 = vperm.slane %v154, 1
    %v177 = vunpack.c.l.b16 %v138
    %v178 = vunpack.c.h.b16 %v138
    %v179 = vunpack.c.l.b16 %v139
    %v180 = vunpack.c.h.b16 %v139
    %v181 = vunpack.c.l.b16 %v140
    %v182 = vunpack.c.h.b16 %v140
    %v183 = vunpack.c.l.b16 %v141
    %v184 = vunpack.c.h.b16 %v141
    %v185 = vunpack.c.l.b16 %v142
    %v186 = vunpack.c.h.b16 %v142
    %v187 = vunpack.c.l.b16 %v143
    %v188 = vunpack.c.h.b16 %v143
    %v189 = vunpack.c.l.b16 %v144
    %v190 = vunpack.c.h.b16 %v144
    %v191 = vunpack.c.l.b16 %v145
    %v192 = vunpack.c.h.b16 %v145
    %v193 = vunpack.c.l.b16 %v146
    %v194 = vunpack.c.h.b16 %v146
    %v195 = vunpack.c.l.b16 %v147
    %v196 = vunpack.c.h.b16 %v147
    %v197 = vunpack.c.l.b16 %v148
    %v198 = vunpack.c.h.b16 %v148
    %v199 = vunpack.c.l.b16 %v149
    %v200 = vunpack.c.h.b16 %v149
    %v201 = vunpack.c.l.b16 %v150
    %v202 = vunpack.c.h.b16 %v150
    %v203 = vunpack.c.l.b16 %v151
    %v204 = vunpack.c.h.b16 %v151
    %v205 = vunpack.c.l.b16 %v152
    %v206 = vunpack.c.h.b16 %v152
    %v207 = vunpack.c.l.b16 %v153
    %v208 = vunpack.c.h.b16 %v153
    %v209 = vpack.c.b16 %v179, %v177
    %v210 = vpack.c.b16 %v180, %v178
    %v211 = vpack.c.b16 %v183, %v181
    %v212 = vpack.c.b16 %v184, %v182
    %v213 = vpack.c.b16 %v187, %v185
    %v214 = vpack.c.b16 %v188, %v186
    %v215 = vpack.c.b16 %v191, %v189
    %v216 = vpack.c.b16 %v192, %v190
    %v217 = vpack.c.b16 %v195, %v193
    %v218 = vpack.c.b16 %v196, %v194
    %v219 = vpack.c.b16 %v199, %v197
    %v220 = vpack.c.b16 %v200, %v198
    %v221 = vpack.c.b16 %v203, %v201
    %v222 = vpack.c.b16 %v204, %v202
    %v223 = vpack.c.b16 %v207, %v205
    %v224 = vpack.c.b16 %v208, %v206
    %241 = vmatpush.bf16.msra.mxu0 %v223
    %242 = vmatpush.bf16.msra.mxu0 %v221
    %243 = vmatpush.bf16.msra.mxu0 %v219
    %244 = vmatpush.bf16.msra.mxu0 %v217
    %245 = vmatpush.bf16.msra.mxu0 %v215
    %246 = vmatpush.bf16.msra.mxu0 %v213
    %247 = vmatpush.bf16.msra.mxu0 %v211
    %248 = vmatpush.bf16.msra.mxu0 %v209
    %249 = vmatmul.bf16.gmra.mxu0 %v155
    %v250 = vpop.f32.mrf.mxu0
    %v251 = vadd.f32 %v157, %v250
    %v252 = vpop.f32.mrf.mxu0
    %v253 = vadd.f32 %v157, %v252
    %254 = vdwg.mxu0
    %255 = vmatpush.bf16.msra.mxu0 %v224
    %256 = vmatpush.bf16.msra.mxu0 %v222
    %257 = vmatpush.bf16.msra.mxu0 %v220
    %258 = vmatpush.bf16.msra.mxu0 %v218
    %259 = vmatpush.bf16.msra.mxu0 %v216
    %260 = vmatpush.bf16.msra.mxu0 %v214
    %261 = vmatpush.bf16.msra.mxu0 %v212
    %262 = vmatpush.bf16.msra.mxu0 %v210
    %263 = vmatmul.bf16.gmra.mxu0 %v155
    %v264 = vpop.f32.mrf.mxu0
    %v265 = vadd.f32 %v158, %v264
    %v266 = vpop.f32.mrf.mxu0
    %v267 = vadd.f32 %v158, %v266
    %268 = vdwg.mxu0
    %v269 = vxor.u32 %v251, 2147483648
    %v270 = vxor.u32 %v265, 2147483648
    %v271 = vxor.u32 %v253, 2147483648
    %v272 = vxor.u32 %v267, 2147483648
    %v273 = vmul.f32 %v269, 1.442695
    %v274 = vpow.pop %v273
    %v275 = vmul.f32 %v270, 1.442695
    %v276 = vpow.pop %v275
    %v277 = vmul.f32 %v271, 1.442695
    %v278 = vpow.pop %v277
    %v279 = vmul.f32 %v272, 1.442695
    %v280 = vpow.pop %v279
    %v281 = vadd.f32 %v274, 1.0
    %v282 = vadd.f32 %v276, 1.0
    %v283 = vadd.f32 %v278, 1.0
    %v284 = vadd.f32 %v280, 1.0
    %v285 = vrcp.pop %v281
    %v286 = vmul.f32 %v281, %v285
    %v287 = vsub.f32 1.0, %v286
    %v288 = vmul.f32 %v285, %v287
    %v289 = vadd.f32 %v285, %v288
    %vm290 = vweird.f32 %v281
    %vm291 = vweird.f32 %v285
    %vm292 = vmor %vm290, %vm291
    %v293 = vsel %vm292, %v285, %v289
    %v294 = vand.u32 2147483647, %v281
    %vm295 = vcmp.eq.f32.partialorder %v294, 8.507059e+37
    %v296 = vand.u32 %v281, 2147483648
    %v297 = vor.u32 1.1754944e-38, %v296
    %v298 = vsel %vm295, %v297, %v293
    %v299 = vmul.f32 1.0, %v298
    %v300 = vrcp.pop %v282
    %v301 = vmul.f32 %v282, %v300
    %v302 = vsub.f32 1.0, %v301
    %v303 = vmul.f32 %v300, %v302
    %v304 = vadd.f32 %v300, %v303
    %vm305 = vweird.f32 %v282
    %vm306 = vweird.f32 %v300
    %vm307 = vmor %vm305, %vm306
    %v308 = vsel %vm307, %v300, %v304
    %v309 = vand.u32 2147483647, %v282
    %vm310 = vcmp.eq.f32.partialorder %v309, 8.507059e+37
    %v311 = vand.u32 %v282, 2147483648
    %v312 = vor.u32 1.1754944e-38, %v311
    %v313 = vsel %vm310, %v312, %v308
    %v314 = vmul.f32 1.0, %v313
    %v315 = vrcp.pop %v283
    %v316 = vmul.f32 %v283, %v315
    %v317 = vsub.f32 1.0, %v316
    %v318 = vmul.f32 %v315, %v317
    %v319 = vadd.f32 %v315, %v318
    %vm320 = vweird.f32 %v283
    %vm321 = vweird.f32 %v315
    %vm322 = vmor %vm320, %vm321
    %v323 = vsel %vm322, %v315, %v319
    %v324 = vand.u32 2147483647, %v283
    %vm325 = vcmp.eq.f32.partialorder %v324, 8.507059e+37
    %v326 = vand.u32 %v283, 2147483648
    %v327 = vor.u32 1.1754944e-38, %v326
    %v328 = vsel %vm325, %v327, %v323
    %v329 = vmul.f32 1.0, %v328
    %v330 = vrcp.pop %v284
    %v331 = vmul.f32 %v284, %v330
    %v332 = vsub.f32 1.0, %v331
    %v333 = vmul.f32 %v330, %v332
    %v334 = vadd.f32 %v330, %v333
    %vm335 = vweird.f32 %v284
    %vm336 = vweird.f32 %v330
    %vm337 = vmor %vm335, %vm336
    %v338 = vsel %vm337, %v330, %v334
    %v339 = vand.u32 2147483647, %v284
    %vm340 = vcmp.eq.f32.partialorder %v339, 8.507059e+37
    %v341 = vand.u32 %v284, 2147483648
    %v342 = vor.u32 1.1754944e-38, %v341
    %v343 = vsel %vm340, %v342, %v338
    %v344 = vmul.f32 1.0, %v343
    %v345 = vmul.f32 %v251, %v299
    %v346 = vmul.f32 %v265, %v314
    %v347 = vmul.f32 %v253, %v329
    %v348 = vmul.f32 %v267, %v344
    %349 = vst [vmem:[%s5] sm:$0xff] %v345
    %350 = vst [vmem:[%s5 + $0x8] sm:$0xff] %v346
    %351 = vst [vmem:[%s5 + $0x10] sm:$0xff] %v347
    %352 = vst [vmem:[%s5 + $0x18] sm:$0xff] %v348
    // Predicated region
    $region38: #{detection_net_forward.117} parent=1 // pred_check
      _
    $region39: #{detection_net_forward.117} parent=1 // pred_check_branch
      %354 = sbr.rel (0) target = $region41
    $region40: #{detection_net_forward.117} parent=1 // pred_region
      _
    $region41: #{detection_net_forward.117} parent=1 // pred_fallthru
      _
    // Predicated region
    $region42: #{detection_net_forward.117} parent=1 // pred_check
      _
    $region43: #{detection_net_forward.117} parent=1 // pred_check_branch
      %356 = sbr.rel (0) target = $region45
    $region44: #{detection_net_forward.117} parent=1 // pred_region
      _
    $region45: #{detection_net_forward.117} parent=1 // pred_fallthru
      _
    %357 = vsyncpa [#allocation3], 1
    %358 = vsyncpa [#allocation5], 1
    %359 = vsyncpa [#allocation8], 1

// kernel: detection_net_forward.116
$region0: #{detection_net_forward.116}
  #allocation0 [shape = 'u32[]', space=smem, size = 0x4, offset = 0x4, fixed_abs, tag = 'smem constant byte address 0x4 - core index']
  #allocation1 [shape = 'u32[72,128]{1,0:T(1,128)}', space=vmem, size = 0x9000, scoped, tag = 'internal scratch']
  %s0 = inlined_call_operand.vmem [shape: f32[16,256], index: 0, kind: input, shape index: {}]
  %s1 = inlined_call_operand.hbm [shape: bf16[256,128], index: 1, kind: input, shape index: {}]
  %s2 = inlined_call_operand.hbm [shape: f32[1,128], index: 2, kind: input, shape index: {}]
  %s3 = inlined_call_operand.vmem [shape: f32[16,128], index: 3, kind: input, shape index: {}]
  %s4 = inlined_call_operand.hbm [shape: f32[1,128], index: 4, kind: input, shape index: {}]
  %s5 = inlined_call_operand.hbm [shape: f32[1,128], index: 5, kind: input, shape index: {}]
  %s6 = inlined_call_operand.vmem [shape: f32[16,128], index: 6, kind: output, shape index: {}]
  %s7 = sld [smem:[#allocation0]]
  $region50: #{detection_net_forward.116} parent=0
    _
  %s9 = ssub.s32 1, %s7
  %s10 = scalar_select 0, %s9, %s7
  $region1: #{detection_net_forward.116} parent=0
    #allocation2 [shape = 'u8[65536]{0}', space=vmem, size = 0x10000, scoped, tag = 'input window, operand 1, single buffered']
    #allocation3 [shape = 's32[1]{0}', space=sflag, size = 0x4, scoped, tag = 'scoped memory for detection_net_forward.116']
    #allocation4 [shape = 'u8[512]{0}', space=vmem, size = 0x400, scoped, tag = 'input window, operand 2, single buffered']
    #allocation5 [shape = 's32[1]{0}', space=sflag, size = 0x4, scoped, tag = 'scoped memory for detection_net_forward.116']
    #allocation6 [shape = 'u8[512]{0}', space=vmem, size = 0x400, scoped, tag = 'input window, operand 4, single buffered']
    #allocation7 [shape = 'u8[512]{0}', space=vmem, size = 0x400, scoped, tag = 'input window, operand 5, single buffered']
    #allocation8 [shape = 's32[1]{0}', space=sflag, size = 0x4, scoped, tag = 'scoped memory for detection_net_forward.116']
    %11 = vsyncpa [#allocation3], 0
    %12 = vsyncpa [#allocation5], 0
    %13 = vsyncpa [#allocation8], 0
    // Predicated region
    $region2: #{detection_net_forward.116} parent=1 // pred_check
      _
    $region3: #{detection_net_forward.116} parent=1 // pred_check_branch
      %15 = sbr.rel (0) target = $region5
    $region4: #{detection_net_forward.116} parent=1 // pred_region
      _
    $region5: #{detection_net_forward.116} parent=1 // pred_fallthru
      _
    // Predicated region
    $region6: #{detection_net_forward.116} parent=1 // pred_check
      _
    $region7: #{detection_net_forward.116} parent=1 // pred_check_branch
      %17 = sbr.rel (0) target = $region9
    $region8: #{detection_net_forward.116} parent=1 // pred_region
      %19 = vsyncadd [#allocation3], 0
      %s20 = sshll.u32 %s1, 4
      %s21 = int_to_ptr.hbm [resolvable:$true] %s20
      %s22 = sshll.u32 [#allocation2], 4
      %s23 = int_to_ptr.vmem [resolvable:$true] %s22
      %28 = dma.hbm_to_vmem [thread:$0]  %s21, 2048, %s23, [#allocation3], 64, 64, 4
    $region9: #{detection_net_forward.116} parent=1 // pred_fallthru
      _
    // Predicated region
    $region10: #{detection_net_forward.116} parent=1 // pred_check
      _
    $region11: #{detection_net_forward.116} parent=1 // pred_check_branch
      %30 = sbr.rel (0) target = $region13
    $region12: #{detection_net_forward.116} parent=1 // pred_region
      %32 = vsyncadd [#allocation5], 0
      %s34 = sshll.u32 %s2, 4
      %s35 = int_to_ptr.hbm [resolvable:$true] %s34
      %s36 = sshll.u32 [#allocation4], 4
      %s37 = int_to_ptr.vmem [resolvable:$true] %s36
      %39 = dma.hbm_to_vmem [thread:$0]  %s35, 16, %s37, [#allocation5]
    $region13: #{detection_net_forward.116} parent=1 // pred_fallthru
      _
    // Predicated region
    $region14: #{detection_net_forward.116} parent=1 // pred_check
      _
    $region15: #{detection_net_forward.116} parent=1 // pred_check_branch
      %41 = sbr.rel (0) target = $region17
    $region16: #{detection_net_forward.116} parent=1 // pred_region
      _
    $region17: #{detection_net_forward.116} parent=1 // pred_fallthru
      _
    // Predicated region
    $region18: #{detection_net_forward.116} parent=1 // pred_check
      _
    $region19: #{detection_net_forward.116} parent=1 // pred_check_branch
      %43 = sbr.rel (0) target = $region21
    $region20: #{detection_net_forward.116} parent=1 // pred_region
      %45 = vsyncadd [#allocation5], 0
      %s47 = sshll.u32 %s4, 4
      %s48 = int_to_ptr.hbm [resolvable:$true] %s47
      %s49 = sshll.u32 [#allocation6], 4
      %s50 = int_to_ptr.vmem [resolvable:$true] %s49
      %52 = dma.hbm_to_vmem [thread:$0]  %s48, 16, %s50, [#allocation5]
    $region21: #{detection_net_forward.116} parent=1 // pred_fallthru
      _
    // Predicated region
    $region22: #{detection_net_forward.116} parent=1 // pred_check
      _
    $region23: #{detection_net_forward.116} parent=1 // pred_check_branch
      %54 = sbr.rel (0) target = $region25
    $region24: #{detection_net_forward.116} parent=1 // pred_region
      %56 = vsyncadd [#allocation8], 0
      %s58 = sshll.u32 %s5, 4
      %s59 = int_to_ptr.hbm [resolvable:$true] %s58
      %s60 = sshll.u32 [#allocation7], 4
      %s61 = int_to_ptr.vmem [resolvable:$true] %s60
      %63 = dma.hbm_to_vmem [thread:$0]  %s59, 16, %s61, [#allocation8]
    $region25: #{detection_net_forward.116} parent=1 // pred_fallthru
      _
    // Predicated region
    $region26: #{detection_net_forward.116} parent=1 // pred_check
      _
    $region27: #{detection_net_forward.116} parent=1 // pred_check_branch
      %65 = sbr.rel (0) target = $region29
    $region28: #{detection_net_forward.116} parent=1 // pred_region
      %67 = dma.done [#allocation3], 2048
    $region29: #{detection_net_forward.116} parent=1 // pred_fallthru
      _
    // Predicated region
    $region30: #{detection_net_forward.116} parent=1 // pred_check
      _
    $region31: #{detection_net_forward.116} parent=1 // pred_check_branch
      %69 = sbr.rel (0) target = $region33
    $region32: #{detection_net_forward.116} parent=1 // pred_region
      %71 = dma.done [#allocation5], 16
    $region33: #{detection_net_forward.116} parent=1 // pred_fallthru
      _
    // Predicated region
    $region34: #{detection_net_forward.116} parent=1 // pred_check
      _
    $region35: #{detection_net_forward.116} parent=1 // pred_check_branch
      %73 = sbr.rel (0) target = $region37
    $region36: #{detection_net_forward.116} parent=1 // pred_region
      %75 = dma.done [#allocation5], 16
    $region37: #{detection_net_forward.116} parent=1 // pred_fallthru
      _
    // Predicated region
    $region38: #{detection_net_forward.116} parent=1 // pred_check
      _
    $region39: #{detection_net_forward.116} parent=1 // pred_check_branch
      %77 = sbr.rel (0) target = $region41
    $region40: #{detection_net_forward.116} parent=1 // pred_region
      %79 = dma.done [#allocation8], 16
    $region41: #{detection_net_forward.116} parent=1 // pred_fallthru
      _
    %v80 = vld [vmem:[%s0] sm:$0xff]
    %v81 = vld [vmem:[%s0 + $0x8] sm:$0xff]
    %v82 = vld [vmem:[%s0 + $0x10] sm:$0xff]
    %v83 = vld [vmem:[%s0 + $0x18] sm:$0xff]
    %v84 = vld [vmem:[#allocation2] sm:$0xf]
    %v85 = vld [vmem:[#allocation2 + $0x4] sm:$0xf]
    %v86 = vld [vmem:[#allocation2 + $0x8] sm:$0xf]
    %v87 = vld [vmem:[#allocation2 + $0xc] sm:$0xf]
    %v88 = vld [vmem:[#allocation2 + $0x10] sm:$0xf]
    %v89 = vld [vmem:[#allocation2 + $0x14] sm:$0xf]
    %v90 = vld [vmem:[#allocation2 + $0x18] sm:$0xf]
    %v91 = vld [vmem:[#allocation2 + $0x1c] sm:$0xf]
    %v92 = vld [vmem:[#allocation2 + $0x20] sm:$0xf]
    %v93 = vld [vmem:[#allocation2 + $0x24] sm:$0xf]
    %v94 = vld [vmem:[#allocation2 + $0x28] sm:$0xf]
    %v95 = vld [vmem:[#allocation2 + $0x2c] sm:$0xf]
    %v96 = vld [vmem:[#allocation2 + $0x30] sm:$0xf]
    %v97 = vld [vmem:[#allocation2 + $0x34] sm:$0xf]
    %v98 = vld [vmem:[#allocation2 + $0x38] sm:$0xf]
    %v99 = vld [vmem:[#allocation2 + $0x3c] sm:$0xf]
    %v100 = vld [vmem:[#allocation2 + $0x40] sm:$0xf]
    %v101 = vld [vmem:[#allocation2 + $0x44] sm:$0xf]
    %v102 = vld [vmem:[#allocation2 + $0x48] sm:$0xf]
    %v103 = vld [vmem:[#allocation2 + $0x4c] sm:$0xf]
    %v104 = vld [vmem:[#allocation2 + $0x50] sm:$0xf]
    %v105 = vld [vmem:[#allocation2 + $0x54] sm:$0xf]
    %v106 = vld [vmem:[#allocation2 + $0x58] sm:$0xf]
    %v107 = vld [vmem:[#allocation2 + $0x5c] sm:$0xf]
    %v108 = vld [vmem:[#allocation2 + $0x60] sm:$0xf]
    %v109 = vld [vmem:[#allocation2 + $0x64] sm:$0xf]
    %v110 = vld [vmem:[#allocation2 + $0x68] sm:$0xf]
    %v111 = vld [vmem:[#allocation2 + $0x6c] sm:$0xf]
    %v112 = vld [vmem:[#allocation2 + $0x70] sm:$0xf]
    %v113 = vld [vmem:[#allocation2 + $0x74] sm:$0xf]
    %v114 = vld [vmem:[#allocation2 + $0x78] sm:$0xf]
    %v115 = vld [vmem:[#allocation2 + $0x7c] sm:$0xf]
    %v116 = vld [vmem:[#allocation4] sm:$0x1]
    %v117 = vpack.c.bf16 %v82, %v80
    %v118 = vpack.c.bf16 %v83, %v81
    %v120 = vperm.slane %v116, 0
    %v154 = vunpack.c.l.b16 %v84
    %v155 = vunpack.c.l.b16 %v85
    %v156 = vunpack.c.l.b16 %v86
    %v157 = vunpack.c.l.b16 %v87
    %v158 = vunpack.c.l.b16 %v88
    %v159 = vunpack.c.l.b16 %v89
    %v160 = vunpack.c.l.b16 %v90
    %v161 = vunpack.c.l.b16 %v91
    %v162 = vunpack.c.l.b16 %v92
    %v163 = vunpack.c.l.b16 %v93
    %v164 = vunpack.c.l.b16 %v94
    %v165 = vunpack.c.l.b16 %v95
    %v166 = vunpack.c.l.b16 %v96
    %v167 = vunpack.c.l.b16 %v97
    %v168 = vunpack.c.l.b16 %v98
    %v169 = vunpack.c.l.b16 %v99
    %v170 = vunpack.c.l.b16 %v100
    %v171 = vunpack.c.l.b16 %v101
    %v172 = vunpack.c.l.b16 %v102
    %v173 = vunpack.c.l.b16 %v103
    %v174 = vunpack.c.l.b16 %v104
    %v175 = vunpack.c.l.b16 %v105
    %v176 = vunpack.c.l.b16 %v106
    %v177 = vunpack.c.l.b16 %v107
    %v178 = vunpack.c.l.b16 %v108
    %v179 = vunpack.c.l.b16 %v109
    %v180 = vunpack.c.l.b16 %v110
    %v181 = vunpack.c.l.b16 %v111
    %v182 = vunpack.c.l.b16 %v112
    %v183 = vunpack.c.l.b16 %v113
    %v184 = vunpack.c.l.b16 %v114
    %v185 = vunpack.c.l.b16 %v115
    %v186 = vpack.c.b16 %v155, %v154
    %v187 = vpack.c.b16 %v157, %v156
    %v188 = vpack.c.b16 %v159, %v158
    %v189 = vpack.c.b16 %v161, %v160
    %v190 = vpack.c.b16 %v163, %v162
    %v191 = vpack.c.b16 %v165, %v164
    %v192 = vpack.c.b16 %v167, %v166
    %v193 = vpack.c.b16 %v169, %v168
    %v194 = vpack.c.b16 %v171, %v170
    %v195 = vpack.c.b16 %v173, %v172
    %v196 = vpack.c.b16 %v175, %v174
    %v197 = vpack.c.b16 %v177, %v176
    %v198 = vpack.c.b16 %v179, %v178
    %v199 = vpack.c.b16 %v181, %v180
    %v200 = vpack.c.b16 %v183, %v182
    %v201 = vpack.c.b16 %v185, %v184
    %218 = vmatpush.bf16.msra.mxu0 %v193
    %219 = vmatpush.bf16.msra.mxu0 %v192
    %220 = vmatpush.bf16.msra.mxu0 %v191
    %221 = vmatpush.bf16.msra.mxu0 %v190
    %222 = vmatpush.bf16.msra.mxu0 %v189
    %223 = vmatpush.bf16.msra.mxu0 %v188
    %224 = vmatpush.bf16.msra.mxu0 %v187
    %225 = vmatpush.bf16.msra.mxu0 %v186
    %226 = vmatmul.bf16.gmra.mxu0 %v117
    %v227 = vpop.f32.mrf.mxu0
    %v228 = vadd.f32 %v120, %v227
    %v229 = vpop.f32.mrf.mxu0
    %v230 = vadd.f32 %v120, %v229
    %231 = vdwg.mxu0
    %232 = vmatpush.bf16.msra.mxu0 %v201
    %233 = vmatpush.bf16.msra.mxu0 %v200
    %234 = vmatpush.bf16.msra.mxu0 %v199
    %235 = vmatpush.bf16.msra.mxu0 %v198
    %236 = vmatpush.bf16.msra.mxu0 %v197
    %237 = vmatpush.bf16.msra.mxu0 %v196
    %238 = vmatpush.bf16.msra.mxu0 %v195
    %239 = vmatpush.bf16.msra.mxu0 %v194
    %240 = vmatmul.bf16.gmra.mxu0 %v118
    %v241 = vpop.f32.mrf.mxu0
    %v242 = vadd.f32 %v228, %v241
    %v243 = vpop.f32.mrf.mxu0
    %v244 = vadd.f32 %v230, %v243
    %245 = vdwg.mxu0
    %v246 = vmul.f32 %v242, 0.5
    %v247 = vmul.f32 %v244, 0.5
    %v248 = vld [vmem:[%s3] sm:$0xff]
    %v249 = vld [vmem:[%s3 + $0x8] sm:$0xff]
    %v250 = vadd.f32 %v246, %v248
    %v251 = vadd.f32 %v247, %v249
    %v252 = vld [vmem:[#allocation6] sm:$0x1]
    %v253 = vld [vmem:[#allocation7] sm:$0x1]
    %254 = vadd.xlane.f32.xlu0 %v250
    %v255 = vpop.xlane.xlu0 %254
    %256 = vadd.xlane.f32.xlu0 %v251
    %v257 = vpop.xlane.xlu0 %256
    %v258 = vrcp.pop 128.0
    %v259 = vmul.f32 128.0, %v258
    %v260 = vsub.f32 1.0, %v259
    %v261 = vmul.f32 %v258, %v260
    %v262 = vadd.f32 %v258, %v261
    %vm263 = vweird.f32 %v258
    %v264 = vsel %vm263, %v258, %v262
    %v265 = vmul.f32 %v255, %v264
    %v266 = vmul.f32 %v257, %v264
    %v267 = vsub.f32 %v250, %v265
    %v268 = vsub.f32 %v251, %v266
    %v269 = vmul.f32 %v267, %v267
    %v270 = vmul.f32 %v268, %v268
    %271 = vadd.xlane.f32.xlu0 %v269
    %v272 = vpop.xlane.xlu0 %271
    %273 = vadd.xlane.f32.xlu0 %v270
    %v274 = vpop.xlane.xlu0 %273
    %v275 = vmul.f32 %v272, %v264
    %v276 = vmul.f32 %v274, %v264
    %v277 = vadd.f32 %v275, 1e-05
    %v278 = vadd.f32 %v276, 1e-05
    %v279 = vrsqrt.pop %v277
    %v280 = vmul.f32 %v279, %v277
    %v281 = vmul.f32 %v280, %v279
    %v282 = vmul.f32 0.5, %v281
    %v283 = vsub.f32 1.5, %v282
    %v284 = vmul.f32 %v279, %v283
    %vm285 = vweird.f32 %v277
    %vm286 = vweird.f32 %v279
    %vm287 = vmor %vm285, %vm286
    %v288 = vsel %vm287, %v279, %v284
    %v289 = vrsqrt.pop %v278
    %v290 = vmul.f32 %v289, %v278
    %v291 = vmul.f32 %v290, %v289
    %v292 = vmul.f32 0.5, %v291
    %v293 = vsub.f32 1.5, %v292
    %v294 = vmul.f32 %v289, %v293
    %vm295 = vweird.f32 %v278
    %vm296 = vweird.f32 %v289
    %vm297 = vmor %vm295, %vm296
    %v298 = vsel %vm297, %v289, %v294
    %v299 = vmul.f32 %v267, %v288
    %v300 = vmul.f32 %v268, %v298
    %v302 = vperm.slane %v252, 0
    %v304 = vmul.f32 %v299, %v302
    %v305 = vmul.f32 %v300, %v302
    %v307 = vperm.slane %v253, 0
    %v309 = vadd.f32 %v304, %v307
    %v310 = vadd.f32 %v305, %v307
    %311 = vst [vmem:[%s6] sm:$0xff] %v309
    %312 = vst [vmem:[%s6 + $0x8] sm:$0xff] %v310
    // Predicated region
    $region42: #{detection_net_forward.116} parent=1 // pred_check
      _
    $region43: #{detection_net_forward.116} parent=1 // pred_check_branch
      %314 = sbr.rel (0) target = $region45
    $region44: #{detection_net_forward.116} parent=1 // pred_region
      _
    $region45: #{detection_net_forward.116} parent=1 // pred_fallthru
      _
    // Predicated region
    $region46: #{detection_net_forward.116} parent=1 // pred_check
      _
    $region47: #{detection_net_forward.116} parent=1 // pred_check_branch
      %316 = sbr.rel (0) target = $region49
    $region48: #{detection_net_forward.116} parent=1 // pred_region
      _
    $region49: #{detection_net_forward.116} parent=1 // pred_fallthru
      _
    %317 = vsyncpa [#allocation3], 1
    %318 = vsyncpa [#allocation5], 1
    %319 = vsyncpa [#allocation8], 1

// kernel: detection_net_forward.118
$region0: #{detection_net_forward.118}
  #allocation0 [shape = 'u32[]', space=smem, size = 0x4, offset = 0x4, fixed_abs, tag = 'smem constant byte address 0x4 - core index']
  #allocation1 [shape = 'u32[72,128]{1,0:T(1,128)}', space=vmem, size = 0x9000, scoped, tag = 'internal scratch']
  %s0 = inlined_call_operand.vmem [shape: f32[16,256], index: 0, kind: input, shape index: {}]
  %s1 = inlined_call_operand.hbm [shape: bf16[256,128], index: 1, kind: input, shape index: {}]
  %s2 = inlined_call_operand.hbm [shape: f32[1,128], index: 2, kind: input, shape index: {}]
  %s3 = inlined_call_operand.vmem [shape: f32[16,128], index: 3, kind: input, shape index: {}]
  %s4 = inlined_call_operand.vmem [shape: f32[16,128], index: 4, kind: output, shape index: {}]
  %s5 = sld [smem:[#allocation0]]
  $region34: #{detection_net_forward.118} parent=0
    _
  %s7 = ssub.s32 1, %s5
  %s8 = scalar_select 0, %s7, %s5
  $region1: #{detection_net_forward.118} parent=0
    #allocation2 [shape = 'u8[65536]{0}', space=vmem, size = 0x10000, scoped, tag = 'input window, operand 1, single buffered']
    #allocation3 [shape = 's32[1]{0}', space=sflag, size = 0x4, scoped, tag = 'scoped memory for detection_net_forward.118']
    #allocation4 [shape = 'u8[512]{0}', space=vmem, size = 0x400, scoped, tag = 'input window, operand 2, single buffered']
    #allocation5 [shape = 's32[1]{0}', space=sflag, size = 0x4, scoped, tag = 'scoped memory for detection_net_forward.118']
    %9 = vsyncpa [#allocation3], 0
    %10 = vsyncpa [#allocation5], 0
    // Predicated region
    $region2: #{detection_net_forward.118} parent=1 // pred_check
      _
    $region3: #{detection_net_forward.118} parent=1 // pred_check_branch
      %12 = sbr.rel (0) target = $region5
    $region4: #{detection_net_forward.118} parent=1 // pred_region
      _
    $region5: #{detection_net_forward.118} parent=1 // pred_fallthru
      _
    // Predicated region
    $region6: #{detection_net_forward.118} parent=1 // pred_check
      _
    $region7: #{detection_net_forward.118} parent=1 // pred_check_branch
      %14 = sbr.rel (0) target = $region9
    $region8: #{detection_net_forward.118} parent=1 // pred_region
      %16 = vsyncadd [#allocation3], 0
      %s17 = sshll.u32 %s1, 4
      %s18 = int_to_ptr.hbm [resolvable:$true] %s17
      %s19 = sshll.u32 [#allocation2], 4
      %s20 = int_to_ptr.vmem [resolvable:$true] %s19
      %25 = dma.hbm_to_vmem [thread:$0]  %s18, 2048, %s20, [#allocation3], 64, 64, 4
    $region9: #{detection_net_forward.118} parent=1 // pred_fallthru
      _
    // Predicated region
    $region10: #{detection_net_forward.118} parent=1 // pred_check
      _
    $region11: #{detection_net_forward.118} parent=1 // pred_check_branch
      %27 = sbr.rel (0) target = $region13
    $region12: #{detection_net_forward.118} parent=1 // pred_region
      %29 = vsyncadd [#allocation5], 0
      %s31 = sshll.u32 %s2, 4
      %s32 = int_to_ptr.hbm [resolvable:$true] %s31
      %s33 = sshll.u32 [#allocation4], 4
      %s34 = int_to_ptr.vmem [resolvable:$true] %s33
      %36 = dma.hbm_to_vmem [thread:$0]  %s32, 16, %s34, [#allocation5]
    $region13: #{detection_net_forward.118} parent=1 // pred_fallthru
      _
    // Predicated region
    $region14: #{detection_net_forward.118} parent=1 // pred_check
      _
    $region15: #{detection_net_forward.118} parent=1 // pred_check_branch
      %38 = sbr.rel (0) target = $region17
    $region16: #{detection_net_forward.118} parent=1 // pred_region
      _
    $region17: #{detection_net_forward.118} parent=1 // pred_fallthru
      _
    // Predicated region
    $region18: #{detection_net_forward.118} parent=1 // pred_check
      _
    $region19: #{detection_net_forward.118} parent=1 // pred_check_branch
      %40 = sbr.rel (0) target = $region21
    $region20: #{detection_net_forward.118} parent=1 // pred_region
      %42 = dma.done [#allocation3], 2048
    $region21: #{detection_net_forward.118} parent=1 // pred_fallthru
      _
    // Predicated region
    $region22: #{detection_net_forward.118} parent=1 // pred_check
      _
    $region23: #{detection_net_forward.118} parent=1 // pred_check_branch
      %44 = sbr.rel (0) target = $region25
    $region24: #{detection_net_forward.118} parent=1 // pred_region
      %46 = dma.done [#allocation5], 16
    $region25: #{detection_net_forward.118} parent=1 // pred_fallthru
      _
    %v47 = vld [vmem:[%s0] sm:$0xff]
    %v48 = vld [vmem:[%s0 + $0x8] sm:$0xff]
    %v49 = vld [vmem:[%s0 + $0x10] sm:$0xff]
    %v50 = vld [vmem:[%s0 + $0x18] sm:$0xff]
    %v51 = vld [vmem:[#allocation2] sm:$0xf]
    %v52 = vld [vmem:[#allocation2 + $0x4] sm:$0xf]
    %v53 = vld [vmem:[#allocation2 + $0x8] sm:$0xf]
    %v54 = vld [vmem:[#allocation2 + $0xc] sm:$0xf]
    %v55 = vld [vmem:[#allocation2 + $0x10] sm:$0xf]
    %v56 = vld [vmem:[#allocation2 + $0x14] sm:$0xf]
    %v57 = vld [vmem:[#allocation2 + $0x18] sm:$0xf]
    %v58 = vld [vmem:[#allocation2 + $0x1c] sm:$0xf]
    %v59 = vld [vmem:[#allocation2 + $0x20] sm:$0xf]
    %v60 = vld [vmem:[#allocation2 + $0x24] sm:$0xf]
    %v61 = vld [vmem:[#allocation2 + $0x28] sm:$0xf]
    %v62 = vld [vmem:[#allocation2 + $0x2c] sm:$0xf]
    %v63 = vld [vmem:[#allocation2 + $0x30] sm:$0xf]
    %v64 = vld [vmem:[#allocation2 + $0x34] sm:$0xf]
    %v65 = vld [vmem:[#allocation2 + $0x38] sm:$0xf]
    %v66 = vld [vmem:[#allocation2 + $0x3c] sm:$0xf]
    %v67 = vld [vmem:[#allocation2 + $0x40] sm:$0xf]
    %v68 = vld [vmem:[#allocation2 + $0x44] sm:$0xf]
    %v69 = vld [vmem:[#allocation2 + $0x48] sm:$0xf]
    %v70 = vld [vmem:[#allocation2 + $0x4c] sm:$0xf]
    %v71 = vld [vmem:[#allocation2 + $0x50] sm:$0xf]
    %v72 = vld [vmem:[#allocation2 + $0x54] sm:$0xf]
    %v73 = vld [vmem:[#allocation2 + $0x58] sm:$0xf]
    %v74 = vld [vmem:[#allocation2 + $0x5c] sm:$0xf]
    %v75 = vld [vmem:[#allocation2 + $0x60] sm:$0xf]
    %v76 = vld [vmem:[#allocation2 + $0x64] sm:$0xf]
    %v77 = vld [vmem:[#allocation2 + $0x68] sm:$0xf]
    %v78 = vld [vmem:[#allocation2 + $0x6c] sm:$0xf]
    %v79 = vld [vmem:[#allocation2 + $0x70] sm:$0xf]
    %v80 = vld [vmem:[#allocation2 + $0x74] sm:$0xf]
    %v81 = vld [vmem:[#allocation2 + $0x78] sm:$0xf]
    %v82 = vld [vmem:[#allocation2 + $0x7c] sm:$0xf]
    %v83 = vld [vmem:[#allocation4] sm:$0x1]
    %v84 = vpack.c.bf16 %v49, %v47
    %v85 = vpack.c.bf16 %v50, %v48
    %v87 = vperm.slane %v83, 0
    %v121 = vunpack.c.l.b16 %v51
    %v122 = vunpack.c.l.b16 %v52
    %v123 = vunpack.c.l.b16 %v53
    %v124 = vunpack.c.l.b16 %v54
    %v125 = vunpack.c.l.b16 %v55
    %v126 = vunpack.c.l.b16 %v56
    %v127 = vunpack.c.l.b16 %v57
    %v128 = vunpack.c.l.b16 %v58
    %v129 = vunpack.c.l.b16 %v59
    %v130 = vunpack.c.l.b16 %v60
    %v131 = vunpack.c.l.b16 %v61
    %v132 = vunpack.c.l.b16 %v62
    %v133 = vunpack.c.l.b16 %v63
    %v134 = vunpack.c.l.b16 %v64
    %v135 = vunpack.c.l.b16 %v65
    %v136 = vunpack.c.l.b16 %v66
    %v137 = vunpack.c.l.b16 %v67
    %v138 = vunpack.c.l.b16 %v68
    %v139 = vunpack.c.l.b16 %v69
    %v140 = vunpack.c.l.b16 %v70
    %v141 = vunpack.c.l.b16 %v71
    %v142 = vunpack.c.l.b16 %v72
    %v143 = vunpack.c.l.b16 %v73
    %v144 = vunpack.c.l.b16 %v74
    %v145 = vunpack.c.l.b16 %v75
    %v146 = vunpack.c.l.b16 %v76
    %v147 = vunpack.c.l.b16 %v77
    %v148 = vunpack.c.l.b16 %v78
    %v149 = vunpack.c.l.b16 %v79
    %v150 = vunpack.c.l.b16 %v80
    %v151 = vunpack.c.l.b16 %v81
    %v152 = vunpack.c.l.b16 %v82
    %v153 = vpack.c.b16 %v122, %v121
    %v154 = vpack.c.b16 %v124, %v123
    %v155 = vpack.c.b16 %v126, %v125
    %v156 = vpack.c.b16 %v128, %v127
    %v157 = vpack.c.b16 %v130, %v129
    %v158 = vpack.c.b16 %v132, %v131
    %v159 = vpack.c.b16 %v134, %v133
    %v160 = vpack.c.b16 %v136, %v135
    %v161 = vpack.c.b16 %v138, %v137
    %v162 = vpack.c.b16 %v140, %v139
    %v163 = vpack.c.b16 %v142, %v141
    %v164 = vpack.c.b16 %v144, %v143
    %v165 = vpack.c.b16 %v146, %v145
    %v166 = vpack.c.b16 %v148, %v147
    %v167 = vpack.c.b16 %v150, %v149
    %v168 = vpack.c.b16 %v152, %v151
    %185 = vmatpush.bf16.msra.mxu0 %v160
    %186 = vmatpush.bf16.msra.mxu0 %v159
    %187 = vmatpush.bf16.msra.mxu0 %v158
    %188 = vmatpush.bf16.msra.mxu0 %v157
    %189 = vmatpush.bf16.msra.mxu0 %v156
    %190 = vmatpush.bf16.msra.mxu0 %v155
    %191 = vmatpush.bf16.msra.mxu0 %v154
    %192 = vmatpush.bf16.msra.mxu0 %v153
    %193 = vmatmul.bf16.gmra.mxu0 %v84
    %v194 = vpop.f32.mrf.mxu0
    %v195 = vadd.f32 %v87, %v194
    %v196 = vpop.f32.mrf.mxu0
    %v197 = vadd.f32 %v87, %v196
    %198 = vdwg.mxu0
    %199 = vmatpush.bf16.msra.mxu0 %v168
    %200 = vmatpush.bf16.msra.mxu0 %v167
    %201 = vmatpush.bf16.msra.mxu0 %v166
    %202 = vmatpush.bf16.msra.mxu0 %v165
    %203 = vmatpush.bf16.msra.mxu0 %v164
    %204 = vmatpush.bf16.msra.mxu0 %v163
    %205 = vmatpush.bf16.msra.mxu0 %v162
    %206 = vmatpush.bf16.msra.mxu0 %v161
    %207 = vmatmul.bf16.gmra.mxu0 %v85
    %v208 = vpop.f32.mrf.mxu0
    %v209 = vadd.f32 %v195, %v208
    %v210 = vpop.f32.mrf.mxu0
    %v211 = vadd.f32 %v197, %v210
    %212 = vdwg.mxu0
    %v213 = vmul.f32 %v209, 0.5
    %v214 = vmul.f32 %v211, 0.5
    %v215 = vld [vmem:[%s3] sm:$0xff]
    %v216 = vld [vmem:[%s3 + $0x8] sm:$0xff]
    %v217 = vadd.f32 %v213, %v215
    %v218 = vadd.f32 %v214, %v216
    %219 = vst [vmem:[%s4] sm:$0xff] %v217
    %220 = vst [vmem:[%s4 + $0x8] sm:$0xff] %v218
    // Predicated region
    $region26: #{detection_net_forward.118} parent=1 // pred_check
      _
    $region27: #{detection_net_forward.118} parent=1 // pred_check_branch
      %222 = sbr.rel (0) target = $region29
    $region28: #{detection_net_forward.118} parent=1 // pred_region
      _
    $region29: #{detection_net_forward.118} parent=1 // pred_fallthru
      _
    // Predicated region
    $region30: #{detection_net_forward.118} parent=1 // pred_check
      _
    $region31: #{detection_net_forward.118} parent=1 // pred_check_branch
      %224 = sbr.rel (0) target = $region33
    $region32: #{detection_net_forward.118} parent=1 // pred_region
      _
    $region33: #{detection_net_forward.118} parent=1 // pred_fallthru
      _
    %225 = vsyncpa [#allocation3], 1
    %226 = vsyncpa [#allocation5], 1

// kernel: detection_net_forward.122
$region0: #{detection_net_forward.122}
  #allocation0 [shape = 'u32[]', space=smem, size = 0x4, offset = 0x4, fixed_abs, tag = 'smem constant byte address 0x4 - core index']
  #allocation1 [shape = 'u32[72,128]{1,0:T(1,128)}', space=vmem, size = 0x9000, scoped, tag = 'internal scratch']
  %s0 = inlined_call_operand.vmem [shape: f32[16,128], index: 0, kind: input, shape index: {}]
  %s1 = inlined_call_operand.hbm [shape: f32[1,128], index: 1, kind: input, shape index: {}]
  %s2 = inlined_call_operand.hbm [shape: f32[1,128], index: 2, kind: input, shape index: {}]
  %s3 = inlined_call_operand.hbm [shape: bf16[128,256], index: 3, kind: input, shape index: {}]
  %s4 = inlined_call_operand.hbm [shape: f32[1,256], index: 4, kind: input, shape index: {}]
  %s5 = inlined_call_operand.vmem [shape: f32[16,128], index: 5, kind: output, shape index: {}]
  %s6 = sld [smem:[#allocation0]]
  $region46: #{detection_net_forward.122} parent=0
    _
  %s8 = ssub.s32 1, %s6
  %s9 = scalar_select 0, %s8, %s6
  $region1: #{detection_net_forward.122} parent=0
    #allocation2 [shape = 'u8[512]{0}', space=vmem, size = 0x400, scoped, tag = 'input window, operand 1, single buffered']
    #allocation3 [shape = 's32[1]{0}', space=sflag, size = 0x4, scoped, tag = 'scoped memory for detection_net_forward.122']
    #allocation4 [shape = 'u8[512]{0}', space=vmem, size = 0x400, scoped, tag = 'input window, operand 2, single buffered']
    #allocation5 [shape = 's32[1]{0}', space=sflag, size = 0x4, scoped, tag = 'scoped memory for detection_net_forward.122']
    #allocation6 [shape = 'u8[65536]{0}', space=vmem, size = 0x10000, scoped, tag = 'input window, operand 3, single buffered']
    #allocation7 [shape = 'u8[1024]{0}', space=vmem, size = 0x400, scoped, tag = 'input window, operand 4, single buffered']
    #allocation8 [shape = 's32[1]{0}', space=sflag, size = 0x4, scoped, tag = 'scoped memory for detection_net_forward.122']
    %10 = vsyncpa [#allocation3], 0
    %11 = vsyncpa [#allocation5], 0
    %12 = vsyncpa [#allocation8], 0
    // Predicated region
    $region2: #{detection_net_forward.122} parent=1 // pred_check
      _
    $region3: #{detection_net_forward.122} parent=1 // pred_check_branch
      %14 = sbr.rel (0) target = $region5
    $region4: #{detection_net_forward.122} parent=1 // pred_region
      _
    $region5: #{detection_net_forward.122} parent=1 // pred_fallthru
      _
    // Predicated region
    $region6: #{detection_net_forward.122} parent=1 // pred_check
      _
    $region7: #{detection_net_forward.122} parent=1 // pred_check_branch
      %16 = sbr.rel (0) target = $region9
    $region8: #{detection_net_forward.122} parent=1 // pred_region
      %18 = vsyncadd [#allocation3], 0
      %s20 = sshll.u32 %s1, 4
      %s21 = int_to_ptr.hbm [resolvable:$true] %s20
      %s22 = sshll.u32 [#allocation2], 4
      %s23 = int_to_ptr.vmem [resolvable:$true] %s22
      %25 = dma.hbm_to_vmem [thread:$0]  %s21, 16, %s23, [#allocation3]
    $region9: #{detection_net_forward.122} parent=1 // pred_fallthru
      _
    // Predicated region
    $region10: #{detection_net_forward.122} parent=1 // pred_check
      _
    $region11: #{detection_net_forward.122} parent=1 // pred_check_branch
      %27 = sbr.rel (0) target = $region13
    $region12: #{detection_net_forward.122} parent=1 // pred_region
      %29 = vsyncadd [#allocation5], 0
      %s31 = sshll.u32 %s2, 4
      %s32 = int_to_ptr.hbm [resolvable:$true] %s31
      %s33 = sshll.u32 [#allocation4], 4
      %s34 = int_to_ptr.vmem [resolvable:$true] %s33
      %36 = dma.hbm_to_vmem [thread:$0]  %s32, 16, %s34, [#allocation5]
    $region13: #{detection_net_forward.122} parent=1 // pred_fallthru
      _
    // Predicated region
    $region14: #{detection_net_forward.122} parent=1 // pred_check
      _
    $region15: #{detection_net_forward.122} parent=1 // pred_check_branch
      %38 = sbr.rel (0) target = $region17
    $region16: #{detection_net_forward.122} parent=1 // pred_region
      %40 = vsyncadd [#allocation5], 0
      %s41 = sshll.u32 %s3, 4
      %s42 = int_to_ptr.hbm [resolvable:$true] %s41
      %s43 = sshll.u32 [#allocation6], 4
      %s44 = int_to_ptr.vmem [resolvable:$true] %s43
      %49 = dma.hbm_to_vmem [thread:$0]  %s42, 2048, %s44, [#allocation5], 128, 128, 8
    $region17: #{detection_net_forward.122} parent=1 // pred_fallthru
      _
    // Predicated region
    $region18: #{detection_net_forward.122} parent=1 // pred_check
      _
    $region19: #{detection_net_forward.122} parent=1 // pred_check_branch
      %51 = sbr.rel (0) target = $region21
    $region20: #{detection_net_forward.122} parent=1 // pred_region
      %53 = vsyncadd [#allocation8], 0
      %s55 = sshll.u32 %s4, 4
      %s56 = int_to_ptr.hbm [resolvable:$true] %s55
      %s57 = sshll.u32 [#allocation7], 4
      %s58 = int_to_ptr.vmem [resolvable:$true] %s57
      %60 = dma.hbm_to_vmem [thread:$0]  %s56, 32, %s58, [#allocation8]
    $region21: #{detection_net_forward.122} parent=1 // pred_fallthru
      _
    // Predicated region
    $region22: #{detection_net_forward.122} parent=1 // pred_check
      _
    $region23: #{detection_net_forward.122} parent=1 // pred_check_branch
      %62 = sbr.rel (0) target = $region25
    $region24: #{detection_net_forward.122} parent=1 // pred_region
      %64 = dma.done [#allocation3], 16
    $region25: #{detection_net_forward.122} parent=1 // pred_fallthru
      _
    // Predicated region
    $region26: #{detection_net_forward.122} parent=1 // pred_check
      _
    $region27: #{detection_net_forward.122} parent=1 // pred_check_branch
      %66 = sbr.rel (0) target = $region29
    $region28: #{detection_net_forward.122} parent=1 // pred_region
      %68 = dma.done [#allocation5], 16
    $region29: #{detection_net_forward.122} parent=1 // pred_fallthru
      _
    // Predicated region
    $region30: #{detection_net_forward.122} parent=1 // pred_check
      _
    $region31: #{detection_net_forward.122} parent=1 // pred_check_branch
      %70 = sbr.rel (0) target = $region33
    $region32: #{detection_net_forward.122} parent=1 // pred_region
      %72 = dma.done [#allocation5], 2048
    $region33: #{detection_net_forward.122} parent=1 // pred_fallthru
      _
    // Predicated region
    $region34: #{detection_net_forward.122} parent=1 // pred_check
      _
    $region35: #{detection_net_forward.122} parent=1 // pred_check_branch
      %74 = sbr.rel (0) target = $region37
    $region36: #{detection_net_forward.122} parent=1 // pred_region
      %76 = dma.done [#allocation8], 32
    $region37: #{detection_net_forward.122} parent=1 // pred_fallthru
      _
    %v77 = vld [vmem:[%s0] sm:$0xff]
    %v78 = vld [vmem:[%s0 + $0x8] sm:$0xff]
    %v79 = vld [vmem:[#allocation2] sm:$0x1]
    %v80 = vld [vmem:[#allocation4] sm:$0x1]
    %81 = vadd.xlane.f32.xlu0 %v77
    %v82 = vpop.xlane.xlu0 %81
    %83 = vadd.xlane.f32.xlu0 %v78
    %v84 = vpop.xlane.xlu0 %83
    %v85 = vrcp.pop 128.0
    %v86 = vmul.f32 128.0, %v85
    %v87 = vsub.f32 1.0, %v86
    %v88 = vmul.f32 %v85, %v87
    %v89 = vadd.f32 %v85, %v88
    %vm90 = vweird.f32 %v85
    %v91 = vsel %vm90, %v85, %v89
    %v92 = vmul.f32 %v82, %v91
    %v93 = vmul.f32 %v84, %v91
    %v94 = vsub.f32 %v77, %v92
    %v95 = vsub.f32 %v78, %v93
    %v96 = vmul.f32 %v94, %v94
    %v97 = vmul.f32 %v95, %v95
    %98 = vadd.xlane.f32.xlu0 %v96
    %v99 = vpop.xlane.xlu0 %98
    %100 = vadd.xlane.f32.xlu0 %v97
    %v101 = vpop.xlane.xlu0 %100
    %v102 = vmul.f32 %v99, %v91
    %v103 = vmul.f32 %v101, %v91
    %v104 = vadd.f32 %v102, 1e-05
    %v105 = vadd.f32 %v103, 1e-05
    %v106 = vrsqrt.pop %v104
    %v107 = vmul.f32 %v106, %v104
    %v108 = vmul.f32 %v107, %v106
    %v109 = vmul.f32 0.5, %v108
    %v110 = vsub.f32 1.5, %v109
    %v111 = vmul.f32 %v106, %v110
    %vm112 = vweird.f32 %v104
    %vm113 = vweird.f32 %v106
    %vm114 = vmor %vm112, %vm113
    %v115 = vsel %vm114, %v106, %v111
    %v116 = vrsqrt.pop %v105
    %v117 = vmul.f32 %v116, %v105
    %v118 = vmul.f32 %v117, %v116
    %v119 = vmul.f32 0.5, %v118
    %v120 = vsub.f32 1.5, %v119
    %v121 = vmul.f32 %v116, %v120
    %vm122 = vweird.f32 %v105
    %vm123 = vweird.f32 %v116
    %vm124 = vmor %vm122, %vm123
    %v125 = vsel %vm124, %v116, %v121
    %v126 = vmul.f32 %v94, %v115
    %v127 = vmul.f32 %v95, %v125
    %v129 = vperm.slane %v79, 0
    %v131 = vmul.f32 %v126, %v129
    %v132 = vmul.f32 %v127, %v129
    %v134 = vperm.slane %v80, 0
    %v136 = vadd.f32 %v131, %v134
    %v137 = vadd.f32 %v132, %v134
    %v138 = vld [vmem:[#allocation6] sm:$0xff]
    %v139 = vld [vmem:[#allocation6 + $0x8] sm:$0xff]
    %v140 = vld [vmem:[#allocation6 + $0x10] sm:$0xff]
    %v141 = vld [vmem:[#allocation6 + $0x18] sm:$0xff]
    %v142 = vld [vmem:[#allocation6 + $0x20] sm:$0xff]
    %v143 = vld [vmem:[#allocation6 + $0x28] sm:$0xff]
    %v144 = vld [vmem:[#allocation6 + $0x30] sm:$0xff]
    %v145 = vld [vmem:[#allocation6 + $0x38] sm:$0xff]
    %v146 = vld [vmem:[#allocation6 + $0x40] sm:$0xff]
    %v147 = vld [vmem:[#allocation6 + $0x48] sm:$0xff]
    %v148 = vld [vmem:[#allocation6 + $0x50] sm:$0xff]
    %v149 = vld [vmem:[#allocation6 + $0x58] sm:$0xff]
    %v150 = vld [vmem:[#allocation6 + $0x60] sm:$0xff]
    %v151 = vld [vmem:[#allocation6 + $0x68] sm:$0xff]
    %v152 = vld [vmem:[#allocation6 + $0x70] sm:$0xff]
    %v153 = vld [vmem:[#allocation6 + $0x78] sm:$0xff]
    %v154 = vld [vmem:[#allocation7] sm:$0x3]
    %v155 = vpack.c.bf16 %v137, %v136
    %v157 = vperm.slane %v154, 0
    %v158 = vperm.slane %v154, 1
    %v177 = vunpack.c.l.b16 %v138
    %v178 = vunpack.c.h.b16 %v138
    %v179 = vunpack.c.l.b16 %v139
    %v180 = vunpack.c.h.b16 %v139
    %v181 = vunpack.c.l.b16 %v140
    %v182 = vunpack.c.h.b16 %v140
    %v183 = vunpack.c.l.b16 %v141
    %v184 = vunpack.c.h.b16 %v141
    %v185 = vunpack.c.l.b16 %v142
    %v186 = vunpack.c.h.b16 %v142
    %v187 = vunpack.c.l.b16 %v143
    %v188 = vunpack.c.h.b16 %v143
    %v189 = vunpack.c.l.b16 %v144
    %v190 = vunpack.c.h.b16 %v144
    %v191 = vunpack.c.l.b16 %v145
    %v192 = vunpack.c.h.b16 %v145
    %v193 = vunpack.c.l.b16 %v146
    %v194 = vunpack.c.h.b16 %v146
    %v195 = vunpack.c.l.b16 %v147
    %v196 = vunpack.c.h.b16 %v147
    %v197 = vunpack.c.l.b16 %v148
    %v198 = vunpack.c.h.b16 %v148
    %v199 = vunpack.c.l.b16 %v149
    %v200 = vunpack.c.h.b16 %v149
    %v201 = vunpack.c.l.b16 %v150
    %v202 = vunpack.c.h.b16 %v150
    %v203 = vunpack.c.l.b16 %v151
    %v204 = vunpack.c.h.b16 %v151
    %v205 = vunpack.c.l.b16 %v152
    %v206 = vunpack.c.h.b16 %v152
    %v207 = vunpack.c.l.b16 %v153
    %v208 = vunpack.c.h.b16 %v153
    %v209 = vpack.c.b16 %v179, %v177
    %v210 = vpack.c.b16 %v180, %v178
    %v211 = vpack.c.b16 %v183, %v181
    %v212 = vpack.c.b16 %v184, %v182
    %v213 = vpack.c.b16 %v187, %v185
    %v214 = vpack.c.b16 %v188, %v186
    %v215 = vpack.c.b16 %v191, %v189
    %v216 = vpack.c.b16 %v192, %v190
    %v217 = vpack.c.b16 %v195, %v193
    %v218 = vpack.c.b16 %v196, %v194
    %v219 = vpack.c.b16 %v199, %v197
    %v220 = vpack.c.b16 %v200, %v198
    %v221 = vpack.c.b16 %v203, %v201
    %v222 = vpack.c.b16 %v204, %v202
    %v223 = vpack.c.b16 %v207, %v205
    %v224 = vpack.c.b16 %v208, %v206
    %241 = vmatpush.bf16.msra.mxu0 %v223
    %242 = vmatpush.bf16.msra.mxu0 %v221
    %243 = vmatpush.bf16.msra.mxu0 %v219
    %244 = vmatpush.bf16.msra.mxu0 %v217
    %245 = vmatpush.bf16.msra.mxu0 %v215
    %246 = vmatpush.bf16.msra.mxu0 %v213
    %247 = vmatpush.bf16.msra.mxu0 %v211
    %248 = vmatpush.bf16.msra.mxu0 %v209
    %249 = vmatmul.bf16.gmra.mxu0 %v155
    %v250 = vpop.f32.mrf.mxu0
    %v251 = vadd.f32 %v157, %v250
    %v252 = vpop.f32.mrf.mxu0
    %v253 = vadd.f32 %v157, %v252
    %254 = vdwg.mxu0
    %255 = vmatpush.bf16.msra.mxu0 %v224
    %256 = vmatpush.bf16.msra.mxu0 %v222
    %257 = vmatpush.bf16.msra.mxu0 %v220
    %258 = vmatpush.bf16.msra.mxu0 %v218
    %259 = vmatpush.bf16.msra.mxu0 %v216
    %260 = vmatpush.bf16.msra.mxu0 %v214
    %261 = vmatpush.bf16.msra.mxu0 %v212
    %262 = vmatpush.bf16.msra.mxu0 %v210
    %263 = vmatmul.bf16.gmra.mxu0 %v155
    %v264 = vpop.f32.mrf.mxu0
    %v265 = vadd.f32 %v158, %v264
    %v266 = vpop.f32.mrf.mxu0
    %v267 = vadd.f32 %v158, %v266
    %268 = vdwg.mxu0
    %v269 = vxor.u32 %v265, 2147483648
    %v270 = vxor.u32 %v267, 2147483648
    %v271 = vmul.f32 %v269, 1.442695
    %v272 = vpow.pop %v271
    %v273 = vmul.f32 %v270, 1.442695
    %v274 = vpow.pop %v273
    %v275 = vadd.f32 %v272, 1.0
    %v276 = vadd.f32 %v274, 1.0
    %v277 = vrcp.pop %v275
    %v278 = vmul.f32 %v275, %v277
    %v279 = vsub.f32 1.0, %v278
    %v280 = vmul.f32 %v277, %v279
    %v281 = vadd.f32 %v277, %v280
    %vm282 = vweird.f32 %v275
    %vm283 = vweird.f32 %v277
    %vm284 = vmor %vm282, %vm283
    %v285 = vsel %vm284, %v277, %v281
    %v286 = vand.u32 2147483647, %v275
    %vm287 = vcmp.eq.f32.partialorder %v286, 8.507059e+37
    %v288 = vand.u32 %v275, 2147483648
    %v289 = vor.u32 1.1754944e-38, %v288
    %v290 = vsel %vm287, %v289, %v285
    %v291 = vmul.f32 1.0, %v290
    %v292 = vrcp.pop %v276
    %v293 = vmul.f32 %v276, %v292
    %v294 = vsub.f32 1.0, %v293
    %v295 = vmul.f32 %v292, %v294
    %v296 = vadd.f32 %v292, %v295
    %vm297 = vweird.f32 %v276
    %vm298 = vweird.f32 %v292
    %vm299 = vmor %vm297, %vm298
    %v300 = vsel %vm299, %v292, %v296
    %v301 = vand.u32 2147483647, %v276
    %vm302 = vcmp.eq.f32.partialorder %v301, 8.507059e+37
    %v303 = vand.u32 %v276, 2147483648
    %v304 = vor.u32 1.1754944e-38, %v303
    %v305 = vsel %vm302, %v304, %v300
    %v306 = vmul.f32 1.0, %v305
    %v307 = vmul.f32 %v251, %v291
    %v308 = vmul.f32 %v253, %v306
    %309 = vst [vmem:[%s5] sm:$0xff] %v307
    %310 = vst [vmem:[%s5 + $0x8] sm:$0xff] %v308
    // Predicated region
    $region38: #{detection_net_forward.122} parent=1 // pred_check
      _
    $region39: #{detection_net_forward.122} parent=1 // pred_check_branch
      %312 = sbr.rel (0) target = $region41
    $region40: #{detection_net_forward.122} parent=1 // pred_region
      _
    $region41: #{detection_net_forward.122} parent=1 // pred_fallthru
      _
    // Predicated region
    $region42: #{detection_net_forward.122} parent=1 // pred_check
      _
    $region43: #{detection_net_forward.122} parent=1 // pred_check_branch
      %314 = sbr.rel (0) target = $region45
    $region44: #{detection_net_forward.122} parent=1 // pred_region
      _
    $region45: #{detection_net_forward.122} parent=1 // pred_fallthru
      _
    %315 = vsyncpa [#allocation3], 1
    %316 = vsyncpa [#allocation5], 1
    %317 = vsyncpa [#allocation8], 1

// kernel: detection_net_forward.167
$region0: #{detection_net_forward.167}
  #allocation0 [shape = 'u32[]', space=smem, size = 0x4, offset = 0x4, fixed_abs, tag = 'smem constant byte address 0x4 - core index']
  #allocation1 [shape = 'u32[72,128]{1,0:T(1,128)}', space=vmem, size = 0x9000, scoped, tag = 'internal scratch']
  %s0 = inlined_call_operand.vmem [shape: f32[16,128], index: 0, kind: input, shape index: {}]
  %s1 = inlined_call_operand.vmem [shape: bf16[128,384], index: 1, kind: input, shape index: {}]
  %s2 = inlined_call_operand.vmem [shape: f32[1,384], index: 2, kind: input, shape index: {}]
  %s3 = inlined_call_operand.vmem [shape: f32[16,384], index: 3, kind: output, shape index: {}]
  %s4 = sld [smem:[#allocation0]]
  $region22: #{detection_net_forward.167} parent=0
    _
  %s6 = ssub.s32 1, %s4
  %s7 = scalar_select 0, %s6, %s4
  // Predicated region
  $region2: #{detection_net_forward.167} parent=0 // pred_check
    _
  $region3: #{detection_net_forward.167} parent=0 // pred_check_branch
    %9 = sbr.rel (0) target = $region5
  $region4: #{detection_net_forward.167} parent=0 // pred_region
    _
  $region5: #{detection_net_forward.167} parent=0 // pred_fallthru
    _
  // Predicated region
  $region6: #{detection_net_forward.167} parent=0 // pred_check
    _
  $region7: #{detection_net_forward.167} parent=0 // pred_check_branch
    %11 = sbr.rel (0) target = $region9
  $region8: #{detection_net_forward.167} parent=0 // pred_region
    _
  $region9: #{detection_net_forward.167} parent=0 // pred_fallthru
    _
  // Predicated region
  $region10: #{detection_net_forward.167} parent=0 // pred_check
    _
  $region11: #{detection_net_forward.167} parent=0 // pred_check_branch
    %13 = sbr.rel (0) target = $region13
  $region12: #{detection_net_forward.167} parent=0 // pred_region
    _
  $region13: #{detection_net_forward.167} parent=0 // pred_fallthru
    _
  %v14 = vld [vmem:[%s0] sm:$0xff]
  %v15 = vld [vmem:[%s0 + $0x8] sm:$0xff]
  %v16 = vld [vmem:[%s1] sm:$0xff]
  %v17 = vld [vmem:[%s1 + $0x8] sm:$0xf]
  %v18 = vld [vmem:[%s1 + $0xc] sm:$0xff]
  %v19 = vld [vmem:[%s1 + $0x14] sm:$0xf]
  %v20 = vld [vmem:[%s1 + $0x18] sm:$0xff]
  %v21 = vld [vmem:[%s1 + $0x20] sm:$0xf]
  %v22 = vld [vmem:[%s1 + $0x24] sm:$0xff]
  %v23 = vld [vmem:[%s1 + $0x2c] sm:$0xf]
  %v24 = vld [vmem:[%s1 + $0x30] sm:$0xff]
  %v25 = vld [vmem:[%s1 + $0x38] sm:$0xf]
  %v26 = vld [vmem:[%s1 + $0x3c] sm:$0xff]
  %v27 = vld [vmem:[%s1 + $0x44] sm:$0xf]
  %v28 = vld [vmem:[%s1 + $0x48] sm:$0xff]
  %v29 = vld [vmem:[%s1 + $0x50] sm:$0xf]
  %v30 = vld [vmem:[%s1 + $0x54] sm:$0xff]
  %v31 = vld [vmem:[%s1 + $0x5c] sm:$0xf]
  %v32 = vld [vmem:[%s1 + $0x60] sm:$0xff]
  %v33 = vld [vmem:[%s1 + $0x68] sm:$0xf]
  %v34 = vld [vmem:[%s1 + $0x6c] sm:$0xff]
  %v35 = vld [vmem:[%s1 + $0x74] sm:$0xf]
  %v36 = vld [vmem:[%s1 + $0x78] sm:$0xff]
  %v37 = vld [vmem:[%s1 + $0x80] sm:$0xf]
  %v38 = vld [vmem:[%s1 + $0x84] sm:$0xff]
  %v39 = vld [vmem:[%s1 + $0x8c] sm:$0xf]
  %v40 = vld [vmem:[%s1 + $0x90] sm:$0xff]
  %v41 = vld [vmem:[%s1 + $0x98] sm:$0xf]
  %v42 = vld [vmem:[%s1 + $0x9c] sm:$0xff]
  %v43 = vld [vmem:[%s1 + $0xa4] sm:$0xf]
  %v44 = vld [vmem:[%s1 + $0xa8] sm:$0xff]
  %v45 = vld [vmem:[%s1 + $0xb0] sm:$0xf]
  %v46 = vld [vmem:[%s1 + $0xb4] sm:$0xff]
  %v47 = vld [vmem:[%s1 + $0xbc] sm:$0xf]
  %v48 = vld [vmem:[%s2] sm:$0x7]
  %v49 = vpack.c.bf16 %v15, %v14
  %v51 = vperm.slane %v48, 0
  %v52 = vperm.slane %v48, 1
  %v53 = vperm.slane %v48, 2
  %v89 = vunpack.c.l.b16 %v16
  %v90 = vunpack.c.h.b16 %v16
  %v91 = vunpack.c.l.b16 %v17
  %v92 = vunpack.c.l.b16 %v18
  %v93 = vunpack.c.h.b16 %v18
  %v94 = vunpack.c.l.b16 %v19
  %v95 = vunpack.c.l.b16 %v20
  %v96 = vunpack.c.h.b16 %v20
  %v97 = vunpack.c.l.b16 %v21
  %v98 = vunpack.c.l.b16 %v22
  %v99 = vunpack.c.h.b16 %v22
  %v100 = vunpack.c.l.b16 %v23
  %v101 = vunpack.c.l.b16 %v24
  %v102 = vunpack.c.h.b16 %v24
  %v103 = vunpack.c.l.b16 %v25
  %v104 = vunpack.c.l.b16 %v26
  %v105 = vunpack.c.h.b16 %v26
  %v106 = vunpack.c.l.b16 %v27
  %v107 = vunpack.c.l.b16 %v28
  %v108 = vunpack.c.h.b16 %v28
  %v109 = vunpack.c.l.b16 %v29
  %v110 = vunpack.c.l.b16 %v30
  %v111 = vunpack.c.h.b16 %v30
  %v112 = vunpack.c.l.b16 %v31
  %v113 = vunpack.c.l.b16 %v32
  %v114 = vunpack.c.h.b16 %v32
  %v115 = vunpack.c.l.b16 %v33
  %v116 = vunpack.c.l.b16 %v34
  %v117 = vunpack.c.h.b16 %v34
  %v118 = vunpack.c.l.b16 %v35
  %v119 = vunpack.c.l.b16 %v36
  %v120 = vunpack.c.h.b16 %v36
  %v121 = vunpack.c.l.b16 %v37
  %v122 = vunpack.c.l.b16 %v38
  %v123 = vunpack.c.h.b16 %v38
  %v124 = vunpack.c.l.b16 %v39
  %v125 = vunpack.c.l.b16 %v40
  %v126 = vunpack.c.h.b16 %v40
  %v127 = vunpack.c.l.b16 %v41
  %v128 = vunpack.c.l.b16 %v42
  %v129 = vunpack.c.h.b16 %v42
  %v130 = vunpack.c.l.b16 %v43
  %v131 = vunpack.c.l.b16 %v44
  %v132 = vunpack.c.h.b16 %v44
  %v133 = vunpack.c.l.b16 %v45
  %v134 = vunpack.c.l.b16 %v46
  %v135 = vunpack.c.h.b16 %v46
  %v136 = vunpack.c.l.b16 %v47
  %v137 = vpack.c.b16 %v92, %v89
  %v138 = vpack.c.b16 %v93, %v90
  %v139 = vpack.c.b16 %v94, %v91
  %v140 = vpack.c.b16 %v98, %v95
  %v141 = vpack.c.b16 %v99, %v96
  %v142 = vpack.c.b16 %v100, %v97
  %v143 = vpack.c.b16 %v104, %v101
  %v144 = vpack.c.b16 %v105, %v102
  %v145 = vpack.c.b16 %v106, %v103
  %v146 = vpack.c.b16 %v110, %v107
  %v147 = vpack.c.b16 %v111, %v108
  %v148 = vpack.c.b16 %v112, %v109
  %v149 = vpack.c.b16 %v116, %v113
  %v150 = vpack.c.b16 %v117, %v114
  %v151 = vpack.c.b16 %v118, %v115
  %v152 = vpack.c.b16 %v122, %v119
  %v153 = vpack.c.b16 %v123, %v120
  %v154 = vpack.c.b16 %v124, %v121
  %v155 = vpack.c.b16 %v128, %v125
  %v156 = vpack.c.b16 %v129, %v126
  %v157 = vpack.c.b16 %v130, %v127
  %v158 = vpack.c.b16 %v134, %v131
  %v159 = vpack.c.b16 %v135, %v132
  %v160 = vpack.c.b16 %v136, %v133
  %185 = vmatpush.bf16.msra.mxu0 %v158
  %186 = vmatpush.bf16.msra.mxu0 %v155
  %187 = vmatpush.bf16.msra.mxu0 %v152
  %188 = vmatpush.bf16.msra.mxu0 %v149
  %189 = vmatpush.bf16.msra.mxu0 %v146
  %190 = vmatpush.bf16.msra.mxu0 %v143
  %191 = vmatpush.bf16.msra.mxu0 %v140
  %192 = vmatpush.bf16.msra.mxu0 %v137
  %193 = vmatmul.bf16.gmra.mxu0 %v49
  %v194 = vpop.f32.mrf.mxu0
  %v195 = vadd.f32 %v51, %v194
  %v196 = vpop.f32.mrf.mxu0
  %v197 = vadd.f32 %v51, %v196
  %198 = vdwg.mxu0
  %199 = vmatpush.bf16.msra.mxu0 %v159
  %200 = vmatpush.bf16.msra.mxu0 %v156
  %201 = vmatpush.bf16.msra.mxu0 %v153
  %202 = vmatpush.bf16.msra.mxu0 %v150
  %203 = vmatpush.bf16.msra.mxu0 %v147
  %204 = vmatpush.bf16.msra.mxu0 %v144
  %205 = vmatpush.bf16.msra.mxu0 %v141
  %206 = vmatpush.bf16.msra.mxu0 %v138
  %207 = vmatmul.bf16.gmra.mxu0 %v49
  %v208 = vpop.f32.mrf.mxu0
  %v209 = vadd.f32 %v52, %v208
  %v210 = vpop.f32.mrf.mxu0
  %v211 = vadd.f32 %v52, %v210
  %212 = vdwg.mxu0
  %213 = vmatpush.bf16.msra.mxu0 %v160
  %214 = vmatpush.bf16.msra.mxu0 %v157
  %215 = vmatpush.bf16.msra.mxu0 %v154
  %216 = vmatpush.bf16.msra.mxu0 %v151
  %217 = vmatpush.bf16.msra.mxu0 %v148
  %218 = vmatpush.bf16.msra.mxu0 %v145
  %219 = vmatpush.bf16.msra.mxu0 %v142
  %220 = vmatpush.bf16.msra.mxu0 %v139
  %221 = vmatmul.bf16.gmra.mxu0 %v49
  %v222 = vpop.f32.mrf.mxu0
  %v223 = vadd.f32 %v53, %v222
  %v224 = vpop.f32.mrf.mxu0
  %v225 = vadd.f32 %v53, %v224
  %226 = vdwg.mxu0
  %227 = vst [vmem:[%s3] sm:$0xff] %v195
  %228 = vst [vmem:[%s3 + $0x8] sm:$0xff] %v209
  %229 = vst [vmem:[%s3 + $0x10] sm:$0xff] %v223
  %230 = vst [vmem:[%s3 + $0x18] sm:$0xff] %v197
  %231 = vst [vmem:[%s3 + $0x20] sm:$0xff] %v211
  %232 = vst [vmem:[%s3 + $0x28] sm:$0xff] %v225
  // Predicated region
  $region14: #{detection_net_forward.167} parent=0 // pred_check
    _
  $region15: #{detection_net_forward.167} parent=0 // pred_check_branch
    %234 = sbr.rel (0) target = $region17
  $region16: #{detection_net_forward.167} parent=0 // pred_region
    _
  $region17: #{detection_net_forward.167} parent=0 // pred_fallthru
    _
  // Predicated region
  $region18: #{detection_net_forward.167} parent=0 // pred_check
    _
  $region19: #{detection_net_forward.167} parent=0 // pred_check_branch
    %236 = sbr.rel (0) target = $region21
  $region20: #{detection_net_forward.167} parent=0 // pred_region
    _
  $region21: #{detection_net_forward.167} parent=0 // pred_fallthru
    _

// kernel: detection_net_forward.168
$region0: #{detection_net_forward.168}
  #allocation0 [shape = 'u32[]', space=smem, size = 0x4, offset = 0x4, fixed_abs, tag = 'smem constant byte address 0x4 - core index']
  #allocation1 [shape = 'u32[72,128]{1,0:T(1,128)}', space=vmem, size = 0x9000, scoped, tag = 'internal scratch']
  %s0 = inlined_call_operand.vmem [shape: f32[34,128], index: 0, kind: input, shape index: {}]
  %s1 = inlined_call_operand.vmem [shape: bf16[128,384], index: 1, kind: input, shape index: {}]
  %s2 = inlined_call_operand.vmem [shape: f32[1,384], index: 2, kind: input, shape index: {}]
  %s3 = inlined_call_operand.vmem [shape: f32[34,384], index: 3, kind: output, shape index: {}]
  %s4 = sld [smem:[#allocation0]]
  $region22: #{detection_net_forward.168} parent=0
    _
  %s6 = ssub.s32 1, %s4
  %s7 = scalar_select 0, %s6, %s4
  // Predicated region
  $region2: #{detection_net_forward.168} parent=0 // pred_check
    _
  $region3: #{detection_net_forward.168} parent=0 // pred_check_branch
    %9 = sbr.rel (0) target = $region5
  $region4: #{detection_net_forward.168} parent=0 // pred_region
    _
  $region5: #{detection_net_forward.168} parent=0 // pred_fallthru
    _
  // Predicated region
  $region6: #{detection_net_forward.168} parent=0 // pred_check
    _
  $region7: #{detection_net_forward.168} parent=0 // pred_check_branch
    %11 = sbr.rel (0) target = $region9
  $region8: #{detection_net_forward.168} parent=0 // pred_region
    _
  $region9: #{detection_net_forward.168} parent=0 // pred_fallthru
    _
  // Predicated region
  $region10: #{detection_net_forward.168} parent=0 // pred_check
    _
  $region11: #{detection_net_forward.168} parent=0 // pred_check_branch
    %13 = sbr.rel (0) target = $region13
  $region12: #{detection_net_forward.168} parent=0 // pred_region
    _
  $region13: #{detection_net_forward.168} parent=0 // pred_fallthru
    _
  %v14 = vld [vmem:[%s0] sm:$0xff]
  %v15 = vld [vmem:[%s0 + $0x8] sm:$0xff]
  %v16 = vld [vmem:[%s0 + $0x10] sm:$0xff]
  %v17 = vld [vmem:[%s0 + $0x18] sm:$0xff]
  %v18 = vld [vmem:[%s0 + $0x20] sm:$0x3]
  %v19 = vld [vmem:[%s1] sm:$0xff]
  %v20 = vld [vmem:[%s1 + $0x8] sm:$0xf]
  %v21 = vld [vmem:[%s1 + $0xc] sm:$0xff]
  %v22 = vld [vmem:[%s1 + $0x14] sm:$0xf]
  %v23 = vld [vmem:[%s1 + $0x18] sm:$0xff]
  %v24 = vld [vmem:[%s1 + $0x20] sm:$0xf]
  %v25 = vld [vmem:[%s1 + $0x24] sm:$0xff]
  %v26 = vld [vmem:[%s1 + $0x2c] sm:$0xf]
  %v27 = vld [vmem:[%s1 + $0x30] sm:$0xff]
  %v28 = vld [vmem:[%s1 + $0x38] sm:$0xf]
  %v29 = vld [vmem:[%s1 + $0x3c] sm:$0xff]
  %v30 = vld [vmem:[%s1 + $0x44] sm:$0xf]
  %v31 = vld [vmem:[%s1 + $0x48] sm:$0xff]
  %v32 = vld [vmem:[%s1 + $0x50] sm:$0xf]
  %v33 = vld [vmem:[%s1 + $0x54] sm:$0xff]
  %v34 = vld [vmem:[%s1 + $0x5c] sm:$0xf]
  %v35 = vld [vmem:[%s1 + $0x60] sm:$0xff]
  %v36 = vld [vmem:[%s1 + $0x68] sm:$0xf]
  %v37 = vld [vmem:[%s1 + $0x6c] sm:$0xff]
  %v38 = vld [vmem:[%s1 + $0x74] sm:$0xf]
  %v39 = vld [vmem:[%s1 + $0x78] sm:$0xff]
  %v40 = vld [vmem:[%s1 + $0x80] sm:$0xf]
  %v41 = vld [vmem:[%s1 + $0x84] sm:$0xff]
  %v42 = vld [vmem:[%s1 + $0x8c] sm:$0xf]
  %v43 = vld [vmem:[%s1 + $0x90] sm:$0xff]
  %v44 = vld [vmem:[%s1 + $0x98] sm:$0xf]
  %v45 = vld [vmem:[%s1 + $0x9c] sm:$0xff]
  %v46 = vld [vmem:[%s1 + $0xa4] sm:$0xf]
  %v47 = vld [vmem:[%s1 + $0xa8] sm:$0xff]
  %v48 = vld [vmem:[%s1 + $0xb0] sm:$0xf]
  %v49 = vld [vmem:[%s1 + $0xb4] sm:$0xff]
  %v50 = vld [vmem:[%s1 + $0xbc] sm:$0xf]
  %v51 = vld [vmem:[%s2] sm:$0x7]
  %v52 = vpack.c.bf16 %v15, %v14
  %v53 = vpack.c.bf16 %v17, %v16
  %v54 = vpack.c.bf16 %v18, %v18
  %v56 = vperm.slane %v51, 0
  %v57 = vperm.slane %v51, 1
  %v58 = vperm.slane %v51, 2
  %v94 = vunpack.c.l.b16 %v19
  %v95 = vunpack.c.h.b16 %v19
  %v96 = vunpack.c.l.b16 %v20
  %v97 = vunpack.c.l.b16 %v21
  %v98 = vunpack.c.h.b16 %v21
  %v99 = vunpack.c.l.b16 %v22
  %v100 = vunpack.c.l.b16 %v23
  %v101 = vunpack.c.h.b16 %v23
  %v102 = vunpack.c.l.b16 %v24
  %v103 = vunpack.c.l.b16 %v25
  %v104 = vunpack.c.h.b16 %v25
  %v105 = vunpack.c.l.b16 %v26
  %v106 = vunpack.c.l.b16 %v27
  %v107 = vunpack.c.h.b16 %v27
  %v108 = vunpack.c.l.b16 %v28
  %v109 = vunpack.c.l.b16 %v29
  %v110 = vunpack.c.h.b16 %v29
  %v111 = vunpack.c.l.b16 %v30
  %v112 = vunpack.c.l.b16 %v31
  %v113 = vunpack.c.h.b16 %v31
  %v114 = vunpack.c.l.b16 %v32
  %v115 = vunpack.c.l.b16 %v33
  %v116 = vunpack.c.h.b16 %v33
  %v117 = vunpack.c.l.b16 %v34
  %v118 = vunpack.c.l.b16 %v35
  %v119 = vunpack.c.h.b16 %v35
  %v120 = vunpack.c.l.b16 %v36
  %v121 = vunpack.c.l.b16 %v37
  %v122 = vunpack.c.h.b16 %v37
  %v123 = vunpack.c.l.b16 %v38
  %v124 = vunpack.c.l.b16 %v39
  %v125 = vunpack.c.h.b16 %v39
  %v126 = vunpack.c.l.b16 %v40
  %v127 = vunpack.c.l.b16 %v41
  %v128 = vunpack.c.h.b16 %v41
  %v129 = vunpack.c.l.b16 %v42
  %v130 = vunpack.c.l.b16 %v43
  %v131 = vunpack.c.h.b16 %v43
  %v132 = vunpack.c.l.b16 %v44
  %v133 = vunpack.c.l.b16 %v45
  %v134 = vunpack.c.h.b16 %v45
  %v135 = vunpack.c.l.b16 %v46
  %v136 = vunpack.c.l.b16 %v47
  %v137 = vunpack.c.h.b16 %v47
  %v138 = vunpack.c.l.b16 %v48
  %v139 = vunpack.c.l.b16 %v49
  %v140 = vunpack.c.h.b16 %v49
  %v141 = vunpack.c.l.b16 %v50
  %v142 = vpack.c.b16 %v97, %v94
  %v143 = vpack.c.b16 %v98, %v95
  %v144 = vpack.c.b16 %v99, %v96
  %v145 = vpack.c.b16 %v103, %v100
  %v146 = vpack.c.b16 %v104, %v101
  %v147 = vpack.c.b16 %v105, %v102
  %v148 = vpack.c.b16 %v109, %v106
  %v149 = vpack.c.b16 %v110, %v107
  %v150 = vpack.c.b16 %v111, %v108
  %v151 = vpack.c.b16 %v115, %v112
  %v152 = vpack.c.b16 %v116, %v113
  %v153 = vpack.c.b16 %v117, %v114
  %v154 = vpack.c.b16 %v121, %v118
  %v155 = vpack.c.b16 %v122, %v119
  %v156 = vpack.c.b16 %v123, %v120
  %v157 = vpack.c.b16 %v127, %v124
  %v158 = vpack.c.b16 %v128, %v125
  %v159 = vpack.c.b16 %v129, %v126
  %v160 = vpack.c.b16 %v133, %v130
  %v161 = vpack.c.b16 %v134, %v131
  %v162 = vpack.c.b16 %v135, %v132
  %v163 = vpack.c.b16 %v139, %v136
  %v164 = vpack.c.b16 %v140, %v137
  %v165 = vpack.c.b16 %v141, %v138
  %190 = vmatpush.bf16.msra.mxu0 %v163
  %191 = vmatpush.bf16.msra.mxu0 %v160
  %192 = vmatpush.bf16.msra.mxu0 %v157
  %193 = vmatpush.bf16.msra.mxu0 %v154
  %194 = vmatpush.bf16.msra.mxu0 %v151
  %195 = vmatpush.bf16.msra.mxu0 %v148
  %196 = vmatpush.bf16.msra.mxu0 %v145
  %197 = vmatpush.bf16.msra.mxu0 %v142
  %198 = vmatmul.bf16.gmra.mxu0 %v52
  %v199 = vpop.f32.mrf.mxu0
  %v200 = vadd.f32 %v56, %v199
  %v201 = vpop.f32.mrf.mxu0
  %v202 = vadd.f32 %v56, %v201
  %203 = vmatmul.bf16.gmra.mxu0 %v53
  %v204 = vpop.f32.mrf.mxu0
  %v205 = vadd.f32 %v56, %v204
  %v206 = vpop.f32.mrf.mxu0
  %v207 = vadd.f32 %v56, %v206
  %208 = vmatmul.bf16.gmra.mxu0 %v54
  %v209 = vpop.f32.mrf.mxu0
  %v210 = vadd.f32 %v56, %v209
  %v211 = vpop.f32.mrf.mxu0
  %212 = vdwg.mxu0
  %213 = vmatpush.bf16.msra.mxu0 %v164
  %214 = vmatpush.bf16.msra.mxu0 %v161
  %215 = vmatpush.bf16.msra.mxu0 %v158
  %216 = vmatpush.bf16.msra.mxu0 %v155
  %217 = vmatpush.bf16.msra.mxu0 %v152
  %218 = vmatpush.bf16.msra.mxu0 %v149
  %219 = vmatpush.bf16.msra.mxu0 %v146
  %220 = vmatpush.bf16.msra.mxu0 %v143
  %221 = vmatmul.bf16.gmra.mxu0 %v52
  %v222 = vpop.f32.mrf.mxu0
  %v223 = vadd.f32 %v57, %v222
  %v224 = vpop.f32.mrf.mxu0
  %v225 = vadd.f32 %v57, %v224
  %226 = vmatmul.bf16.gmra.mxu0 %v53
  %v227 = vpop.f32.mrf.mxu0
  %v228 = vadd.f32 %v57, %v227
  %v229 = vpop.f32.mrf.mxu0
  %v230 = vadd.f32 %v57, %v229
  %231 = vmatmul.bf16.gmra.mxu0 %v54
  %v232 = vpop.f32.mrf.mxu0
  %v233 = vadd.f32 %v57, %v232
  %v234 = vpop.f32.mrf.mxu0
  %235 = vdwg.mxu0
  %236 = vmatpush.bf16.msra.mxu0 %v165
  %237 = vmatpush.bf16.msra.mxu0 %v162
  %238 = vmatpush.bf16.msra.mxu0 %v159
  %239 = vmatpush.bf16.msra.mxu0 %v156
  %240 = vmatpush.bf16.msra.mxu0 %v153
  %241 = vmatpush.bf16.msra.mxu0 %v150
  %242 = vmatpush.bf16.msra.mxu0 %v147
  %243 = vmatpush.bf16.msra.mxu0 %v144
  %244 = vmatmul.bf16.gmra.mxu0 %v52
  %v245 = vpop.f32.mrf.mxu0
  %v246 = vadd.f32 %v58, %v245
  %v247 = vpop.f32.mrf.mxu0
  %v248 = vadd.f32 %v58, %v247
  %249 = vmatmul.bf16.gmra.mxu0 %v53
  %v250 = vpop.f32.mrf.mxu0
  %v251 = vadd.f32 %v58, %v250
  %v252 = vpop.f32.mrf.mxu0
  %v253 = vadd.f32 %v58, %v252
  %254 = vmatmul.bf16.gmra.mxu0 %v54
  %v255 = vpop.f32.mrf.mxu0
  %v256 = vadd.f32 %v58, %v255
  %v257 = vpop.f32.mrf.mxu0
  %258 = vdwg.mxu0
  %259 = vst [vmem:[%s3] sm:$0xff] %v200
  %260 = vst [vmem:[%s3 + $0x8] sm:$0xff] %v223
  %261 = vst [vmem:[%s3 + $0x10] sm:$0xff] %v246
  %262 = vst [vmem:[%s3 + $0x18] sm:$0xff] %v202
  %263 = vst [vmem:[%s3 + $0x20] sm:$0xff] %v225
  %264 = vst [vmem:[%s3 + $0x28] sm:$0xff] %v248
  %265 = vst [vmem:[%s3 + $0x30] sm:$0xff] %v205
  %266 = vst [vmem:[%s3 + $0x38] sm:$0xff] %v228
  %267 = vst [vmem:[%s3 + $0x40] sm:$0xff] %v251
  %268 = vst [vmem:[%s3 + $0x48] sm:$0xff] %v207
  %269 = vst [vmem:[%s3 + $0x50] sm:$0xff] %v230
  %270 = vst [vmem:[%s3 + $0x58] sm:$0xff] %v253
  %271 = vst [vmem:[%s3 + $0x60] sm:$0x3] %v210
  %272 = vst [vmem:[%s3 + $0x68] sm:$0x3] %v233
  %273 = vst [vmem:[%s3 + $0x70] sm:$0x3] %v256
  // Predicated region
  $region14: #{detection_net_forward.168} parent=0 // pred_check
    _
  $region15: #{detection_net_forward.168} parent=0 // pred_check_branch
    %275 = sbr.rel (0) target = $region17
  $region16: #{detection_net_forward.168} parent=0 // pred_region
    _
  $region17: #{detection_net_forward.168} parent=0 // pred_fallthru
    _
  // Predicated region
  $region18: #{detection_net_forward.168} parent=0 // pred_check
    _
  $region19: #{detection_net_forward.168} parent=0 // pred_check_branch
    %277 = sbr.rel (0) target = $region21
  $region20: #{detection_net_forward.168} parent=0 // pred_region
    _
  $region21: #{detection_net_forward.168} parent=0 // pred_fallthru
    _

// kernel: detection_net_forward.169
$region0: #{detection_net_forward.169}
  #allocation0 [shape = 'u32[]', space=smem, size = 0x4, offset = 0x4, fixed_abs, tag = 'smem constant byte address 0x4 - core index']
  #allocation1 [shape = 'u32[72,128]{1,0:T(1,128)}', space=vmem, size = 0x9000, scoped, tag = 'internal scratch']
  %s0 = inlined_call_operand.vmem [shape: f32[70,128], index: 0, kind: input, shape index: {}]
  %s1 = inlined_call_operand.vmem [shape: bf16[128,1024], index: 1, kind: input, shape index: {}]
  %s2 = inlined_call_operand.vmem [shape: f32[1,1024], index: 2, kind: input, shape index: {}]
  %s3 = inlined_call_operand.vmem [shape: f32[70,1024], index: 3, kind: output, shape index: {}]
  %s4 = sld [smem:[#allocation0]]
  $region22: #{detection_net_forward.169} parent=0
    _
  %s6 = ssub.s32 1, %s4
  %s7 = scalar_select 0, %s6, %s4
  // Predicated region
  $region2: #{detection_net_forward.169} parent=0 // pred_check
    _
  $region3: #{detection_net_forward.169} parent=0 // pred_check_branch
    %9 = sbr.rel (0) target = $region5
  $region4: #{detection_net_forward.169} parent=0 // pred_region
    _
  $region5: #{detection_net_forward.169} parent=0 // pred_fallthru
    _
  // Predicated region
  $region6: #{detection_net_forward.169} parent=0 // pred_check
    _
  $region7: #{detection_net_forward.169} parent=0 // pred_check_branch
    %11 = sbr.rel (0) target = $region9
  $region8: #{detection_net_forward.169} parent=0 // pred_region
    _
  $region9: #{detection_net_forward.169} parent=0 // pred_fallthru
    _
  // Predicated region
  $region10: #{detection_net_forward.169} parent=0 // pred_check
    _
  $region11: #{detection_net_forward.169} parent=0 // pred_check_branch
    %13 = sbr.rel (0) target = $region13
  $region12: #{detection_net_forward.169} parent=0 // pred_region
    _
  $region13: #{detection_net_forward.169} parent=0 // pred_fallthru
    _
  %v14 = vld [vmem:[%s0] sm:$0xff]
  %v15 = vld [vmem:[%s0 + $0x8] sm:$0xff]
  %v16 = vld [vmem:[%s0 + $0x10] sm:$0xff]
  %v17 = vld [vmem:[%s0 + $0x18] sm:$0xff]
  %v18 = vld [vmem:[%s0 + $0x20] sm:$0xff]
  %v19 = vld [vmem:[%s0 + $0x28] sm:$0xff]
  %v20 = vld [vmem:[%s0 + $0x30] sm:$0xff]
  %v21 = vld [vmem:[%s0 + $0x38] sm:$0xff]
  %v22 = vld [vmem:[%s0 + $0x40] sm:$0x3f]
  %v23 = vld [vmem:[%s1] sm:$0xff]
  %v24 = vld [vmem:[%s1 + $0x8] sm:$0xff]
  %v25 = vld [vmem:[%s1 + $0x10] sm:$0xff]
  %v26 = vld [vmem:[%s1 + $0x18] sm:$0xff]
  %v27 = vld [vmem:[%s1 + $0x20] sm:$0xff]
  %v28 = vld [vmem:[%s1 + $0x28] sm:$0xff]
  %v29 = vld [vmem:[%s1 + $0x30] sm:$0xff]
  %v30 = vld [vmem:[%s1 + $0x38] sm:$0xff]
  %v31 = vld [vmem:[%s1 + $0x40] sm:$0xff]
  %v32 = vld [vmem:[%s1 + $0x48] sm:$0xff]
  %v33 = vld [vmem:[%s1 + $0x50] sm:$0xff]
  %v34 = vld [vmem:[%s1 + $0x58] sm:$0xff]
  %v35 = vld [vmem:[%s1 + $0x60] sm:$0xff]
  %v36 = vld [vmem:[%s1 + $0x68] sm:$0xff]
  %v37 = vld [vmem:[%s1 + $0x70] sm:$0xff]
  %v38 = vld [vmem:[%s1 + $0x78] sm:$0xff]
  %v39 = vld [vmem:[%s1 + $0x80] sm:$0xff]
  %v40 = vld [vmem:[%s1 + $0x88] sm:$0xff]
  %v41 = vld [vmem:[%s1 + $0x90] sm:$0xff]
  %v42 = vld [vmem:[%s1 + $0x98] sm:$0xff]
  %v43 = vld [vmem:[%s1 + $0xa0] sm:$0xff]
  %v44 = vld [vmem:[%s1 + $0xa8] sm:$0xff]
  %v45 = vld [vmem:[%s1 + $0xb0] sm:$0xff]
  %v46 = vld [vmem:[%s1 + $0xb8] sm:$0xff]
  %v47 = vld [vmem:[%s1 + $0xc0] sm:$0xff]
  %v48 = vld [vmem:[%s1 + $0xc8] sm:$0xff]
  %v49 = vld [vmem:[%s1 + $0xd0] sm:$0xff]
  %v50 = vld [vmem:[%s1 + $0xd8] sm:$0xff]
  %v51 = vld [vmem:[%s1 + $0xe0] sm:$0xff]
  %v52 = vld [vmem:[%s1 + $0xe8] sm:$0xff]
  %v53 = vld [vmem:[%s1 + $0xf0] sm:$0xff]
  %v54 = vld [vmem:[%s1 + $0xf8] sm:$0xff]
  %v55 = vld [vmem:[%s1 + $0x100] sm:$0xff]
  %v56 = vld [vmem:[%s1 + $0x108] sm:$0xff]
  %v57 = vld [vmem:[%s1 + $0x110] sm:$0xff]
  %v58 = vld [vmem:[%s1 + $0x118] sm:$0xff]
  %v59 = vld [vmem:[%s1 + $0x120] sm:$0xff]
  %v60 = vld [vmem:[%s1 + $0x128] sm:$0xff]
  %v61 = vld [vmem:[%s1 + $0x130] sm:$0xff]
  %v62 = vld [vmem:[%s1 + $0x138] sm:$0xff]
  %v63 = vld [vmem:[%s1 + $0x140] sm:$0xff]
  %v64 = vld [vmem:[%s1 + $0x148] sm:$0xff]
  %v65 = vld [vmem:[%s1 + $0x150] sm:$0xff]
  %v66 = vld [vmem:[%s1 + $0x158] sm:$0xff]
  %v67 = vld [vmem:[%s1 + $0x160] sm:$0xff]
  %v68 = vld [vmem:[%s1 + $0x168] sm:$0xff]
  %v69 = vld [vmem:[%s1 + $0x170] sm:$0xff]
  %v70 = vld [vmem:[%s1 + $0x178] sm:$0xff]
  %v71 = vld [vmem:[%s1 + $0x180] sm:$0xff]
  %v72 = vld [vmem:[%s1 + $0x188] sm:$0xff]
  %v73 = vld [vmem:[%s1 + $0x190] sm:$0xff]
  %v74 = vld [vmem:[%s1 + $0x198] sm:$0xff]
  %v75 = vld [vmem:[%s1 + $0x1a0] sm:$0xff]
  %v76 = vld [vmem:[%s1 + $0x1a8] sm:$0xff]
  %v77 = vld [vmem:[%s1 + $0x1b0] sm:$0xff]
  %v78 = vld [vmem:[%s1 + $0x1b8] sm:$0xff]
  %v79 = vld [vmem:[%s1 + $0x1c0] sm:$0xff]
  %v80 = vld [vmem:[%s1 + $0x1c8] sm:$0xff]
  %v81 = vld [vmem:[%s1 + $0x1d0] sm:$0xff]
  %v82 = vld [vmem:[%s1 + $0x1d8] sm:$0xff]
  %v83 = vld [vmem:[%s1 + $0x1e0] sm:$0xff]
  %v84 = vld [vmem:[%s1 + $0x1e8] sm:$0xff]
  %v85 = vld [vmem:[%s1 + $0x1f0] sm:$0xff]
  %v86 = vld [vmem:[%s1 + $0x1f8] sm:$0xff]
  %v87 = vld [vmem:[%s2] sm:$0xff]
  %v88 = vpack.c.bf16 %v15, %v14
  %v89 = vpack.c.bf16 %v17, %v16
  %v90 = vpack.c.bf16 %v19, %v18
  %v91 = vpack.c.bf16 %v21, %v20
  %v92 = vpack.c.bf16 %v22, %v22
  %v94 = vperm.slane %v87, 0
  %v95 = vperm.slane %v87, 1
  %v96 = vperm.slane %v87, 2
  %v97 = vperm.slane %v87, 3
  %v98 = vperm.slane %v87, 4
  %v99 = vperm.slane %v87, 5
  %v100 = vperm.slane %v87, 6
  %v101 = vperm.slane %v87, 7
  %v174 = vunpack.c.l.b16 %v23
  %v175 = vunpack.c.h.b16 %v23
  %v176 = vunpack.c.l.b16 %v24
  %v177 = vunpack.c.h.b16 %v24
  %v178 = vunpack.c.l.b16 %v25
  %v179 = vunpack.c.h.b16 %v25
  %v180 = vunpack.c.l.b16 %v26
  %v181 = vunpack.c.h.b16 %v26
  %v182 = vunpack.c.l.b16 %v27
  %v183 = vunpack.c.h.b16 %v27
  %v184 = vunpack.c.l.b16 %v28
  %v185 = vunpack.c.h.b16 %v28
  %v186 = vunpack.c.l.b16 %v29
  %v187 = vunpack.c.h.b16 %v29
  %v188 = vunpack.c.l.b16 %v30
  %v189 = vunpack.c.h.b16 %v30
  %v190 = vunpack.c.l.b16 %v31
  %v191 = vunpack.c.h.b16 %v31
  %v192 = vunpack.c.l.b16 %v32
  %v193 = vunpack.c.h.b16 %v32
  %v194 = vunpack.c.l.b16 %v33
  %v195 = vunpack.c.h.b16 %v33
  %v196 = vunpack.c.l.b16 %v34
  %v197 = vunpack.c.h.b16 %v34
  %v198 = vunpack.c.l.b16 %v35
  %v199 = vunpack.c.h.b16 %v35
  %v200 = vunpack.c.l.b16 %v36
  %v201 = vunpack.c.h.b16 %v36
  %v202 = vunpack.c.l.b16 %v37
  %v203 = vunpack.c.h.b16 %v37
  %v204 = vunpack.c.l.b16 %v38
  %v205 = vunpack.c.h.b16 %v38
  %v206 = vunpack.c.l.b16 %v39
  %v207 = vunpack.c.h.b16 %v39
  %v208 = vunpack.c.l.b16 %v40
  %v209 = vunpack.c.h.b16 %v40
  %v210 = vunpack.c.l.b16 %v41
  %v211 = vunpack.c.h.b16 %v41
  %v212 = vunpack.c.l.b16 %v42
  %v213 = vunpack.c.h.b16 %v42
  %v214 = vunpack.c.l.b16 %v43
  %v215 = vunpack.c.h.b16 %v43
  %v216 = vunpack.c.l.b16 %v44
  %v217 = vunpack.c.h.b16 %v44
  %v218 = vunpack.c.l.b16 %v45
  %v219 = vunpack.c.h.b16 %v45
  %v220 = vunpack.c.l.b16 %v46
  %v221 = vunpack.c.h.b16 %v46
  %v222 = vunpack.c.l.b16 %v47
  %v223 = vunpack.c.h.b16 %v47
  %v224 = vunpack.c.l.b16 %v48
  %v225 = vunpack.c.h.b16 %v48
  %v226 = vunpack.c.l.b16 %v49
  %v227 = vunpack.c.h.b16 %v49
  %v228 = vunpack.c.l.b16 %v50
  %v229 = vunpack.c.h.b16 %v50
  %v230 = vunpack.c.l.b16 %v51
  %v231 = vunpack.c.h.b16 %v51
  %v232 = vunpack.c.l.b16 %v52
  %v233 = vunpack.c.h.b16 %v52
  %v234 = vunpack.c.l.b16 %v53
  %v235 = vunpack.c.h.b16 %v53
  %v236 = vunpack.c.l.b16 %v54
  %v237 = vunpack.c.h.b16 %v54
  %v238 = vunpack.c.l.b16 %v55
  %v239 = vunpack.c.h.b16 %v55
  %v240 = vunpack.c.l.b16 %v56
  %v241 = vunpack.c.h.b16 %v56
  %v242 = vunpack.c.l.b16 %v57
  %v243 = vunpack.c.h.b16 %v57
  %v244 = vunpack.c.l.b16 %v58
  %v245 = vunpack.c.h.b16 %v58
  %v246 = vunpack.c.l.b16 %v59
  %v247 = vunpack.c.h.b16 %v59
  %v248 = vunpack.c.l.b16 %v60
  %v249 = vunpack.c.h.b16 %v60
  %v250 = vunpack.c.l.b16 %v61
  %v251 = vunpack.c.h.b16 %v61
  %v252 = vunpack.c.l.b16 %v62
  %v253 = vunpack.c.h.b16 %v62
  %v254 = vunpack.c.l.b16 %v63
  %v255 = vunpack.c.h.b16 %v63
  %v256 = vunpack.c.l.b16 %v64
  %v257 = vunpack.c.h.b16 %v64
  %v258 = vunpack.c.l.b16 %v65
  %v259 = vunpack.c.h.b16 %v65
  %v260 = vunpack.c.l.b16 %v66
  %v261 = vunpack.c.h.b16 %v66
  %v262 = vunpack.c.l.b16 %v67
  %v263 = vunpack.c.h.b16 %v67
  %v264 = vunpack.c.l.b16 %v68
  %v265 = vunpack.c.h.b16 %v68
  %v266 = vunpack.c.l.b16 %v69
  %v267 = vunpack.c.h.b16 %v69
  %v268 = vunpack.c.l.b16 %v70
  %v269 = vunpack.c.h.b16 %v70
  %v270 = vunpack.c.l.b16 %v71
  %v271 = vunpack.c.h.b16 %v71
  %v272 = vunpack.c.l.b16 %v72
  %v273 = vunpack.c.h.b16 %v72
  %v274 = vunpack.c.l.b16 %v73
  %v275 = vunpack.c.h.b16 %v73
  %v276 = vunpack.c.l.b16 %v74
  %v277 = vunpack.c.h.b16 %v74
  %v278 = vunpack.c.l.b16 %v75
  %v279 = vunpack.c.h.b16 %v75
  %v280 = vunpack.c.l.b16 %v76
  %v281 = vunpack.c.h.b16 %v76
  %v282 = vunpack.c.l.b16 %v77
  %v283 = vunpack.c.h.b16 %v77
  %v284 = vunpack.c.l.b16 %v78
  %v285 = vunpack.c.h.b16 %v78
  %v286 = vunpack.c.l.b16 %v79
  %v287 = vunpack.c.h.b16 %v79
  %v288 = vunpack.c.l.b16 %v80
  %v289 = vunpack.c.h.b16 %v80
  %v290 = vunpack.c.l.b16 %v81
  %v291 = vunpack.c.h.b16 %v81
  %v292 = vunpack.c.l.b16 %v82
  %v293 = vunpack.c.h.b16 %v82
  %v294 = vunpack.c.l.b16 %v83
  %v295 = vunpack.c.h.b16 %v83
  %v296 = vunpack.c.l.b16 %v84
  %v297 = vunpack.c.h.b16 %v84
  %v298 = vunpack.c.l.b16 %v85
  %v299 = vunpack.c.h.b16 %v85
  %v300 = vunpack.c.l.b16 %v86
  %v301 = vunpack.c.h.b16 %v86
  %v302 = vpack.c.b16 %v182, %v174
  %v303 = vpack.c.b16 %v183, %v175
  %v304 = vpack.c.b16 %v184, %v176
  %v305 = vpack.c.b16 %v185, %v177
  %v306 = vpack.c.b16 %v186, %v178
  %v307 = vpack.c.b16 %v187, %v179
  %v308 = vpack.c.b16 %v188, %v180
  %v309 = vpack.c.b16 %v189, %v181
  %v310 = vpack.c.b16 %v198, %v190
  %v311 = vpack.c.b16 %v199, %v191
  %v312 = vpack.c.b16 %v200, %v192
  %v313 = vpack.c.b16 %v201, %v193
  %v314 = vpack.c.b16 %v202, %v194
  %v315 = vpack.c.b16 %v203, %v195
  %v316 = vpack.c.b16 %v204, %v196
  %v317 = vpack.c.b16 %v205, %v197
  %v318 = vpack.c.b16 %v214, %v206
  %v319 = vpack.c.b16 %v215, %v207
  %v320 = vpack.c.b16 %v216, %v208
  %v321 = vpack.c.b16 %v217, %v209
  %v322 = vpack.c.b16 %v218, %v210
  %v323 = vpack.c.b16 %v219, %v211
  %v324 = vpack.c.b16 %v220, %v212
  %v325 = vpack.c.b16 %v221, %v213
  %v326 = vpack.c.b16 %v230, %v222
  %v327 = vpack.c.b16 %v231, %v223
  %v328 = vpack.c.b16 %v232, %v224
  %v329 = vpack.c.b16 %v233, %v225
  %v330 = vpack.c.b16 %v234, %v226
  %v331 = vpack.c.b16 %v235, %v227
  %v332 = vpack.c.b16 %v236, %v228
  %v333 = vpack.c.b16 %v237, %v229
  %v334 = vpack.c.b16 %v246, %v238
  %v335 = vpack.c.b16 %v247, %v239
  %v336 = vpack.c.b16 %v248, %v240
  %v337 = vpack.c.b16 %v249, %v241
  %v338 = vpack.c.b16 %v250, %v242
  %v339 = vpack.c.b16 %v251, %v243
  %v340 = vpack.c.b16 %v252, %v244
  %v341 = vpack.c.b16 %v253, %v245
  %v342 = vpack.c.b16 %v262, %v254
  %v343 = vpack.c.b16 %v263, %v255
  %v344 = vpack.c.b16 %v264, %v256
  %v345 = vpack.c.b16 %v265, %v257
  %v346 = vpack.c.b16 %v266, %v258
  %v347 = vpack.c.b16 %v267, %v259
  %v348 = vpack.c.b16 %v268, %v260
  %v349 = vpack.c.b16 %v269, %v261
  %v350 = vpack.c.b16 %v278, %v270
  %v351 = vpack.c.b16 %v279, %v271
  %v352 = vpack.c.b16 %v280, %v272
  %v353 = vpack.c.b16 %v281, %v273
  %v354 = vpack.c.b16 %v282, %v274
  %v355 = vpack.c.b16 %v283, %v275
  %v356 = vpack.c.b16 %v284, %v276
  %v357 = vpack.c.b16 %v285, %v277
  %v358 = vpack.c.b16 %v294, %v286
  %v359 = vpack.c.b16 %v295, %v287
  %v360 = vpack.c.b16 %v296, %v288
  %v361 = vpack.c.b16 %v297, %v289
  %v362 = vpack.c.b16 %v298, %v290
  %v363 = vpack.c.b16 %v299, %v291
  %v364 = vpack.c.b16 %v300, %v292
  %v365 = vpack.c.b16 %v301, %v293
  %430 = vmatpush.bf16.msra.mxu0 %v358
  %431 = vmatpush.bf16.msra.mxu0 %v350
  %432 = vmatpush.bf16.msra.mxu0 %v342
  %433 = vmatpush.bf16.msra.mxu0 %v334
  %434 = vmatpush.bf16.msra.mxu0 %v326
  %435 = vmatpush.bf16.msra.mxu0 %v318
  %436 = vmatpush.bf16.msra.mxu0 %v310
  %437 = vmatpush.bf16.msra.mxu0 %v302
  %438 = vmatmul.bf16.gmra.mxu0 %v88
  %v439 = vpop.f32.mrf.mxu0
  %v440 = vadd.f32 %v94, %v439
  %v441 = vpop.f32.mrf.mxu0
  %v442 = vadd.f32 %v94, %v441
  %443 = vmatmul.bf16.gmra.mxu0 %v89
  %v444 = vpop.f32.mrf.mxu0
  %v445 = vadd.f32 %v94, %v444
  %v446 = vpop.f32.mrf.mxu0
  %v447 = vadd.f32 %v94, %v446
  %448 = vmatmul.bf16.gmra.mxu0 %v90
  %v449 = vpop.f32.mrf.mxu0
  %v450 = vadd.f32 %v94, %v449
  %v451 = vpop.f32.mrf.mxu0
  %v452 = vadd.f32 %v94, %v451
  %453 = vmatmul.bf16.gmra.mxu0 %v91
  %v454 = vpop.f32.mrf.mxu0
  %v455 = vadd.f32 %v94, %v454
  %v456 = vpop.f32.mrf.mxu0
  %v457 = vadd.f32 %v94, %v456
  %458 = vmatmul.bf16.gmra.mxu0 %v92
  %v459 = vpop.f32.mrf.mxu0
  %v460 = vadd.f32 %v94, %v459
  %v461 = vpop.f32.mrf.mxu0
  %462 = vdwg.mxu0
  %463 = vmatpush.bf16.msra.mxu0 %v359
  %464 = vmatpush.bf16.msra.mxu0 %v351
  %465 = vmatpush.bf16.msra.mxu0 %v343
  %466 = vmatpush.bf16.msra.mxu0 %v335
  %467 = vmatpush.bf16.msra.mxu0 %v327
  %468 = vmatpush.bf16.msra.mxu0 %v319
  %469 = vmatpush.bf16.msra.mxu0 %v311
  %470 = vmatpush.bf16.msra.mxu0 %v303
  %471 = vmatmul.bf16.gmra.mxu0 %v88
  %v472 = vpop.f32.mrf.mxu0
  %v473 = vadd.f32 %v95, %v472
  %v474 = vpop.f32.mrf.mxu0
  %v475 = vadd.f32 %v95, %v474
  %476 = vmatmul.bf16.gmra.mxu0 %v89
  %v477 = vpop.f32.mrf.mxu0
  %v478 = vadd.f32 %v95, %v477
  %v479 = vpop.f32.mrf.mxu0
  %v480 = vadd.f32 %v95, %v479
  %481 = vmatmul.bf16.gmra.mxu0 %v90
  %v482 = vpop.f32.mrf.mxu0
  %v483 = vadd.f32 %v95, %v482
  %v484 = vpop.f32.mrf.mxu0
  %v485 = vadd.f32 %v95, %v484
  %486 = vmatmul.bf16.gmra.mxu0 %v91
  %v487 = vpop.f32.mrf.mxu0
  %v488 = vadd.f32 %v95, %v487
  %v489 = vpop.f32.mrf.mxu0
  %v490 = vadd.f32 %v95, %v489
  %491 = vmatmul.bf16.gmra.mxu0 %v92
  %v492 = vpop.f32.mrf.mxu0
  %v493 = vadd.f32 %v95, %v492
  %v494 = vpop.f32.mrf.mxu0
  %495 = vdwg.mxu0
  %496 = vmatpush.bf16.msra.mxu0 %v360
  %497 = vmatpush.bf16.msra.mxu0 %v352
  %498 = vmatpush.bf16.msra.mxu0 %v344
  %499 = vmatpush.bf16.msra.mxu0 %v336
  %500 = vmatpush.bf16.msra.mxu0 %v328
  %501 = vmatpush.bf16.msra.mxu0 %v320
  %502 = vmatpush.bf16.msra.mxu0 %v312
  %503 = vmatpush.bf16.msra.mxu0 %v304
  %504 = vmatmul.bf16.gmra.mxu0 %v88
  %v505 = vpop.f32.mrf.mxu0
  %v506 = vadd.f32 %v96, %v505
  %v507 = vpop.f32.mrf.mxu0
  %v508 = vadd.f32 %v96, %v507
  %509 = vmatmul.bf16.gmra.mxu0 %v89
  %v510 = vpop.f32.mrf.mxu0
  %v511 = vadd.f32 %v96, %v510
  %v512 = vpop.f32.mrf.mxu0
  %v513 = vadd.f32 %v96, %v512
  %514 = vmatmul.bf16.gmra.mxu0 %v90
  %v515 = vpop.f32.mrf.mxu0
  %v516 = vadd.f32 %v96, %v515
  %v517 = vpop.f32.mrf.mxu0
  %v518 = vadd.f32 %v96, %v517
  %519 = vmatmul.bf16.gmra.mxu0 %v91
  %v520 = vpop.f32.mrf.mxu0
  %v521 = vadd.f32 %v96, %v520
  %v522 = vpop.f32.mrf.mxu0
  %v523 = vadd.f32 %v96, %v522
  %524 = vmatmul.bf16.gmra.mxu0 %v92
  %v525 = vpop.f32.mrf.mxu0
  %v526 = vadd.f32 %v96, %v525
  %v527 = vpop.f32.mrf.mxu0
  %528 = vdwg.mxu0
  %529 = vmatpush.bf16.msra.mxu0 %v361
  %530 = vmatpush.bf16.msra.mxu0 %v353
  %531 = vmatpush.bf16.msra.mxu0 %v345
  %532 = vmatpush.bf16.msra.mxu0 %v337
  %533 = vmatpush.bf16.msra.mxu0 %v329
  %534 = vmatpush.bf16.msra.mxu0 %v321
  %535 = vmatpush.bf16.msra.mxu0 %v313
  %536 = vmatpush.bf16.msra.mxu0 %v305
  %537 = vmatmul.bf16.gmra.mxu0 %v88
  %v538 = vpop.f32.mrf.mxu0
  %v539 = vadd.f32 %v97, %v538
  %v540 = vpop.f32.mrf.mxu0
  %v541 = vadd.f32 %v97, %v540
  %542 = vmatmul.bf16.gmra.mxu0 %v89
  %v543 = vpop.f32.mrf.mxu0
  %v544 = vadd.f32 %v97, %v543
  %v545 = vpop.f32.mrf.mxu0
  %v546 = vadd.f32 %v97, %v545
  %547 = vmatmul.bf16.gmra.mxu0 %v90
  %v548 = vpop.f32.mrf.mxu0
  %v549 = vadd.f32 %v97, %v548
  %v550 = vpop.f32.mrf.mxu0
  %v551 = vadd.f32 %v97, %v550
  %552 = vmatmul.bf16.gmra.mxu0 %v91
  %v553 = vpop.f32.mrf.mxu0
  %v554 = vadd.f32 %v97, %v553
  %v555 = vpop.f32.mrf.mxu0
  %v556 = vadd.f32 %v97, %v555
  %557 = vmatmul.bf16.gmra.mxu0 %v92
  %v558 = vpop.f32.mrf.mxu0
  %v559 = vadd.f32 %v97, %v558
  %v560 = vpop.f32.mrf.mxu0
  %561 = vdwg.mxu0
  %562 = vmatpush.bf16.msra.mxu0 %v362
  %563 = vmatpush.bf16.msra.mxu0 %v354
  %564 = vmatpush.bf16.msra.mxu0 %v346
  %565 = vmatpush.bf16.msra.mxu0 %v338
  %566 = vmatpush.bf16.msra.mxu0 %v330
  %567 = vmatpush.bf16.msra.mxu0 %v322
  %568 = vmatpush.bf16.msra.mxu0 %v314
  %569 = vmatpush.bf16.msra.mxu0 %v306
  %570 = vmatmul.bf16.gmra.mxu0 %v88
  %v571 = vpop.f32.mrf.mxu0
  %v572 = vadd.f32 %v98, %v571
  %v573 = vpop.f32.mrf.mxu0
  %v574 = vadd.f32 %v98, %v573
  %575 = vmatmul.bf16.gmra.mxu0 %v89
  %v576 = vpop.f32.mrf.mxu0
  %v577 = vadd.f32 %v98, %v576
  %v578 = vpop.f32.mrf.mxu0
  %v579 = vadd.f32 %v98, %v578
  %580 = vmatmul.bf16.gmra.mxu0 %v90
  %v581 = vpop.f32.mrf.mxu0
  %v582 = vadd.f32 %v98, %v581
  %v583 = vpop.f32.mrf.mxu0
  %v584 = vadd.f32 %v98, %v583
  %585 = vmatmul.bf16.gmra.mxu0 %v91
  %v586 = vpop.f32.mrf.mxu0
  %v587 = vadd.f32 %v98, %v586
  %v588 = vpop.f32.mrf.mxu0
  %v589 = vadd.f32 %v98, %v588
  %590 = vmatmul.bf16.gmra.mxu0 %v92
  %v591 = vpop.f32.mrf.mxu0
  %v592 = vadd.f32 %v98, %v591
  %v593 = vpop.f32.mrf.mxu0
  %594 = vdwg.mxu0
  %595 = vmatpush.bf16.msra.mxu0 %v363
  %596 = vmatpush.bf16.msra.mxu0 %v355
  %597 = vmatpush.bf16.msra.mxu0 %v347
  %598 = vmatpush.bf16.msra.mxu0 %v339
  %599 = vmatpush.bf16.msra.mxu0 %v331
  %600 = vmatpush.bf16.msra.mxu0 %v323
  %601 = vmatpush.bf16.msra.mxu0 %v315
  %602 = vmatpush.bf16.msra.mxu0 %v307
  %603 = vmatmul.bf16.gmra.mxu0 %v88
  %v604 = vpop.f32.mrf.mxu0
  %v605 = vadd.f32 %v99, %v604
  %v606 = vpop.f32.mrf.mxu0
  %v607 = vadd.f32 %v99, %v606
  %608 = vmatmul.bf16.gmra.mxu0 %v89
  %v609 = vpop.f32.mrf.mxu0
  %v610 = vadd.f32 %v99, %v609
  %v611 = vpop.f32.mrf.mxu0
  %v612 = vadd.f32 %v99, %v611
  %613 = vmatmul.bf16.gmra.mxu0 %v90
  %v614 = vpop.f32.mrf.mxu0
  %v615 = vadd.f32 %v99, %v614
  %v616 = vpop.f32.mrf.mxu0
  %v617 = vadd.f32 %v99, %v616
  %618 = vmatmul.bf16.gmra.mxu0 %v91
  %v619 = vpop.f32.mrf.mxu0
  %v620 = vadd.f32 %v99, %v619
  %v621 = vpop.f32.mrf.mxu0
  %v622 = vadd.f32 %v99, %v621
  %623 = vmatmul.bf16.gmra.mxu0 %v92
  %v624 = vpop.f32.mrf.mxu0
  %v625 = vadd.f32 %v99, %v624
  %v626 = vpop.f32.mrf.mxu0
  %627 = vdwg.mxu0
  %628 = vmatpush.bf16.msra.mxu0 %v364
  %629 = vmatpush.bf16.msra.mxu0 %v356
  %630 = vmatpush.bf16.msra.mxu0 %v348
  %631 = vmatpush.bf16.msra.mxu0 %v340
  %632 = vmatpush.bf16.msra.mxu0 %v332
  %633 = vmatpush.bf16.msra.mxu0 %v324
  %634 = vmatpush.bf16.msra.mxu0 %v316
  %635 = vmatpush.bf16.msra.mxu0 %v308
  %636 = vmatmul.bf16.gmra.mxu0 %v88
  %v637 = vpop.f32.mrf.mxu0
  %v638 = vadd.f32 %v100, %v637
  %v639 = vpop.f32.mrf.mxu0
  %v640 = vadd.f32 %v100, %v639
  %641 = vmatmul.bf16.gmra.mxu0 %v89
  %v642 = vpop.f32.mrf.mxu0
  %v643 = vadd.f32 %v100, %v642
  %v644 = vpop.f32.mrf.mxu0
  %v645 = vadd.f32 %v100, %v644
  %646 = vmatmul.bf16.gmra.mxu0 %v90
  %v647 = vpop.f32.mrf.mxu0
  %v648 = vadd.f32 %v100, %v647
  %v649 = vpop.f32.mrf.mxu0
  %v650 = vadd.f32 %v100, %v649
  %651 = vmatmul.bf16.gmra.mxu0 %v91
  %v652 = vpop.f32.mrf.mxu0
  %v653 = vadd.f32 %v100, %v652
  %v654 = vpop.f32.mrf.mxu0
  %v655 = vadd.f32 %v100, %v654
  %656 = vmatmul.bf16.gmra.mxu0 %v92
  %v657 = vpop.f32.mrf.mxu0
  %v658 = vadd.f32 %v100, %v657
  %v659 = vpop.f32.mrf.mxu0
  %660 = vdwg.mxu0
  %661 = vmatpush.bf16.msra.mxu0 %v365
  %662 = vmatpush.bf16.msra.mxu0 %v357
  %663 = vmatpush.bf16.msra.mxu0 %v349
  %664 = vmatpush.bf16.msra.mxu0 %v341
  %665 = vmatpush.bf16.msra.mxu0 %v333
  %666 = vmatpush.bf16.msra.mxu0 %v325
  %667 = vmatpush.bf16.msra.mxu0 %v317
  %668 = vmatpush.bf16.msra.mxu0 %v309
  %669 = vmatmul.bf16.gmra.mxu0 %v88
  %v670 = vpop.f32.mrf.mxu0
  %v671 = vadd.f32 %v101, %v670
  %v672 = vpop.f32.mrf.mxu0
  %v673 = vadd.f32 %v101, %v672
  %674 = vmatmul.bf16.gmra.mxu0 %v89
  %v675 = vpop.f32.mrf.mxu0
  %v676 = vadd.f32 %v101, %v675
  %v677 = vpop.f32.mrf.mxu0
  %v678 = vadd.f32 %v101, %v677
  %679 = vmatmul.bf16.gmra.mxu0 %v90
  %v680 = vpop.f32.mrf.mxu0
  %v681 = vadd.f32 %v101, %v680
  %v682 = vpop.f32.mrf.mxu0
  %v683 = vadd.f32 %v101, %v682
  %684 = vmatmul.bf16.gmra.mxu0 %v91
  %v685 = vpop.f32.mrf.mxu0
  %v686 = vadd.f32 %v101, %v685
  %v687 = vpop.f32.mrf.mxu0
  %v688 = vadd.f32 %v101, %v687
  %689 = vmatmul.bf16.gmra.mxu0 %v92
  %v690 = vpop.f32.mrf.mxu0
  %v691 = vadd.f32 %v101, %v690
  %v692 = vpop.f32.mrf.mxu0
  %693 = vdwg.mxu0
  %694 = vst [vmem:[%s3] sm:$0xff] %v440
  %695 = vst [vmem:[%s3 + $0x8] sm:$0xff] %v473
  %696 = vst [vmem:[%s3 + $0x10] sm:$0xff] %v506
  %697 = vst [vmem:[%s3 + $0x18] sm:$0xff] %v539
  %698 = vst [vmem:[%s3 + $0x20] sm:$0xff] %v572
  %699 = vst [vmem:[%s3 + $0x28] sm:$0xff] %v605
  %700 = vst [vmem:[%s3 + $0x30] sm:$0xff] %v638
  %701 = vst [vmem:[%s3 + $0x38] sm:$0xff] %v671
  %702 = vst [vmem:[%s3 + $0x40] sm:$0xff] %v442
  %703 = vst [vmem:[%s3 + $0x48] sm:$0xff] %v475
  %704 = vst [vmem:[%s3 + $0x50] sm:$0xff] %v508
  %705 = vst [vmem:[%s3 + $0x58] sm:$0xff] %v541
  %706 = vst [vmem:[%s3 + $0x60] sm:$0xff] %v574
  %707 = vst [vmem:[%s3 + $0x68] sm:$0xff] %v607
  %708 = vst [vmem:[%s3 + $0x70] sm:$0xff] %v640
  %709 = vst [vmem:[%s3 + $0x78] sm:$0xff] %v673
  %710 = vst [vmem:[%s3 + $0x80] sm:$0xff] %v445
  %711 = vst [vmem:[%s3 + $0x88] sm:$0xff] %v478
  %712 = vst [vmem:[%s3 + $0x90] sm:$0xff] %v511
  %713 = vst [vmem:[%s3 + $0x98] sm:$0xff] %v544
  %714 = vst [vmem:[%s3 + $0xa0] sm:$0xff] %v577
  %715 = vst [vmem:[%s3 + $0xa8] sm:$0xff] %v610
  %716 = vst [vmem:[%s3 + $0xb0] sm:$0xff] %v643
  %717 = vst [vmem:[%s3 + $0xb8] sm:$0xff] %v676
  %718 = vst [vmem:[%s3 + $0xc0] sm:$0xff] %v447
  %719 = vst [vmem:[%s3 + $0xc8] sm:$0xff] %v480
  %720 = vst [vmem:[%s3 + $0xd0] sm:$0xff] %v513
  %721 = vst [vmem:[%s3 + $0xd8] sm:$0xff] %v546
  %722 = vst [vmem:[%s3 + $0xe0] sm:$0xff] %v579
  %723 = vst [vmem:[%s3 + $0xe8] sm:$0xff] %v612
  %724 = vst [vmem:[%s3 + $0xf0] sm:$0xff] %v645
  %725 = vst [vmem:[%s3 + $0xf8] sm:$0xff] %v678
  %726 = vst [vmem:[%s3 + $0x100] sm:$0xff] %v450
  %727 = vst [vmem:[%s3 + $0x108] sm:$0xff] %v483
  %728 = vst [vmem:[%s3 + $0x110] sm:$0xff] %v516
  %729 = vst [vmem:[%s3 + $0x118] sm:$0xff] %v549
  %730 = vst [vmem:[%s3 + $0x120] sm:$0xff] %v582
  %731 = vst [vmem:[%s3 + $0x128] sm:$0xff] %v615
  %732 = vst [vmem:[%s3 + $0x130] sm:$0xff] %v648
  %733 = vst [vmem:[%s3 + $0x138] sm:$0xff] %v681
  %734 = vst [vmem:[%s3 + $0x140] sm:$0xff] %v452
  %735 = vst [vmem:[%s3 + $0x148] sm:$0xff] %v485
  %736 = vst [vmem:[%s3 + $0x150] sm:$0xff] %v518
  %737 = vst [vmem:[%s3 + $0x158] sm:$0xff] %v551
  %738 = vst [vmem:[%s3 + $0x160] sm:$0xff] %v584
  %739 = vst [vmem:[%s3 + $0x168] sm:$0xff] %v617
  %740 = vst [vmem:[%s3 + $0x170] sm:$0xff] %v650
  %741 = vst [vmem:[%s3 + $0x178] sm:$0xff] %v683
  %742 = vst [vmem:[%s3 + $0x180] sm:$0xff] %v455
  %743 = vst [vmem:[%s3 + $0x188] sm:$0xff] %v488
  %744 = vst [vmem:[%s3 + $0x190] sm:$0xff] %v521
  %745 = vst [vmem:[%s3 + $0x198] sm:$0xff] %v554
  %746 = vst [vmem:[%s3 + $0x1a0] sm:$0xff] %v587
  %747 = vst [vmem:[%s3 + $0x1a8] sm:$0xff] %v620
  %748 = vst [vmem:[%s3 + $0x1b0] sm:$0xff] %v653
  %749 = vst [vmem:[%s3 + $0x1b8] sm:$0xff] %v686
  %750 = vst [vmem:[%s3 + $0x1c0] sm:$0xff] %v457
  %751 = vst [vmem:[%s3 + $0x1c8] sm:$0xff] %v490
  %752 = vst [vmem:[%s3 + $0x1d0] sm:$0xff] %v523
  %753 = vst [vmem:[%s3 + $0x1d8] sm:$0xff] %v556
  %754 = vst [vmem:[%s3 + $0x1e0] sm:$0xff] %v589
  %755 = vst [vmem:[%s3 + $0x1e8] sm:$0xff] %v622
  %756 = vst [vmem:[%s3 + $0x1f0] sm:$0xff] %v655
  %757 = vst [vmem:[%s3 + $0x1f8] sm:$0xff] %v688
  %758 = vst [vmem:[%s3 + $0x200] sm:$0x3f] %v460
  %759 = vst [vmem:[%s3 + $0x208] sm:$0x3f] %v493
  %760 = vst [vmem:[%s3 + $0x210] sm:$0x3f] %v526
  %761 = vst [vmem:[%s3 + $0x218] sm:$0x3f] %v559
  %762 = vst [vmem:[%s3 + $0x220] sm:$0x3f] %v592
  %763 = vst [vmem:[%s3 + $0x228] sm:$0x3f] %v625
  %764 = vst [vmem:[%s3 + $0x230] sm:$0x3f] %v658
  %765 = vst [vmem:[%s3 + $0x238] sm:$0x3f] %v691
  // Predicated region
  $region14: #{detection_net_forward.169} parent=0 // pred_check
    _
  $region15: #{detection_net_forward.169} parent=0 // pred_check_branch
    %767 = sbr.rel (0) target = $region17
  $region16: #{detection_net_forward.169} parent=0 // pred_region
    _
  $region17: #{detection_net_forward.169} parent=0 // pred_fallthru
    _
  // Predicated region
  $region18: #{detection_net_forward.169} parent=0 // pred_check
    _
  $region19: #{detection_net_forward.169} parent=0 // pred_check_branch
    %769 = sbr.rel (0) target = $region21
  $region20: #{detection_net_forward.169} parent=0 // pred_region
    _
  $region21: #{detection_net_forward.169} parent=0 // pred_fallthru
    _

// kernel: detection_net_forward.171
$region0: #{detection_net_forward.171}
  #allocation0 [shape = 'u32[]', space=smem, size = 0x4, offset = 0x4, fixed_abs, tag = 'smem constant byte address 0x4 - core index']
  #allocation1 [shape = 'u32[72,128]{1,0:T(1,128)}', space=vmem, size = 0x9000, scoped, tag = 'internal scratch']
  #allocation2 [shape = 'f32[2,256]{1,0:T(2,128)}', space=vmem, size = 0x800, scoped, tag = 'scratch operand']
  #allocation3 [shape = 'f32[2,256]{1,0:T(2,128)}', space=vmem, size = 0x800, scoped, tag = 'scratch operand']
  #allocation4 [shape = 'f32[35,2,256]{2,1,0:T(2,128)}', space=vmem, size = 0x11800, scoped, tag = 'scratch operand']
  #allocation5 [shape = 'f32[35,2,256]{2,1,0:T(2,128)}', space=vmem, size = 0x11800, scoped, tag = 'scratch operand']
  #allocation6 [shape = 'f32[1,1]{1,0:T(1,128)S(1)}', space=vmem, size = 0x200, scoped, tag = 'scoped memory for detection_net_forward.171']
  %s0 = inlined_call_operand.vmem [shape: f32[35,2,1024], index: 0, kind: input, shape index: {}]
  %s1 = inlined_call_operand.vmem [shape: f32[35,2,1024], index: 1, kind: input, shape index: {}]
  %s2 = inlined_call_operand.vmem [shape: bf16[256,1024], index: 2, kind: input, shape index: {}]
  %s3 = inlined_call_operand.vmem [shape: bf16[256,1024], index: 3, kind: input, shape index: {}]
  %s4 = inlined_call_operand.vmem [shape: f32[1,256], index: 4, kind: input, shape index: {}]
  %s5 = inlined_call_operand.vmem [shape: f32[1,256], index: 5, kind: input, shape index: {}]
  %s6 = inlined_call_operand.<no memory space> [shape: f32[1,1], index: 6, kind: input, shape index: {}]
  %s7 = inlined_call_operand.vmem [shape: f32[35,2], index: 7, kind: output, shape index: {}]
  %s8 = sld [smem:[#allocation0]]
  $region52: #{detection_net_forward.171} parent=0
    _
  %s10 = ssub.s32 1, %s8
  %s11 = scalar_select 0, %s10, %s8
  %v12 = vstv %s6
  %13 = vst [vmem:[#allocation6] sm:$0x1] %v12
  // Predicated region
  $region2: #{detection_net_forward.171} parent=0 // pred_check
    _
  $region3: #{detection_net_forward.171} parent=0 // pred_check_branch
    %15 = sbr.rel (0) target = $region5
  $region4: #{detection_net_forward.171} parent=0 // pred_region
    _
  $region5: #{detection_net_forward.171} parent=0 // pred_fallthru
    _
  // Predicated region
  $region6: #{detection_net_forward.171} parent=0 // pred_check
    _
  $region7: #{detection_net_forward.171} parent=0 // pred_check_branch
    %17 = sbr.rel (0) target = $region9
  $region8: #{detection_net_forward.171} parent=0 // pred_region
    _
  $region9: #{detection_net_forward.171} parent=0 // pred_fallthru
    _
  // Predicated region
  $region10: #{detection_net_forward.171} parent=0 // pred_check
    _
  $region11: #{detection_net_forward.171} parent=0 // pred_check_branch
    %19 = sbr.rel (0) target = $region13
  $region12: #{detection_net_forward.171} parent=0 // pred_region
    _
  $region13: #{detection_net_forward.171} parent=0 // pred_fallthru
    _
  // Predicated region
  $region14: #{detection_net_forward.171} parent=0 // pred_check
    _
  $region15: #{detection_net_forward.171} parent=0 // pred_check_branch
    %21 = sbr.rel (0) target = $region17
  $region16: #{detection_net_forward.171} parent=0 // pred_region
    _
  $region17: #{detection_net_forward.171} parent=0 // pred_fallthru
    _
  // Predicated region
  $region18: #{detection_net_forward.171} parent=0 // pred_check
    _
  $region19: #{detection_net_forward.171} parent=0 // pred_check_branch
    %23 = sbr.rel (0) target = $region21
  $region20: #{detection_net_forward.171} parent=0 // pred_region
    _
  $region21: #{detection_net_forward.171} parent=0 // pred_fallthru
    _
  // Predicated region
  $region22: #{detection_net_forward.171} parent=0 // pred_check
    _
  $region23: #{detection_net_forward.171} parent=0 // pred_check_branch
    %25 = sbr.rel (0) target = $region25
  $region24: #{detection_net_forward.171} parent=0 // pred_region
    _
  $region25: #{detection_net_forward.171} parent=0 // pred_fallthru
    _
  // Predicated region
  $region26: #{detection_net_forward.171} parent=0 // pred_check
    _
  $region27: #{detection_net_forward.171} parent=0 // pred_check_branch
    %27 = sbr.rel (0) target = $region29
  $region28: #{detection_net_forward.171} parent=0 // pred_region
    _
  $region29: #{detection_net_forward.171} parent=0 // pred_fallthru
    _
  %28 = vst [vmem:[#allocation2] sm:$0xf] 0.0
  %29 = vst [vmem:[#allocation3] sm:$0xf] 0.0
  loop: start=0, step=1, limit=35
  $region30: #{detection_net_forward.171} parent=0 // loop_pre_header
    _
  $region31: #{detection_net_forward.171} parent=0 // loop_header
    %s31 = sphi 0, %s35
    %p32 = scmp.ge.s32.totalorder %s31, 35
  $region32: #{detection_net_forward.171} parent=0 // loop_header_branch
    %34 = sbr.rel (%p32) target = $region36
  $region33: #{detection_net_forward.171} parent=0 // loop_body
    %s36 = smul.u32 %s31, 8
    %s37 = smul.addr %s36, 2
    %s38 = scalar_lea.vmem %s0, %s37
    %v39 = vld [vmem:[%s38] sm:$0xff]
    %v40 = vld [vmem:[%s38 + $0x8] sm:$0xff]
    %v41 = vld [vmem:[#allocation2] sm:$0xf]
    %43 = vst [vmem:[#allocation1] ss:$4 sm:$0xff] %v41
    %v44 = vld.sshfl [vmem:[#allocation1] sm:$0xff pattern:$0x73625140]
    %v45 = vld.sshfl [vmem:[#allocation1 + $0x8] sm:$0xff pattern:$0x73625140]
    %v48 = vpack.c.bf16 %v44, %v44
    %v49 = vpack.c.bf16 %v45, %v45
    %v50 = vld [vmem:[%s2] sm:$0xff]
    %v51 = vld [vmem:[%s2 + $0x8] sm:$0xff]
    %v52 = vld [vmem:[%s2 + $0x10] sm:$0xff]
    %v53 = vld [vmem:[%s2 + $0x18] sm:$0xff]
    %v54 = vld [vmem:[%s2 + $0x20] sm:$0xff]
    %v55 = vld [vmem:[%s2 + $0x28] sm:$0xff]
    %v56 = vld [vmem:[%s2 + $0x30] sm:$0xff]
    %v57 = vld [vmem:[%s2 + $0x38] sm:$0xff]
    %v58 = vld [vmem:[%s2 + $0x40] sm:$0xff]
    %v59 = vld [vmem:[%s2 + $0x48] sm:$0xff]
    %v60 = vld [vmem:[%s2 + $0x50] sm:$0xff]
    %v61 = vld [vmem:[%s2 + $0x58] sm:$0xff]
    %v62 = vld [vmem:[%s2 + $0x60] sm:$0xff]
    %v63 = vld [vmem:[%s2 + $0x68] sm:$0xff]
    %v64 = vld [vmem:[%s2 + $0x70] sm:$0xff]
    %v65 = vld [vmem:[%s2 + $0x78] sm:$0xff]
    %v66 = vld [vmem:[%s2 + $0x80] sm:$0xff]
    %v67 = vld [vmem:[%s2 + $0x88] sm:$0xff]
    %v68 = vld [vmem:[%s2 + $0x90] sm:$0xff]
    %v69 = vld [vmem:[%s2 + $0x98] sm:$0xff]
    %v70 = vld [vmem:[%s2 + $0xa0] sm:$0xff]
    %v71 = vld [vmem:[%s2 + $0xa8] sm:$0xff]
    %v72 = vld [vmem:[%s2 + $0xb0] sm:$0xff]
    %v73 = vld [vmem:[%s2 + $0xb8] sm:$0xff]
    %v74 = vld [vmem:[%s2 + $0xc0] sm:$0xff]
    %v75 = vld [vmem:[%s2 + $0xc8] sm:$0xff]
    %v76 = vld [vmem:[%s2 + $0xd0] sm:$0xff]
    %v77 = vld [vmem:[%s2 + $0xd8] sm:$0xff]
    %v78 = vld [vmem:[%s2 + $0xe0] sm:$0xff]
    %v79 = vld [vmem:[%s2 + $0xe8] sm:$0xff]
    %v80 = vld [vmem:[%s2 + $0xf0] sm:$0xff]
    %v81 = vld [vmem:[%s2 + $0xf8] sm:$0xff]
    %v82 = vld [vmem:[%s2 + $0x100] sm:$0xff]
    %v83 = vld [vmem:[%s2 + $0x108] sm:$0xff]
    %v84 = vld [vmem:[%s2 + $0x110] sm:$0xff]
    %v85 = vld [vmem:[%s2 + $0x118] sm:$0xff]
    %v86 = vld [vmem:[%s2 + $0x120] sm:$0xff]
    %v87 = vld [vmem:[%s2 + $0x128] sm:$0xff]
    %v88 = vld [vmem:[%s2 + $0x130] sm:$0xff]
    %v89 = vld [vmem:[%s2 + $0x138] sm:$0xff]
    %v90 = vld [vmem:[%s2 + $0x140] sm:$0xff]
    %v91 = vld [vmem:[%s2 + $0x148] sm:$0xff]
    %v92 = vld [vmem:[%s2 + $0x150] sm:$0xff]
    %v93 = vld [vmem:[%s2 + $0x158] sm:$0xff]
    %v94 = vld [vmem:[%s2 + $0x160] sm:$0xff]
    %v95 = vld [vmem:[%s2 + $0x168] sm:$0xff]
    %v96 = vld [vmem:[%s2 + $0x170] sm:$0xff]
    %v97 = vld [vmem:[%s2 + $0x178] sm:$0xff]
    %v98 = vld [vmem:[%s2 + $0x180] sm:$0xff]
    %v99 = vld [vmem:[%s2 + $0x188] sm:$0xff]
    %v100 = vld [vmem:[%s2 + $0x190] sm:$0xff]
    %v101 = vld [vmem:[%s2 + $0x198] sm:$0xff]
    %v102 = vld [vmem:[%s2 + $0x1a0] sm:$0xff]
    %v103 = vld [vmem:[%s2 + $0x1a8] sm:$0xff]
    %v104 = vld [vmem:[%s2 + $0x1b0] sm:$0xff]
    %v105 = vld [vmem:[%s2 + $0x1b8] sm:$0xff]
    %v106 = vld [vmem:[%s2 + $0x1c0] sm:$0xff]
    %v107 = vld [vmem:[%s2 + $0x1c8] sm:$0xff]
    %v108 = vld [vmem:[%s2 + $0x1d0] sm:$0xff]
    %v109 = vld [vmem:[%s2 + $0x1d8] sm:$0xff]
    %v110 = vld [vmem:[%s2 + $0x1e0] sm:$0xff]
    %v111 = vld [vmem:[%s2 + $0x1e8] sm:$0xff]
    %v112 = vld [vmem:[%s2 + $0x1f0] sm:$0xff]
    %v113 = vld [vmem:[%s2 + $0x1f8] sm:$0xff]
    %v114 = vld [vmem:[%s2 + $0x200] sm:$0xff]
    %v115 = vld [vmem:[%s2 + $0x208] sm:$0xff]
    %v116 = vld [vmem:[%s2 + $0x210] sm:$0xff]
    %v117 = vld [vmem:[%s2 + $0x218] sm:$0xff]
    %v118 = vld [vmem:[%s2 + $0x220] sm:$0xff]
    %v119 = vld [vmem:[%s2 + $0x228] sm:$0xff]
    %v120 = vld [vmem:[%s2 + $0x230] sm:$0xff]
    %v121 = vld [vmem:[%s2 + $0x238] sm:$0xff]
    %v122 = vld [vmem:[%s2 + $0x240] sm:$0xff]
    %v123 = vld [vmem:[%s2 + $0x248] sm:$0xff]
    %v124 = vld [vmem:[%s2 + $0x250] sm:$0xff]
    %v125 = vld [vmem:[%s2 + $0x258] sm:$0xff]
    %v126 = vld [vmem:[%s2 + $0x260] sm:$0xff]
    %v127 = vld [vmem:[%s2 + $0x268] sm:$0xff]
    %v128 = vld [vmem:[%s2 + $0x270] sm:$0xff]
    %v129 = vld [vmem:[%s2 + $0x278] sm:$0xff]
    %v130 = vld [vmem:[%s2 + $0x280] sm:$0xff]
    %v131 = vld [vmem:[%s2 + $0x288] sm:$0xff]
    %v132 = vld [vmem:[%s2 + $0x290] sm:$0xff]
    %v133 = vld [vmem:[%s2 + $0x298] sm:$0xff]
    %v134 = vld [vmem:[%s2 + $0x2a0] sm:$0xff]
    %v135 = vld [vmem:[%s2 + $0x2a8] sm:$0xff]
    %v136 = vld [vmem:[%s2 + $0x2b0] sm:$0xff]
    %v137 = vld [vmem:[%s2 + $0x2b8] sm:$0xff]
    %v138 = vld [vmem:[%s2 + $0x2c0] sm:$0xff]
    %v139 = vld [vmem:[%s2 + $0x2c8] sm:$0xff]
    %v140 = vld [vmem:[%s2 + $0x2d0] sm:$0xff]
    %v141 = vld [vmem:[%s2 + $0x2d8] sm:$0xff]
    %v142 = vld [vmem:[%s2 + $0x2e0] sm:$0xff]
    %v143 = vld [vmem:[%s2 + $0x2e8] sm:$0xff]
    %v144 = vld [vmem:[%s2 + $0x2f0] sm:$0xff]
    %v145 = vld [vmem:[%s2 + $0x2f8] sm:$0xff]
    %v146 = vld [vmem:[%s2 + $0x300] sm:$0xff]
    %v147 = vld [vmem:[%s2 + $0x308] sm:$0xff]
    %v148 = vld [vmem:[%s2 + $0x310] sm:$0xff]
    %v149 = vld [vmem:[%s2 + $0x318] sm:$0xff]
    %v150 = vld [vmem:[%s2 + $0x320] sm:$0xff]
    %v151 = vld [vmem:[%s2 + $0x328] sm:$0xff]
    %v152 = vld [vmem:[%s2 + $0x330] sm:$0xff]
    %v153 = vld [vmem:[%s2 + $0x338] sm:$0xff]
    %v154 = vld [vmem:[%s2 + $0x340] sm:$0xff]
    %v155 = vld [vmem:[%s2 + $0x348] sm:$0xff]
    %v156 = vld [vmem:[%s2 + $0x350] sm:$0xff]
    %v157 = vld [vmem:[%s2 + $0x358] sm:$0xff]
    %v158 = vld [vmem:[%s2 + $0x360] sm:$0xff]
    %v159 = vld [vmem:[%s2 + $0x368] sm:$0xff]
    %v160 = vld [vmem:[%s2 + $0x370] sm:$0xff]
    %v161 = vld [vmem:[%s2 + $0x378] sm:$0xff]
    %v162 = vld [vmem:[%s2 + $0x380] sm:$0xff]
    %v163 = vld [vmem:[%s2 + $0x388] sm:$0xff]
    %v164 = vld [vmem:[%s2 + $0x390] sm:$0xff]
    %v165 = vld [vmem:[%s2 + $0x398] sm:$0xff]
    %v166 = vld [vmem:[%s2 + $0x3a0] sm:$0xff]
    %v167 = vld [vmem:[%s2 + $0x3a8] sm:$0xff]
    %v168 = vld [vmem:[%s2 + $0x3b0] sm:$0xff]
    %v169 = vld [vmem:[%s2 + $0x3b8] sm:$0xff]
    %v170 = vld [vmem:[%s2 + $0x3c0] sm:$0xff]
    %v171 = vld [vmem:[%s2 + $0x3c8] sm:$0xff]
    %v172 = vld [vmem:[%s2 + $0x3d0] sm:$0xff]
    %v173 = vld [vmem:[%s2 + $0x3d8] sm:$0xff]
    %v174 = vld [vmem:[%s2 + $0x3e0] sm:$0xff]
    %v175 = vld [vmem:[%s2 + $0x3e8] sm:$0xff]
    %v176 = vld [vmem:[%s2 + $0x3f0] sm:$0xff]
    %v177 = vld [vmem:[%s2 + $0x3f8] sm:$0xff]
    %v306 = vunpack.c.l.b16 %v50
    %v307 = vunpack.c.h.b16 %v50
    %v308 = vunpack.c.l.b16 %v51
    %v309 = vunpack.c.h.b16 %v51
    %v310 = vunpack.c.l.b16 %v52
    %v311 = vunpack.c.h.b16 %v52
    %v312 = vunpack.c.l.b16 %v53
    %v313 = vunpack.c.h.b16 %v53
    %v314 = vunpack.c.l.b16 %v54
    %v315 = vunpack.c.h.b16 %v54
    %v316 = vunpack.c.l.b16 %v55
    %v317 = vunpack.c.h.b16 %v55
    %v318 = vunpack.c.l.b16 %v56
    %v319 = vunpack.c.h.b16 %v56
    %v320 = vunpack.c.l.b16 %v57
    %v321 = vunpack.c.h.b16 %v57
    %v322 = vunpack.c.l.b16 %v58
    %v323 = vunpack.c.h.b16 %v58
    %v324 = vunpack.c.l.b16 %v59
    %v325 = vunpack.c.h.b16 %v59
    %v326 = vunpack.c.l.b16 %v60
    %v327 = vunpack.c.h.b16 %v60
    %v328 = vunpack.c.l.b16 %v61
    %v329 = vunpack.c.h.b16 %v61
    %v330 = vunpack.c.l.b16 %v62
    %v331 = vunpack.c.h.b16 %v62
    %v332 = vunpack.c.l.b16 %v63
    %v333 = vunpack.c.h.b16 %v63
    %v334 = vunpack.c.l.b16 %v64
    %v335 = vunpack.c.h.b16 %v64
    %v336 = vunpack.c.l.b16 %v65
    %v337 = vunpack.c.h.b16 %v65
    %v338 = vunpack.c.l.b16 %v66
    %v339 = vunpack.c.h.b16 %v66
    %v340 = vunpack.c.l.b16 %v67
    %v341 = vunpack.c.h.b16 %v67
    %v342 = vunpack.c.l.b16 %v68
    %v343 = vunpack.c.h.b16 %v68
    %v344 = vunpack.c.l.b16 %v69
    %v345 = vunpack.c.h.b16 %v69
    %v346 = vunpack.c.l.b16 %v70
    %v347 = vunpack.c.h.b16 %v70
    %v348 = vunpack.c.l.b16 %v71
    %v349 = vunpack.c.h.b16 %v71
    %v350 = vunpack.c.l.b16 %v72
    %v351 = vunpack.c.h.b16 %v72
    %v352 = vunpack.c.l.b16 %v73
    %v353 = vunpack.c.h.b16 %v73
    %v354 = vunpack.c.l.b16 %v74
    %v355 = vunpack.c.h.b16 %v74
    %v356 = vunpack.c.l.b16 %v75
    %v357 = vunpack.c.h.b16 %v75
    %v358 = vunpack.c.l.b16 %v76
    %v359 = vunpack.c.h.b16 %v76
    %v360 = vunpack.c.l.b16 %v77
    %v361 = vunpack.c.h.b16 %v77
    %v362 = vunpack.c.l.b16 %v78
    %v363 = vunpack.c.h.b16 %v78
    %v364 = vunpack.c.l.b16 %v79
    %v365 = vunpack.c.h.b16 %v79
    %v366 = vunpack.c.l.b16 %v80
    %v367 = vunpack.c.h.b16 %v80
    %v368 = vunpack.c.l.b16 %v81
    %v369 = vunpack.c.h.b16 %v81
    %v370 = vunpack.c.l.b16 %v82
    %v371 = vunpack.c.h.b16 %v82
    %v372 = vunpack.c.l.b16 %v83
    %v373 = vunpack.c.h.b16 %v83
    %v374 = vunpack.c.l.b16 %v84
    %v375 = vunpack.c.h.b16 %v84
    %v376 = vunpack.c.l.b16 %v85
    %v377 = vunpack.c.h.b16 %v85
    %v378 = vunpack.c.l.b16 %v86
    %v379 = vunpack.c.h.b16 %v86
    %v380 = vunpack.c.l.b16 %v87
    %v381 = vunpack.c.h.b16 %v87
    %v382 = vunpack.c.l.b16 %v88
    %v383 = vunpack.c.h.b16 %v88
    %v384 = vunpack.c.l.b16 %v89
    %v385 = vunpack.c.h.b16 %v89
    %v386 = vunpack.c.l.b16 %v90
    %v387 = vunpack.c.h.b16 %v90
    %v388 = vunpack.c.l.b16 %v91
    %v389 = vunpack.c.h.b16 %v91
    %v390 = vunpack.c.l.b16 %v92
    %v391 = vunpack.c.h.b16 %v92
    %v392 = vunpack.c.l.b16 %v93
    %v393 = vunpack.c.h.b16 %v93
    %v394 = vunpack.c.l.b16 %v94
    %v395 = vunpack.c.h.b16 %v94
    %v396 = vunpack.c.l.b16 %v95
    %v397 = vunpack.c.h.b16 %v95
    %v398 = vunpack.c.l.b16 %v96
    %v399 = vunpack.c.h.b16 %v96
    %v400 = vunpack.c.l.b16 %v97
    %v401 = vunpack.c.h.b16 %v97
    %v402 = vunpack.c.l.b16 %v98
    %v403 = vunpack.c.h.b16 %v98
    %v404 = vunpack.c.l.b16 %v99
    %v405 = vunpack.c.h.b16 %v99
    %v406 = vunpack.c.l.b16 %v100
    %v407 = vunpack.c.h.b16 %v100
    %v408 = vunpack.c.l.b16 %v101
    %v409 = vunpack.c.h.b16 %v101
    %v410 = vunpack.c.l.b16 %v102
    %v411 = vunpack.c.h.b16 %v102
    %v412 = vunpack.c.l.b16 %v103
    %v413 = vunpack.c.h.b16 %v103
    %v414 = vunpack.c.l.b16 %v104
    %v415 = vunpack.c.h.b16 %v104
    %v416 = vunpack.c.l.b16 %v105
    %v417 = vunpack.c.h.b16 %v105
    %v418 = vunpack.c.l.b16 %v106
    %v419 = vunpack.c.h.b16 %v106
    %v420 = vunpack.c.l.b16 %v107
    %v421 = vunpack.c.h.b16 %v107
    %v422 = vunpack.c.l.b16 %v108
    %v423 = vunpack.c.h.b16 %v108
    %v424 = vunpack.c.l.b16 %v109
    %v425 = vunpack.c.h.b16 %v109
    %v426 = vunpack.c.l.b16 %v110
    %v427 = vunpack.c.h.b16 %v110
    %v428 = vunpack.c.l.b16 %v111
    %v429 = vunpack.c.h.b16 %v111
    %v430 = vunpack.c.l.b16 %v112
    %v431 = vunpack.c.h.b16 %v112
    %v432 = vunpack.c.l.b16 %v113
    %v433 = vunpack.c.h.b16 %v113
    %v434 = vunpack.c.l.b16 %v114
    %v435 = vunpack.c.h.b16 %v114
    %v436 = vunpack.c.l.b16 %v115
    %v437 = vunpack.c.h.b16 %v115
    %v438 = vunpack.c.l.b16 %v116
    %v439 = vunpack.c.h.b16 %v116
    %v440 = vunpack.c.l.b16 %v117
    %v441 = vunpack.c.h.b16 %v117
    %v442 = vunpack.c.l.b16 %v118
    %v443 = vunpack.c.h.b16 %v118
    %v444 = vunpack.c.l.b16 %v119
    %v445 = vunpack.c.h.b16 %v119
    %v446 = vunpack.c.l.b16 %v120
    %v447 = vunpack.c.h.b16 %v120
    %v448 = vunpack.c.l.b16 %v121
    %v449 = vunpack.c.h.b16 %v121
    %v450 = vunpack.c.l.b16 %v122
    %v451 = vunpack.c.h.b16 %v122
    %v452 = vunpack.c.l.b16 %v123
    %v453 = vunpack.c.h.b16 %v123
    %v454 = vunpack.c.l.b16 %v124
    %v455 = vunpack.c.h.b16 %v124
    %v456 = vunpack.c.l.b16 %v125
    %v457 = vunpack.c.h.b16 %v125
    %v458 = vunpack.c.l.b16 %v126
    %v459 = vunpack.c.h.b16 %v126
    %v460 = vunpack.c.l.b16 %v127
    %v461 = vunpack.c.h.b16 %v127
    %v462 = vunpack.c.l.b16 %v128
    %v463 = vunpack.c.h.b16 %v128
    %v464 = vunpack.c.l.b16 %v129
    %v465 = vunpack.c.h.b16 %v129
    %v466 = vunpack.c.l.b16 %v130
    %v467 = vunpack.c.h.b16 %v130
    %v468 = vunpack.c.l.b16 %v131
    %v469 = vunpack.c.h.b16 %v131
    %v470 = vunpack.c.l.b16 %v132
    %v471 = vunpack.c.h.b16 %v132
    %v472 = vunpack.c.l.b16 %v133
    %v473 = vunpack.c.h.b16 %v133
    %v474 = vunpack.c.l.b16 %v134
    %v475 = vunpack.c.h.b16 %v134
    %v476 = vunpack.c.l.b16 %v135
    %v477 = vunpack.c.h.b16 %v135
    %v478 = vunpack.c.l.b16 %v136
    %v479 = vunpack.c.h.b16 %v136
    %v480 = vunpack.c.l.b16 %v137
    %v481 = vunpack.c.h.b16 %v137
    %v482 = vunpack.c.l.b16 %v138
    %v483 = vunpack.c.h.b16 %v138
    %v484 = vunpack.c.l.b16 %v139
    %v485 = vunpack.c.h.b16 %v139
    %v486 = vunpack.c.l.b16 %v140
    %v487 = vunpack.c.h.b16 %v140
    %v488 = vunpack.c.l.b16 %v141
    %v489 = vunpack.c.h.b16 %v141
    %v490 = vunpack.c.l.b16 %v142
    %v491 = vunpack.c.h.b16 %v142
    %v492 = vunpack.c.l.b16 %v143
    %v493 = vunpack.c.h.b16 %v143
    %v494 = vunpack.c.l.b16 %v144
    %v495 = vunpack.c.h.b16 %v144
    %v496 = vunpack.c.l.b16 %v145
    %v497 = vunpack.c.h.b16 %v145
    %v498 = vunpack.c.l.b16 %v146
    %v499 = vunpack.c.h.b16 %v146
    %v500 = vunpack.c.l.b16 %v147
    %v501 = vunpack.c.h.b16 %v147
    %v502 = vunpack.c.l.b16 %v148
    %v503 = vunpack.c.h.b16 %v148
    %v504 = vunpack.c.l.b16 %v149
    %v505 = vunpack.c.h.b16 %v149
    %v506 = vunpack.c.l.b16 %v150
    %v507 = vunpack.c.h.b16 %v150
    %v508 = vunpack.c.l.b16 %v151
    %v509 = vunpack.c.h.b16 %v151
    %v510 = vunpack.c.l.b16 %v152
    %v511 = vunpack.c.h.b16 %v152
    %v512 = vunpack.c.l.b16 %v153
    %v513 = vunpack.c.h.b16 %v153
    %v514 = vunpack.c.l.b16 %v154
    %v515 = vunpack.c.h.b16 %v154
    %v516 = vunpack.c.l.b16 %v155
    %v517 = vunpack.c.h.b16 %v155
    %v518 = vunpack.c.l.b16 %v156
    %v519 = vunpack.c.h.b16 %v156
    %v520 = vunpack.c.l.b16 %v157
    %v521 = vunpack.c.h.b16 %v157
    %v522 = vunpack.c.l.b16 %v158
    %v523 = vunpack.c.h.b16 %v158
    %v524 = vunpack.c.l.b16 %v159
    %v525 = vunpack.c.h.b16 %v159
    %v526 = vunpack.c.l.b16 %v160
    %v527 = vunpack.c.h.b16 %v160
    %v528 = vunpack.c.l.b16 %v161
    %v529 = vunpack.c.h.b16 %v161
    %v530 = vunpack.c.l.b16 %v162
    %v531 = vunpack.c.h.b16 %v162
    %v532 = vunpack.c.l.b16 %v163
    %v533 = vunpack.c.h.b16 %v163
    %v534 = vunpack.c.l.b16 %v164
    %v535 = vunpack.c.h.b16 %v164
    %v536 = vunpack.c.l.b16 %v165
    %v537 = vunpack.c.h.b16 %v165
    %v538 = vunpack.c.l.b16 %v166
    %v539 = vunpack.c.h.b16 %v166
    %v540 = vunpack.c.l.b16 %v167
    %v541 = vunpack.c.h.b16 %v167
    %v542 = vunpack.c.l.b16 %v168
    %v543 = vunpack.c.h.b16 %v168
    %v544 = vunpack.c.l.b16 %v169
    %v545 = vunpack.c.h.b16 %v169
    %v546 = vunpack.c.l.b16 %v170
    %v547 = vunpack.c.h.b16 %v170
    %v548 = vunpack.c.l.b16 %v171
    %v549 = vunpack.c.h.b16 %v171
    %v550 = vunpack.c.l.b16 %v172
    %v551 = vunpack.c.h.b16 %v172
    %v552 = vunpack.c.l.b16 %v173
    %v553 = vunpack.c.h.b16 %v173
    %v554 = vunpack.c.l.b16 %v174
    %v555 = vunpack.c.h.b16 %v174
    %v556 = vunpack.c.l.b16 %v175
    %v557 = vunpack.c.h.b16 %v175
    %v558 = vunpack.c.l.b16 %v176
    %v559 = vunpack.c.h.b16 %v176
    %v560 = vunpack.c.l.b16 %v177
    %v561 = vunpack.c.h.b16 %v177
    %v562 = vpack.c.b16 %v314, %v306
    %v563 = vpack.c.b16 %v315, %v307
    %v564 = vpack.c.b16 %v316, %v308
    %v565 = vpack.c.b16 %v317, %v309
    %v566 = vpack.c.b16 %v318, %v310
    %v567 = vpack.c.b16 %v319, %v311
    %v568 = vpack.c.b16 %v320, %v312
    %v569 = vpack.c.b16 %v321, %v313
    %v570 = vpack.c.b16 %v330, %v322
    %v571 = vpack.c.b16 %v331, %v323
    %v572 = vpack.c.b16 %v332, %v324
    %v573 = vpack.c.b16 %v333, %v325
    %v574 = vpack.c.b16 %v334, %v326
    %v575 = vpack.c.b16 %v335, %v327
    %v576 = vpack.c.b16 %v336, %v328
    %v577 = vpack.c.b16 %v337, %v329
    %v578 = vpack.c.b16 %v346, %v338
    %v579 = vpack.c.b16 %v347, %v339
    %v580 = vpack.c.b16 %v348, %v340
    %v581 = vpack.c.b16 %v349, %v341
    %v582 = vpack.c.b16 %v350, %v342
    %v583 = vpack.c.b16 %v351, %v343
    %v584 = vpack.c.b16 %v352, %v344
    %v585 = vpack.c.b16 %v353, %v345
    %v586 = vpack.c.b16 %v362, %v354
    %v587 = vpack.c.b16 %v363, %v355
    %v588 = vpack.c.b16 %v364, %v356
    %v589 = vpack.c.b16 %v365, %v357
    %v590 = vpack.c.b16 %v366, %v358
    %v591 = vpack.c.b16 %v367, %v359
    %v592 = vpack.c.b16 %v368, %v360
    %v593 = vpack.c.b16 %v369, %v361
    %v594 = vpack.c.b16 %v378, %v370
    %v595 = vpack.c.b16 %v379, %v371
    %v596 = vpack.c.b16 %v380, %v372
    %v597 = vpack.c.b16 %v381, %v373
    %v598 = vpack.c.b16 %v382, %v374
    %v599 = vpack.c.b16 %v383, %v375
    %v600 = vpack.c.b16 %v384, %v376
    %v601 = vpack.c.b16 %v385, %v377
    %v602 = vpack.c.b16 %v394, %v386
    %v603 = vpack.c.b16 %v395, %v387
    %v604 = vpack.c.b16 %v396, %v388
    %v605 = vpack.c.b16 %v397, %v389
    %v606 = vpack.c.b16 %v398, %v390
    %v607 = vpack.c.b16 %v399, %v391
    %v608 = vpack.c.b16 %v400, %v392
    %v609 = vpack.c.b16 %v401, %v393
    %v610 = vpack.c.b16 %v410, %v402
    %v611 = vpack.c.b16 %v411, %v403
    %v612 = vpack.c.b16 %v412, %v404
    %v613 = vpack.c.b16 %v413, %v405
    %v614 = vpack.c.b16 %v414, %v406
    %v615 = vpack.c.b16 %v415, %v407
    %v616 = vpack.c.b16 %v416, %v408
    %v617 = vpack.c.b16 %v417, %v409
    %v618 = vpack.c.b16 %v426, %v418
    %v619 = vpack.c.b16 %v427, %v419
    %v620 = vpack.c.b16 %v428, %v420
    %v621 = vpack.c.b16 %v429, %v421
    %v622 = vpack.c.b16 %v430, %v422
    %v623 = vpack.c.b16 %v431, %v423
    %v624 = vpack.c.b16 %v432, %v424
    %v625 = vpack.c.b16 %v433, %v425
    %v626 = vpack.c.b16 %v442, %v434
    %v627 = vpack.c.b16 %v443, %v435
    %v628 = vpack.c.b16 %v444, %v436
    %v629 = vpack.c.b16 %v445, %v437
    %v630 = vpack.c.b16 %v446, %v438
    %v631 = vpack.c.b16 %v447, %v439
    %v632 = vpack.c.b16 %v448, %v440
    %v633 = vpack.c.b16 %v449, %v441
    %v634 = vpack.c.b16 %v458, %v450
    %v635 = vpack.c.b16 %v459, %v451
    %v636 = vpack.c.b16 %v460, %v452
    %v637 = vpack.c.b16 %v461, %v453
    %v638 = vpack.c.b16 %v462, %v454
    %v639 = vpack.c.b16 %v463, %v455
    %v640 = vpack.c.b16 %v464, %v456
    %v641 = vpack.c.b16 %v465, %v457
    %v642 = vpack.c.b16 %v474, %v466
    %v643 = vpack.c.b16 %v475, %v467
    %v644 = vpack.c.b16 %v476, %v468
    %v645 = vpack.c.b16 %v477, %v469
    %v646 = vpack.c.b16 %v478, %v470
    %v647 = vpack.c.b16 %v479, %v471
    %v648 = vpack.c.b16 %v480, %v472
    %v649 = vpack.c.b16 %v481, %v473
    %v650 = vpack.c.b16 %v490, %v482
    %v651 = vpack.c.b16 %v491, %v483
    %v652 = vpack.c.b16 %v492, %v484
    %v653 = vpack.c.b16 %v493, %v485
    %v654 = vpack.c.b16 %v494, %v486
    %v655 = vpack.c.b16 %v495, %v487
    %v656 = vpack.c.b16 %v496, %v488
    %v657 = vpack.c.b16 %v497, %v489
    %v658 = vpack.c.b16 %v506, %v498
    %v659 = vpack.c.b16 %v507, %v499
    %v660 = vpack.c.b16 %v508, %v500
    %v661 = vpack.c.b16 %v509, %v501
    %v662 = vpack.c.b16 %v510, %v502
    %v663 = vpack.c.b16 %v511, %v503
    %v664 = vpack.c.b16 %v512, %v504
    %v665 = vpack.c.b16 %v513, %v505
    %v666 = vpack.c.b16 %v522, %v514
    %v667 = vpack.c.b16 %v523, %v515
    %v668 = vpack.c.b16 %v524, %v516
    %v669 = vpack.c.b16 %v525, %v517
    %v670 = vpack.c.b16 %v526, %v518
    %v671 = vpack.c.b16 %v527, %v519
    %v672 = vpack.c.b16 %v528, %v520
    %v673 = vpack.c.b16 %v529, %v521
    %v674 = vpack.c.b16 %v538, %v530
    %v675 = vpack.c.b16 %v539, %v531
    %v676 = vpack.c.b16 %v540, %v532
    %v677 = vpack.c.b16 %v541, %v533
    %v678 = vpack.c.b16 %v542, %v534
    %v679 = vpack.c.b16 %v543, %v535
    %v680 = vpack.c.b16 %v544, %v536
    %v681 = vpack.c.b16 %v545, %v537
    %v682 = vpack.c.b16 %v554, %v546
    %v683 = vpack.c.b16 %v555, %v547
    %v684 = vpack.c.b16 %v556, %v548
    %v685 = vpack.c.b16 %v557, %v549
    %v686 = vpack.c.b16 %v558, %v550
    %v687 = vpack.c.b16 %v559, %v551
    %v688 = vpack.c.b16 %v560, %v552
    %v689 = vpack.c.b16 %v561, %v553
    %818 = vmatpush.bf16.msra.mxu0 %v618
    %819 = vmatpush.bf16.msra.mxu0 %v610
    %820 = vmatpush.bf16.msra.mxu0 %v602
    %821 = vmatpush.bf16.msra.mxu0 %v594
    %822 = vmatpush.bf16.msra.mxu0 %v586
    %823 = vmatpush.bf16.msra.mxu0 %v578
    %824 = vmatpush.bf16.msra.mxu0 %v570
    %825 = vmatpush.bf16.msra.mxu0 %v562
    %826 = vmatmul.bf16.gmra.mxu0 %v48
    %v827 = vpop.f32.mrf.mxu0
    %v828 = vadd.f32 0.0, %v827
    %v829 = vpop.f32.mrf.mxu0
    %830 = vdwg.mxu0
    %831 = vmatpush.bf16.msra.mxu0 %v682
    %832 = vmatpush.bf16.msra.mxu0 %v674
    %833 = vmatpush.bf16.msra.mxu0 %v666
    %834 = vmatpush.bf16.msra.mxu0 %v658
    %835 = vmatpush.bf16.msra.mxu0 %v650
    %836 = vmatpush.bf16.msra.mxu0 %v642
    %837 = vmatpush.bf16.msra.mxu0 %v634
    %838 = vmatpush.bf16.msra.mxu0 %v626
    %839 = vmatmul.bf16.gmra.mxu0 %v49
    %v840 = vpop.f32.mrf.mxu0
    %v841 = vadd.f32 %v828, %v840
    %v842 = vpop.f32.mrf.mxu0
    %843 = vdwg.mxu0
    %844 = vmatpush.bf16.msra.mxu0 %v619
    %845 = vmatpush.bf16.msra.mxu0 %v611
    %846 = vmatpush.bf16.msra.mxu0 %v603
    %847 = vmatpush.bf16.msra.mxu0 %v595
    %848 = vmatpush.bf16.msra.mxu0 %v587
    %849 = vmatpush.bf16.msra.mxu0 %v579
    %850 = vmatpush.bf16.msra.mxu0 %v571
    %851 = vmatpush.bf16.msra.mxu0 %v563
    %852 = vmatmul.bf16.gmra.mxu0 %v48
    %v853 = vpop.f32.mrf.mxu0
    %v854 = vadd.f32 0.0, %v853
    %v855 = vpop.f32.mrf.mxu0
    %856 = vdwg.mxu0
    %857 = vmatpush.bf16.msra.mxu0 %v683
    %858 = vmatpush.bf16.msra.mxu0 %v675
    %859 = vmatpush.bf16.msra.mxu0 %v667
    %860 = vmatpush.bf16.msra.mxu0 %v659
    %861 = vmatpush.bf16.msra.mxu0 %v651
    %862 = vmatpush.bf16.msra.mxu0 %v643
    %863 = vmatpush.bf16.msra.mxu0 %v635
    %864 = vmatpush.bf16.msra.mxu0 %v627
    %865 = vmatmul.bf16.gmra.mxu0 %v49
    %v866 = vpop.f32.mrf.mxu0
    %v867 = vadd.f32 %v854, %v866
    %v868 = vpop.f32.mrf.mxu0
    %869 = vdwg.mxu0
    %870 = vmatpush.bf16.msra.mxu0 %v620
    %871 = vmatpush.bf16.msra.mxu0 %v612
    %872 = vmatpush.bf16.msra.mxu0 %v604
    %873 = vmatpush.bf16.msra.mxu0 %v596
    %874 = vmatpush.bf16.msra.mxu0 %v588
    %875 = vmatpush.bf16.msra.mxu0 %v580
    %876 = vmatpush.bf16.msra.mxu0 %v572
    %877 = vmatpush.bf16.msra.mxu0 %v564
    %878 = vmatmul.bf16.gmra.mxu0 %v48
    %v879 = vpop.f32.mrf.mxu0
    %v880 = vadd.f32 0.0, %v879
    %v881 = vpop.f32.mrf.mxu0
    %882 = vdwg.mxu0
    %883 = vmatpush.bf16.msra.mxu0 %v684
    %884 = vmatpush.bf16.msra.mxu0 %v676
    %885 = vmatpush.bf16.msra.mxu0 %v668
    %886 = vmatpush.bf16.msra.mxu0 %v660
    %887 = vmatpush.bf16.msra.mxu0 %v652
    %888 = vmatpush.bf16.msra.mxu0 %v644
    %889 = vmatpush.bf16.msra.mxu0 %v636
    %890 = vmatpush.bf16.msra.mxu0 %v628
    %891 = vmatmul.bf16.gmra.mxu0 %v49
    %v892 = vpop.f32.mrf.mxu0
    %v893 = vadd.f32 %v880, %v892
    %v894 = vpop.f32.mrf.mxu0
    %895 = vdwg.mxu0
    %896 = vmatpush.bf16.msra.mxu0 %v621
    %897 = vmatpush.bf16.msra.mxu0 %v613
    %898 = vmatpush.bf16.msra.mxu0 %v605
    %899 = vmatpush.bf16.msra.mxu0 %v597
    %900 = vmatpush.bf16.msra.mxu0 %v589
    %901 = vmatpush.bf16.msra.mxu0 %v581
    %902 = vmatpush.bf16.msra.mxu0 %v573
    %903 = vmatpush.bf16.msra.mxu0 %v565
    %904 = vmatmul.bf16.gmra.mxu0 %v48
    %v905 = vpop.f32.mrf.mxu0
    %v906 = vadd.f32 0.0, %v905
    %v907 = vpop.f32.mrf.mxu0
    %908 = vdwg.mxu0
    %909 = vmatpush.bf16.msra.mxu0 %v685
    %910 = vmatpush.bf16.msra.mxu0 %v677
    %911 = vmatpush.bf16.msra.mxu0 %v669
    %912 = vmatpush.bf16.msra.mxu0 %v661
    %913 = vmatpush.bf16.msra.mxu0 %v653
    %914 = vmatpush.bf16.msra.mxu0 %v645
    %915 = vmatpush.bf16.msra.mxu0 %v637
    %916 = vmatpush.bf16.msra.mxu0 %v629
    %917 = vmatmul.bf16.gmra.mxu0 %v49
    %v918 = vpop.f32.mrf.mxu0
    %v919 = vadd.f32 %v906, %v918
    %v920 = vpop.f32.mrf.mxu0
    %921 = vdwg.mxu0
    %922 = vmatpush.bf16.msra.mxu0 %v622
    %923 = vmatpush.bf16.msra.mxu0 %v614
    %924 = vmatpush.bf16.msra.mxu0 %v606
    %925 = vmatpush.bf16.msra.mxu0 %v598
    %926 = vmatpush.bf16.msra.mxu0 %v590
    %927 = vmatpush.bf16.msra.mxu0 %v582
    %928 = vmatpush.bf16.msra.mxu0 %v574
    %929 = vmatpush.bf16.msra.mxu0 %v566
    %930 = vmatmul.bf16.gmra.mxu0 %v48
    %v931 = vpop.f32.mrf.mxu0
    %v932 = vadd.f32 0.0, %v931
    %v933 = vpop.f32.mrf.mxu0
    %934 = vdwg.mxu0
    %935 = vmatpush.bf16.msra.mxu0 %v686
    %936 = vmatpush.bf16.msra.mxu0 %v678
    %937 = vmatpush.bf16.msra.mxu0 %v670
    %938 = vmatpush.bf16.msra.mxu0 %v662
    %939 = vmatpush.bf16.msra.mxu0 %v654
    %940 = vmatpush.bf16.msra.mxu0 %v646
    %941 = vmatpush.bf16.msra.mxu0 %v638
    %942 = vmatpush.bf16.msra.mxu0 %v630
    %943 = vmatmul.bf16.gmra.mxu0 %v49
    %v944 = vpop.f32.mrf.mxu0
    %v945 = vadd.f32 %v932, %v944
    %v946 = vpop.f32.mrf.mxu0
    %947 = vdwg.mxu0
    %948 = vmatpush.bf16.msra.mxu0 %v623
    %949 = vmatpush.bf16.msra.mxu0 %v615
    %950 = vmatpush.bf16.msra.mxu0 %v607
    %951 = vmatpush.bf16.msra.mxu0 %v599
    %952 = vmatpush.bf16.msra.mxu0 %v591
    %953 = vmatpush.bf16.msra.mxu0 %v583
    %954 = vmatpush.bf16.msra.mxu0 %v575
    %955 = vmatpush.bf16.msra.mxu0 %v567
    %956 = vmatmul.bf16.gmra.mxu0 %v48
    %v957 = vpop.f32.mrf.mxu0
    %v958 = vadd.f32 0.0, %v957
    %v959 = vpop.f32.mrf.mxu0
    %960 = vdwg.mxu0
    %961 = vmatpush.bf16.msra.mxu0 %v687
    %962 = vmatpush.bf16.msra.mxu0 %v679
    %963 = vmatpush.bf16.msra.mxu0 %v671
    %964 = vmatpush.bf16.msra.mxu0 %v663
    %965 = vmatpush.bf16.msra.mxu0 %v655
    %966 = vmatpush.bf16.msra.mxu0 %v647
    %967 = vmatpush.bf16.msra.mxu0 %v639
    %968 = vmatpush.bf16.msra.mxu0 %v631
    %969 = vmatmul.bf16.gmra.mxu0 %v49
    %v970 = vpop.f32.mrf.mxu0
    %v971 = vadd.f32 %v958, %v970
    %v972 = vpop.f32.mrf.mxu0
    %973 = vdwg.mxu0
    %974 = vmatpush.bf16.msra.mxu0 %v624
    %975 = vmatpush.bf16.msra.mxu0 %v616
    %976 = vmatpush.bf16.msra.mxu0 %v608
    %977 = vmatpush.bf16.msra.mxu0 %v600
    %978 = vmatpush.bf16.msra.mxu0 %v592
    %979 = vmatpush.bf16.msra.mxu0 %v584
    %980 = vmatpush.bf16.msra.mxu0 %v576
    %981 = vmatpush.bf16.msra.mxu0 %v568
    %982 = vmatmul.bf16.gmra.mxu0 %v48
    %v983 = vpop.f32.mrf.mxu0
    %v984 = vadd.f32 0.0, %v983
    %v985 = vpop.f32.mrf.mxu0
    %986 = vdwg.mxu0
    %987 = vmatpush.bf16.msra.mxu0 %v688
    %988 = vmatpush.bf16.msra.mxu0 %v680
    %989 = vmatpush.bf16.msra.mxu0 %v672
    %990 = vmatpush.bf16.msra.mxu0 %v664
    %991 = vmatpush.bf16.msra.mxu0 %v656
    %992 = vmatpush.bf16.msra.mxu0 %v648
    %993 = vmatpush.bf16.msra.mxu0 %v640
    %994 = vmatpush.bf16.msra.mxu0 %v632
    %995 = vmatmul.bf16.gmra.mxu0 %v49
    %v996 = vpop.f32.mrf.mxu0
    %v997 = vadd.f32 %v984, %v996
    %v998 = vpop.f32.mrf.mxu0
    %999 = vdwg.mxu0
    %1000 = vmatpush.bf16.msra.mxu0 %v625
    %1001 = vmatpush.bf16.msra.mxu0 %v617
    %1002 = vmatpush.bf16.msra.mxu0 %v609
    %1003 = vmatpush.bf16.msra.mxu0 %v601
    %1004 = vmatpush.bf16.msra.mxu0 %v593
    %1005 = vmatpush.bf16.msra.mxu0 %v585
    %1006 = vmatpush.bf16.msra.mxu0 %v577
    %1007 = vmatpush.bf16.msra.mxu0 %v569
    %1008 = vmatmul.bf16.gmra.mxu0 %v48
    %v1009 = vpop.f32.mrf.mxu0
    %v1010 = vadd.f32 0.0, %v1009
    %v1011 = vpop.f32.mrf.mxu0
    %1012 = vdwg.mxu0
    %1013 = vmatpush.bf16.msra.mxu0 %v689
    %1014 = vmatpush.bf16.msra.mxu0 %v681
    %1015 = vmatpush.bf16.msra.mxu0 %v673
    %1016 = vmatpush.bf16.msra.mxu0 %v665
    %1017 = vmatpush.bf16.msra.mxu0 %v657
    %1018 = vmatpush.bf16.msra.mxu0 %v649
    %1019 = vmatpush.bf16.msra.mxu0 %v641
    %1020 = vmatpush.bf16.msra.mxu0 %v633
    %1021 = vmatmul.bf16.gmra.mxu0 %v49
    %v1022 = vpop.f32.mrf.mxu0
    %v1023 = vadd.f32 %v1010, %v1022
    %v1024 = vpop.f32.mrf.mxu0
    %1025 = vdwg.mxu0
    %v1034 = vrot.slane %v867, 6
    %v1035 = vrot.slane %v893, 4
    %v1036 = vrot.slane %v919, 2
    %v1037 = vrot.slane %v971, 6
    %v1038 = vrot.slane %v997, 4
    %v1039 = vrot.slane %v1023, 2
    %vm1040 = vcmask 1041408
    %v1041 = vsel %vm1040, %v841, %v1034
    %vm1042 = vcmask 1045508
    %v1043 = vsel %vm1042, %v1035, %v1036
    %vm1044 = vcmask 1043456
    %v1045 = vsel %vm1044, %v1041, %v1043
    %v1046 = vsel %vm1040, %v945, %v1037
    %v1047 = vsel %vm1042, %v1038, %v1039
    %v1048 = vsel %vm1044, %v1046, %v1047
    %v1051 = vadd.f32 %v39, %v1045
    %v1052 = vadd.f32 %v40, %v1048
    %v1053 = vxor.u32 %v1051, 2147483648
    %v1054 = vmul.f32 %v1053, 1.442695
    %v1055 = vpow.pop %v1054
    %v1056 = vadd.f32 %v1055, 1.0
    %v1057 = vrcp.pop %v1056
    %v1058 = vmul.f32 %v1056, %v1057
    %v1059 = vsub.f32 1.0, %v1058
    %v1060 = vmul.f32 %v1057, %v1059
    %v1061 = vadd.f32 %v1057, %v1060
    %vm1062 = vweird.f32 %v1056
    %vm1063 = vweird.f32 %v1057
    %vm1064 = vmor %vm1062, %vm1063
    %v1065 = vsel %vm1064, %v1057, %v1061
    %v1066 = vand.u32 2147483647, %v1056
    %vm1067 = vcmp.eq.f32.partialorder %v1066, 8.507059e+37
    %v1068 = vand.u32 %v1056, 2147483648
    %v1069 = vor.u32 1.1754944e-38, %v1068
    %v1070 = vsel %vm1067, %v1069, %v1065
    %v1071 = vmul.f32 1.0, %v1070
    %v1073 = vrot.slane %v1051, 4
    %v1075 = vxor.u32 %v1073, 2147483648
    %v1076 = vmul.f32 %v1075, 1.442695
    %v1077 = vpow.pop %v1076
    %v1078 = vadd.f32 %v1077, 1.0
    %v1079 = vrcp.pop %v1078
    %v1080 = vmul.f32 %v1078, %v1079
    %v1081 = vsub.f32 1.0, %v1080
    %v1082 = vmul.f32 %v1079, %v1081
    %v1083 = vadd.f32 %v1079, %v1082
    %vm1084 = vweird.f32 %v1078
    %vm1085 = vweird.f32 %v1079
    %vm1086 = vmor %vm1084, %vm1085
    %v1087 = vsel %vm1086, %v1079, %v1083
    %v1088 = vand.u32 2147483647, %v1078
    %vm1089 = vcmp.eq.f32.partialorder %v1088, 8.507059e+37
    %v1090 = vand.u32 %v1078, 2147483648
    %v1091 = vor.u32 1.1754944e-38, %v1090
    %v1092 = vsel %vm1089, %v1091, %v1087
    %v1093 = vmul.f32 1.0, %v1092
    %v1094 = vtanh.pop %v1052
    %v1096 = vrot.slane %v1052, 4
    %v1098 = vxor.u32 %v1096, 2147483648
    %v1099 = vmul.f32 %v1098, 1.442695
    %v1100 = vpow.pop %v1099
    %v1101 = vadd.f32 %v1100, 1.0
    %v1102 = vrcp.pop %v1101
    %v1103 = vmul.f32 %v1101, %v1102
    %v1104 = vsub.f32 1.0, %v1103
    %v1105 = vmul.f32 %v1102, %v1104
    %v1106 = vadd.f32 %v1102, %v1105
    %vm1107 = vweird.f32 %v1101
    %vm1108 = vweird.f32 %v1102
    %vm1109 = vmor %vm1107, %vm1108
    %v1110 = vsel %vm1109, %v1102, %v1106
    %v1111 = vand.u32 2147483647, %v1101
    %vm1112 = vcmp.eq.f32.partialorder %v1111, 8.507059e+37
    %v1113 = vand.u32 %v1101, 2147483648
    %v1114 = vor.u32 1.1754944e-38, %v1113
    %v1115 = vsel %vm1112, %v1114, %v1110
    %v1116 = vmul.f32 1.0, %v1115
    %v1117 = vld [vmem:[#allocation3] sm:$0xf]
    %v1118 = vmul.f32 %v1093, %v1117
    %v1119 = vmul.f32 %v1071, %v1094
    %v1120 = vadd.f32 %v1118, %v1119
    %1121 = vst [vmem:[#allocation3] sm:$0xf] %v1120
    %v1122 = vld [vmem:[#allocation3] sm:$0xf]
    %v1123 = vtanh.pop %v1122
    %v1124 = vmul.f32 %v1116, %v1123
    %1125 = vst [vmem:[#allocation2] sm:$0xf] %v1124
    %v1126 = vld [vmem:[#allocation2] sm:$0xf]
    %s1127 = smul.u32 %s31, 2
    %s1128 = smul.addr %s1127, 2
    %s1129 = scalar_lea.vmem [#allocation4], %s1128
    %1130 = vst [vmem:[%s1129] sm:$0xf] %v1126
  $region34: #{detection_net_forward.171} parent=0 // loop_footer
    %s35 = sadd.s32 1, %s31
  $region35: #{detection_net_forward.171} parent=0 // loop_footer_branch
    %30 = sbr.rel target = $region31
  $region36: #{detection_net_forward.171} parent=0 // loop_exit
    _
  %1131 = vst [vmem:[#allocation2] sm:$0xf] 0.0
  %1132 = vst [vmem:[#allocation3] sm:$0xf] 0.0
  loop: start=0, step=1, limit=35
  $region37: #{detection_net_forward.171} parent=0 // loop_pre_header
    _
  $region38: #{detection_net_forward.171} parent=0 // loop_header
    %s1134 = sphi 0, %s1138
    %p1135 = scmp.ge.s32.totalorder %s1134, 35
  $region39: #{detection_net_forward.171} parent=0 // loop_header_branch
    %1137 = sbr.rel (%p1135) target = $region43
  $region40: #{detection_net_forward.171} parent=0 // loop_body
    %s1139 = ssub.s32 34, %s1134
    %s1140 = smul.u32 %s1139, 8
    %s1141 = smul.addr %s1140, 2
    %s1142 = scalar_lea.vmem %s1, %s1141
    %v1143 = vld [vmem:[%s1142] sm:$0xff]
    %v1144 = vld [vmem:[%s1142 + $0x8] sm:$0xff]
    %v1145 = vld [vmem:[#allocation2] sm:$0xf]
    %1147 = vst [vmem:[#allocation1] ss:$4 sm:$0xff] %v1145
    %v1148 = vld.sshfl [vmem:[#allocation1] sm:$0xff pattern:$0x73625140]
    %v1149 = vld.sshfl [vmem:[#allocation1 + $0x8] sm:$0xff pattern:$0x73625140]
    %v1152 = vpack.c.bf16 %v1148, %v1148
    %v1153 = vpack.c.bf16 %v1149, %v1149
    %v1154 = vld [vmem:[%s3] sm:$0xff]
    %v1155 = vld [vmem:[%s3 + $0x8] sm:$0xff]
    %v1156 = vld [vmem:[%s3 + $0x10] sm:$0xff]
    %v1157 = vld [vmem:[%s3 + $0x18] sm:$0xff]
    %v1158 = vld [vmem:[%s3 + $0x20] sm:$0xff]
    %v1159 = vld [vmem:[%s3 + $0x28] sm:$0xff]
    %v1160 = vld [vmem:[%s3 + $0x30] sm:$0xff]
    %v1161 = vld [vmem:[%s3 + $0x38] sm:$0xff]
    %v1162 = vld [vmem:[%s3 + $0x40] sm:$0xff]
    %v1163 = vld [vmem:[%s3 + $0x48] sm:$0xff]
    %v1164 = vld [vmem:[%s3 + $0x50] sm:$0xff]
    %v1165 = vld [vmem:[%s3 + $0x58] sm:$0xff]
    %v1166 = vld [vmem:[%s3 + $0x60] sm:$0xff]
    %v1167 = vld [vmem:[%s3 + $0x68] sm:$0xff]
    %v1168 = vld [vmem:[%s3 + $0x70] sm:$0xff]
    %v1169 = vld [vmem:[%s3 + $0x78] sm:$0xff]
    %v1170 = vld [vmem:[%s3 + $0x80] sm:$0xff]
    %v1171 = vld [vmem:[%s3 + $0x88] sm:$0xff]
    %v1172 = vld [vmem:[%s3 + $0x90] sm:$0xff]
    %v1173 = vld [vmem:[%s3 + $0x98] sm:$0xff]
    %v1174 = vld [vmem:[%s3 + $0xa0] sm:$0xff]
    %v1175 = vld [vmem:[%s3 + $0xa8] sm:$0xff]
    %v1176 = vld [vmem:[%s3 + $0xb0] sm:$0xff]
    %v1177 = vld [vmem:[%s3 + $0xb8] sm:$0xff]
    %v1178 = vld [vmem:[%s3 + $0xc0] sm:$0xff]
    %v1179 = vld [vmem:[%s3 + $0xc8] sm:$0xff]
    %v1180 = vld [vmem:[%s3 + $0xd0] sm:$0xff]
    %v1181 = vld [vmem:[%s3 + $0xd8] sm:$0xff]
    %v1182 = vld [vmem:[%s3 + $0xe0] sm:$0xff]
    %v1183 = vld [vmem:[%s3 + $0xe8] sm:$0xff]
    %v1184 = vld [vmem:[%s3 + $0xf0] sm:$0xff]
    %v1185 = vld [vmem:[%s3 + $0xf8] sm:$0xff]
    %v1186 = vld [vmem:[%s3 + $0x100] sm:$0xff]
    %v1187 = vld [vmem:[%s3 + $0x108] sm:$0xff]
    %v1188 = vld [vmem:[%s3 + $0x110] sm:$0xff]
    %v1189 = vld [vmem:[%s3 + $0x118] sm:$0xff]
    %v1190 = vld [vmem:[%s3 + $0x120] sm:$0xff]
    %v1191 = vld [vmem:[%s3 + $0x128] sm:$0xff]
    %v1192 = vld [vmem:[%s3 + $0x130] sm:$0xff]
    %v1193 = vld [vmem:[%s3 + $0x138] sm:$0xff]
    %v1194 = vld [vmem:[%s3 + $0x140] sm:$0xff]
    %v1195 = vld [vmem:[%s3 + $0x148] sm:$0xff]
    %v1196 = vld [vmem:[%s3 + $0x150] sm:$0xff]
    %v1197 = vld [vmem:[%s3 + $0x158] sm:$0xff]
    %v1198 = vld [vmem:[%s3 + $0x160] sm:$0xff]
    %v1199 = vld [vmem:[%s3 + $0x168] sm:$0xff]
    %v1200 = vld [vmem:[%s3 + $0x170] sm:$0xff]
    %v1201 = vld [vmem:[%s3 + $0x178] sm:$0xff]
    %v1202 = vld [vmem:[%s3 + $0x180] sm:$0xff]
    %v1203 = vld [vmem:[%s3 + $0x188] sm:$0xff]
    %v1204 = vld [vmem:[%s3 + $0x190] sm:$0xff]
    %v1205 = vld [vmem:[%s3 + $0x198] sm:$0xff]
    %v1206 = vld [vmem:[%s3 + $0x1a0] sm:$0xff]
    %v1207 = vld [vmem:[%s3 + $0x1a8] sm:$0xff]
    %v1208 = vld [vmem:[%s3 + $0x1b0] sm:$0xff]
    %v1209 = vld [vmem:[%s3 + $0x1b8] sm:$0xff]
    %v1210 = vld [vmem:[%s3 + $0x1c0] sm:$0xff]
    %v1211 = vld [vmem:[%s3 + $0x1c8] sm:$0xff]
    %v1212 = vld [vmem:[%s3 + $0x1d0] sm:$0xff]
    %v1213 = vld [vmem:[%s3 + $0x1d8] sm:$0xff]
    %v1214 = vld [vmem:[%s3 + $0x1e0] sm:$0xff]
    %v1215 = vld [vmem:[%s3 + $0x1e8] sm:$0xff]
    %v1216 = vld [vmem:[%s3 + $0x1f0] sm:$0xff]
    %v1217 = vld [vmem:[%s3 + $0x1f8] sm:$0xff]
    %v1218 = vld [vmem:[%s3 + $0x200] sm:$0xff]
    %v1219 = vld [vmem:[%s3 + $0x208] sm:$0xff]
    %v1220 = vld [vmem:[%s3 + $0x210] sm:$0xff]
    %v1221 = vld [vmem:[%s3 + $0x218] sm:$0xff]
    %v1222 = vld [vmem:[%s3 + $0x220] sm:$0xff]
    %v1223 = vld [vmem:[%s3 + $0x228] sm:$0xff]
    %v1224 = vld [vmem:[%s3 + $0x230] sm:$0xff]
    %v1225 = vld [vmem:[%s3 + $0x238] sm:$0xff]
    %v1226 = vld [vmem:[%s3 + $0x240] sm:$0xff]
    %v1227 = vld [vmem:[%s3 + $0x248] sm:$0xff]
    %v1228 = vld [vmem:[%s3 + $0x250] sm:$0xff]
    %v1229 = vld [vmem:[%s3 + $0x258] sm:$0xff]
    %v1230 = vld [vmem:[%s3 + $0x260] sm:$0xff]
    %v1231 = vld [vmem:[%s3 + $0x268] sm:$0xff]
    %v1232 = vld [vmem:[%s3 + $0x270] sm:$0xff]
    %v1233 = vld [vmem:[%s3 + $0x278] sm:$0xff]
    %v1234 = vld [vmem:[%s3 + $0x280] sm:$0xff]
    %v1235 = vld [vmem:[%s3 + $0x288] sm:$0xff]
    %v1236 = vld [vmem:[%s3 + $0x290] sm:$0xff]
    %v1237 = vld [vmem:[%s3 + $0x298] sm:$0xff]
    %v1238 = vld [vmem:[%s3 + $0x2a0] sm:$0xff]
    %v1239 = vld [vmem:[%s3 + $0x2a8] sm:$0xff]
    %v1240 = vld [vmem:[%s3 + $0x2b0] sm:$0xff]
    %v1241 = vld [vmem:[%s3 + $0x2b8] sm:$0xff]
    %v1242 = vld [vmem:[%s3 + $0x2c0] sm:$0xff]
    %v1243 = vld [vmem:[%s3 + $0x2c8] sm:$0xff]
    %v1244 = vld [vmem:[%s3 + $0x2d0] sm:$0xff]
    %v1245 = vld [vmem:[%s3 + $0x2d8] sm:$0xff]
    %v1246 = vld [vmem:[%s3 + $0x2e0] sm:$0xff]
    %v1247 = vld [vmem:[%s3 + $0x2e8] sm:$0xff]
    %v1248 = vld [vmem:[%s3 + $0x2f0] sm:$0xff]
    %v1249 = vld [vmem:[%s3 + $0x2f8] sm:$0xff]
    %v1250 = vld [vmem:[%s3 + $0x300] sm:$0xff]
    %v1251 = vld [vmem:[%s3 + $0x308] sm:$0xff]
    %v1252 = vld [vmem:[%s3 + $0x310] sm:$0xff]
    %v1253 = vld [vmem:[%s3 + $0x318] sm:$0xff]
    %v1254 = vld [vmem:[%s3 + $0x320] sm:$0xff]
    %v1255 = vld [vmem:[%s3 + $0x328] sm:$0xff]
    %v1256 = vld [vmem:[%s3 + $0x330] sm:$0xff]
    %v1257 = vld [vmem:[%s3 + $0x338] sm:$0xff]
    %v1258 = vld [vmem:[%s3 + $0x340] sm:$0xff]
    %v1259 = vld [vmem:[%s3 + $0x348] sm:$0xff]
    %v1260 = vld [vmem:[%s3 + $0x350] sm:$0xff]
    %v1261 = vld [vmem:[%s3 + $0x358] sm:$0xff]
    %v1262 = vld [vmem:[%s3 + $0x360] sm:$0xff]
    %v1263 = vld [vmem:[%s3 + $0x368] sm:$0xff]
    %v1264 = vld [vmem:[%s3 + $0x370] sm:$0xff]
    %v1265 = vld [vmem:[%s3 + $0x378] sm:$0xff]
    %v1266 = vld [vmem:[%s3 + $0x380] sm:$0xff]
    %v1267 = vld [vmem:[%s3 + $0x388] sm:$0xff]
    %v1268 = vld [vmem:[%s3 + $0x390] sm:$0xff]
    %v1269 = vld [vmem:[%s3 + $0x398] sm:$0xff]
    %v1270 = vld [vmem:[%s3 + $0x3a0] sm:$0xff]
    %v1271 = vld [vmem:[%s3 + $0x3a8] sm:$0xff]
    %v1272 = vld [vmem:[%s3 + $0x3b0] sm:$0xff]
    %v1273 = vld [vmem:[%s3 + $0x3b8] sm:$0xff]
    %v1274 = vld [vmem:[%s3 + $0x3c0] sm:$0xff]
    %v1275 = vld [vmem:[%s3 + $0x3c8] sm:$0xff]
    %v1276 = vld [vmem:[%s3 + $0x3d0] sm:$0xff]
    %v1277 = vld [vmem:[%s3 + $0x3d8] sm:$0xff]
    %v1278 = vld [vmem:[%s3 + $0x3e0] sm:$0xff]
    %v1279 = vld [vmem:[%s3 + $0x3e8] sm:$0xff]
    %v1280 = vld [vmem:[%s3 + $0x3f0] sm:$0xff]
    %v1281 = vld [vmem:[%s3 + $0x3f8] sm:$0xff]
    %v1410 = vunpack.c.l.b16 %v1154
    %v1411 = vunpack.c.h.b16 %v1154
    %v1412 = vunpack.c.l.b16 %v1155
    %v1413 = vunpack.c.h.b16 %v1155
    %v1414 = vunpack.c.l.b16 %v1156
    %v1415 = vunpack.c.h.b16 %v1156
    %v1416 = vunpack.c.l.b16 %v1157
    %v1417 = vunpack.c.h.b16 %v1157
    %v1418 = vunpack.c.l.b16 %v1158
    %v1419 = vunpack.c.h.b16 %v1158
    %v1420 = vunpack.c.l.b16 %v1159
    %v1421 = vunpack.c.h.b16 %v1159
    %v1422 = vunpack.c.l.b16 %v1160
    %v1423 = vunpack.c.h.b16 %v1160
    %v1424 = vunpack.c.l.b16 %v1161
    %v1425 = vunpack.c.h.b16 %v1161
    %v1426 = vunpack.c.l.b16 %v1162
    %v1427 = vunpack.c.h.b16 %v1162
    %v1428 = vunpack.c.l.b16 %v1163
    %v1429 = vunpack.c.h.b16 %v1163
    %v1430 = vunpack.c.l.b16 %v1164
    %v1431 = vunpack.c.h.b16 %v1164
    %v1432 = vunpack.c.l.b16 %v1165
    %v1433 = vunpack.c.h.b16 %v1165
    %v1434 = vunpack.c.l.b16 %v1166
    %v1435 = vunpack.c.h.b16 %v1166
    %v1436 = vunpack.c.l.b16 %v1167
    %v1437 = vunpack.c.h.b16 %v1167
    %v1438 = vunpack.c.l.b16 %v1168
    %v1439 = vunpack.c.h.b16 %v1168
    %v1440 = vunpack.c.l.b16 %v1169
    %v1441 = vunpack.c.h.b16 %v1169
    %v1442 = vunpack.c.l.b16 %v1170
    %v1443 = vunpack.c.h.b16 %v1170
    %v1444 = vunpack.c.l.b16 %v1171
    %v1445 = vunpack.c.h.b16 %v1171
    %v1446 = vunpack.c.l.b16 %v1172
    %v1447 = vunpack.c.h.b16 %v1172
    %v1448 = vunpack.c.l.b16 %v1173
    %v1449 = vunpack.c.h.b16 %v1173
    %v1450 = vunpack.c.l.b16 %v1174
    %v1451 = vunpack.c.h.b16 %v1174
    %v1452 = vunpack.c.l.b16 %v1175
    %v1453 = vunpack.c.h.b16 %v1175
    %v1454 = vunpack.c.l.b16 %v1176
    %v1455 = vunpack.c.h.b16 %v1176
    %v1456 = vunpack.c.l.b16 %v1177
    %v1457 = vunpack.c.h.b16 %v1177
    %v1458 = vunpack.c.l.b16 %v1178
    %v1459 = vunpack.c.h.b16 %v1178
    %v1460 = vunpack.c.l.b16 %v1179
    %v1461 = vunpack.c.h.b16 %v1179
    %v1462 = vunpack.c.l.b16 %v1180
    %v1463 = vunpack.c.h.b16 %v1180
    %v1464 = vunpack.c.l.b16 %v1181
    %v1465 = vunpack.c.h.b16 %v1181
    %v1466 = vunpack.c.l.b16 %v1182
    %v1467 = vunpack.c.h.b16 %v1182
    %v1468 = vunpack.c.l.b16 %v1183
    %v1469 = vunpack.c.h.b16 %v1183
    %v1470 = vunpack.c.l.b16 %v1184
    %v1471 = vunpack.c.h.b16 %v1184
    %v1472 = vunpack.c.l.b16 %v1185
    %v1473 = vunpack.c.h.b16 %v1185
    %v1474 = vunpack.c.l.b16 %v1186
    %v1475 = vunpack.c.h.b16 %v1186
    %v1476 = vunpack.c.l.b16 %v1187
    %v1477 = vunpack.c.h.b16 %v1187
    %v1478 = vunpack.c.l.b16 %v1188
    %v1479 = vunpack.c.h.b16 %v1188
    %v1480 = vunpack.c.l.b16 %v1189
    %v1481 = vunpack.c.h.b16 %v1189
    %v1482 = vunpack.c.l.b16 %v1190
    %v1483 = vunpack.c.h.b16 %v1190
    %v1484 = vunpack.c.l.b16 %v1191
    %v1485 = vunpack.c.h.b16 %v1191
    %v1486 = vunpack.c.l.b16 %v1192
    %v1487 = vunpack.c.h.b16 %v1192
    %v1488 = vunpack.c.l.b16 %v1193
    %v1489 = vunpack.c.h.b16 %v1193
    %v1490 = vunpack.c.l.b16 %v1194
    %v1491 = vunpack.c.h.b16 %v1194
    %v1492 = vunpack.c.l.b16 %v1195
    %v1493 = vunpack.c.h.b16 %v1195
    %v1494 = vunpack.c.l.b16 %v1196
    %v1495 = vunpack.c.h.b16 %v1196
    %v1496 = vunpack.c.l.b16 %v1197
    %v1497 = vunpack.c.h.b16 %v1197
    %v1498 = vunpack.c.l.b16 %v1198
    %v1499 = vunpack.c.h.b16 %v1198
    %v1500 = vunpack.c.l.b16 %v1199
    %v1501 = vunpack.c.h.b16 %v1199
    %v1502 = vunpack.c.l.b16 %v1200
    %v1503 = vunpack.c.h.b16 %v1200
    %v1504 = vunpack.c.l.b16 %v1201
    %v1505 = vunpack.c.h.b16 %v1201
    %v1506 = vunpack.c.l.b16 %v1202
    %v1507 = vunpack.c.h.b16 %v1202
    %v1508 = vunpack.c.l.b16 %v1203
    %v1509 = vunpack.c.h.b16 %v1203
    %v1510 = vunpack.c.l.b16 %v1204
    %v1511 = vunpack.c.h.b16 %v1204
    %v1512 = vunpack.c.l.b16 %v1205
    %v1513 = vunpack.c.h.b16 %v1205
    %v1514 = vunpack.c.l.b16 %v1206
    %v1515 = vunpack.c.h.b16 %v1206
    %v1516 = vunpack.c.l.b16 %v1207
    %v1517 = vunpack.c.h.b16 %v1207
    %v1518 = vunpack.c.l.b16 %v1208
    %v1519 = vunpack.c.h.b16 %v1208
    %v1520 = vunpack.c.l.b16 %v1209
    %v1521 = vunpack.c.h.b16 %v1209
    %v1522 = vunpack.c.l.b16 %v1210
    %v1523 = vunpack.c.h.b16 %v1210
    %v1524 = vunpack.c.l.b16 %v1211
    %v1525 = vunpack.c.h.b16 %v1211
    %v1526 = vunpack.c.l.b16 %v1212
    %v1527 = vunpack.c.h.b16 %v1212
    %v1528 = vunpack.c.l.b16 %v1213
    %v1529 = vunpack.c.h.b16 %v1213
    %v1530 = vunpack.c.l.b16 %v1214
    %v1531 = vunpack.c.h.b16 %v1214
    %v1532 = vunpack.c.l.b16 %v1215
    %v1533 = vunpack.c.h.b16 %v1215
    %v1534 = vunpack.c.l.b16 %v1216
    %v1535 = vunpack.c.h.b16 %v1216
    %v1536 = vunpack.c.l.b16 %v1217
    %v1537 = vunpack.c.h.b16 %v1217
    %v1538 = vunpack.c.l.b16 %v1218
    %v1539 = vunpack.c.h.b16 %v1218
    %v1540 = vunpack.c.l.b16 %v1219
    %v1541 = vunpack.c.h.b16 %v1219
    %v1542 = vunpack.c.l.b16 %v1220
    %v1543 = vunpack.c.h.b16 %v1220
    %v1544 = vunpack.c.l.b16 %v1221
    %v1545 = vunpack.c.h.b16 %v1221
    %v1546 = vunpack.c.l.b16 %v1222
    %v1547 = vunpack.c.h.b16 %v1222
    %v1548 = vunpack.c.l.b16 %v1223
    %v1549 = vunpack.c.h.b16 %v1223
    %v1550 = vunpack.c.l.b16 %v1224
    %v1551 = vunpack.c.h.b16 %v1224
    %v1552 = vunpack.c.l.b16 %v1225
    %v1553 = vunpack.c.h.b16 %v1225
    %v1554 = vunpack.c.l.b16 %v1226
    %v1555 = vunpack.c.h.b16 %v1226
    %v1556 = vunpack.c.l.b16 %v1227
    %v1557 = vunpack.c.h.b16 %v1227
    %v1558 = vunpack.c.l.b16 %v1228
    %v1559 = vunpack.c.h.b16 %v1228
    %v1560 = vunpack.c.l.b16 %v1229
    %v1561 = vunpack.c.h.b16 %v1229
    %v1562 = vunpack.c.l.b16 %v1230
    %v1563 = vunpack.c.h.b16 %v1230
    %v1564 = vunpack.c.l.b16 %v1231
    %v1565 = vunpack.c.h.b16 %v1231
    %v1566 = vunpack.c.l.b16 %v1232
    %v1567 = vunpack.c.h.b16 %v1232
    %v1568 = vunpack.c.l.b16 %v1233
    %v1569 = vunpack.c.h.b16 %v1233
    %v1570 = vunpack.c.l.b16 %v1234
    %v1571 = vunpack.c.h.b16 %v1234
    %v1572 = vunpack.c.l.b16 %v1235
    %v1573 = vunpack.c.h.b16 %v1235
    %v1574 = vunpack.c.l.b16 %v1236
    %v1575 = vunpack.c.h.b16 %v1236
    %v1576 = vunpack.c.l.b16 %v1237
    %v1577 = vunpack.c.h.b16 %v1237
    %v1578 = vunpack.c.l.b16 %v1238
    %v1579 = vunpack.c.h.b16 %v1238
    %v1580 = vunpack.c.l.b16 %v1239
    %v1581 = vunpack.c.h.b16 %v1239
    %v1582 = vunpack.c.l.b16 %v1240
    %v1583 = vunpack.c.h.b16 %v1240
    %v1584 = vunpack.c.l.b16 %v1241
    %v1585 = vunpack.c.h.b16 %v1241
    %v1586 = vunpack.c.l.b16 %v1242
    %v1587 = vunpack.c.h.b16 %v1242
    %v1588 = vunpack.c.l.b16 %v1243
    %v1589 = vunpack.c.h.b16 %v1243
    %v1590 = vunpack.c.l.b16 %v1244
    %v1591 = vunpack.c.h.b16 %v1244
    %v1592 = vunpack.c.l.b16 %v1245
    %v1593 = vunpack.c.h.b16 %v1245
    %v1594 = vunpack.c.l.b16 %v1246
    %v1595 = vunpack.c.h.b16 %v1246
    %v1596 = vunpack.c.l.b16 %v1247
    %v1597 = vunpack.c.h.b16 %v1247
    %v1598 = vunpack.c.l.b16 %v1248
    %v1599 = vunpack.c.h.b16 %v1248
    %v1600 = vunpack.c.l.b16 %v1249
    %v1601 = vunpack.c.h.b16 %v1249
    %v1602 = vunpack.c.l.b16 %v1250
    %v1603 = vunpack.c.h.b16 %v1250
    %v1604 = vunpack.c.l.b16 %v1251
    %v1605 = vunpack.c.h.b16 %v1251
    %v1606 = vunpack.c.l.b16 %v1252
    %v1607 = vunpack.c.h.b16 %v1252
    %v1608 = vunpack.c.l.b16 %v1253
    %v1609 = vunpack.c.h.b16 %v1253
    %v1610 = vunpack.c.l.b16 %v1254
    %v1611 = vunpack.c.h.b16 %v1254
    %v1612 = vunpack.c.l.b16 %v1255
    %v1613 = vunpack.c.h.b16 %v1255
    %v1614 = vunpack.c.l.b16 %v1256
    %v1615 = vunpack.c.h.b16 %v1256
    %v1616 = vunpack.c.l.b16 %v1257
    %v1617 = vunpack.c.h.b16 %v1257
    %v1618 = vunpack.c.l.b16 %v1258
    %v1619 = vunpack.c.h.b16 %v1258
    %v1620 = vunpack.c.l.b16 %v1259
    %v1621 = vunpack.c.h.b16 %v1259
    %v1622 = vunpack.c.l.b16 %v1260
    %v1623 = vunpack.c.h.b16 %v1260
    %v1624 = vunpack.c.l.b16 %v1261
    %v1625 = vunpack.c.h.b16 %v1261
    %v1626 = vunpack.c.l.b16 %v1262
    %v1627 = vunpack.c.h.b16 %v1262
    %v1628 = vunpack.c.l.b16 %v1263
    %v1629 = vunpack.c.h.b16 %v1263
    %v1630 = vunpack.c.l.b16 %v1264
    %v1631 = vunpack.c.h.b16 %v1264
    %v1632 = vunpack.c.l.b16 %v1265
    %v1633 = vunpack.c.h.b16 %v1265
    %v1634 = vunpack.c.l.b16 %v1266
    %v1635 = vunpack.c.h.b16 %v1266
    %v1636 = vunpack.c.l.b16 %v1267
    %v1637 = vunpack.c.h.b16 %v1267
    %v1638 = vunpack.c.l.b16 %v1268
    %v1639 = vunpack.c.h.b16 %v1268
    %v1640 = vunpack.c.l.b16 %v1269
    %v1641 = vunpack.c.h.b16 %v1269
    %v1642 = vunpack.c.l.b16 %v1270
    %v1643 = vunpack.c.h.b16 %v1270
    %v1644 = vunpack.c.l.b16 %v1271
    %v1645 = vunpack.c.h.b16 %v1271
    %v1646 = vunpack.c.l.b16 %v1272
    %v1647 = vunpack.c.h.b16 %v1272
    %v1648 = vunpack.c.l.b16 %v1273
    %v1649 = vunpack.c.h.b16 %v1273
    %v1650 = vunpack.c.l.b16 %v1274
    %v1651 = vunpack.c.h.b16 %v1274
    %v1652 = vunpack.c.l.b16 %v1275
    %v1653 = vunpack.c.h.b16 %v1275
    %v1654 = vunpack.c.l.b16 %v1276
    %v1655 = vunpack.c.h.b16 %v1276
    %v1656 = vunpack.c.l.b16 %v1277
    %v1657 = vunpack.c.h.b16 %v1277
    %v1658 = vunpack.c.l.b16 %v1278
    %v1659 = vunpack.c.h.b16 %v1278
    %v1660 = vunpack.c.l.b16 %v1279
    %v1661 = vunpack.c.h.b16 %v1279
    %v1662 = vunpack.c.l.b16 %v1280
    %v1663 = vunpack.c.h.b16 %v1280
    %v1664 = vunpack.c.l.b16 %v1281
    %v1665 = vunpack.c.h.b16 %v1281
    %v1666 = vpack.c.b16 %v1418, %v1410
    %v1667 = vpack.c.b16 %v1419, %v1411
    %v1668 = vpack.c.b16 %v1420, %v1412
    %v1669 = vpack.c.b16 %v1421, %v1413
    %v1670 = vpack.c.b16 %v1422, %v1414
    %v1671 = vpack.c.b16 %v1423, %v1415
    %v1672 = vpack.c.b16 %v1424, %v1416
    %v1673 = vpack.c.b16 %v1425, %v1417
    %v1674 = vpack.c.b16 %v1434, %v1426
    %v1675 = vpack.c.b16 %v1435, %v1427
    %v1676 = vpack.c.b16 %v1436, %v1428
    %v1677 = vpack.c.b16 %v1437, %v1429
    %v1678 = vpack.c.b16 %v1438, %v1430
    %v1679 = vpack.c.b16 %v1439, %v1431
    %v1680 = vpack.c.b16 %v1440, %v1432
    %v1681 = vpack.c.b16 %v1441, %v1433
    %v1682 = vpack.c.b16 %v1450, %v1442
    %v1683 = vpack.c.b16 %v1451, %v1443
    %v1684 = vpack.c.b16 %v1452, %v1444
    %v1685 = vpack.c.b16 %v1453, %v1445
    %v1686 = vpack.c.b16 %v1454, %v1446
    %v1687 = vpack.c.b16 %v1455, %v1447
    %v1688 = vpack.c.b16 %v1456, %v1448
    %v1689 = vpack.c.b16 %v1457, %v1449
    %v1690 = vpack.c.b16 %v1466, %v1458
    %v1691 = vpack.c.b16 %v1467, %v1459
    %v1692 = vpack.c.b16 %v1468, %v1460
    %v1693 = vpack.c.b16 %v1469, %v1461
    %v1694 = vpack.c.b16 %v1470, %v1462
    %v1695 = vpack.c.b16 %v1471, %v1463
    %v1696 = vpack.c.b16 %v1472, %v1464
    %v1697 = vpack.c.b16 %v1473, %v1465
    %v1698 = vpack.c.b16 %v1482, %v1474
    %v1699 = vpack.c.b16 %v1483, %v1475
    %v1700 = vpack.c.b16 %v1484, %v1476
    %v1701 = vpack.c.b16 %v1485, %v1477
    %v1702 = vpack.c.b16 %v1486, %v1478
    %v1703 = vpack.c.b16 %v1487, %v1479
    %v1704 = vpack.c.b16 %v1488, %v1480
    %v1705 = vpack.c.b16 %v1489, %v1481
    %v1706 = vpack.c.b16 %v1498, %v1490
    %v1707 = vpack.c.b16 %v1499, %v1491
    %v1708 = vpack.c.b16 %v1500, %v1492
    %v1709 = vpack.c.b16 %v1501, %v1493
    %v1710 = vpack.c.b16 %v1502, %v1494
    %v1711 = vpack.c.b16 %v1503, %v1495
    %v1712 = vpack.c.b16 %v1504, %v1496
    %v1713 = vpack.c.b16 %v1505, %v1497
    %v1714 = vpack.c.b16 %v1514, %v1506
    %v1715 = vpack.c.b16 %v1515, %v1507
    %v1716 = vpack.c.b16 %v1516, %v1508
    %v1717 = vpack.c.b16 %v1517, %v1509
    %v1718 = vpack.c.b16 %v1518, %v1510
    %v1719 = vpack.c.b16 %v1519, %v1511
    %v1720 = vpack.c.b16 %v1520, %v1512
    %v1721 = vpack.c.b16 %v1521, %v1513
    %v1722 = vpack.c.b16 %v1530, %v1522
    %v1723 = vpack.c.b16 %v1531, %v1523
    %v1724 = vpack.c.b16 %v1532, %v1524
    %v1725 = vpack.c.b16 %v1533, %v1525
    %v1726 = vpack.c.b16 %v1534, %v1526
    %v1727 = vpack.c.b16 %v1535, %v1527
    %v1728 = vpack.c.b16 %v1536, %v1528
    %v1729 = vpack.c.b16 %v1537, %v1529
    %v1730 = vpack.c.b16 %v1546, %v1538
    %v1731 = vpack.c.b16 %v1547, %v1539
    %v1732 = vpack.c.b16 %v1548, %v1540
    %v1733 = vpack.c.b16 %v1549, %v1541
    %v1734 = vpack.c.b16 %v1550, %v1542
    %v1735 = vpack.c.b16 %v1551, %v1543
    %v1736 = vpack.c.b16 %v1552, %v1544
    %v1737 = vpack.c.b16 %v1553, %v1545
    %v1738 = vpack.c.b16 %v1562, %v1554
    %v1739 = vpack.c.b16 %v1563, %v1555
    %v1740 = vpack.c.b16 %v1564, %v1556
    %v1741 = vpack.c.b16 %v1565, %v1557
    %v1742 = vpack.c.b16 %v1566, %v1558
    %v1743 = vpack.c.b16 %v1567, %v1559
    %v1744 = vpack.c.b16 %v1568, %v1560
    %v1745 = vpack.c.b16 %v1569, %v1561
    %v1746 = vpack.c.b16 %v1578, %v1570
    %v1747 = vpack.c.b16 %v1579, %v1571
    %v1748 = vpack.c.b16 %v1580, %v1572
    %v1749 = vpack.c.b16 %v1581, %v1573
    %v1750 = vpack.c.b16 %v1582, %v1574
    %v1751 = vpack.c.b16 %v1583, %v1575
    %v1752 = vpack.c.b16 %v1584, %v1576
    %v1753 = vpack.c.b16 %v1585, %v1577
    %v1754 = vpack.c.b16 %v1594, %v1586
    %v1755 = vpack.c.b16 %v1595, %v1587
    %v1756 = vpack.c.b16 %v1596, %v1588
    %v1757 = vpack.c.b16 %v1597, %v1589
    %v1758 = vpack.c.b16 %v1598, %v1590
    %v1759 = vpack.c.b16 %v1599, %v1591
    %v1760 = vpack.c.b16 %v1600, %v1592
    %v1761 = vpack.c.b16 %v1601, %v1593
    %v1762 = vpack.c.b16 %v1610, %v1602
    %v1763 = vpack.c.b16 %v1611, %v1603
    %v1764 = vpack.c.b16 %v1612, %v1604
    %v1765 = vpack.c.b16 %v1613, %v1605
    %v1766 = vpack.c.b16 %v1614, %v1606
    %v1767 = vpack.c.b16 %v1615, %v1607
    %v1768 = vpack.c.b16 %v1616, %v1608
    %v1769 = vpack.c.b16 %v1617, %v1609
    %v1770 = vpack.c.b16 %v1626, %v1618
    %v1771 = vpack.c.b16 %v1627, %v1619
    %v1772 = vpack.c.b16 %v1628, %v1620
    %v1773 = vpack.c.b16 %v1629, %v1621
    %v1774 = vpack.c.b16 %v1630, %v1622
    %v1775 = vpack.c.b16 %v1631, %v1623
    %v1776 = vpack.c.b16 %v1632, %v1624
    %v1777 = vpack.c.b16 %v1633, %v1625
    %v1778 = vpack.c.b16 %v1642, %v1634
    %v1779 = vpack.c.b16 %v1643, %v1635
    %v1780 = vpack.c.b16 %v1644, %v1636
    %v1781 = vpack.c.b16 %v1645, %v1637
    %v1782 = vpack.c.b16 %v1646, %v1638
    %v1783 = vpack.c.b16 %v1647, %v1639
    %v1784 = vpack.c.b16 %v1648, %v1640
    %v1785 = vpack.c.b16 %v1649, %v1641
    %v1786 = vpack.c.b16 %v1658, %v1650
    %v1787 = vpack.c.b16 %v1659, %v1651
    %v1788 = vpack.c.b16 %v1660, %v1652
    %v1789 = vpack.c.b16 %v1661, %v1653
    %v1790 = vpack.c.b16 %v1662, %v1654
    %v1791 = vpack.c.b16 %v1663, %v1655
    %v1792 = vpack.c.b16 %v1664, %v1656
    %v1793 = vpack.c.b16 %v1665, %v1657
    %1922 = vmatpush.bf16.msra.mxu0 %v1722
    %1923 = vmatpush.bf16.msra.mxu0 %v1714
    %1924 = vmatpush.bf16.msra.mxu0 %v1706
    %1925 = vmatpush.bf16.msra.mxu0 %v1698
    %1926 = vmatpush.bf16.msra.mxu0 %v1690
    %1927 = vmatpush.bf16.msra.mxu0 %v1682
    %1928 = vmatpush.bf16.msra.mxu0 %v1674
    %1929 = vmatpush.bf16.msra.mxu0 %v1666
    %1930 = vmatmul.bf16.gmra.mxu0 %v1152
    %v1931 = vpop.f32.mrf.mxu0
    %v1932 = vadd.f32 0.0, %v1931
    %v1933 = vpop.f32.mrf.mxu0
    %1934 = vdwg.mxu0
    %1935 = vmatpush.bf16.msra.mxu0 %v1786
    %1936 = vmatpush.bf16.msra.mxu0 %v1778
    %1937 = vmatpush.bf16.msra.mxu0 %v1770
    %1938 = vmatpush.bf16.msra.mxu0 %v1762
    %1939 = vmatpush.bf16.msra.mxu0 %v1754
    %1940 = vmatpush.bf16.msra.mxu0 %v1746
    %1941 = vmatpush.bf16.msra.mxu0 %v1738
    %1942 = vmatpush.bf16.msra.mxu0 %v1730
    %1943 = vmatmul.bf16.gmra.mxu0 %v1153
    %v1944 = vpop.f32.mrf.mxu0
    %v1945 = vadd.f32 %v1932, %v1944
    %v1946 = vpop.f32.mrf.mxu0
    %1947 = vdwg.mxu0
    %1948 = vmatpush.bf16.msra.mxu0 %v1723
    %1949 = vmatpush.bf16.msra.mxu0 %v1715
    %1950 = vmatpush.bf16.msra.mxu0 %v1707
    %1951 = vmatpush.bf16.msra.mxu0 %v1699
    %1952 = vmatpush.bf16.msra.mxu0 %v1691
    %1953 = vmatpush.bf16.msra.mxu0 %v1683
    %1954 = vmatpush.bf16.msra.mxu0 %v1675
    %1955 = vmatpush.bf16.msra.mxu0 %v1667
    %1956 = vmatmul.bf16.gmra.mxu0 %v1152
    %v1957 = vpop.f32.mrf.mxu0
    %v1958 = vadd.f32 0.0, %v1957
    %v1959 = vpop.f32.mrf.mxu0
    %1960 = vdwg.mxu0
    %1961 = vmatpush.bf16.msra.mxu0 %v1787
    %1962 = vmatpush.bf16.msra.mxu0 %v1779
    %1963 = vmatpush.bf16.msra.mxu0 %v1771
    %1964 = vmatpush.bf16.msra.mxu0 %v1763
    %1965 = vmatpush.bf16.msra.mxu0 %v1755
    %1966 = vmatpush.bf16.msra.mxu0 %v1747
    %1967 = vmatpush.bf16.msra.mxu0 %v1739
    %1968 = vmatpush.bf16.msra.mxu0 %v1731
    %1969 = vmatmul.bf16.gmra.mxu0 %v1153
    %v1970 = vpop.f32.mrf.mxu0
    %v1971 = vadd.f32 %v1958, %v1970
    %v1972 = vpop.f32.mrf.mxu0
    %1973 = vdwg.mxu0
    %1974 = vmatpush.bf16.msra.mxu0 %v1724
    %1975 = vmatpush.bf16.msra.mxu0 %v1716
    %1976 = vmatpush.bf16.msra.mxu0 %v1708
    %1977 = vmatpush.bf16.msra.mxu0 %v1700
    %1978 = vmatpush.bf16.msra.mxu0 %v1692
    %1979 = vmatpush.bf16.msra.mxu0 %v1684
    %1980 = vmatpush.bf16.msra.mxu0 %v1676
    %1981 = vmatpush.bf16.msra.mxu0 %v1668
    %1982 = vmatmul.bf16.gmra.mxu0 %v1152
    %v1983 = vpop.f32.mrf.mxu0
    %v1984 = vadd.f32 0.0, %v1983
    %v1985 = vpop.f32.mrf.mxu0
    %1986 = vdwg.mxu0
    %1987 = vmatpush.bf16.msra.mxu0 %v1788
    %1988 = vmatpush.bf16.msra.mxu0 %v1780
    %1989 = vmatpush.bf16.msra.mxu0 %v1772
    %1990 = vmatpush.bf16.msra.mxu0 %v1764
    %1991 = vmatpush.bf16.msra.mxu0 %v1756
    %1992 = vmatpush.bf16.msra.mxu0 %v1748
    %1993 = vmatpush.bf16.msra.mxu0 %v1740
    %1994 = vmatpush.bf16.msra.mxu0 %v1732
    %1995 = vmatmul.bf16.gmra.mxu0 %v1153
    %v1996 = vpop.f32.mrf.mxu0
    %v1997 = vadd.f32 %v1984, %v1996
    %v1998 = vpop.f32.mrf.mxu0
    %1999 = vdwg.mxu0
    %2000 = vmatpush.bf16.msra.mxu0 %v1725
    %2001 = vmatpush.bf16.msra.mxu0 %v1717
    %2002 = vmatpush.bf16.msra.mxu0 %v1709
    %2003 = vmatpush.bf16.msra.mxu0 %v1701
    %2004 = vmatpush.bf16.msra.mxu0 %v1693
    %2005 = vmatpush.bf16.msra.mxu0 %v1685
    %2006 = vmatpush.bf16.msra.mxu0 %v1677
    %2007 = vmatpush.bf16.msra.mxu0 %v1669
    %2008 = vmatmul.bf16.gmra.mxu0 %v1152
    %v2009 = vpop.f32.mrf.mxu0
    %v2010 = vadd.f32 0.0, %v2009
    %v2011 = vpop.f32.mrf.mxu0
    %2012 = vdwg.mxu0
    %2013 = vmatpush.bf16.msra.mxu0 %v1789
    %2014 = vmatpush.bf16.msra.mxu0 %v1781
    %2015 = vmatpush.bf16.msra.mxu0 %v1773
    %2016 = vmatpush.bf16.msra.mxu0 %v1765
    %2017 = vmatpush.bf16.msra.mxu0 %v1757
    %2018 = vmatpush.bf16.msra.mxu0 %v1749
    %2019 = vmatpush.bf16.msra.mxu0 %v1741
    %2020 = vmatpush.bf16.msra.mxu0 %v1733
    %2021 = vmatmul.bf16.gmra.mxu0 %v1153
    %v2022 = vpop.f32.mrf.mxu0
    %v2023 = vadd.f32 %v2010, %v2022
    %v2024 = vpop.f32.mrf.mxu0
    %2025 = vdwg.mxu0
    %2026 = vmatpush.bf16.msra.mxu0 %v1726
    %2027 = vmatpush.bf16.msra.mxu0 %v1718
    %2028 = vmatpush.bf16.msra.mxu0 %v1710
    %2029 = vmatpush.bf16.msra.mxu0 %v1702
    %2030 = vmatpush.bf16.msra.mxu0 %v1694
    %2031 = vmatpush.bf16.msra.mxu0 %v1686
    %2032 = vmatpush.bf16.msra.mxu0 %v1678
    %2033 = vmatpush.bf16.msra.mxu0 %v1670
    %2034 = vmatmul.bf16.gmra.mxu0 %v1152
    %v2035 = vpop.f32.mrf.mxu0
    %v2036 = vadd.f32 0.0, %v2035
    %v2037 = vpop.f32.mrf.mxu0
    %2038 = vdwg.mxu0
    %2039 = vmatpush.bf16.msra.mxu0 %v1790
    %2040 = vmatpush.bf16.msra.mxu0 %v1782
    %2041 = vmatpush.bf16.msra.mxu0 %v1774
    %2042 = vmatpush.bf16.msra.mxu0 %v1766
    %2043 = vmatpush.bf16.msra.mxu0 %v1758
    %2044 = vmatpush.bf16.msra.mxu0 %v1750
    %2045 = vmatpush.bf16.msra.mxu0 %v1742
    %2046 = vmatpush.bf16.msra.mxu0 %v1734
    %2047 = vmatmul.bf16.gmra.mxu0 %v1153
    %v2048 = vpop.f32.mrf.mxu0
    %v2049 = vadd.f32 %v2036, %v2048
    %v2050 = vpop.f32.mrf.mxu0
    %2051 = vdwg.mxu0
    %2052 = vmatpush.bf16.msra.mxu0 %v1727
    %2053 = vmatpush.bf16.msra.mxu0 %v1719
    %2054 = vmatpush.bf16.msra.mxu0 %v1711
    %2055 = vmatpush.bf16.msra.mxu0 %v1703
    %2056 = vmatpush.bf16.msra.mxu0 %v1695
    %2057 = vmatpush.bf16.msra.mxu0 %v1687
    %2058 = vmatpush.bf16.msra.mxu0 %v1679
    %2059 = vmatpush.bf16.msra.mxu0 %v1671
    %2060 = vmatmul.bf16.gmra.mxu0 %v1152
    %v2061 = vpop.f32.mrf.mxu0
    %v2062 = vadd.f32 0.0, %v2061
    %v2063 = vpop.f32.mrf.mxu0
    %2064 = vdwg.mxu0
    %2065 = vmatpush.bf16.msra.mxu0 %v1791
    %2066 = vmatpush.bf16.msra.mxu0 %v1783
    %2067 = vmatpush.bf16.msra.mxu0 %v1775
    %2068 = vmatpush.bf16.msra.mxu0 %v1767
    %2069 = vmatpush.bf16.msra.mxu0 %v1759
    %2070 = vmatpush.bf16.msra.mxu0 %v1751
    %2071 = vmatpush.bf16.msra.mxu0 %v1743
    %2072 = vmatpush.bf16.msra.mxu0 %v1735
    %2073 = vmatmul.bf16.gmra.mxu0 %v1153
    %v2074 = vpop.f32.mrf.mxu0
    %v2075 = vadd.f32 %v2062, %v2074
    %v2076 = vpop.f32.mrf.mxu0
    %2077 = vdwg.mxu0
    %2078 = vmatpush.bf16.msra.mxu0 %v1728
    %2079 = vmatpush.bf16.msra.mxu0 %v1720
    %2080 = vmatpush.bf16.msra.mxu0 %v1712
    %2081 = vmatpush.bf16.msra.mxu0 %v1704
    %2082 = vmatpush.bf16.msra.mxu0 %v1696
    %2083 = vmatpush.bf16.msra.mxu0 %v1688
    %2084 = vmatpush.bf16.msra.mxu0 %v1680
    %2085 = vmatpush.bf16.msra.mxu0 %v1672
    %2086 = vmatmul.bf16.gmra.mxu0 %v1152
    %v2087 = vpop.f32.mrf.mxu0
    %v2088 = vadd.f32 0.0, %v2087
    %v2089 = vpop.f32.mrf.mxu0
    %2090 = vdwg.mxu0
    %2091 = vmatpush.bf16.msra.mxu0 %v1792
    %2092 = vmatpush.bf16.msra.mxu0 %v1784
    %2093 = vmatpush.bf16.msra.mxu0 %v1776
    %2094 = vmatpush.bf16.msra.mxu0 %v1768
    %2095 = vmatpush.bf16.msra.mxu0 %v1760
    %2096 = vmatpush.bf16.msra.mxu0 %v1752
    %2097 = vmatpush.bf16.msra.mxu0 %v1744
    %2098 = vmatpush.bf16.msra.mxu0 %v1736
    %2099 = vmatmul.bf16.gmra.mxu0 %v1153
    %v2100 = vpop.f32.mrf.mxu0
    %v2101 = vadd.f32 %v2088, %v2100
    %v2102 = vpop.f32.mrf.mxu0
    %2103 = vdwg.mxu0
    %2104 = vmatpush.bf16.msra.mxu0 %v1729
    %2105 = vmatpush.bf16.msra.mxu0 %v1721
    %2106 = vmatpush.bf16.msra.mxu0 %v1713
    %2107 = vmatpush.bf16.msra.mxu0 %v1705
    %2108 = vmatpush.bf16.msra.mxu0 %v1697
    %2109 = vmatpush.bf16.msra.mxu0 %v1689
    %2110 = vmatpush.bf16.msra.mxu0 %v1681
    %2111 = vmatpush.bf16.msra.mxu0 %v1673
    %2112 = vmatmul.bf16.gmra.mxu0 %v1152
    %v2113 = vpop.f32.mrf.mxu0
    %v2114 = vadd.f32 0.0, %v2113
    %v2115 = vpop.f32.mrf.mxu0
    %2116 = vdwg.mxu0
    %2117 = vmatpush.bf16.msra.mxu0 %v1793
    %2118 = vmatpush.bf16.msra.mxu0 %v1785
    %2119 = vmatpush.bf16.msra.mxu0 %v1777
    %2120 = vmatpush.bf16.msra.mxu0 %v1769
    %2121 = vmatpush.bf16.msra.mxu0 %v1761
    %2122 = vmatpush.bf16.msra.mxu0 %v1753
    %2123 = vmatpush.bf16.msra.mxu0 %v1745
    %2124 = vmatpush.bf16.msra.mxu0 %v1737
    %2125 = vmatmul.bf16.gmra.mxu0 %v1153
    %v2126 = vpop.f32.mrf.mxu0
    %v2127 = vadd.f32 %v2114, %v2126
    %v2128 = vpop.f32.mrf.mxu0
    %2129 = vdwg.mxu0
    %v2138 = vrot.slane %v1971, 6
    %v2139 = vrot.slane %v1997, 4
    %v2140 = vrot.slane %v2023, 2
    %v2141 = vrot.slane %v2075, 6
    %v2142 = vrot.slane %v2101, 4
    %v2143 = vrot.slane %v2127, 2
    %vm2144 = vcmask 1041408
    %v2145 = vsel %vm2144, %v1945, %v2138
    %vm2146 = vcmask 1045508
    %v2147 = vsel %vm2146, %v2139, %v2140
    %vm2148 = vcmask 1043456
    %v2149 = vsel %vm2148, %v2145, %v2147
    %v2150 = vsel %vm2144, %v2049, %v2141
    %v2151 = vsel %vm2146, %v2142, %v2143
    %v2152 = vsel %vm2148, %v2150, %v2151
    %v2155 = vadd.f32 %v1143, %v2149
    %v2156 = vadd.f32 %v1144, %v2152
    %v2157 = vxor.u32 %v2155, 2147483648
    %v2158 = vmul.f32 %v2157, 1.442695
    %v2159 = vpow.pop %v2158
    %v2160 = vadd.f32 %v2159, 1.0
    %v2161 = vrcp.pop %v2160
    %v2162 = vmul.f32 %v2160, %v2161
    %v2163 = vsub.f32 1.0, %v2162
    %v2164 = vmul.f32 %v2161, %v2163
    %v2165 = vadd.f32 %v2161, %v2164
    %vm2166 = vweird.f32 %v2160
    %vm2167 = vweird.f32 %v2161
    %vm2168 = vmor %vm2166, %vm2167
    %v2169 = vsel %vm2168, %v2161, %v2165
    %v2170 = vand.u32 2147483647, %v2160
    %vm2171 = vcmp.eq.f32.partialorder %v2170, 8.507059e+37
    %v2172 = vand.u32 %v2160, 2147483648
    %v2173 = vor.u32 1.1754944e-38, %v2172
    %v2174 = vsel %vm2171, %v2173, %v2169
    %v2175 = vmul.f32 1.0, %v2174
    %v2177 = vrot.slane %v2155, 4
    %v2179 = vxor.u32 %v2177, 2147483648
    %v2180 = vmul.f32 %v2179, 1.442695
    %v2181 = vpow.pop %v2180
    %v2182 = vadd.f32 %v2181, 1.0
    %v2183 = vrcp.pop %v2182
    %v2184 = vmul.f32 %v2182, %v2183
    %v2185 = vsub.f32 1.0, %v2184
    %v2186 = vmul.f32 %v2183, %v2185
    %v2187 = vadd.f32 %v2183, %v2186
    %vm2188 = vweird.f32 %v2182
    %vm2189 = vweird.f32 %v2183
    %vm2190 = vmor %vm2188, %vm2189
    %v2191 = vsel %vm2190, %v2183, %v2187
    %v2192 = vand.u32 2147483647, %v2182
    %vm2193 = vcmp.eq.f32.partialorder %v2192, 8.507059e+37
    %v2194 = vand.u32 %v2182, 2147483648
    %v2195 = vor.u32 1.1754944e-38, %v2194
    %v2196 = vsel %vm2193, %v2195, %v2191
    %v2197 = vmul.f32 1.0, %v2196
    %v2198 = vtanh.pop %v2156
    %v2200 = vrot.slane %v2156, 4
    %v2202 = vxor.u32 %v2200, 2147483648
    %v2203 = vmul.f32 %v2202, 1.442695
    %v2204 = vpow.pop %v2203
    %v2205 = vadd.f32 %v2204, 1.0
    %v2206 = vrcp.pop %v2205
    %v2207 = vmul.f32 %v2205, %v2206
    %v2208 = vsub.f32 1.0, %v2207
    %v2209 = vmul.f32 %v2206, %v2208
    %v2210 = vadd.f32 %v2206, %v2209
    %vm2211 = vweird.f32 %v2205
    %vm2212 = vweird.f32 %v2206
    %vm2213 = vmor %vm2211, %vm2212
    %v2214 = vsel %vm2213, %v2206, %v2210
    %v2215 = vand.u32 2147483647, %v2205
    %vm2216 = vcmp.eq.f32.partialorder %v2215, 8.507059e+37
    %v2217 = vand.u32 %v2205, 2147483648
    %v2218 = vor.u32 1.1754944e-38, %v2217
    %v2219 = vsel %vm2216, %v2218, %v2214
    %v2220 = vmul.f32 1.0, %v2219
    %v2221 = vld [vmem:[#allocation3] sm:$0xf]
    %v2222 = vmul.f32 %v2197, %v2221
    %v2223 = vmul.f32 %v2175, %v2198
    %v2224 = vadd.f32 %v2222, %v2223
    %2225 = vst [vmem:[#allocation3] sm:$0xf] %v2224
    %v2226 = vld [vmem:[#allocation3] sm:$0xf]
    %v2227 = vtanh.pop %v2226
    %v2228 = vmul.f32 %v2220, %v2227
    %2229 = vst [vmem:[#allocation2] sm:$0xf] %v2228
    %v2230 = vld [vmem:[#allocation2] sm:$0xf]
    %s2231 = smul.u32 %s1139, 2
    %s2232 = smul.addr %s2231, 2
    %s2233 = scalar_lea.vmem [#allocation5], %s2232
    %2234 = vst [vmem:[%s2233] sm:$0xf] %v2230
  $region41: #{detection_net_forward.171} parent=0 // loop_footer
    %s1138 = sadd.s32 1, %s1134
  $region42: #{detection_net_forward.171} parent=0 // loop_footer_branch
    %1133 = sbr.rel target = $region38
  $region43: #{detection_net_forward.171} parent=0 // loop_exit
    _
  %v2235 = vld [vmem:[#allocation4] sm:$0xf]
  %v2236 = vld [vmem:[#allocation4 + $0x4] sm:$0xf]
  %v2237 = vld [vmem:[#allocation4 + $0x8] sm:$0xf]
  %v2238 = vld [vmem:[#allocation4 + $0xc] sm:$0xf]
  %v2239 = vld [vmem:[#allocation4 + $0x10] sm:$0xf]
  %v2240 = vld [vmem:[#allocation4 + $0x14] sm:$0xf]
  %v2241 = vld [vmem:[#allocation4 + $0x18] sm:$0xf]
  %v2242 = vld [vmem:[#allocation4 + $0x1c] sm:$0xf]
  %v2243 = vld [vmem:[#allocation4 + $0x20] sm:$0xf]
  %v2244 = vld [vmem:[#allocation4 + $0x24] sm:$0xf]
  %v2245 = vld [vmem:[#allocation4 + $0x28] sm:$0xf]
  %v2246 = vld [vmem:[#allocation4 + $0x2c] sm:$0xf]
  %v2247 = vld [vmem:[#allocation4 + $0x30] sm:$0xf]
  %v2248 = vld [vmem:[#allocation4 + $0x34] sm:$0xf]
  %v2249 = vld [vmem:[#allocation4 + $0x38] sm:$0xf]
  %v2250 = vld [vmem:[#allocation4 + $0x3c] sm:$0xf]
  %v2251 = vld [vmem:[#allocation4 + $0x40] sm:$0xf]
  %v2252 = vld [vmem:[#allocation4 + $0x44] sm:$0xf]
  %v2253 = vld [vmem:[#allocation4 + $0x48] sm:$0xf]
  %v2254 = vld [vmem:[#allocation4 + $0x4c] sm:$0xf]
  %v2255 = vld [vmem:[#allocation4 + $0x50] sm:$0xf]
  %v2256 = vld [vmem:[#allocation4 + $0x54] sm:$0xf]
  %v2257 = vld [vmem:[#allocation4 + $0x58] sm:$0xf]
  %v2258 = vld [vmem:[#allocation4 + $0x5c] sm:$0xf]
  %v2259 = vld [vmem:[#allocation4 + $0x60] sm:$0xf]
  %v2260 = vld [vmem:[#allocation4 + $0x64] sm:$0xf]
  %v2261 = vld [vmem:[#allocation4 + $0x68] sm:$0xf]
  %v2262 = vld [vmem:[#allocation4 + $0x6c] sm:$0xf]
  %v2263 = vld [vmem:[#allocation4 + $0x70] sm:$0xf]
  %v2264 = vld [vmem:[#allocation4 + $0x74] sm:$0xf]
  %v2265 = vld [vmem:[#allocation4 + $0x78] sm:$0xf]
  %v2266 = vld [vmem:[#allocation4 + $0x7c] sm:$0xf]
  %v2267 = vld [vmem:[#allocation4 + $0x80] sm:$0xf]
  %v2268 = vld [vmem:[#allocation4 + $0x84] sm:$0xf]
  %v2269 = vld [vmem:[#allocation4 + $0x88] sm:$0xf]
  %v2270 = vld [vmem:[%s4] sm:$0x3]
  %v2272 = vperm.slane %v2270, 0
  %v2273 = vperm.slane %v2270, 1
  %v2274 = vrot.slane %v2273, 6
  %vm2275 = vcmask 1041408
  %v2276 = vsel %vm2275, %v2272, %v2274
  %v2278 = vmul.f32 %v2235, %v2276
  %v2279 = vmul.f32 %v2236, %v2276
  %v2280 = vmul.f32 %v2237, %v2276
  %v2281 = vmul.f32 %v2238, %v2276
  %v2282 = vmul.f32 %v2239, %v2276
  %v2283 = vmul.f32 %v2240, %v2276
  %v2284 = vmul.f32 %v2241, %v2276
  %v2285 = vmul.f32 %v2242, %v2276
  %v2286 = vmul.f32 %v2243, %v2276
  %v2287 = vmul.f32 %v2244, %v2276
  %v2288 = vmul.f32 %v2245, %v2276
  %v2289 = vmul.f32 %v2246, %v2276
  %v2290 = vmul.f32 %v2247, %v2276
  %v2291 = vmul.f32 %v2248, %v2276
  %v2292 = vmul.f32 %v2249, %v2276
  %v2293 = vmul.f32 %v2250, %v2276
  %v2294 = vmul.f32 %v2251, %v2276
  %v2295 = vmul.f32 %v2252, %v2276
  %v2296 = vmul.f32 %v2253, %v2276
  %v2297 = vmul.f32 %v2254, %v2276
  %v2298 = vmul.f32 %v2255, %v2276
  %v2299 = vmul.f32 %v2256, %v2276
  %v2300 = vmul.f32 %v2257, %v2276
  %v2301 = vmul.f32 %v2258, %v2276
  %v2302 = vmul.f32 %v2259, %v2276
  %v2303 = vmul.f32 %v2260, %v2276
  %v2304 = vmul.f32 %v2261, %v2276
  %v2305 = vmul.f32 %v2262, %v2276
  %v2306 = vmul.f32 %v2263, %v2276
  %v2307 = vmul.f32 %v2264, %v2276
  %v2308 = vmul.f32 %v2265, %v2276
  %v2309 = vmul.f32 %v2266, %v2276
  %v2310 = vmul.f32 %v2267, %v2276
  %v2311 = vmul.f32 %v2268, %v2276
  %v2312 = vmul.f32 %v2269, %v2276
  %2348 = vst [vmem:[#allocation1] ss:$4 sm:$0xff] %v2278
  %v2349 = vld.sshfl [vmem:[#allocation1] sm:$0xff pattern:$0x73625140]
  %v2350 = vld.sshfl [vmem:[#allocation1 + $0x8] sm:$0xff pattern:$0x73625140]
  %s2351 = scalar_lea.vmem [#allocation1], 32
  %2352 = vst [vmem:[%s2351] ss:$4 sm:$0xff] %v2279
  %v2353 = vld.sshfl [vmem:[#allocation1 + $0x20] sm:$0xff pattern:$0x73625140]
  %v2354 = vld.sshfl [vmem:[#allocation1 + $0x28] sm:$0xff pattern:$0x73625140]
  %2355 = vst [vmem:[#allocation1] ss:$4 sm:$0xff] %v2280
  %v2356 = vld.sshfl [vmem:[#allocation1] sm:$0xff pattern:$0x73625140]
  %v2357 = vld.sshfl [vmem:[#allocation1 + $0x8] sm:$0xff pattern:$0x73625140]
  %2358 = vst [vmem:[%s2351] ss:$4 sm:$0xff] %v2281
  %v2359 = vld.sshfl [vmem:[#allocation1 + $0x20] sm:$0xff pattern:$0x73625140]
  %v2360 = vld.sshfl [vmem:[#allocation1 + $0x28] sm:$0xff pattern:$0x73625140]
  %2361 = vst [vmem:[#allocation1] ss:$4 sm:$0xff] %v2282
  %v2362 = vld.sshfl [vmem:[#allocation1] sm:$0xff pattern:$0x73625140]
  %v2363 = vld.sshfl [vmem:[#allocation1 + $0x8] sm:$0xff pattern:$0x73625140]
  %2364 = vst [vmem:[%s2351] ss:$4 sm:$0xff] %v2283
  %v2365 = vld.sshfl [vmem:[#allocation1 + $0x20] sm:$0xff pattern:$0x73625140]
  %v2366 = vld.sshfl [vmem:[#allocation1 + $0x28] sm:$0xff pattern:$0x73625140]
  %2367 = vst [vmem:[#allocation1] ss:$4 sm:$0xff] %v2284
  %v2368 = vld.sshfl [vmem:[#allocation1] sm:$0xff pattern:$0x73625140]
  %v2369 = vld.sshfl [vmem:[#allocation1 + $0x8] sm:$0xff pattern:$0x73625140]
  %2370 = vst [vmem:[%s2351] ss:$4 sm:$0xff] %v2285
  %v2371 = vld.sshfl [vmem:[#allocation1 + $0x20] sm:$0xff pattern:$0x73625140]
  %v2372 = vld.sshfl [vmem:[#allocation1 + $0x28] sm:$0xff pattern:$0x73625140]
  %2373 = vst [vmem:[#allocation1] ss:$4 sm:$0xff] %v2286
  %v2374 = vld.sshfl [vmem:[#allocation1] sm:$0xff pattern:$0x73625140]
  %v2375 = vld.sshfl [vmem:[#allocation1 + $0x8] sm:$0xff pattern:$0x73625140]
  %2376 = vst [vmem:[%s2351] ss:$4 sm:$0xff] %v2287
  %v2377 = vld.sshfl [vmem:[#allocation1 + $0x20] sm:$0xff pattern:$0x73625140]
  %v2378 = vld.sshfl [vmem:[#allocation1 + $0x28] sm:$0xff pattern:$0x73625140]
  %2379 = vst [vmem:[#allocation1] ss:$4 sm:$0xff] %v2288
  %v2380 = vld.sshfl [vmem:[#allocation1] sm:$0xff pattern:$0x73625140]
  %v2381 = vld.sshfl [vmem:[#allocation1 + $0x8] sm:$0xff pattern:$0x73625140]
  %2382 = vst [vmem:[%s2351] ss:$4 sm:$0xff] %v2289
  %v2383 = vld.sshfl [vmem:[#allocation1 + $0x20] sm:$0xff pattern:$0x73625140]
  %v2384 = vld.sshfl [vmem:[#allocation1 + $0x28] sm:$0xff pattern:$0x73625140]
  %2385 = vst [vmem:[#allocation1] ss:$4 sm:$0xff] %v2290
  %v2386 = vld.sshfl [vmem:[#allocation1] sm:$0xff pattern:$0x73625140]
  %v2387 = vld.sshfl [vmem:[#allocation1 + $0x8] sm:$0xff pattern:$0x73625140]
  %2388 = vst [vmem:[%s2351] ss:$4 sm:$0xff] %v2291
  %v2389 = vld.sshfl [vmem:[#allocation1 + $0x20] sm:$0xff pattern:$0x73625140]
  %v2390 = vld.sshfl [vmem:[#allocation1 + $0x28] sm:$0xff pattern:$0x73625140]
  %2391 = vst [vmem:[#allocation1] ss:$4 sm:$0xff] %v2292
  %v2392 = vld.sshfl [vmem:[#allocation1] sm:$0xff pattern:$0x73625140]
  %v2393 = vld.sshfl [vmem:[#allocation1 + $0x8] sm:$0xff pattern:$0x73625140]
  %2394 = vst [vmem:[%s2351] ss:$4 sm:$0xff] %v2293
  %v2395 = vld.sshfl [vmem:[#allocation1 + $0x20] sm:$0xff pattern:$0x73625140]
  %v2396 = vld.sshfl [vmem:[#allocation1 + $0x28] sm:$0xff pattern:$0x73625140]
  %2397 = vst [vmem:[#allocation1] ss:$4 sm:$0xff] %v2294
  %v2398 = vld.sshfl [vmem:[#allocation1] sm:$0xff pattern:$0x73625140]
  %v2399 = vld.sshfl [vmem:[#allocation1 + $0x8] sm:$0xff pattern:$0x73625140]
  %2400 = vst [vmem:[%s2351] ss:$4 sm:$0xff] %v2295
  %v2401 = vld.sshfl [vmem:[#allocation1 + $0x20] sm:$0xff pattern:$0x73625140]
  %v2402 = vld.sshfl [vmem:[#allocation1 + $0x28] sm:$0xff pattern:$0x73625140]
  %2403 = vst [vmem:[#allocation1] ss:$4 sm:$0xff] %v2296
  %v2404 = vld.sshfl [vmem:[#allocation1] sm:$0xff pattern:$0x73625140]
  %v2405 = vld.sshfl [vmem:[#allocation1 + $0x8] sm:$0xff pattern:$0x73625140]
  %2406 = vst [vmem:[%s2351] ss:$4 sm:$0xff] %v2297
  %v2407 = vld.sshfl [vmem:[#allocation1 + $0x20] sm:$0xff pattern:$0x73625140]
  %v2408 = vld.sshfl [vmem:[#allocation1 + $0x28] sm:$0xff pattern:$0x73625140]
  %2409 = vst [vmem:[#allocation1] ss:$4 sm:$0xff] %v2298
  %v2410 = vld.sshfl [vmem:[#allocation1] sm:$0xff pattern:$0x73625140]
  %v2411 = vld.sshfl [vmem:[#allocation1 + $0x8] sm:$0xff pattern:$0x73625140]
  %2412 = vst [vmem:[%s2351] ss:$4 sm:$0xff] %v2299
  %v2413 = vld.sshfl [vmem:[#allocation1 + $0x20] sm:$0xff pattern:$0x73625140]
  %v2414 = vld.sshfl [vmem:[#allocation1 + $0x28] sm:$0xff pattern:$0x73625140]
  %2415 = vst [vmem:[#allocation1] ss:$4 sm:$0xff] %v2300
  %v2416 = vld.sshfl [vmem:[#allocation1] sm:$0xff pattern:$0x73625140]
  %v2417 = vld.sshfl [vmem:[#allocation1 + $0x8] sm:$0xff pattern:$0x73625140]
  %2418 = vst [vmem:[%s2351] ss:$4 sm:$0xff] %v2301
  %v2419 = vld.sshfl [vmem:[#allocation1 + $0x20] sm:$0xff pattern:$0x73625140]
  %v2420 = vld.sshfl [vmem:[#allocation1 + $0x28] sm:$0xff pattern:$0x73625140]
  %2421 = vst [vmem:[#allocation1] ss:$4 sm:$0xff] %v2302
  %v2422 = vld.sshfl [vmem:[#allocation1] sm:$0xff pattern:$0x73625140]
  %v2423 = vld.sshfl [vmem:[#allocation1 + $0x8] sm:$0xff pattern:$0x73625140]
  %2424 = vst [vmem:[%s2351] ss:$4 sm:$0xff] %v2303
  %v2425 = vld.sshfl [vmem:[#allocation1 + $0x20] sm:$0xff pattern:$0x73625140]
  %v2426 = vld.sshfl [vmem:[#allocation1 + $0x28] sm:$0xff pattern:$0x73625140]
  %2427 = vst [vmem:[#allocation1] ss:$4 sm:$0xff] %v2304
  %v2428 = vld.sshfl [vmem:[#allocation1] sm:$0xff pattern:$0x73625140]
  %v2429 = vld.sshfl [vmem:[#allocation1 + $0x8] sm:$0xff pattern:$0x73625140]
  %2430 = vst [vmem:[%s2351] ss:$4 sm:$0xff] %v2305
  %v2431 = vld.sshfl [vmem:[#allocation1 + $0x20] sm:$0xff pattern:$0x73625140]
  %v2432 = vld.sshfl [vmem:[#allocation1 + $0x28] sm:$0xff pattern:$0x73625140]
  %2433 = vst [vmem:[#allocation1] ss:$4 sm:$0xff] %v2306
  %v2434 = vld.sshfl [vmem:[#allocation1] sm:$0xff pattern:$0x73625140]
  %v2435 = vld.sshfl [vmem:[#allocation1 + $0x8] sm:$0xff pattern:$0x73625140]
  %2436 = vst [vmem:[%s2351] ss:$4 sm:$0xff] %v2307
  %v2437 = vld.sshfl [vmem:[#allocation1 + $0x20] sm:$0xff pattern:$0x73625140]
  %v2438 = vld.sshfl [vmem:[#allocation1 + $0x28] sm:$0xff pattern:$0x73625140]
  %2439 = vst [vmem:[#allocation1] ss:$4 sm:$0xff] %v2308
  %v2440 = vld.sshfl [vmem:[#allocation1] sm:$0xff pattern:$0x73625140]
  %v2441 = vld.sshfl [vmem:[#allocation1 + $0x8] sm:$0xff pattern:$0x73625140]
  %2442 = vst [vmem:[%s2351] ss:$4 sm:$0xff] %v2309
  %v2443 = vld.sshfl [vmem:[#allocation1 + $0x20] sm:$0xff pattern:$0x73625140]
  %v2444 = vld.sshfl [vmem:[#allocation1 + $0x28] sm:$0xff pattern:$0x73625140]
  %2445 = vst [vmem:[#allocation1] ss:$4 sm:$0xff] %v2310
  %v2446 = vld.sshfl [vmem:[#allocation1] sm:$0xff pattern:$0x73625140]
  %v2447 = vld.sshfl [vmem:[#allocation1 + $0x8] sm:$0xff pattern:$0x73625140]
  %2448 = vst [vmem:[%s2351] ss:$4 sm:$0xff] %v2311
  %v2449 = vld.sshfl [vmem:[#allocation1 + $0x20] sm:$0xff pattern:$0x73625140]
  %v2450 = vld.sshfl [vmem:[#allocation1 + $0x28] sm:$0xff pattern:$0x73625140]
  %2451 = vst [vmem:[#allocation1] ss:$4 sm:$0xff] %v2312
  %v2452 = vld.sshfl [vmem:[#allocation1] sm:$0xff pattern:$0x73625140]
  %v2453 = vld.sshfl [vmem:[#allocation1 + $0x8] sm:$0xff pattern:$0x73625140]
  %v2524 = vsel %vm2275, %v2349, 0.0
  %v2525 = vsel %vm2275, %v2350, 0.0
  %v2526 = vadd.f32 %v2524, %v2525
  %2527 = vadd.xlane.f32.xlu0 %v2526
  %v2528 = vpop.xlane.xlu0 %2527
  %v2529 = vsel %vm2275, %v2353, 0.0
  %v2530 = vsel %vm2275, %v2354, 0.0
  %v2531 = vadd.f32 %v2529, %v2530
  %2532 = vadd.xlane.f32.xlu0 %v2531
  %v2533 = vpop.xlane.xlu0 %2532
  %v2534 = vsel %vm2275, %v2356, 0.0
  %v2535 = vsel %vm2275, %v2357, 0.0
  %v2536 = vadd.f32 %v2534, %v2535
  %2537 = vadd.xlane.f32.xlu0 %v2536
  %v2538 = vpop.xlane.xlu0 %2537
  %v2539 = vsel %vm2275, %v2359, 0.0
  %v2540 = vsel %vm2275, %v2360, 0.0
  %v2541 = vadd.f32 %v2539, %v2540
  %2542 = vadd.xlane.f32.xlu0 %v2541
  %v2543 = vpop.xlane.xlu0 %2542
  %v2544 = vsel %vm2275, %v2362, 0.0
  %v2545 = vsel %vm2275, %v2363, 0.0
  %v2546 = vadd.f32 %v2544, %v2545
  %2547 = vadd.xlane.f32.xlu0 %v2546
  %v2548 = vpop.xlane.xlu0 %2547
  %v2549 = vsel %vm2275, %v2365, 0.0
  %v2550 = vsel %vm2275, %v2366, 0.0
  %v2551 = vadd.f32 %v2549, %v2550
  %2552 = vadd.xlane.f32.xlu0 %v2551
  %v2553 = vpop.xlane.xlu0 %2552
  %v2554 = vsel %vm2275, %v2368, 0.0
  %v2555 = vsel %vm2275, %v2369, 0.0
  %v2556 = vadd.f32 %v2554, %v2555
  %2557 = vadd.xlane.f32.xlu0 %v2556
  %v2558 = vpop.xlane.xlu0 %2557
  %v2559 = vsel %vm2275, %v2371, 0.0
  %v2560 = vsel %vm2275, %v2372, 0.0
  %v2561 = vadd.f32 %v2559, %v2560
  %2562 = vadd.xlane.f32.xlu0 %v2561
  %v2563 = vpop.xlane.xlu0 %2562
  %v2564 = vsel %vm2275, %v2374, 0.0
  %v2565 = vsel %vm2275, %v2375, 0.0
  %v2566 = vadd.f32 %v2564, %v2565
  %2567 = vadd.xlane.f32.xlu0 %v2566
  %v2568 = vpop.xlane.xlu0 %2567
  %v2569 = vsel %vm2275, %v2377, 0.0
  %v2570 = vsel %vm2275, %v2378, 0.0
  %v2571 = vadd.f32 %v2569, %v2570
  %2572 = vadd.xlane.f32.xlu0 %v2571
  %v2573 = vpop.xlane.xlu0 %2572
  %v2574 = vsel %vm2275, %v2380, 0.0
  %v2575 = vsel %vm2275, %v2381, 0.0
  %v2576 = vadd.f32 %v2574, %v2575
  %2577 = vadd.xlane.f32.xlu0 %v2576
  %v2578 = vpop.xlane.xlu0 %2577
  %v2579 = vsel %vm2275, %v2383, 0.0
  %v2580 = vsel %vm2275, %v2384, 0.0
  %v2581 = vadd.f32 %v2579, %v2580
  %2582 = vadd.xlane.f32.xlu0 %v2581
  %v2583 = vpop.xlane.xlu0 %2582
  %v2584 = vsel %vm2275, %v2386, 0.0
  %v2585 = vsel %vm2275, %v2387, 0.0
  %v2586 = vadd.f32 %v2584, %v2585
  %2587 = vadd.xlane.f32.xlu0 %v2586
  %v2588 = vpop.xlane.xlu0 %2587
  %v2589 = vsel %vm2275, %v2389, 0.0
  %v2590 = vsel %vm2275, %v2390, 0.0
  %v2591 = vadd.f32 %v2589, %v2590
  %2592 = vadd.xlane.f32.xlu0 %v2591
  %v2593 = vpop.xlane.xlu0 %2592
  %v2594 = vsel %vm2275, %v2392, 0.0
  %v2595 = vsel %vm2275, %v2393, 0.0
  %v2596 = vadd.f32 %v2594, %v2595
  %2597 = vadd.xlane.f32.xlu0 %v2596
  %v2598 = vpop.xlane.xlu0 %2597
  %v2599 = vsel %vm2275, %v2395, 0.0
  %v2600 = vsel %vm2275, %v2396, 0.0
  %v2601 = vadd.f32 %v2599, %v2600
  %2602 = vadd.xlane.f32.xlu0 %v2601
  %v2603 = vpop.xlane.xlu0 %2602
  %v2604 = vsel %vm2275, %v2398, 0.0
  %v2605 = vsel %vm2275, %v2399, 0.0
  %v2606 = vadd.f32 %v2604, %v2605
  %2607 = vadd.xlane.f32.xlu0 %v2606
  %v2608 = vpop.xlane.xlu0 %2607
  %v2609 = vsel %vm2275, %v2401, 0.0
  %v2610 = vsel %vm2275, %v2402, 0.0
  %v2611 = vadd.f32 %v2609, %v2610
  %2612 = vadd.xlane.f32.xlu0 %v2611
  %v2613 = vpop.xlane.xlu0 %2612
  %v2614 = vsel %vm2275, %v2404, 0.0
  %v2615 = vsel %vm2275, %v2405, 0.0
  %v2616 = vadd.f32 %v2614, %v2615
  %2617 = vadd.xlane.f32.xlu0 %v2616
  %v2618 = vpop.xlane.xlu0 %2617
  %v2619 = vsel %vm2275, %v2407, 0.0
  %v2620 = vsel %vm2275, %v2408, 0.0
  %v2621 = vadd.f32 %v2619, %v2620
  %2622 = vadd.xlane.f32.xlu0 %v2621
  %v2623 = vpop.xlane.xlu0 %2622
  %v2624 = vsel %vm2275, %v2410, 0.0
  %v2625 = vsel %vm2275, %v2411, 0.0
  %v2626 = vadd.f32 %v2624, %v2625
  %2627 = vadd.xlane.f32.xlu0 %v2626
  %v2628 = vpop.xlane.xlu0 %2627
  %v2629 = vsel %vm2275, %v2413, 0.0
  %v2630 = vsel %vm2275, %v2414, 0.0
  %v2631 = vadd.f32 %v2629, %v2630
  %2632 = vadd.xlane.f32.xlu0 %v2631
  %v2633 = vpop.xlane.xlu0 %2632
  %v2634 = vsel %vm2275, %v2416, 0.0
  %v2635 = vsel %vm2275, %v2417, 0.0
  %v2636 = vadd.f32 %v2634, %v2635
  %2637 = vadd.xlane.f32.xlu0 %v2636
  %v2638 = vpop.xlane.xlu0 %2637
  %v2639 = vsel %vm2275, %v2419, 0.0
  %v2640 = vsel %vm2275, %v2420, 0.0
  %v2641 = vadd.f32 %v2639, %v2640
  %2642 = vadd.xlane.f32.xlu0 %v2641
  %v2643 = vpop.xlane.xlu0 %2642
  %v2644 = vsel %vm2275, %v2422, 0.0
  %v2645 = vsel %vm2275, %v2423, 0.0
  %v2646 = vadd.f32 %v2644, %v2645
  %2647 = vadd.xlane.f32.xlu0 %v2646
  %v2648 = vpop.xlane.xlu0 %2647
  %v2649 = vsel %vm2275, %v2425, 0.0
  %v2650 = vsel %vm2275, %v2426, 0.0
  %v2651 = vadd.f32 %v2649, %v2650
  %2652 = vadd.xlane.f32.xlu0 %v2651
  %v2653 = vpop.xlane.xlu0 %2652
  %v2654 = vsel %vm2275, %v2428, 0.0
  %v2655 = vsel %vm2275, %v2429, 0.0
  %v2656 = vadd.f32 %v2654, %v2655
  %2657 = vadd.xlane.f32.xlu0 %v2656
  %v2658 = vpop.xlane.xlu0 %2657
  %v2659 = vsel %vm2275, %v2431, 0.0
  %v2660 = vsel %vm2275, %v2432, 0.0
  %v2661 = vadd.f32 %v2659, %v2660
  %2662 = vadd.xlane.f32.xlu0 %v2661
  %v2663 = vpop.xlane.xlu0 %2662
  %v2664 = vsel %vm2275, %v2434, 0.0
  %v2665 = vsel %vm2275, %v2435, 0.0
  %v2666 = vadd.f32 %v2664, %v2665
  %2667 = vadd.xlane.f32.xlu0 %v2666
  %v2668 = vpop.xlane.xlu0 %2667
  %v2669 = vsel %vm2275, %v2437, 0.0
  %v2670 = vsel %vm2275, %v2438, 0.0
  %v2671 = vadd.f32 %v2669, %v2670
  %2672 = vadd.xlane.f32.xlu0 %v2671
  %v2673 = vpop.xlane.xlu0 %2672
  %v2674 = vsel %vm2275, %v2440, 0.0
  %v2675 = vsel %vm2275, %v2441, 0.0
  %v2676 = vadd.f32 %v2674, %v2675
  %2677 = vadd.xlane.f32.xlu0 %v2676
  %v2678 = vpop.xlane.xlu0 %2677
  %v2679 = vsel %vm2275, %v2443, 0.0
  %v2680 = vsel %vm2275, %v2444, 0.0
  %v2681 = vadd.f32 %v2679, %v2680
  %2682 = vadd.xlane.f32.xlu0 %v2681
  %v2683 = vpop.xlane.xlu0 %2682
  %v2684 = vsel %vm2275, %v2446, 0.0
  %v2685 = vsel %vm2275, %v2447, 0.0
  %v2686 = vadd.f32 %v2684, %v2685
  %2687 = vadd.xlane.f32.xlu0 %v2686
  %v2688 = vpop.xlane.xlu0 %2687
  %v2689 = vsel %vm2275, %v2449, 0.0
  %v2690 = vsel %vm2275, %v2450, 0.0
  %v2691 = vadd.f32 %v2689, %v2690
  %2692 = vadd.xlane.f32.xlu0 %v2691
  %v2693 = vpop.xlane.xlu0 %2692
  %v2694 = vsel %vm2275, %v2452, 0.0
  %v2695 = vsel %vm2275, %v2453, 0.0
  %v2696 = vadd.f32 %v2694, %v2695
  %2697 = vadd.xlane.f32.xlu0 %v2696
  %v2698 = vpop.xlane.xlu0 %2697
  %v2699 = vld [vmem:[#allocation5] sm:$0xf]
  %v2700 = vld [vmem:[#allocation5 + $0x4] sm:$0xf]
  %v2701 = vld [vmem:[#allocation5 + $0x8] sm:$0xf]
  %v2702 = vld [vmem:[#allocation5 + $0xc] sm:$0xf]
  %v2703 = vld [vmem:[#allocation5 + $0x10] sm:$0xf]
  %v2704 = vld [vmem:[#allocation5 + $0x14] sm:$0xf]
  %v2705 = vld [vmem:[#allocation5 + $0x18] sm:$0xf]
  %v2706 = vld [vmem:[#allocation5 + $0x1c] sm:$0xf]
  %v2707 = vld [vmem:[#allocation5 + $0x20] sm:$0xf]
  %v2708 = vld [vmem:[#allocation5 + $0x24] sm:$0xf]
  %v2709 = vld [vmem:[#allocation5 + $0x28] sm:$0xf]
  %v2710 = vld [vmem:[#allocation5 + $0x2c] sm:$0xf]
  %v2711 = vld [vmem:[#allocation5 + $0x30] sm:$0xf]
  %v2712 = vld [vmem:[#allocation5 + $0x34] sm:$0xf]
  %v2713 = vld [vmem:[#allocation5 + $0x38] sm:$0xf]
  %v2714 = vld [vmem:[#allocation5 + $0x3c] sm:$0xf]
  %v2715 = vld [vmem:[#allocation5 + $0x40] sm:$0xf]
  %v2716 = vld [vmem:[#allocation5 + $0x44] sm:$0xf]
  %v2717 = vld [vmem:[#allocation5 + $0x48] sm:$0xf]
  %v2718 = vld [vmem:[#allocation5 + $0x4c] sm:$0xf]
  %v2719 = vld [vmem:[#allocation5 + $0x50] sm:$0xf]
  %v2720 = vld [vmem:[#allocation5 + $0x54] sm:$0xf]
  %v2721 = vld [vmem:[#allocation5 + $0x58] sm:$0xf]
  %v2722 = vld [vmem:[#allocation5 + $0x5c] sm:$0xf]
  %v2723 = vld [vmem:[#allocation5 + $0x60] sm:$0xf]
  %v2724 = vld [vmem:[#allocation5 + $0x64] sm:$0xf]
  %v2725 = vld [vmem:[#allocation5 + $0x68] sm:$0xf]
  %v2726 = vld [vmem:[#allocation5 + $0x6c] sm:$0xf]
  %v2727 = vld [vmem:[#allocation5 + $0x70] sm:$0xf]
  %v2728 = vld [vmem:[#allocation5 + $0x74] sm:$0xf]
  %v2729 = vld [vmem:[#allocation5 + $0x78] sm:$0xf]
  %v2730 = vld [vmem:[#allocation5 + $0x7c] sm:$0xf]
  %v2731 = vld [vmem:[#allocation5 + $0x80] sm:$0xf]
  %v2732 = vld [vmem:[#allocation5 + $0x84] sm:$0xf]
  %v2733 = vld [vmem:[#allocation5 + $0x88] sm:$0xf]
  %v2734 = vld [vmem:[%s5] sm:$0x3]
  %v2736 = vperm.slane %v2734, 0
  %v2737 = vperm.slane %v2734, 1
  %v2738 = vrot.slane %v2737, 6
  %v2739 = vsel %vm2275, %v2736, %v2738
  %v2741 = vmul.f32 %v2699, %v2739
  %v2742 = vmul.f32 %v2700, %v2739
  %v2743 = vmul.f32 %v2701, %v2739
  %v2744 = vmul.f32 %v2702, %v2739
  %v2745 = vmul.f32 %v2703, %v2739
  %v2746 = vmul.f32 %v2704, %v2739
  %v2747 = vmul.f32 %v2705, %v2739
  %v2748 = vmul.f32 %v2706, %v2739
  %v2749 = vmul.f32 %v2707, %v2739
  %v2750 = vmul.f32 %v2708, %v2739
  %v2751 = vmul.f32 %v2709, %v2739
  %v2752 = vmul.f32 %v2710, %v2739
  %v2753 = vmul.f32 %v2711, %v2739
  %v2754 = vmul.f32 %v2712, %v2739
  %v2755 = vmul.f32 %v2713, %v2739
  %v2756 = vmul.f32 %v2714, %v2739
  %v2757 = vmul.f32 %v2715, %v2739
  %v2758 = vmul.f32 %v2716, %v2739
  %v2759 = vmul.f32 %v2717, %v2739
  %v2760 = vmul.f32 %v2718, %v2739
  %v2761 = vmul.f32 %v2719, %v2739
  %v2762 = vmul.f32 %v2720, %v2739
  %v2763 = vmul.f32 %v2721, %v2739
  %v2764 = vmul.f32 %v2722, %v2739
  %v2765 = vmul.f32 %v2723, %v2739
  %v2766 = vmul.f32 %v2724, %v2739
  %v2767 = vmul.f32 %v2725, %v2739
  %v2768 = vmul.f32 %v2726, %v2739
  %v2769 = vmul.f32 %v2727, %v2739
  %v2770 = vmul.f32 %v2728, %v2739
  %v2771 = vmul.f32 %v2729, %v2739
  %v2772 = vmul.f32 %v2730, %v2739
  %v2773 = vmul.f32 %v2731, %v2739
  %v2774 = vmul.f32 %v2732, %v2739
  %v2775 = vmul.f32 %v2733, %v2739
  %2811 = vst [vmem:[#allocation1] ss:$4 sm:$0xff] %v2741
  %v2812 = vld.sshfl [vmem:[#allocation1] sm:$0xff pattern:$0x73625140]
  %v2813 = vld.sshfl [vmem:[#allocation1 + $0x8] sm:$0xff pattern:$0x73625140]
  %s2814 = scalar_lea.vmem [#allocation1], 32
  %2815 = vst [vmem:[%s2814] ss:$4 sm:$0xff] %v2742
  %v2816 = vld.sshfl [vmem:[#allocation1 + $0x20] sm:$0xff pattern:$0x73625140]
  %v2817 = vld.sshfl [vmem:[#allocation1 + $0x28] sm:$0xff pattern:$0x73625140]
  %2818 = vst [vmem:[#allocation1] ss:$4 sm:$0xff] %v2743
  %v2819 = vld.sshfl [vmem:[#allocation1] sm:$0xff pattern:$0x73625140]
  %v2820 = vld.sshfl [vmem:[#allocation1 + $0x8] sm:$0xff pattern:$0x73625140]
  %2821 = vst [vmem:[%s2814] ss:$4 sm:$0xff] %v2744
  %v2822 = vld.sshfl [vmem:[#allocation1 + $0x20] sm:$0xff pattern:$0x73625140]
  %v2823 = vld.sshfl [vmem:[#allocation1 + $0x28] sm:$0xff pattern:$0x73625140]
  %2824 = vst [vmem:[#allocation1] ss:$4 sm:$0xff] %v2745
  %v2825 = vld.sshfl [vmem:[#allocation1] sm:$0xff pattern:$0x73625140]
  %v2826 = vld.sshfl [vmem:[#allocation1 + $0x8] sm:$0xff pattern:$0x73625140]
  %2827 = vst [vmem:[%s2814] ss:$4 sm:$0xff] %v2746
  %v2828 = vld.sshfl [vmem:[#allocation1 + $0x20] sm:$0xff pattern:$0x73625140]
  %v2829 = vld.sshfl [vmem:[#allocation1 + $0x28] sm:$0xff pattern:$0x73625140]
  %2830 = vst [vmem:[#allocation1] ss:$4 sm:$0xff] %v2747
  %v2831 = vld.sshfl [vmem:[#allocation1] sm:$0xff pattern:$0x73625140]
  %v2832 = vld.sshfl [vmem:[#allocation1 + $0x8] sm:$0xff pattern:$0x73625140]
  %2833 = vst [vmem:[%s2814] ss:$4 sm:$0xff] %v2748
  %v2834 = vld.sshfl [vmem:[#allocation1 + $0x20] sm:$0xff pattern:$0x73625140]
  %v2835 = vld.sshfl [vmem:[#allocation1 + $0x28] sm:$0xff pattern:$0x73625140]
  %2836 = vst [vmem:[#allocation1] ss:$4 sm:$0xff] %v2749
  %v2837 = vld.sshfl [vmem:[#allocation1] sm:$0xff pattern:$0x73625140]
  %v2838 = vld.sshfl [vmem:[#allocation1 + $0x8] sm:$0xff pattern:$0x73625140]
  %2839 = vst [vmem:[%s2814] ss:$4 sm:$0xff] %v2750
  %v2840 = vld.sshfl [vmem:[#allocation1 + $0x20] sm:$0xff pattern:$0x73625140]
  %v2841 = vld.sshfl [vmem:[#allocation1 + $0x28] sm:$0xff pattern:$0x73625140]
  %2842 = vst [vmem:[#allocation1] ss:$4 sm:$0xff] %v2751
  %v2843 = vld.sshfl [vmem:[#allocation1] sm:$0xff pattern:$0x73625140]
  %v2844 = vld.sshfl [vmem:[#allocation1 + $0x8] sm:$0xff pattern:$0x73625140]
  %2845 = vst [vmem:[%s2814] ss:$4 sm:$0xff] %v2752
  %v2846 = vld.sshfl [vmem:[#allocation1 + $0x20] sm:$0xff pattern:$0x73625140]
  %v2847 = vld.sshfl [vmem:[#allocation1 + $0x28] sm:$0xff pattern:$0x73625140]
  %2848 = vst [vmem:[#allocation1] ss:$4 sm:$0xff] %v2753
  %v2849 = vld.sshfl [vmem:[#allocation1] sm:$0xff pattern:$0x73625140]
  %v2850 = vld.sshfl [vmem:[#allocation1 + $0x8] sm:$0xff pattern:$0x73625140]
  %2851 = vst [vmem:[%s2814] ss:$4 sm:$0xff] %v2754
  %v2852 = vld.sshfl [vmem:[#allocation1 + $0x20] sm:$0xff pattern:$0x73625140]
  %v2853 = vld.sshfl [vmem:[#allocation1 + $0x28] sm:$0xff pattern:$0x73625140]
  %2854 = vst [vmem:[#allocation1] ss:$4 sm:$0xff] %v2755
  %v2855 = vld.sshfl [vmem:[#allocation1] sm:$0xff pattern:$0x73625140]
  %v2856 = vld.sshfl [vmem:[#allocation1 + $0x8] sm:$0xff pattern:$0x73625140]
  %2857 = vst [vmem:[%s2814] ss:$4 sm:$0xff] %v2756
  %v2858 = vld.sshfl [vmem:[#allocation1 + $0x20] sm:$0xff pattern:$0x73625140]
  %v2859 = vld.sshfl [vmem:[#allocation1 + $0x28] sm:$0xff pattern:$0x73625140]
  %2860 = vst [vmem:[#allocation1] ss:$4 sm:$0xff] %v2757
  %v2861 = vld.sshfl [vmem:[#allocation1] sm:$0xff pattern:$0x73625140]
  %v2862 = vld.sshfl [vmem:[#allocation1 + $0x8] sm:$0xff pattern:$0x73625140]
  %2863 = vst [vmem:[%s2814] ss:$4 sm:$0xff] %v2758
  %v2864 = vld.sshfl [vmem:[#allocation1 + $0x20] sm:$0xff pattern:$0x73625140]
  %v2865 = vld.sshfl [vmem:[#allocation1 + $0x28] sm:$0xff pattern:$0x73625140]
  %2866 = vst [vmem:[#allocation1] ss:$4 sm:$0xff] %v2759
  %v2867 = vld.sshfl [vmem:[#allocation1] sm:$0xff pattern:$0x73625140]
  %v2868 = vld.sshfl [vmem:[#allocation1 + $0x8] sm:$0xff pattern:$0x73625140]
  %2869 = vst [vmem:[%s2814] ss:$4 sm:$0xff] %v2760
  %v2870 = vld.sshfl [vmem:[#allocation1 + $0x20] sm:$0xff pattern:$0x73625140]
  %v2871 = vld.sshfl [vmem:[#allocation1 + $0x28] sm:$0xff pattern:$0x73625140]
  %2872 = vst [vmem:[#allocation1] ss:$4 sm:$0xff] %v2761
  %v2873 = vld.sshfl [vmem:[#allocation1] sm:$0xff pattern:$0x73625140]
  %v2874 = vld.sshfl [vmem:[#allocation1 + $0x8] sm:$0xff pattern:$0x73625140]
  %2875 = vst [vmem:[%s2814] ss:$4 sm:$0xff] %v2762
  %v2876 = vld.sshfl [vmem:[#allocation1 + $0x20] sm:$0xff pattern:$0x73625140]
  %v2877 = vld.sshfl [vmem:[#allocation1 + $0x28] sm:$0xff pattern:$0x73625140]
  %2878 = vst [vmem:[#allocation1] ss:$4 sm:$0xff] %v2763
  %v2879 = vld.sshfl [vmem:[#allocation1] sm:$0xff pattern:$0x73625140]
  %v2880 = vld.sshfl [vmem:[#allocation1 + $0x8] sm:$0xff pattern:$0x73625140]
  %2881 = vst [vmem:[%s2814] ss:$4 sm:$0xff] %v2764
  %v2882 = vld.sshfl [vmem:[#allocation1 + $0x20] sm:$0xff pattern:$0x73625140]
  %v2883 = vld.sshfl [vmem:[#allocation1 + $0x28] sm:$0xff pattern:$0x73625140]
  %2884 = vst [vmem:[#allocation1] ss:$4 sm:$0xff] %v2765
  %v2885 = vld.sshfl [vmem:[#allocation1] sm:$0xff pattern:$0x73625140]
  %v2886 = vld.sshfl [vmem:[#allocation1 + $0x8] sm:$0xff pattern:$0x73625140]
  %2887 = vst [vmem:[%s2814] ss:$4 sm:$0xff] %v2766
  %v2888 = vld.sshfl [vmem:[#allocation1 + $0x20] sm:$0xff pattern:$0x73625140]
  %v2889 = vld.sshfl [vmem:[#allocation1 + $0x28] sm:$0xff pattern:$0x73625140]
  %2890 = vst [vmem:[#allocation1] ss:$4 sm:$0xff] %v2767
  %v2891 = vld.sshfl [vmem:[#allocation1] sm:$0xff pattern:$0x73625140]
  %v2892 = vld.sshfl [vmem:[#allocation1 + $0x8] sm:$0xff pattern:$0x73625140]
  %2893 = vst [vmem:[%s2814] ss:$4 sm:$0xff] %v2768
  %v2894 = vld.sshfl [vmem:[#allocation1 + $0x20] sm:$0xff pattern:$0x73625140]
  %v2895 = vld.sshfl [vmem:[#allocation1 + $0x28] sm:$0xff pattern:$0x73625140]
  %2896 = vst [vmem:[#allocation1] ss:$4 sm:$0xff] %v2769
  %v2897 = vld.sshfl [vmem:[#allocation1] sm:$0xff pattern:$0x73625140]
  %v2898 = vld.sshfl [vmem:[#allocation1 + $0x8] sm:$0xff pattern:$0x73625140]
  %2899 = vst [vmem:[%s2814] ss:$4 sm:$0xff] %v2770
  %v2900 = vld.sshfl [vmem:[#allocation1 + $0x20] sm:$0xff pattern:$0x73625140]
  %v2901 = vld.sshfl [vmem:[#allocation1 + $0x28] sm:$0xff pattern:$0x73625140]
  %2902 = vst [vmem:[#allocation1] ss:$4 sm:$0xff] %v2771
  %v2903 = vld.sshfl [vmem:[#allocation1] sm:$0xff pattern:$0x73625140]
  %v2904 = vld.sshfl [vmem:[#allocation1 + $0x8] sm:$0xff pattern:$0x73625140]
  %2905 = vst [vmem:[%s2814] ss:$4 sm:$0xff] %v2772
  %v2906 = vld.sshfl [vmem:[#allocation1 + $0x20] sm:$0xff pattern:$0x73625140]
  %v2907 = vld.sshfl [vmem:[#allocation1 + $0x28] sm:$0xff pattern:$0x73625140]
  %2908 = vst [vmem:[#allocation1] ss:$4 sm:$0xff] %v2773
  %v2909 = vld.sshfl [vmem:[#allocation1] sm:$0xff pattern:$0x73625140]
  %v2910 = vld.sshfl [vmem:[#allocation1 + $0x8] sm:$0xff pattern:$0x73625140]
  %2911 = vst [vmem:[%s2814] ss:$4 sm:$0xff] %v2774
  %v2912 = vld.sshfl [vmem:[#allocation1 + $0x20] sm:$0xff pattern:$0x73625140]
  %v2913 = vld.sshfl [vmem:[#allocation1 + $0x28] sm:$0xff pattern:$0x73625140]
  %2914 = vst [vmem:[#allocation1] ss:$4 sm:$0xff] %v2775
  %v2915 = vld.sshfl [vmem:[#allocation1] sm:$0xff pattern:$0x73625140]
  %v2916 = vld.sshfl [vmem:[#allocation1 + $0x8] sm:$0xff pattern:$0x73625140]
  %v2987 = vsel %vm2275, %v2812, 0.0
  %v2988 = vsel %vm2275, %v2813, 0.0
  %v2989 = vadd.f32 %v2987, %v2988
  %2990 = vadd.xlane.f32.xlu0 %v2989
  %v2991 = vpop.xlane.xlu0 %2990
  %v2992 = vsel %vm2275, %v2816, 0.0
  %v2993 = vsel %vm2275, %v2817, 0.0
  %v2994 = vadd.f32 %v2992, %v2993
  %2995 = vadd.xlane.f32.xlu0 %v2994
  %v2996 = vpop.xlane.xlu0 %2995
  %v2997 = vsel %vm2275, %v2819, 0.0
  %v2998 = vsel %vm2275, %v2820, 0.0
  %v2999 = vadd.f32 %v2997, %v2998
  %3000 = vadd.xlane.f32.xlu0 %v2999
  %v3001 = vpop.xlane.xlu0 %3000
  %v3002 = vsel %vm2275, %v2822, 0.0
  %v3003 = vsel %vm2275, %v2823, 0.0
  %v3004 = vadd.f32 %v3002, %v3003
  %3005 = vadd.xlane.f32.xlu0 %v3004
  %v3006 = vpop.xlane.xlu0 %3005
  %v3007 = vsel %vm2275, %v2825, 0.0
  %v3008 = vsel %vm2275, %v2826, 0.0
  %v3009 = vadd.f32 %v3007, %v3008
  %3010 = vadd.xlane.f32.xlu0 %v3009
  %v3011 = vpop.xlane.xlu0 %3010
  %v3012 = vsel %vm2275, %v2828, 0.0
  %v3013 = vsel %vm2275, %v2829, 0.0
  %v3014 = vadd.f32 %v3012, %v3013
  %3015 = vadd.xlane.f32.xlu0 %v3014
  %v3016 = vpop.xlane.xlu0 %3015
  %v3017 = vsel %vm2275, %v2831, 0.0
  %v3018 = vsel %vm2275, %v2832, 0.0
  %v3019 = vadd.f32 %v3017, %v3018
  %3020 = vadd.xlane.f32.xlu0 %v3019
  %v3021 = vpop.xlane.xlu0 %3020
  %v3022 = vsel %vm2275, %v2834, 0.0
  %v3023 = vsel %vm2275, %v2835, 0.0
  %v3024 = vadd.f32 %v3022, %v3023
  %3025 = vadd.xlane.f32.xlu0 %v3024
  %v3026 = vpop.xlane.xlu0 %3025
  %v3027 = vsel %vm2275, %v2837, 0.0
  %v3028 = vsel %vm2275, %v2838, 0.0
  %v3029 = vadd.f32 %v3027, %v3028
  %3030 = vadd.xlane.f32.xlu0 %v3029
  %v3031 = vpop.xlane.xlu0 %3030
  %v3032 = vsel %vm2275, %v2840, 0.0
  %v3033 = vsel %vm2275, %v2841, 0.0
  %v3034 = vadd.f32 %v3032, %v3033
  %3035 = vadd.xlane.f32.xlu0 %v3034
  %v3036 = vpop.xlane.xlu0 %3035
  %v3037 = vsel %vm2275, %v2843, 0.0
  %v3038 = vsel %vm2275, %v2844, 0.0
  %v3039 = vadd.f32 %v3037, %v3038
  %3040 = vadd.xlane.f32.xlu0 %v3039
  %v3041 = vpop.xlane.xlu0 %3040
  %v3042 = vsel %vm2275, %v2846, 0.0
  %v3043 = vsel %vm2275, %v2847, 0.0
  %v3044 = vadd.f32 %v3042, %v3043
  %3045 = vadd.xlane.f32.xlu0 %v3044
  %v3046 = vpop.xlane.xlu0 %3045
  %v3047 = vsel %vm2275, %v2849, 0.0
  %v3048 = vsel %vm2275, %v2850, 0.0
  %v3049 = vadd.f32 %v3047, %v3048
  %3050 = vadd.xlane.f32.xlu0 %v3049
  %v3051 = vpop.xlane.xlu0 %3050
  %v3052 = vsel %vm2275, %v2852, 0.0
  %v3053 = vsel %vm2275, %v2853, 0.0
  %v3054 = vadd.f32 %v3052, %v3053
  %3055 = vadd.xlane.f32.xlu0 %v3054
  %v3056 = vpop.xlane.xlu0 %3055
  %v3057 = vsel %vm2275, %v2855, 0.0
  %v3058 = vsel %vm2275, %v2856, 0.0
  %v3059 = vadd.f32 %v3057, %v3058
  %3060 = vadd.xlane.f32.xlu0 %v3059
  %v3061 = vpop.xlane.xlu0 %3060
  %v3062 = vsel %vm2275, %v2858, 0.0
  %v3063 = vsel %vm2275, %v2859, 0.0
  %v3064 = vadd.f32 %v3062, %v3063
  %3065 = vadd.xlane.f32.xlu0 %v3064
  %v3066 = vpop.xlane.xlu0 %3065
  %v3067 = vsel %vm2275, %v2861, 0.0
  %v3068 = vsel %vm2275, %v2862, 0.0
  %v3069 = vadd.f32 %v3067, %v3068
  %3070 = vadd.xlane.f32.xlu0 %v3069
  %v3071 = vpop.xlane.xlu0 %3070
  %v3072 = vsel %vm2275, %v2864, 0.0
  %v3073 = vsel %vm2275, %v2865, 0.0
  %v3074 = vadd.f32 %v3072, %v3073
  %3075 = vadd.xlane.f32.xlu0 %v3074
  %v3076 = vpop.xlane.xlu0 %3075
  %v3077 = vsel %vm2275, %v2867, 0.0
  %v3078 = vsel %vm2275, %v2868, 0.0
  %v3079 = vadd.f32 %v3077, %v3078
  %3080 = vadd.xlane.f32.xlu0 %v3079
  %v3081 = vpop.xlane.xlu0 %3080
  %v3082 = vsel %vm2275, %v2870, 0.0
  %v3083 = vsel %vm2275, %v2871, 0.0
  %v3084 = vadd.f32 %v3082, %v3083
  %3085 = vadd.xlane.f32.xlu0 %v3084
  %v3086 = vpop.xlane.xlu0 %3085
  %v3087 = vsel %vm2275, %v2873, 0.0
  %v3088 = vsel %vm2275, %v2874, 0.0
  %v3089 = vadd.f32 %v3087, %v3088
  %3090 = vadd.xlane.f32.xlu0 %v3089
  %v3091 = vpop.xlane.xlu0 %3090
  %v3092 = vsel %vm2275, %v2876, 0.0
  %v3093 = vsel %vm2275, %v2877, 0.0
  %v3094 = vadd.f32 %v3092, %v3093
  %3095 = vadd.xlane.f32.xlu0 %v3094
  %v3096 = vpop.xlane.xlu0 %3095
  %v3097 = vsel %vm2275, %v2879, 0.0
  %v3098 = vsel %vm2275, %v2880, 0.0
  %v3099 = vadd.f32 %v3097, %v3098
  %3100 = vadd.xlane.f32.xlu0 %v3099
  %v3101 = vpop.xlane.xlu0 %3100
  %v3102 = vsel %vm2275, %v2882, 0.0
  %v3103 = vsel %vm2275, %v2883, 0.0
  %v3104 = vadd.f32 %v3102, %v3103
  %3105 = vadd.xlane.f32.xlu0 %v3104
  %v3106 = vpop.xlane.xlu0 %3105
  %v3107 = vsel %vm2275, %v2885, 0.0
  %v3108 = vsel %vm2275, %v2886, 0.0
  %v3109 = vadd.f32 %v3107, %v3108
  %3110 = vadd.xlane.f32.xlu0 %v3109
  %v3111 = vpop.xlane.xlu0 %3110
  %v3112 = vsel %vm2275, %v2888, 0.0
  %v3113 = vsel %vm2275, %v2889, 0.0
  %v3114 = vadd.f32 %v3112, %v3113
  %3115 = vadd.xlane.f32.xlu0 %v3114
  %v3116 = vpop.xlane.xlu0 %3115
  %v3117 = vsel %vm2275, %v2891, 0.0
  %v3118 = vsel %vm2275, %v2892, 0.0
  %v3119 = vadd.f32 %v3117, %v3118
  %3120 = vadd.xlane.f32.xlu0 %v3119
  %v3121 = vpop.xlane.xlu0 %3120
  %v3122 = vsel %vm2275, %v2894, 0.0
  %v3123 = vsel %vm2275, %v2895, 0.0
  %v3124 = vadd.f32 %v3122, %v3123
  %3125 = vadd.xlane.f32.xlu0 %v3124
  %v3126 = vpop.xlane.xlu0 %3125
  %v3127 = vsel %vm2275, %v2897, 0.0
  %v3128 = vsel %vm2275, %v2898, 0.0
  %v3129 = vadd.f32 %v3127, %v3128
  %3130 = vadd.xlane.f32.xlu0 %v3129
  %v3131 = vpop.xlane.xlu0 %3130
  %v3132 = vsel %vm2275, %v2900, 0.0
  %v3133 = vsel %vm2275, %v2901, 0.0
  %v3134 = vadd.f32 %v3132, %v3133
  %3135 = vadd.xlane.f32.xlu0 %v3134
  %v3136 = vpop.xlane.xlu0 %3135
  %v3137 = vsel %vm2275, %v2903, 0.0
  %v3138 = vsel %vm2275, %v2904, 0.0
  %v3139 = vadd.f32 %v3137, %v3138
  %3140 = vadd.xlane.f32.xlu0 %v3139
  %v3141 = vpop.xlane.xlu0 %3140
  %v3142 = vsel %vm2275, %v2906, 0.0
  %v3143 = vsel %vm2275, %v2907, 0.0
  %v3144 = vadd.f32 %v3142, %v3143
  %3145 = vadd.xlane.f32.xlu0 %v3144
  %v3146 = vpop.xlane.xlu0 %3145
  %v3147 = vsel %vm2275, %v2909, 0.0
  %v3148 = vsel %vm2275, %v2910, 0.0
  %v3149 = vadd.f32 %v3147, %v3148
  %3150 = vadd.xlane.f32.xlu0 %v3149
  %v3151 = vpop.xlane.xlu0 %3150
  %v3152 = vsel %vm2275, %v2912, 0.0
  %v3153 = vsel %vm2275, %v2913, 0.0
  %v3154 = vadd.f32 %v3152, %v3153
  %3155 = vadd.xlane.f32.xlu0 %v3154
  %v3156 = vpop.xlane.xlu0 %3155
  %v3157 = vsel %vm2275, %v2915, 0.0
  %v3158 = vsel %vm2275, %v2916, 0.0
  %v3159 = vadd.f32 %v3157, %v3158
  %3160 = vadd.xlane.f32.xlu0 %v3159
  %v3161 = vpop.xlane.xlu0 %3160
  %v3162 = vadd.f32 %v2528, %v2991
  %v3163 = vadd.f32 %v2533, %v2996
  %v3164 = vadd.f32 %v2538, %v3001
  %v3165 = vadd.f32 %v2543, %v3006
  %v3166 = vadd.f32 %v2548, %v3011
  %v3167 = vadd.f32 %v2553, %v3016
  %v3168 = vadd.f32 %v2558, %v3021
  %v3169 = vadd.f32 %v2563, %v3026
  %v3170 = vadd.f32 %v2568, %v3031
  %v3171 = vadd.f32 %v2573, %v3036
  %v3172 = vadd.f32 %v2578, %v3041
  %v3173 = vadd.f32 %v2583, %v3046
  %v3174 = vadd.f32 %v2588, %v3051
  %v3175 = vadd.f32 %v2593, %v3056
  %v3176 = vadd.f32 %v2598, %v3061
  %v3177 = vadd.f32 %v2603, %v3066
  %v3178 = vadd.f32 %v2608, %v3071
  %v3179 = vadd.f32 %v2613, %v3076
  %v3180 = vadd.f32 %v2618, %v3081
  %v3181 = vadd.f32 %v2623, %v3086
  %v3182 = vadd.f32 %v2628, %v3091
  %v3183 = vadd.f32 %v2633, %v3096
  %v3184 = vadd.f32 %v2638, %v3101
  %v3185 = vadd.f32 %v2643, %v3106
  %v3186 = vadd.f32 %v2648, %v3111
  %v3187 = vadd.f32 %v2653, %v3116
  %v3188 = vadd.f32 %v2658, %v3121
  %v3189 = vadd.f32 %v2663, %v3126
  %v3190 = vadd.f32 %v2668, %v3131
  %v3191 = vadd.f32 %v2673, %v3136
  %v3192 = vadd.f32 %v2678, %v3141
  %v3193 = vadd.f32 %v2683, %v3146
  %v3194 = vadd.f32 %v2688, %v3151
  %v3195 = vadd.f32 %v2693, %v3156
  %v3196 = vadd.f32 %v2698, %v3161
  %v3197 = vld [vmem:[#allocation6] sm:$0x1]
  %v3199 = vperm.slane %v3197, 0
  %3200 = vset.pattern.permute.xlu0 0
  %3201 = vperm.xlu0 %3200, %v3199
  %v3202 = vpop.permute.xlu0 %3201
  %v3204 = vadd.f32 %v3162, %v3202
  %v3205 = vadd.f32 %v3163, %v3202
  %v3206 = vadd.f32 %v3164, %v3202
  %v3207 = vadd.f32 %v3165, %v3202
  %v3208 = vadd.f32 %v3166, %v3202
  %v3209 = vadd.f32 %v3167, %v3202
  %v3210 = vadd.f32 %v3168, %v3202
  %v3211 = vadd.f32 %v3169, %v3202
  %v3212 = vadd.f32 %v3170, %v3202
  %v3213 = vadd.f32 %v3171, %v3202
  %v3214 = vadd.f32 %v3172, %v3202
  %v3215 = vadd.f32 %v3173, %v3202
  %v3216 = vadd.f32 %v3174, %v3202
  %v3217 = vadd.f32 %v3175, %v3202
  %v3218 = vadd.f32 %v3176, %v3202
  %v3219 = vadd.f32 %v3177, %v3202
  %v3220 = vadd.f32 %v3178, %v3202
  %v3221 = vadd.f32 %v3179, %v3202
  %v3222 = vadd.f32 %v3180, %v3202
  %v3223 = vadd.f32 %v3181, %v3202
  %v3224 = vadd.f32 %v3182, %v3202
  %v3225 = vadd.f32 %v3183, %v3202
  %v3226 = vadd.f32 %v3184, %v3202
  %v3227 = vadd.f32 %v3185, %v3202
  %v3228 = vadd.f32 %v3186, %v3202
  %v3229 = vadd.f32 %v3187, %v3202
  %v3230 = vadd.f32 %v3188, %v3202
  %v3231 = vadd.f32 %v3189, %v3202
  %v3232 = vadd.f32 %v3190, %v3202
  %v3233 = vadd.f32 %v3191, %v3202
  %v3234 = vadd.f32 %v3192, %v3202
  %v3235 = vadd.f32 %v3193, %v3202
  %v3236 = vadd.f32 %v3194, %v3202
  %v3237 = vadd.f32 %v3195, %v3202
  %v3238 = vadd.f32 %v3196, %v3202
  %v3239 = vxor.u32 %v3204, 2147483648
  %v3240 = vxor.u32 %v3205, 2147483648
  %v3241 = vxor.u32 %v3206, 2147483648
  %v3242 = vxor.u32 %v3207, 2147483648
  %v3243 = vxor.u32 %v3208, 2147483648
  %v3244 = vxor.u32 %v3209, 2147483648
  %v3245 = vxor.u32 %v3210, 2147483648
  %v3246 = vxor.u32 %v3211, 2147483648
  %v3247 = vxor.u32 %v3212, 2147483648
  %v3248 = vxor.u32 %v3213, 2147483648
  %v3249 = vxor.u32 %v3214, 2147483648
  %v3250 = vxor.u32 %v3215, 2147483648
  %v3251 = vxor.u32 %v3216, 2147483648
  %v3252 = vxor.u32 %v3217, 2147483648
  %v3253 = vxor.u32 %v3218, 2147483648
  %v3254 = vxor.u32 %v3219, 2147483648
  %v3255 = vxor.u32 %v3220, 2147483648
  %v3256 = vxor.u32 %v3221, 2147483648
  %v3257 = vxor.u32 %v3222, 2147483648
  %v3258 = vxor.u32 %v3223, 2147483648
  %v3259 = vxor.u32 %v3224, 2147483648
  %v3260 = vxor.u32 %v3225, 2147483648
  %v3261 = vxor.u32 %v3226, 2147483648
  %v3262 = vxor.u32 %v3227, 2147483648
  %v3263 = vxor.u32 %v3228, 2147483648
  %v3264 = vxor.u32 %v3229, 2147483648
  %v3265 = vxor.u32 %v3230, 2147483648
  %v3266 = vxor.u32 %v3231, 2147483648
  %v3267 = vxor.u32 %v3232, 2147483648
  %v3268 = vxor.u32 %v3233, 2147483648
  %v3269 = vxor.u32 %v3234, 2147483648
  %v3270 = vxor.u32 %v3235, 2147483648
  %v3271 = vxor.u32 %v3236, 2147483648
  %v3272 = vxor.u32 %v3237, 2147483648
  %v3273 = vxor.u32 %v3238, 2147483648
  %v3274 = vmul.f32 %v3239, 1.442695
  %v3275 = vpow.pop %v3274
  %v3276 = vmul.f32 %v3240, 1.442695
  %v3277 = vpow.pop %v3276
  %v3278 = vmul.f32 %v3241, 1.442695
  %v3279 = vpow.pop %v3278
  %v3280 = vmul.f32 %v3242, 1.442695
  %v3281 = vpow.pop %v3280
  %v3282 = vmul.f32 %v3243, 1.442695
  %v3283 = vpow.pop %v3282
  %v3284 = vmul.f32 %v3244, 1.442695
  %v3285 = vpow.pop %v3284
  %v3286 = vmul.f32 %v3245, 1.442695
  %v3287 = vpow.pop %v3286
  %v3288 = vmul.f32 %v3246, 1.442695
  %v3289 = vpow.pop %v3288
  %v3290 = vmul.f32 %v3247, 1.442695
  %v3291 = vpow.pop %v3290
  %v3292 = vmul.f32 %v3248, 1.442695
  %v3293 = vpow.pop %v3292
  %v3294 = vmul.f32 %v3249, 1.442695
  %v3295 = vpow.pop %v3294
  %v3296 = vmul.f32 %v3250, 1.442695
  %v3297 = vpow.pop %v3296
  %v3298 = vmul.f32 %v3251, 1.442695
  %v3299 = vpow.pop %v3298
  %v3300 = vmul.f32 %v3252, 1.442695
  %v3301 = vpow.pop %v3300
  %v3302 = vmul.f32 %v3253, 1.442695
  %v3303 = vpow.pop %v3302
  %v3304 = vmul.f32 %v3254, 1.442695
  %v3305 = vpow.pop %v3304
  %v3306 = vmul.f32 %v3255, 1.442695
  %v3307 = vpow.pop %v3306
  %v3308 = vmul.f32 %v3256, 1.442695
  %v3309 = vpow.pop %v3308
  %v3310 = vmul.f32 %v3257, 1.442695
  %v3311 = vpow.pop %v3310
  %v3312 = vmul.f32 %v3258, 1.442695
  %v3313 = vpow.pop %v3312
  %v3314 = vmul.f32 %v3259, 1.442695
  %v3315 = vpow.pop %v3314
  %v3316 = vmul.f32 %v3260, 1.442695
  %v3317 = vpow.pop %v3316
  %v3318 = vmul.f32 %v3261, 1.442695
  %v3319 = vpow.pop %v3318
  %v3320 = vmul.f32 %v3262, 1.442695
  %v3321 = vpow.pop %v3320
  %v3322 = vmul.f32 %v3263, 1.442695
  %v3323 = vpow.pop %v3322
  %v3324 = vmul.f32 %v3264, 1.442695
  %v3325 = vpow.pop %v3324
  %v3326 = vmul.f32 %v3265, 1.442695
  %v3327 = vpow.pop %v3326
  %v3328 = vmul.f32 %v3266, 1.442695
  %v3329 = vpow.pop %v3328
  %v3330 = vmul.f32 %v3267, 1.442695
  %v3331 = vpow.pop %v3330
  %v3332 = vmul.f32 %v3268, 1.442695
  %v3333 = vpow.pop %v3332
  %v3334 = vmul.f32 %v3269, 1.442695
  %v3335 = vpow.pop %v3334
  %v3336 = vmul.f32 %v3270, 1.442695
  %v3337 = vpow.pop %v3336
  %v3338 = vmul.f32 %v3271, 1.442695
  %v3339 = vpow.pop %v3338
  %v3340 = vmul.f32 %v3272, 1.442695
  %v3341 = vpow.pop %v3340
  %v3342 = vmul.f32 %v3273, 1.442695
  %v3343 = vpow.pop %v3342
  %v3344 = vadd.f32 %v3275, 1.0
  %v3345 = vadd.f32 %v3277, 1.0
  %v3346 = vadd.f32 %v3279, 1.0
  %v3347 = vadd.f32 %v3281, 1.0
  %v3348 = vadd.f32 %v3283, 1.0
  %v3349 = vadd.f32 %v3285, 1.0
  %v3350 = vadd.f32 %v3287, 1.0
  %v3351 = vadd.f32 %v3289, 1.0
  %v3352 = vadd.f32 %v3291, 1.0
  %v3353 = vadd.f32 %v3293, 1.0
  %v3354 = vadd.f32 %v3295, 1.0
  %v3355 = vadd.f32 %v3297, 1.0
  %v3356 = vadd.f32 %v3299, 1.0
  %v3357 = vadd.f32 %v3301, 1.0
  %v3358 = vadd.f32 %v3303, 1.0
  %v3359 = vadd.f32 %v3305, 1.0
  %v3360 = vadd.f32 %v3307, 1.0
  %v3361 = vadd.f32 %v3309, 1.0
  %v3362 = vadd.f32 %v3311, 1.0
  %v3363 = vadd.f32 %v3313, 1.0
  %v3364 = vadd.f32 %v3315, 1.0
  %v3365 = vadd.f32 %v3317, 1.0
  %v3366 = vadd.f32 %v3319, 1.0
  %v3367 = vadd.f32 %v3321, 1.0
  %v3368 = vadd.f32 %v3323, 1.0
  %v3369 = vadd.f32 %v3325, 1.0
  %v3370 = vadd.f32 %v3327, 1.0
  %v3371 = vadd.f32 %v3329, 1.0
  %v3372 = vadd.f32 %v3331, 1.0
  %v3373 = vadd.f32 %v3333, 1.0
  %v3374 = vadd.f32 %v3335, 1.0
  %v3375 = vadd.f32 %v3337, 1.0
  %v3376 = vadd.f32 %v3339, 1.0
  %v3377 = vadd.f32 %v3341, 1.0
  %v3378 = vadd.f32 %v3343, 1.0
  %v3379 = vrcp.pop %v3344
  %v3380 = vmul.f32 %v3344, %v3379
  %v3381 = vsub.f32 1.0, %v3380
  %v3382 = vmul.f32 %v3379, %v3381
  %v3383 = vadd.f32 %v3379, %v3382
  %vm3384 = vweird.f32 %v3344
  %vm3385 = vweird.f32 %v3379
  %vm3386 = vmor %vm3384, %vm3385
  %v3387 = vsel %vm3386, %v3379, %v3383
  %v3388 = vand.u32 2147483647, %v3344
  %vm3389 = vcmp.eq.f32.partialorder %v3388, 8.507059e+37
  %v3390 = vand.u32 %v3344, 2147483648
  %v3391 = vor.u32 1.1754944e-38, %v3390
  %v3392 = vsel %vm3389, %v3391, %v3387
  %v3393 = vmul.f32 1.0, %v3392
  %v3394 = vrcp.pop %v3345
  %v3395 = vmul.f32 %v3345, %v3394
  %v3396 = vsub.f32 1.0, %v3395
  %v3397 = vmul.f32 %v3394, %v3396
  %v3398 = vadd.f32 %v3394, %v3397
  %vm3399 = vweird.f32 %v3345
  %vm3400 = vweird.f32 %v3394
  %vm3401 = vmor %vm3399, %vm3400
  %v3402 = vsel %vm3401, %v3394, %v3398
  %v3403 = vand.u32 2147483647, %v3345
  %vm3404 = vcmp.eq.f32.partialorder %v3403, 8.507059e+37
  %v3405 = vand.u32 %v3345, 2147483648
  %v3406 = vor.u32 1.1754944e-38, %v3405
  %v3407 = vsel %vm3404, %v3406, %v3402
  %v3408 = vmul.f32 1.0, %v3407
  %v3409 = vrcp.pop %v3346
  %v3410 = vmul.f32 %v3346, %v3409
  %v3411 = vsub.f32 1.0, %v3410
  %v3412 = vmul.f32 %v3409, %v3411
  %v3413 = vadd.f32 %v3409, %v3412
  %vm3414 = vweird.f32 %v3346
  %vm3415 = vweird.f32 %v3409
  %vm3416 = vmor %vm3414, %vm3415
  %v3417 = vsel %vm3416, %v3409, %v3413
  %v3418 = vand.u32 2147483647, %v3346
  %vm3419 = vcmp.eq.f32.partialorder %v3418, 8.507059e+37
  %v3420 = vand.u32 %v3346, 2147483648
  %v3421 = vor.u32 1.1754944e-38, %v3420
  %v3422 = vsel %vm3419, %v3421, %v3417
  %v3423 = vmul.f32 1.0, %v3422
  %v3424 = vrcp.pop %v3347
  %v3425 = vmul.f32 %v3347, %v3424
  %v3426 = vsub.f32 1.0, %v3425
  %v3427 = vmul.f32 %v3424, %v3426
  %v3428 = vadd.f32 %v3424, %v3427
  %vm3429 = vweird.f32 %v3347
  %vm3430 = vweird.f32 %v3424
  %vm3431 = vmor %vm3429, %vm3430
  %v3432 = vsel %vm3431, %v3424, %v3428
  %v3433 = vand.u32 2147483647, %v3347
  %vm3434 = vcmp.eq.f32.partialorder %v3433, 8.507059e+37
  %v3435 = vand.u32 %v3347, 2147483648
  %v3436 = vor.u32 1.1754944e-38, %v3435
  %v3437 = vsel %vm3434, %v3436, %v3432
  %v3438 = vmul.f32 1.0, %v3437
  %v3439 = vrcp.pop %v3348
  %v3440 = vmul.f32 %v3348, %v3439
  %v3441 = vsub.f32 1.0, %v3440
  %v3442 = vmul.f32 %v3439, %v3441
  %v3443 = vadd.f32 %v3439, %v3442
  %vm3444 = vweird.f32 %v3348
  %vm3445 = vweird.f32 %v3439
  %vm3446 = vmor %vm3444, %vm3445
  %v3447 = vsel %vm3446, %v3439, %v3443
  %v3448 = vand.u32 2147483647, %v3348
  %vm3449 = vcmp.eq.f32.partialorder %v3448, 8.507059e+37
  %v3450 = vand.u32 %v3348, 2147483648
  %v3451 = vor.u32 1.1754944e-38, %v3450
  %v3452 = vsel %vm3449, %v3451, %v3447
  %v3453 = vmul.f32 1.0, %v3452
  %v3454 = vrcp.pop %v3349
  %v3455 = vmul.f32 %v3349, %v3454
  %v3456 = vsub.f32 1.0, %v3455
  %v3457 = vmul.f32 %v3454, %v3456
  %v3458 = vadd.f32 %v3454, %v3457
  %vm3459 = vweird.f32 %v3349
  %vm3460 = vweird.f32 %v3454
  %vm3461 = vmor %vm3459, %vm3460
  %v3462 = vsel %vm3461, %v3454, %v3458
  %v3463 = vand.u32 2147483647, %v3349
  %vm3464 = vcmp.eq.f32.partialorder %v3463, 8.507059e+37
  %v3465 = vand.u32 %v3349, 2147483648
  %v3466 = vor.u32 1.1754944e-38, %v3465
  %v3467 = vsel %vm3464, %v3466, %v3462
  %v3468 = vmul.f32 1.0, %v3467
  %v3469 = vrcp.pop %v3350
  %v3470 = vmul.f32 %v3350, %v3469
  %v3471 = vsub.f32 1.0, %v3470
  %v3472 = vmul.f32 %v3469, %v3471
  %v3473 = vadd.f32 %v3469, %v3472
  %vm3474 = vweird.f32 %v3350
  %vm3475 = vweird.f32 %v3469
  %vm3476 = vmor %vm3474, %vm3475
  %v3477 = vsel %vm3476, %v3469, %v3473
  %v3478 = vand.u32 2147483647, %v3350
  %vm3479 = vcmp.eq.f32.partialorder %v3478, 8.507059e+37
  %v3480 = vand.u32 %v3350, 2147483648
  %v3481 = vor.u32 1.1754944e-38, %v3480
  %v3482 = vsel %vm3479, %v3481, %v3477
  %v3483 = vmul.f32 1.0, %v3482
  %v3484 = vrcp.pop %v3351
  %v3485 = vmul.f32 %v3351, %v3484
  %v3486 = vsub.f32 1.0, %v3485
  %v3487 = vmul.f32 %v3484, %v3486
  %v3488 = vadd.f32 %v3484, %v3487
  %vm3489 = vweird.f32 %v3351
  %vm3490 = vweird.f32 %v3484
  %vm3491 = vmor %vm3489, %vm3490
  %v3492 = vsel %vm3491, %v3484, %v3488
  %v3493 = vand.u32 2147483647, %v3351
  %vm3494 = vcmp.eq.f32.partialorder %v3493, 8.507059e+37
  %v3495 = vand.u32 %v3351, 2147483648
  %v3496 = vor.u32 1.1754944e-38, %v3495
  %v3497 = vsel %vm3494, %v3496, %v3492
  %v3498 = vmul.f32 1.0, %v3497
  %v3499 = vrcp.pop %v3352
  %v3500 = vmul.f32 %v3352, %v3499
  %v3501 = vsub.f32 1.0, %v3500
  %v3502 = vmul.f32 %v3499, %v3501
  %v3503 = vadd.f32 %v3499, %v3502
  %vm3504 = vweird.f32 %v3352
  %vm3505 = vweird.f32 %v3499
  %vm3506 = vmor %vm3504, %vm3505
  %v3507 = vsel %vm3506, %v3499, %v3503
  %v3508 = vand.u32 2147483647, %v3352
  %vm3509 = vcmp.eq.f32.partialorder %v3508, 8.507059e+37
  %v3510 = vand.u32 %v3352, 2147483648
  %v3511 = vor.u32 1.1754944e-38, %v3510
  %v3512 = vsel %vm3509, %v3511, %v3507
  %v3513 = vmul.f32 1.0, %v3512
  %v3514 = vrcp.pop %v3353
  %v3515 = vmul.f32 %v3353, %v3514
  %v3516 = vsub.f32 1.0, %v3515
  %v3517 = vmul.f32 %v3514, %v3516
  %v3518 = vadd.f32 %v3514, %v3517
  %vm3519 = vweird.f32 %v3353
  %vm3520 = vweird.f32 %v3514
  %vm3521 = vmor %vm3519, %vm3520
  %v3522 = vsel %vm3521, %v3514, %v3518
  %v3523 = vand.u32 2147483647, %v3353
  %vm3524 = vcmp.eq.f32.partialorder %v3523, 8.507059e+37
  %v3525 = vand.u32 %v3353, 2147483648
  %v3526 = vor.u32 1.1754944e-38, %v3525
  %v3527 = vsel %vm3524, %v3526, %v3522
  %v3528 = vmul.f32 1.0, %v3527
  %v3529 = vrcp.pop %v3354
  %v3530 = vmul.f32 %v3354, %v3529
  %v3531 = vsub.f32 1.0, %v3530
  %v3532 = vmul.f32 %v3529, %v3531
  %v3533 = vadd.f32 %v3529, %v3532
  %vm3534 = vweird.f32 %v3354
  %vm3535 = vweird.f32 %v3529
  %vm3536 = vmor %vm3534, %vm3535
  %v3537 = vsel %vm3536, %v3529, %v3533
  %v3538 = vand.u32 2147483647, %v3354
  %vm3539 = vcmp.eq.f32.partialorder %v3538, 8.507059e+37
  %v3540 = vand.u32 %v3354, 2147483648
  %v3541 = vor.u32 1.1754944e-38, %v3540
  %v3542 = vsel %vm3539, %v3541, %v3537
  %v3543 = vmul.f32 1.0, %v3542
  %v3544 = vrcp.pop %v3355
  %v3545 = vmul.f32 %v3355, %v3544
  %v3546 = vsub.f32 1.0, %v3545
  %v3547 = vmul.f32 %v3544, %v3546
  %v3548 = vadd.f32 %v3544, %v3547
  %vm3549 = vweird.f32 %v3355
  %vm3550 = vweird.f32 %v3544
  %vm3551 = vmor %vm3549, %vm3550
  %v3552 = vsel %vm3551, %v3544, %v3548
  %v3553 = vand.u32 2147483647, %v3355
  %vm3554 = vcmp.eq.f32.partialorder %v3553, 8.507059e+37
  %v3555 = vand.u32 %v3355, 2147483648
  %v3556 = vor.u32 1.1754944e-38, %v3555
  %v3557 = vsel %vm3554, %v3556, %v3552
  %v3558 = vmul.f32 1.0, %v3557
  %v3559 = vrcp.pop %v3356
  %v3560 = vmul.f32 %v3356, %v3559
  %v3561 = vsub.f32 1.0, %v3560
  %v3562 = vmul.f32 %v3559, %v3561
  %v3563 = vadd.f32 %v3559, %v3562
  %vm3564 = vweird.f32 %v3356
  %vm3565 = vweird.f32 %v3559
  %vm3566 = vmor %vm3564, %vm3565
  %v3567 = vsel %vm3566, %v3559, %v3563
  %v3568 = vand.u32 2147483647, %v3356
  %vm3569 = vcmp.eq.f32.partialorder %v3568, 8.507059e+37
  %v3570 = vand.u32 %v3356, 2147483648
  %v3571 = vor.u32 1.1754944e-38, %v3570
  %v3572 = vsel %vm3569, %v3571, %v3567
  %v3573 = vmul.f32 1.0, %v3572
  %v3574 = vrcp.pop %v3357
  %v3575 = vmul.f32 %v3357, %v3574
  %v3576 = vsub.f32 1.0, %v3575
  %v3577 = vmul.f32 %v3574, %v3576
  %v3578 = vadd.f32 %v3574, %v3577
  %vm3579 = vweird.f32 %v3357
  %vm3580 = vweird.f32 %v3574
  %vm3581 = vmor %vm3579, %vm3580
  %v3582 = vsel %vm3581, %v3574, %v3578
  %v3583 = vand.u32 2147483647, %v3357
  %vm3584 = vcmp.eq.f32.partialorder %v3583, 8.507059e+37
  %v3585 = vand.u32 %v3357, 2147483648
  %v3586 = vor.u32 1.1754944e-38, %v3585
  %v3587 = vsel %vm3584, %v3586, %v3582
  %v3588 = vmul.f32 1.0, %v3587
  %v3589 = vrcp.pop %v3358
  %v3590 = vmul.f32 %v3358, %v3589
  %v3591 = vsub.f32 1.0, %v3590
  %v3592 = vmul.f32 %v3589, %v3591
  %v3593 = vadd.f32 %v3589, %v3592
  %vm3594 = vweird.f32 %v3358
  %vm3595 = vweird.f32 %v3589
  %vm3596 = vmor %vm3594, %vm3595
  %v3597 = vsel %vm3596, %v3589, %v3593
  %v3598 = vand.u32 2147483647, %v3358
  %vm3599 = vcmp.eq.f32.partialorder %v3598, 8.507059e+37
  %v3600 = vand.u32 %v3358, 2147483648
  %v3601 = vor.u32 1.1754944e-38, %v3600
  %v3602 = vsel %vm3599, %v3601, %v3597
  %v3603 = vmul.f32 1.0, %v3602
  %v3604 = vrcp.pop %v3359
  %v3605 = vmul.f32 %v3359, %v3604
  %v3606 = vsub.f32 1.0, %v3605
  %v3607 = vmul.f32 %v3604, %v3606
  %v3608 = vadd.f32 %v3604, %v3607
  %vm3609 = vweird.f32 %v3359
  %vm3610 = vweird.f32 %v3604
  %vm3611 = vmor %vm3609, %vm3610
  %v3612 = vsel %vm3611, %v3604, %v3608
  %v3613 = vand.u32 2147483647, %v3359
  %vm3614 = vcmp.eq.f32.partialorder %v3613, 8.507059e+37
  %v3615 = vand.u32 %v3359, 2147483648
  %v3616 = vor.u32 1.1754944e-38, %v3615
  %v3617 = vsel %vm3614, %v3616, %v3612
  %v3618 = vmul.f32 1.0, %v3617
  %v3619 = vrcp.pop %v3360
  %v3620 = vmul.f32 %v3360, %v3619
  %v3621 = vsub.f32 1.0, %v3620
  %v3622 = vmul.f32 %v3619, %v3621
  %v3623 = vadd.f32 %v3619, %v3622
  %vm3624 = vweird.f32 %v3360
  %vm3625 = vweird.f32 %v3619
  %vm3626 = vmor %vm3624, %vm3625
  %v3627 = vsel %vm3626, %v3619, %v3623
  %v3628 = vand.u32 2147483647, %v3360
  %vm3629 = vcmp.eq.f32.partialorder %v3628, 8.507059e+37
  %v3630 = vand.u32 %v3360, 2147483648
  %v3631 = vor.u32 1.1754944e-38, %v3630
  %v3632 = vsel %vm3629, %v3631, %v3627
  %v3633 = vmul.f32 1.0, %v3632
  %v3634 = vrcp.pop %v3361
  %v3635 = vmul.f32 %v3361, %v3634
  %v3636 = vsub.f32 1.0, %v3635
  %v3637 = vmul.f32 %v3634, %v3636
  %v3638 = vadd.f32 %v3634, %v3637
  %vm3639 = vweird.f32 %v3361
  %vm3640 = vweird.f32 %v3634
  %vm3641 = vmor %vm3639, %vm3640
  %v3642 = vsel %vm3641, %v3634, %v3638
  %v3643 = vand.u32 2147483647, %v3361
  %vm3644 = vcmp.eq.f32.partialorder %v3643, 8.507059e+37
  %v3645 = vand.u32 %v3361, 2147483648
  %v3646 = vor.u32 1.1754944e-38, %v3645
  %v3647 = vsel %vm3644, %v3646, %v3642
  %v3648 = vmul.f32 1.0, %v3647
  %v3649 = vrcp.pop %v3362
  %v3650 = vmul.f32 %v3362, %v3649
  %v3651 = vsub.f32 1.0, %v3650
  %v3652 = vmul.f32 %v3649, %v3651
  %v3653 = vadd.f32 %v3649, %v3652
  %vm3654 = vweird.f32 %v3362
  %vm3655 = vweird.f32 %v3649
  %vm3656 = vmor %vm3654, %vm3655
  %v3657 = vsel %vm3656, %v3649, %v3653
  %v3658 = vand.u32 2147483647, %v3362
  %vm3659 = vcmp.eq.f32.partialorder %v3658, 8.507059e+37
  %v3660 = vand.u32 %v3362, 2147483648
  %v3661 = vor.u32 1.1754944e-38, %v3660
  %v3662 = vsel %vm3659, %v3661, %v3657
  %v3663 = vmul.f32 1.0, %v3662
  %v3664 = vrcp.pop %v3363
  %v3665 = vmul.f32 %v3363, %v3664
  %v3666 = vsub.f32 1.0, %v3665
  %v3667 = vmul.f32 %v3664, %v3666
  %v3668 = vadd.f32 %v3664, %v3667
  %vm3669 = vweird.f32 %v3363
  %vm3670 = vweird.f32 %v3664
  %vm3671 = vmor %vm3669, %vm3670
  %v3672 = vsel %vm3671, %v3664, %v3668
  %v3673 = vand.u32 2147483647, %v3363
  %vm3674 = vcmp.eq.f32.partialorder %v3673, 8.507059e+37
  %v3675 = vand.u32 %v3363, 2147483648
  %v3676 = vor.u32 1.1754944e-38, %v3675
  %v3677 = vsel %vm3674, %v3676, %v3672
  %v3678 = vmul.f32 1.0, %v3677
  %v3679 = vrcp.pop %v3364
  %v3680 = vmul.f32 %v3364, %v3679
  %v3681 = vsub.f32 1.0, %v3680
  %v3682 = vmul.f32 %v3679, %v3681
  %v3683 = vadd.f32 %v3679, %v3682
  %vm3684 = vweird.f32 %v3364
  %vm3685 = vweird.f32 %v3679
  %vm3686 = vmor %vm3684, %vm3685
  %v3687 = vsel %vm3686, %v3679, %v3683
  %v3688 = vand.u32 2147483647, %v3364
  %vm3689 = vcmp.eq.f32.partialorder %v3688, 8.507059e+37
  %v3690 = vand.u32 %v3364, 2147483648
  %v3691 = vor.u32 1.1754944e-38, %v3690
  %v3692 = vsel %vm3689, %v3691, %v3687
  %v3693 = vmul.f32 1.0, %v3692
  %v3694 = vrcp.pop %v3365
  %v3695 = vmul.f32 %v3365, %v3694
  %v3696 = vsub.f32 1.0, %v3695
  %v3697 = vmul.f32 %v3694, %v3696
  %v3698 = vadd.f32 %v3694, %v3697
  %vm3699 = vweird.f32 %v3365
  %vm3700 = vweird.f32 %v3694
  %vm3701 = vmor %vm3699, %vm3700
  %v3702 = vsel %vm3701, %v3694, %v3698
  %v3703 = vand.u32 2147483647, %v3365
  %vm3704 = vcmp.eq.f32.partialorder %v3703, 8.507059e+37
  %v3705 = vand.u32 %v3365, 2147483648
  %v3706 = vor.u32 1.1754944e-38, %v3705
  %v3707 = vsel %vm3704, %v3706, %v3702
  %v3708 = vmul.f32 1.0, %v3707
  %v3709 = vrcp.pop %v3366
  %v3710 = vmul.f32 %v3366, %v3709
  %v3711 = vsub.f32 1.0, %v3710
  %v3712 = vmul.f32 %v3709, %v3711
  %v3713 = vadd.f32 %v3709, %v3712
  %vm3714 = vweird.f32 %v3366
  %vm3715 = vweird.f32 %v3709
  %vm3716 = vmor %vm3714, %vm3715
  %v3717 = vsel %vm3716, %v3709, %v3713
  %v3718 = vand.u32 2147483647, %v3366
  %vm3719 = vcmp.eq.f32.partialorder %v3718, 8.507059e+37
  %v3720 = vand.u32 %v3366, 2147483648
  %v3721 = vor.u32 1.1754944e-38, %v3720
  %v3722 = vsel %vm3719, %v3721, %v3717
  %v3723 = vmul.f32 1.0, %v3722
  %v3724 = vrcp.pop %v3367
  %v3725 = vmul.f32 %v3367, %v3724
  %v3726 = vsub.f32 1.0, %v3725
  %v3727 = vmul.f32 %v3724, %v3726
  %v3728 = vadd.f32 %v3724, %v3727
  %vm3729 = vweird.f32 %v3367
  %vm3730 = vweird.f32 %v3724
  %vm3731 = vmor %vm3729, %vm3730
  %v3732 = vsel %vm3731, %v3724, %v3728
  %v3733 = vand.u32 2147483647, %v3367
  %vm3734 = vcmp.eq.f32.partialorder %v3733, 8.507059e+37
  %v3735 = vand.u32 %v3367, 2147483648
  %v3736 = vor.u32 1.1754944e-38, %v3735
  %v3737 = vsel %vm3734, %v3736, %v3732
  %v3738 = vmul.f32 1.0, %v3737
  %v3739 = vrcp.pop %v3368
  %v3740 = vmul.f32 %v3368, %v3739
  %v3741 = vsub.f32 1.0, %v3740
  %v3742 = vmul.f32 %v3739, %v3741
  %v3743 = vadd.f32 %v3739, %v3742
  %vm3744 = vweird.f32 %v3368
  %vm3745 = vweird.f32 %v3739
  %vm3746 = vmor %vm3744, %vm3745
  %v3747 = vsel %vm3746, %v3739, %v3743
  %v3748 = vand.u32 2147483647, %v3368
  %vm3749 = vcmp.eq.f32.partialorder %v3748, 8.507059e+37
  %v3750 = vand.u32 %v3368, 2147483648
  %v3751 = vor.u32 1.1754944e-38, %v3750
  %v3752 = vsel %vm3749, %v3751, %v3747
  %v3753 = vmul.f32 1.0, %v3752
  %v3754 = vrcp.pop %v3369
  %v3755 = vmul.f32 %v3369, %v3754
  %v3756 = vsub.f32 1.0, %v3755
  %v3757 = vmul.f32 %v3754, %v3756
  %v3758 = vadd.f32 %v3754, %v3757
  %vm3759 = vweird.f32 %v3369
  %vm3760 = vweird.f32 %v3754
  %vm3761 = vmor %vm3759, %vm3760
  %v3762 = vsel %vm3761, %v3754, %v3758
  %v3763 = vand.u32 2147483647, %v3369
  %vm3764 = vcmp.eq.f32.partialorder %v3763, 8.507059e+37
  %v3765 = vand.u32 %v3369, 2147483648
  %v3766 = vor.u32 1.1754944e-38, %v3765
  %v3767 = vsel %vm3764, %v3766, %v3762
  %v3768 = vmul.f32 1.0, %v3767
  %v3769 = vrcp.pop %v3370
  %v3770 = vmul.f32 %v3370, %v3769
  %v3771 = vsub.f32 1.0, %v3770
  %v3772 = vmul.f32 %v3769, %v3771
  %v3773 = vadd.f32 %v3769, %v3772
  %vm3774 = vweird.f32 %v3370
  %vm3775 = vweird.f32 %v3769
  %vm3776 = vmor %vm3774, %vm3775
  %v3777 = vsel %vm3776, %v3769, %v3773
  %v3778 = vand.u32 2147483647, %v3370
  %vm3779 = vcmp.eq.f32.partialorder %v3778, 8.507059e+37
  %v3780 = vand.u32 %v3370, 2147483648
  %v3781 = vor.u32 1.1754944e-38, %v3780
  %v3782 = vsel %vm3779, %v3781, %v3777
  %v3783 = vmul.f32 1.0, %v3782
  %v3784 = vrcp.pop %v3371
  %v3785 = vmul.f32 %v3371, %v3784
  %v3786 = vsub.f32 1.0, %v3785
  %v3787 = vmul.f32 %v3784, %v3786
  %v3788 = vadd.f32 %v3784, %v3787
  %vm3789 = vweird.f32 %v3371
  %vm3790 = vweird.f32 %v3784
  %vm3791 = vmor %vm3789, %vm3790
  %v3792 = vsel %vm3791, %v3784, %v3788
  %v3793 = vand.u32 2147483647, %v3371
  %vm3794 = vcmp.eq.f32.partialorder %v3793, 8.507059e+37
  %v3795 = vand.u32 %v3371, 2147483648
  %v3796 = vor.u32 1.1754944e-38, %v3795
  %v3797 = vsel %vm3794, %v3796, %v3792
  %v3798 = vmul.f32 1.0, %v3797
  %v3799 = vrcp.pop %v3372
  %v3800 = vmul.f32 %v3372, %v3799
  %v3801 = vsub.f32 1.0, %v3800
  %v3802 = vmul.f32 %v3799, %v3801
  %v3803 = vadd.f32 %v3799, %v3802
  %vm3804 = vweird.f32 %v3372
  %vm3805 = vweird.f32 %v3799
  %vm3806 = vmor %vm3804, %vm3805
  %v3807 = vsel %vm3806, %v3799, %v3803
  %v3808 = vand.u32 2147483647, %v3372
  %vm3809 = vcmp.eq.f32.partialorder %v3808, 8.507059e+37
  %v3810 = vand.u32 %v3372, 2147483648
  %v3811 = vor.u32 1.1754944e-38, %v3810
  %v3812 = vsel %vm3809, %v3811, %v3807
  %v3813 = vmul.f32 1.0, %v3812
  %v3814 = vrcp.pop %v3373
  %v3815 = vmul.f32 %v3373, %v3814
  %v3816 = vsub.f32 1.0, %v3815
  %v3817 = vmul.f32 %v3814, %v3816
  %v3818 = vadd.f32 %v3814, %v3817
  %vm3819 = vweird.f32 %v3373
  %vm3820 = vweird.f32 %v3814
  %vm3821 = vmor %vm3819, %vm3820
  %v3822 = vsel %vm3821, %v3814, %v3818
  %v3823 = vand.u32 2147483647, %v3373
  %vm3824 = vcmp.eq.f32.partialorder %v3823, 8.507059e+37
  %v3825 = vand.u32 %v3373, 2147483648
  %v3826 = vor.u32 1.1754944e-38, %v3825
  %v3827 = vsel %vm3824, %v3826, %v3822
  %v3828 = vmul.f32 1.0, %v3827
  %v3829 = vrcp.pop %v3374
  %v3830 = vmul.f32 %v3374, %v3829
  %v3831 = vsub.f32 1.0, %v3830
  %v3832 = vmul.f32 %v3829, %v3831
  %v3833 = vadd.f32 %v3829, %v3832
  %vm3834 = vweird.f32 %v3374
  %vm3835 = vweird.f32 %v3829
  %vm3836 = vmor %vm3834, %vm3835
  %v3837 = vsel %vm3836, %v3829, %v3833
  %v3838 = vand.u32 2147483647, %v3374
  %vm3839 = vcmp.eq.f32.partialorder %v3838, 8.507059e+37
  %v3840 = vand.u32 %v3374, 2147483648
  %v3841 = vor.u32 1.1754944e-38, %v3840
  %v3842 = vsel %vm3839, %v3841, %v3837
  %v3843 = vmul.f32 1.0, %v3842
  %v3844 = vrcp.pop %v3375
  %v3845 = vmul.f32 %v3375, %v3844
  %v3846 = vsub.f32 1.0, %v3845
  %v3847 = vmul.f32 %v3844, %v3846
  %v3848 = vadd.f32 %v3844, %v3847
  %vm3849 = vweird.f32 %v3375
  %vm3850 = vweird.f32 %v3844
  %vm3851 = vmor %vm3849, %vm3850
  %v3852 = vsel %vm3851, %v3844, %v3848
  %v3853 = vand.u32 2147483647, %v3375
  %vm3854 = vcmp.eq.f32.partialorder %v3853, 8.507059e+37
  %v3855 = vand.u32 %v3375, 2147483648
  %v3856 = vor.u32 1.1754944e-38, %v3855
  %v3857 = vsel %vm3854, %v3856, %v3852
  %v3858 = vmul.f32 1.0, %v3857
  %v3859 = vrcp.pop %v3376
  %v3860 = vmul.f32 %v3376, %v3859
  %v3861 = vsub.f32 1.0, %v3860
  %v3862 = vmul.f32 %v3859, %v3861
  %v3863 = vadd.f32 %v3859, %v3862
  %vm3864 = vweird.f32 %v3376
  %vm3865 = vweird.f32 %v3859
  %vm3866 = vmor %vm3864, %vm3865
  %v3867 = vsel %vm3866, %v3859, %v3863
  %v3868 = vand.u32 2147483647, %v3376
  %vm3869 = vcmp.eq.f32.partialorder %v3868, 8.507059e+37
  %v3870 = vand.u32 %v3376, 2147483648
  %v3871 = vor.u32 1.1754944e-38, %v3870
  %v3872 = vsel %vm3869, %v3871, %v3867
  %v3873 = vmul.f32 1.0, %v3872
  %v3874 = vrcp.pop %v3377
  %v3875 = vmul.f32 %v3377, %v3874
  %v3876 = vsub.f32 1.0, %v3875
  %v3877 = vmul.f32 %v3874, %v3876
  %v3878 = vadd.f32 %v3874, %v3877
  %vm3879 = vweird.f32 %v3377
  %vm3880 = vweird.f32 %v3874
  %vm3881 = vmor %vm3879, %vm3880
  %v3882 = vsel %vm3881, %v3874, %v3878
  %v3883 = vand.u32 2147483647, %v3377
  %vm3884 = vcmp.eq.f32.partialorder %v3883, 8.507059e+37
  %v3885 = vand.u32 %v3377, 2147483648
  %v3886 = vor.u32 1.1754944e-38, %v3885
  %v3887 = vsel %vm3884, %v3886, %v3882
  %v3888 = vmul.f32 1.0, %v3887
  %v3889 = vrcp.pop %v3378
  %v3890 = vmul.f32 %v3378, %v3889
  %v3891 = vsub.f32 1.0, %v3890
  %v3892 = vmul.f32 %v3889, %v3891
  %v3893 = vadd.f32 %v3889, %v3892
  %vm3894 = vweird.f32 %v3378
  %vm3895 = vweird.f32 %v3889
  %vm3896 = vmor %vm3894, %vm3895
  %v3897 = vsel %vm3896, %v3889, %v3893
  %v3898 = vand.u32 2147483647, %v3378
  %vm3899 = vcmp.eq.f32.partialorder %v3898, 8.507059e+37
  %v3900 = vand.u32 %v3378, 2147483648
  %v3901 = vor.u32 1.1754944e-38, %v3900
  %v3902 = vsel %vm3899, %v3901, %v3897
  %v3903 = vmul.f32 1.0, %v3902
  %v3939 = vlaneseq
  %v3940 = vand.u32 %v3939, 127
  %v3941 = vperm.slane %v3393, %v3940
  %v3942 = vperm.slane %v3408, %v3940
  %v3943 = vperm.slane %v3423, %v3940
  %v3944 = vperm.slane %v3438, %v3940
  %v3945 = vperm.slane %v3453, %v3940
  %v3946 = vperm.slane %v3468, %v3940
  %v3947 = vperm.slane %v3483, %v3940
  %v3948 = vperm.slane %v3498, %v3940
  %v3949 = vperm.slane %v3513, %v3940
  %v3950 = vperm.slane %v3528, %v3940
  %v3951 = vperm.slane %v3543, %v3940
  %v3952 = vperm.slane %v3558, %v3940
  %v3953 = vperm.slane %v3573, %v3940
  %v3954 = vperm.slane %v3588, %v3940
  %v3955 = vperm.slane %v3603, %v3940
  %v3956 = vperm.slane %v3618, %v3940
  %v3957 = vperm.slane %v3633, %v3940
  %v3958 = vperm.slane %v3648, %v3940
  %v3959 = vperm.slane %v3663, %v3940
  %v3960 = vperm.slane %v3678, %v3940
  %v3961 = vperm.slane %v3693, %v3940
  %v3962 = vperm.slane %v3708, %v3940
  %v3963 = vperm.slane %v3723, %v3940
  %v3964 = vperm.slane %v3738, %v3940
  %v3965 = vperm.slane %v3753, %v3940
  %v3966 = vperm.slane %v3768, %v3940
  %v3967 = vperm.slane %v3783, %v3940
  %v3968 = vperm.slane %v3798, %v3940
  %v3969 = vperm.slane %v3813, %v3940
  %v3970 = vperm.slane %v3828, %v3940
  %v3971 = vperm.slane %v3843, %v3940
  %v3972 = vperm.slane %v3858, %v3940
  %v3973 = vperm.slane %v3873, %v3940
  %v3974 = vperm.slane %v3888, %v3940
  %v3975 = vperm.slane %v3903, %v3940
  %vm3976 = vcmask 1041409
  %v3977 = vsel %vm3976, %v3942, %v3941
  %vm3978 = vcmask 1042434
  %v3979 = vsel %vm3978, %v3943, %v3977
  %vm3980 = vcmask 1043459
  %v3981 = vsel %vm3980, %v3944, %v3979
  %vm3982 = vcmask 1044484
  %v3983 = vsel %vm3982, %v3945, %v3981
  %vm3984 = vcmask 1045509
  %v3985 = vsel %vm3984, %v3946, %v3983
  %vm3986 = vcmask 1046534
  %v3987 = vsel %vm3986, %v3947, %v3985
  %vm3988 = vcmask 1047559
  %v3989 = vsel %vm3988, %v3948, %v3987
  %v3990 = vsel %vm3976, %v3950, %v3949
  %v3991 = vsel %vm3978, %v3951, %v3990
  %v3992 = vsel %vm3980, %v3952, %v3991
  %v3993 = vsel %vm3982, %v3953, %v3992
  %v3994 = vsel %vm3984, %v3954, %v3993
  %v3995 = vsel %vm3986, %v3955, %v3994
  %v3996 = vsel %vm3988, %v3956, %v3995
  %v3997 = vsel %vm3976, %v3958, %v3957
  %v3998 = vsel %vm3978, %v3959, %v3997
  %v3999 = vsel %vm3980, %v3960, %v3998
  %v4000 = vsel %vm3982, %v3961, %v3999
  %v4001 = vsel %vm3984, %v3962, %v4000
  %v4002 = vsel %vm3986, %v3963, %v4001
  %v4003 = vsel %vm3988, %v3964, %v4002
  %v4004 = vsel %vm3976, %v3966, %v3965
  %v4005 = vsel %vm3978, %v3967, %v4004
  %v4006 = vsel %vm3980, %v3968, %v4005
  %v4007 = vsel %vm3982, %v3969, %v4006
  %v4008 = vsel %vm3984, %v3970, %v4007
  %v4009 = vsel %vm3986, %v3971, %v4008
  %v4010 = vsel %vm3988, %v3972, %v4009
  %v4011 = vsel %vm3976, %v3974, %v3973
  %v4012 = vsel %vm3978, %v3975, %v4011
  %vm4018 = vcmask 15360
  %4019 = vst.msk [vmem:[%s7] sm:$0xff] %vm4018, %v3989
  %4020 = vst.msk [vmem:[%s7 + $0x8] sm:$0xff] %vm4018, %v3996
  %4021 = vst.msk [vmem:[%s7 + $0x10] sm:$0xff] %vm4018, %v4003
  %4022 = vst.msk [vmem:[%s7 + $0x18] sm:$0xff] %vm4018, %v4010
  %vm4023 = vcmask 10240
  %4024 = vst.msk [vmem:[%s7 + $0x20] sm:$0x7] %vm4023, %v4012
  // Predicated region
  $region44: #{detection_net_forward.171} parent=0 // pred_check
    _
  $region45: #{detection_net_forward.171} parent=0 // pred_check_branch
    %4026 = sbr.rel (0) target = $region47
  $region46: #{detection_net_forward.171} parent=0 // pred_region
    _
  $region47: #{detection_net_forward.171} parent=0 // pred_fallthru
    _
  // Predicated region
  $region48: #{detection_net_forward.171} parent=0 // pred_check
    _
  $region49: #{detection_net_forward.171} parent=0 // pred_check_branch
    %4028 = sbr.rel (0) target = $region51
  $region50: #{detection_net_forward.171} parent=0 // pred_region
    _
  $region51: #{detection_net_forward.171} parent=0 // pred_fallthru
    _

</llo_original>
